<compile_context>
chip_gen: v7x
topology: tpu7x:2x2x1
jax: 0.10.0
libtpu: 0.0.40
codegen_flags: <defaults>
</compile_context>

<pallas_src>
import functools

import jax
import jax.numpy as jnp
from jax.experimental import pallas as pl
from jax.experimental.pallas import tpu as pltpu

PERCEPTUAL_WEIGHT = 0.7
LANE = 128          # conv output channels zero-padded to one full lane group
CIN_PAD = 8         # raw RGB channel dim zero-padded to 8 (exact: zero weights)
EPS = 1e-10         # matches reference LPIPS: x / (sqrt(sum x^2) + eps)
K = 3               # 3x3 convs in both synthetic stages
WPAD = 8            # left pad inside the activation scratch -> aligned stores


# ----------------------------- Pallas kernel --------------------------------

def _compare(f0, f1, lin):
    """LPIPS stage compare: channel unit-normalize (lanes), squared diff,
    non-negative lin weighting, sum over the spatial rows -> [1, LANE]."""
    inv0 = pl.reciprocal(
        jnp.sqrt(jnp.sum(f0 * f0, axis=-1, keepdims=True)) + EPS, approx=True)
    inv1 = pl.reciprocal(
        jnp.sqrt(jnp.sum(f1 * f1, axis=-1, keepdims=True)) + EPS, approx=True)
    d = (f0 * inv0 - f1 * inv1) ** 2 * lin
    return jnp.sum(d, axis=0, keepdims=True)                       # [1, 128]


def _lpips_fused_kernel(xp_ref, w1_ref, b1_ref, lin1_ref,
                        w2_ref, b2_ref, lin2_ref,
                        score_ref, act_ref, *, H, W):
    """Both LPIPS stages (conv+bias+ReLU, normalize, diff, lin, spatial sum)
    for one sample's (target, reconstruction) pair, fully on-chip.

    xp   : [2, H+2, W+2, CIN_PAD] f32  zero-padded shift-folded image pair
    w1   : [9, CIN_PAD, 128] bf16      per-tap stage-1 weights (scale folded)
    w2   : [9, 128, 128]     bf16      per-tap stage-2 weights
    b*/lin*: [1, 128] f32              bias / non-negative lin weights
    score: [1, 1, 128] f32             per-lane (stage1/HW + stage2/HW2) sums
    act  : [2, H+2, W+WPAD, 128] f32   VMEM scratch holding padded stage-1 maps
    """
    H2, W2 = H // 2, W // 2
    HW, HW2 = H * W, H2 * W2

    # ---- stage 1: 3x3 stride-1 pad-1 conv (+bias+ReLU) on both images ------
    # both images stacked along M -> one MXU pass per tap.
    acc1 = jnp.zeros((2 * HW, LANE), jnp.float32)
    for t in range(K * K):
        i, j = divmod(t, K)
        x_t = xp_ref[:, i:i + H, j:j + W, :].reshape(2 * HW, CIN_PAD)
        acc1 += jnp.dot(x_t.astype(jnp.bfloat16), w1_ref[t],
                        preferred_element_type=jnp.float32)
    a1 = jnp.maximum(acc1 + b1_ref[...], 0.0)                  # [2*HW, 128]

    # ---- stage-1 LPIPS compare (features never touch HBM) ------------------
    s1 = _compare(a1[:HW], a1[HW:], lin1_ref[...])             # [1, 128]

    # ---- stage-1 activations -> zero-padded VMEM scratch for stage 2 -------
    # rows at offset 1 (outer dim), cols at offset WPAD=8 (sublane-aligned).
    act_ref[...] = jnp.zeros_like(act_ref)
    act_ref[:, 1:H + 1, WPAD:WPAD + W, :] = a1.reshape(2, H, W, LANE)

    # ---- stage 2: 3x3 stride-2 pad-1 conv (+bias+ReLU) ---------------------
    # tap (i, j) needs act rows 2*h2-1+i / cols 2*w2-1+j -> strided reads of
    # the padded scratch (row offset +1, col offset +WPAD handle the padding).
    acc2 = jnp.zeros((2 * HW2, LANE), jnp.float32)
    for t in range(K * K):
        i, j = divmod(t, K)
        a_t = act_ref[:, pl.ds(i, H2, 2), pl.ds(WPAD - 1 + j, W2, 2), :]
        a_t = a_t.reshape(2 * HW2, LANE).astype(jnp.bfloat16)
        acc2 += jnp.dot(a_t, w2_ref[t], preferred_element_type=jnp.float32)
    a2 = jnp.maximum(acc2 + b2_ref[...], 0.0)                  # [2*HW2, 128]

    s2 = _compare(a2[:HW2], a2[HW2:], lin2_ref[...])           # [1, 128]

    # per-lane spatial means of both stages; XLA sums the 128 lanes (lanes
    # >= cout are exactly zero because weights/bias/lin are zero there).
    score_ref[...] = (s1 * (1.0 / HW) + s2 * (1.0 / HW2)).reshape(1, 1, LANE)


# ------------------------------ wrappers ------------------------------------

def lpips_fused(x0, x1, p):
    """Fused 2-stage LPIPS distance on NHWC images (target, recon) -> [N]."""
    N, H, W, _ = x0.shape
    assert H % 2 == 0 and W % 2 == 0, "synthetic backbone assumes even H, W"

    # Scaling layer folded away: '-shift' rides the pad/stack pass (exact:
    # padded pixels are 0 in shifted space, matching the reference's zero pad
    # of the scaled tensor), '/scale' goes into the stage-1 weights.
    pair = jnp.stack([x0, x1], axis=1).reshape(2 * N, H, W, 3)
    pair = pair - p["shift"]
    xp = jnp.pad(pair, ((0, 0), (1, 1), (1, 1), (0, CIN_PAD - 3)))

    w1 = (p["conv1_w"] / p["scale"][None, None, :, None]).reshape(K * K, 3, -1)
    c1 = w1.shape[-1]
    w1p = jnp.zeros((K * K, CIN_PAD, LANE), jnp.float32)
    w1p = w1p.at[:, :3, :c1].set(w1).astype(jnp.bfloat16)
    b1p = jnp.zeros((1, LANE), jnp.float32).at[:, :c1].set(p["conv1_b"])
    l1p = jnp.zeros((1, LANE), jnp.float32).at[:, :c1].set(p["lin1"])

    w2 = p["conv2_w"].reshape(K * K, c1, -1)
    c2 = w2.shape[-1]
    w2p = jnp.zeros((K * K, LANE, LANE), jnp.float32)
    w2p = w2p.at[:, :c1, :c2].set(w2).astype(jnp.bfloat16)
    b2p = jnp.zeros((1, LANE), jnp.float32).at[:, :c2].set(p["conv2_b"])
    l2p = jnp.zeros((1, LANE), jnp.float32).at[:, :c2].set(p["lin2"])

    scores = pl.pallas_call(
        functools.partial(_lpips_fused_kernel, H=H, W=W),
        out_shape=jax.ShapeDtypeStruct((N, 1, LANE), jnp.float32),
        grid=(N,),
        in_specs=[
            pl.BlockSpec((2, H + 2, W + 2, CIN_PAD), lambda n: (n, 0, 0, 0)),
            pl.BlockSpec((K * K, CIN_PAD, LANE), lambda n: (0, 0, 0)),
            pl.BlockSpec((1, LANE), lambda n: (0, 0)),
            pl.BlockSpec((1, LANE), lambda n: (0, 0)),
            pl.BlockSpec((K * K, LANE, LANE), lambda n: (0, 0, 0)),
            pl.BlockSpec((1, LANE), lambda n: (0, 0)),
            pl.BlockSpec((1, LANE), lambda n: (0, 0)),
        ],
        out_specs=pl.BlockSpec((1, 1, LANE), lambda n: (n, 0, 0)),
        scratch_shapes=[pltpu.VMEM((2, H + 2, W + WPAD, LANE), jnp.float32)],
        compiler_params=pltpu.CompilerParams(
            dimension_semantics=("parallel",)),
    )(xp, w1p, b1p, l1p, w2p, b2p, l2p)

    return jnp.sum(scores[:, 0, :], axis=-1)                    # [N]


def init_lpips_params():
    """Deterministic synthetic LPIPS parameters (stand-in for pretrained VGG)."""
    keys = jax.random.split(jax.random.PRNGKey(42), 6)
    return {
        # standard LPIPS scaling-layer constants
        "shift": jnp.array([-0.030, -0.088, -0.188], jnp.float32),
        "scale": jnp.array([0.458, 0.448, 0.450], jnp.float32),
        # stage 1: 3x3 conv 3 -> 8, stride 1, pad 1, ReLU
        "conv1_w": 0.2 * jax.random.normal(keys[0], (3, 3, 3, 8), jnp.float32),
        "conv1_b": 0.05 * jax.random.normal(keys[1], (8,), jnp.float32),
        # stage 2: 3x3 conv 8 -> 16, stride 2, pad 1, ReLU
        "conv2_w": 0.2 * jax.random.normal(keys[2], (3, 3, 8, 16), jnp.float32),
        "conv2_b": 0.05 * jax.random.normal(keys[3], (16,), jnp.float32),
        # per-stage non-negative "lin" layers (1x1 conv C -> 1 in real LPIPS)
        "lin1": 0.1 * jnp.abs(jax.random.normal(keys[4], (8,), jnp.float32)),
        "lin2": 0.1 * jnp.abs(jax.random.normal(keys[5], (16,), jnp.float32)),
    }


def lpips_loss_forward(params, img_dim, rec_loss, targets, reconstructions):
    """Mirror of LPIPSLoss.forward."""
    H, W = img_dim

    def transform_dims(x):   # torch: view(-1,H,W,3).permute(0,3,1,2); keep NHWC
        return x.reshape(-1, H, W, 3).astype(jnp.float32)

    t = transform_dims(targets)
    r = transform_dims(reconstructions)
    rl = transform_dims(rec_loss)

    p_loss = lpips_fused(t, r, params)[:, None]                     # [N, 1]
    n = p_loss.shape[0]
    assert rl.shape[0] == n
    rec_mean = jnp.mean(rl.reshape(n, -1), axis=1, keepdims=True)   # [N, 1]
    # Trivial final reduction left to XLA (fuses into one reduce).
    return jnp.mean(rec_mean + PERCEPTUAL_WEIGHT * p_loss)


if __name__ == "__main__":
    img_dim = (16, 16)
    N = 2
    D = img_dim[0] * img_dim[1] * 3

    key = jax.random.PRNGKey(0)
    k1, k2 = jax.random.split(key, 2)
    targets = jax.random.uniform(k1, (N, D), jnp.float32, -1.0, 1.0)
    reconstructions = jax.random.uniform(k2, (N, D), jnp.float32, -1.0, 1.0)
    rec_loss = jnp.abs(targets - reconstructions)   # elementwise rec loss

    params = init_lpips_params()
    fwd = jax.jit(functools.partial(lpips_loss_forward, params, img_dim))
    out = fwd(rec_loss, targets, reconstructions)
    jax.block_until_ready(out)
    print("KERNEL_OK")
</pallas_src>

<mosaic_0001>
module attributes {stable_mosaic.version = 11 : i64} {
  func.func @_lpips_fused_kernel(%arg0: i32, %arg1: memref<2x18x18x8xf32, #tpu.memory_space<vmem>>, %arg2: memref<9x8x128xbf16, #tpu.memory_space<vmem>>, %arg3: memref<1x128xf32, #tpu.memory_space<vmem>>, %arg4: memref<1x128xf32, #tpu.memory_space<vmem>>, %arg5: memref<9x128x128xbf16, #tpu.memory_space<vmem>>, %arg6: memref<1x128xf32, #tpu.memory_space<vmem>>, %arg7: memref<1x128xf32, #tpu.memory_space<vmem>>, %arg8: memref<1x1x128xf32, #tpu.memory_space<vmem>>, %arg9: memref<2x18x24x128xf32, #tpu.memory_space<vmem>>) attributes {dimension_semantics = [#tpu.dimension_semantics<parallel>], iteration_bounds = array<i64: 2>, scalar_prefetch = 0 : i64, scratch_operands = 1 : i64, tpu.core_type = #tpu.core_type<tc>, window_params = [{transform_indices = @transform_0, window_bounds = array<i64: 2, 18, 18, 8>}, {pipeline_mode = #tpu.pipeline_mode<synchronous>, transform_indices = @transform_1, window_bounds = array<i64: 9, 8, 128>}, {pipeline_mode = #tpu.pipeline_mode<synchronous>, transform_indices = @transform_2, window_bounds = array<i64: 1, 128>}, {pipeline_mode = #tpu.pipeline_mode<synchronous>, transform_indices = @transform_3, window_bounds = array<i64: 1, 128>}, {pipeline_mode = #tpu.pipeline_mode<synchronous>, transform_indices = @transform_4, window_bounds = array<i64: 9, 128, 128>}, {pipeline_mode = #tpu.pipeline_mode<synchronous>, transform_indices = @transform_5, window_bounds = array<i64: 1, 128>}, {pipeline_mode = #tpu.pipeline_mode<synchronous>, transform_indices = @transform_6, window_bounds = array<i64: 1, 128>}, {transform_indices = @transform_7, window_bounds = array<i64: 1, 1, 128>}]} {
    %cst = arith.constant 0.000000e+00 : f32
    %0 = vector.broadcast %cst : f32 to vector<512x128xf32>
    %c0 = arith.constant 0 : index
    %c0_0 = arith.constant 0 : index
    %c0_1 = arith.constant 0 : index
    %c0_2 = arith.constant 0 : index
    %1 = vector.load %arg1[%c0, %c0_0, %c0_1, %c0_2] : memref<2x18x18x8xf32, #tpu.memory_space<vmem>>, vector<2x16x16x8xf32>
    %2 = vector.shape_cast %1 : vector<2x16x16x8xf32> to vector<512x8xf32>
    %3 = arith.truncf %2 : vector<512x8xf32> to vector<512x8xbf16>
    %c0_3 = arith.constant 0 : index
    %c0_4 = arith.constant 0 : index
    %c0_5 = arith.constant 0 : index
    %4 = vector.load %arg2[%c0_3, %c0_4, %c0_5] : memref<9x8x128xbf16, #tpu.memory_space<vmem>>, vector<1x8x128xbf16>
    %5 = vector.shape_cast %4 : vector<1x8x128xbf16> to vector<8x128xbf16>
    %cst_6 = arith.constant dense<0.000000e+00> : vector<512x128xf32>
    %6 = tpu.matmul %3, %5, %cst_6 {dimension_numbers = #tpu.dot_dimension_numbers<[1], [0], [0], [1], [0, 0, 1, 1], [], []>} : vector<512x8xbf16>, vector<8x128xbf16>, vector<512x128xf32> -> vector<512x128xf32>
    %7 = arith.addf %0, %6 : vector<512x128xf32>
    %c0_7 = arith.constant 0 : index
    %c0_8 = arith.constant 0 : index
    %c1 = arith.constant 1 : index
    %c0_9 = arith.constant 0 : index
    %8 = vector.load %arg1[%c0_7, %c0_8, %c1, %c0_9] : memref<2x18x18x8xf32, #tpu.memory_space<vmem>>, vector<2x16x16x8xf32>
    %9 = vector.shape_cast %8 : vector<2x16x16x8xf32> to vector<512x8xf32>
    %10 = arith.truncf %9 : vector<512x8xf32> to vector<512x8xbf16>
    %c1_10 = arith.constant 1 : index
    %c0_11 = arith.constant 0 : index
    %c0_12 = arith.constant 0 : index
    %11 = vector.load %arg2[%c1_10, %c0_11, %c0_12] : memref<9x8x128xbf16, #tpu.memory_space<vmem>>, vector<1x8x128xbf16>
    %12 = vector.shape_cast %11 : vector<1x8x128xbf16> to vector<8x128xbf16>
    %cst_13 = arith.constant dense<0.000000e+00> : vector<512x128xf32>
    %13 = tpu.matmul %10, %12, %cst_13 {dimension_numbers = #tpu.dot_dimension_numbers<[1], [0], [0], [1], [0, 0, 1, 1], [], []>} : vector<512x8xbf16>, vector<8x128xbf16>, vector<512x128xf32> -> vector<512x128xf32>
    %14 = arith.addf %7, %13 : vector<512x128xf32>
    %c0_14 = arith.constant 0 : index
    %c0_15 = arith.constant 0 : index
    %c2 = arith.constant 2 : index
    %c0_16 = arith.constant 0 : index
    %15 = vector.load %arg1[%c0_14, %c0_15, %c2, %c0_16] : memref<2x18x18x8xf32, #tpu.memory_space<vmem>>, vector<2x16x16x8xf32>
    %16 = vector.shape_cast %15 : vector<2x16x16x8xf32> to vector<512x8xf32>
    %17 = arith.truncf %16 : vector<512x8xf32> to vector<512x8xbf16>
    %c2_17 = arith.constant 2 : index
    %c0_18 = arith.constant 0 : index
    %c0_19 = arith.constant 0 : index
    %18 = vector.load %arg2[%c2_17, %c0_18, %c0_19] : memref<9x8x128xbf16, #tpu.memory_space<vmem>>, vector<1x8x128xbf16>
    %19 = vector.shape_cast %18 : vector<1x8x128xbf16> to vector<8x128xbf16>
    %cst_20 = arith.constant dense<0.000000e+00> : vector<512x128xf32>
    %20 = tpu.matmul %17, %19, %cst_20 {dimension_numbers = #tpu.dot_dimension_numbers<[1], [0], [0], [1], [0, 0, 1, 1], [], []>} : vector<512x8xbf16>, vector<8x128xbf16>, vector<512x128xf32> -> vector<512x128xf32>
    %21 = arith.addf %14, %20 : vector<512x128xf32>
    %c0_21 = arith.constant 0 : index
    %c1_22 = arith.constant 1 : index
    %c0_23 = arith.constant 0 : index
    %c0_24 = arith.constant 0 : index
    %22 = vector.load %arg1[%c0_21, %c1_22, %c0_23, %c0_24] : memref<2x18x18x8xf32, #tpu.memory_space<vmem>>, vector<2x16x16x8xf32>
    %23 = vector.shape_cast %22 : vector<2x16x16x8xf32> to vector<512x8xf32>
    %24 = arith.truncf %23 : vector<512x8xf32> to vector<512x8xbf16>
    %c3 = arith.constant 3 : index
    %c0_25 = arith.constant 0 : index
    %c0_26 = arith.constant 0 : index
    %25 = vector.load %arg2[%c3, %c0_25, %c0_26] : memref<9x8x128xbf16, #tpu.memory_space<vmem>>, vector<1x8x128xbf16>
    %26 = vector.shape_cast %25 : vector<1x8x128xbf16> to vector<8x128xbf16>
    %cst_27 = arith.constant dense<0.000000e+00> : vector<512x128xf32>
    %27 = tpu.matmul %24, %26, %cst_27 {dimension_numbers = #tpu.dot_dimension_numbers<[1], [0], [0], [1], [0, 0, 1, 1], [], []>} : vector<512x8xbf16>, vector<8x128xbf16>, vector<512x128xf32> -> vector<512x128xf32>
    %28 = arith.addf %21, %27 : vector<512x128xf32>
    %c0_28 = arith.constant 0 : index
    %c1_29 = arith.constant 1 : index
    %c1_30 = arith.constant 1 : index
    %c0_31 = arith.constant 0 : index
    %29 = vector.load %arg1[%c0_28, %c1_29, %c1_30, %c0_31] : memref<2x18x18x8xf32, #tpu.memory_space<vmem>>, vector<2x16x16x8xf32>
    %30 = vector.shape_cast %29 : vector<2x16x16x8xf32> to vector<512x8xf32>
    %31 = arith.truncf %30 : vector<512x8xf32> to vector<512x8xbf16>
    %c4 = arith.constant 4 : index
    %c0_32 = arith.constant 0 : index
    %c0_33 = arith.constant 0 : index
    %32 = vector.load %arg2[%c4, %c0_32, %c0_33] : memref<9x8x128xbf16, #tpu.memory_space<vmem>>, vector<1x8x128xbf16>
    %33 = vector.shape_cast %32 : vector<1x8x128xbf16> to vector<8x128xbf16>
    %cst_34 = arith.constant dense<0.000000e+00> : vector<512x128xf32>
    %34 = tpu.matmul %31, %33, %cst_34 {dimension_numbers = #tpu.dot_dimension_numbers<[1], [0], [0], [1], [0, 0, 1, 1], [], []>} : vector<512x8xbf16>, vector<8x128xbf16>, vector<512x128xf32> -> vector<512x128xf32>
    %35 = arith.addf %28, %34 : vector<512x128xf32>
    %c0_35 = arith.constant 0 : index
    %c1_36 = arith.constant 1 : index
    %c2_37 = arith.constant 2 : index
    %c0_38 = arith.constant 0 : index
    %36 = vector.load %arg1[%c0_35, %c1_36, %c2_37, %c0_38] : memref<2x18x18x8xf32, #tpu.memory_space<vmem>>, vector<2x16x16x8xf32>
    %37 = vector.shape_cast %36 : vector<2x16x16x8xf32> to vector<512x8xf32>
    %38 = arith.truncf %37 : vector<512x8xf32> to vector<512x8xbf16>
    %c5 = arith.constant 5 : index
    %c0_39 = arith.constant 0 : index
    %c0_40 = arith.constant 0 : index
    %39 = vector.load %arg2[%c5, %c0_39, %c0_40] : memref<9x8x128xbf16, #tpu.memory_space<vmem>>, vector<1x8x128xbf16>
    %40 = vector.shape_cast %39 : vector<1x8x128xbf16> to vector<8x128xbf16>
    %cst_41 = arith.constant dense<0.000000e+00> : vector<512x128xf32>
    %41 = tpu.matmul %38, %40, %cst_41 {dimension_numbers = #tpu.dot_dimension_numbers<[1], [0], [0], [1], [0, 0, 1, 1], [], []>} : vector<512x8xbf16>, vector<8x128xbf16>, vector<512x128xf32> -> vector<512x128xf32>
    %42 = arith.addf %35, %41 : vector<512x128xf32>
    %c0_42 = arith.constant 0 : index
    %c2_43 = arith.constant 2 : index
    %c0_44 = arith.constant 0 : index
    %c0_45 = arith.constant 0 : index
    %43 = vector.load %arg1[%c0_42, %c2_43, %c0_44, %c0_45] : memref<2x18x18x8xf32, #tpu.memory_space<vmem>>, vector<2x16x16x8xf32>
    %44 = vector.shape_cast %43 : vector<2x16x16x8xf32> to vector<512x8xf32>
    %45 = arith.truncf %44 : vector<512x8xf32> to vector<512x8xbf16>
    %c6 = arith.constant 6 : index
    %c0_46 = arith.constant 0 : index
    %c0_47 = arith.constant 0 : index
    %46 = vector.load %arg2[%c6, %c0_46, %c0_47] : memref<9x8x128xbf16, #tpu.memory_space<vmem>>, vector<1x8x128xbf16>
    %47 = vector.shape_cast %46 : vector<1x8x128xbf16> to vector<8x128xbf16>
    %cst_48 = arith.constant dense<0.000000e+00> : vector<512x128xf32>
    %48 = tpu.matmul %45, %47, %cst_48 {dimension_numbers = #tpu.dot_dimension_numbers<[1], [0], [0], [1], [0, 0, 1, 1], [], []>} : vector<512x8xbf16>, vector<8x128xbf16>, vector<512x128xf32> -> vector<512x128xf32>
    %49 = arith.addf %42, %48 : vector<512x128xf32>
    %c0_49 = arith.constant 0 : index
    %c2_50 = arith.constant 2 : index
    %c1_51 = arith.constant 1 : index
    %c0_52 = arith.constant 0 : index
    %50 = vector.load %arg1[%c0_49, %c2_50, %c1_51, %c0_52] : memref<2x18x18x8xf32, #tpu.memory_space<vmem>>, vector<2x16x16x8xf32>
    %51 = vector.shape_cast %50 : vector<2x16x16x8xf32> to vector<512x8xf32>
    %52 = arith.truncf %51 : vector<512x8xf32> to vector<512x8xbf16>
    %c7 = arith.constant 7 : index
    %c0_53 = arith.constant 0 : index
    %c0_54 = arith.constant 0 : index
    %53 = vector.load %arg2[%c7, %c0_53, %c0_54] : memref<9x8x128xbf16, #tpu.memory_space<vmem>>, vector<1x8x128xbf16>
    %54 = vector.shape_cast %53 : vector<1x8x128xbf16> to vector<8x128xbf16>
    %cst_55 = arith.constant dense<0.000000e+00> : vector<512x128xf32>
    %55 = tpu.matmul %52, %54, %cst_55 {dimension_numbers = #tpu.dot_dimension_numbers<[1], [0], [0], [1], [0, 0, 1, 1], [], []>} : vector<512x8xbf16>, vector<8x128xbf16>, vector<512x128xf32> -> vector<512x128xf32>
    %56 = arith.addf %49, %55 : vector<512x128xf32>
    %c0_56 = arith.constant 0 : index
    %c2_57 = arith.constant 2 : index
    %c2_58 = arith.constant 2 : index
    %c0_59 = arith.constant 0 : index
    %57 = vector.load %arg1[%c0_56, %c2_57, %c2_58, %c0_59] : memref<2x18x18x8xf32, #tpu.memory_space<vmem>>, vector<2x16x16x8xf32>
    %58 = vector.shape_cast %57 : vector<2x16x16x8xf32> to vector<512x8xf32>
    %59 = arith.truncf %58 : vector<512x8xf32> to vector<512x8xbf16>
    %c8 = arith.constant 8 : index
    %c0_60 = arith.constant 0 : index
    %c0_61 = arith.constant 0 : index
    %60 = vector.load %arg2[%c8, %c0_60, %c0_61] : memref<9x8x128xbf16, #tpu.memory_space<vmem>>, vector<1x8x128xbf16>
    %61 = vector.shape_cast %60 : vector<1x8x128xbf16> to vector<8x128xbf16>
    %cst_62 = arith.constant dense<0.000000e+00> : vector<512x128xf32>
    %62 = tpu.matmul %59, %61, %cst_62 {dimension_numbers = #tpu.dot_dimension_numbers<[1], [0], [0], [1], [0, 0, 1, 1], [], []>} : vector<512x8xbf16>, vector<8x128xbf16>, vector<512x128xf32> -> vector<512x128xf32>
    %63 = arith.addf %56, %62 : vector<512x128xf32>
    %c0_63 = arith.constant 0 : index
    %c0_64 = arith.constant 0 : index
    %64 = vector.load %arg3[%c0_63, %c0_64] : memref<1x128xf32, #tpu.memory_space<vmem>>, vector<1x128xf32>
    %65 = vector.broadcast %64 : vector<1x128xf32> to vector<512x128xf32>
    %66 = arith.addf %63, %65 : vector<512x128xf32>
    %cst_65 = arith.constant 0.000000e+00 : f32
    %67 = vector.broadcast %cst_65 : f32 to vector<512x128xf32>
    %68 = arith.maximumf %66, %67 : vector<512x128xf32>
    %69 = vector.extract_strided_slice %68 {offsets = [0, 0], sizes = [256, 128], strides = [1, 1]} : vector<512x128xf32> to vector<256x128xf32>
    %70 = vector.extract_strided_slice %68 {offsets = [256, 0], sizes = [256, 128], strides = [1, 1]} : vector<512x128xf32> to vector<256x128xf32>
    %c0_66 = arith.constant 0 : index
    %c0_67 = arith.constant 0 : index
    %71 = vector.load %arg4[%c0_66, %c0_67] : memref<1x128xf32, #tpu.memory_space<vmem>>, vector<1x128xf32>
    %72 = arith.mulf %69, %69 : vector<256x128xf32>
    %cst_68 = arith.constant dense<0.000000e+00> : vector<256xf32>
    %73 = vector.multi_reduction <add>, %72, %cst_68 [1] : vector<256x128xf32> to vector<256xf32>
    %74 = vector.shape_cast %73 : vector<256xf32> to vector<256x1xf32>
    %75 = math.sqrt %74 : vector<256x1xf32>
    %cst_69 = arith.constant 1.000000e-10 : f32
    %76 = vector.broadcast %cst_69 : f32 to vector<256x1xf32>
    %77 = arith.addf %75, %76 : vector<256x1xf32>
    %78 = tpu.reciprocal %77 {approx = true} : vector<256x1xf32> -> vector<256x1xf32>
    %79 = arith.mulf %70, %70 : vector<256x128xf32>
    %cst_70 = arith.constant dense<0.000000e+00> : vector<256xf32>
    %80 = vector.multi_reduction <add>, %79, %cst_70 [1] : vector<256x128xf32> to vector<256xf32>
    %81 = vector.shape_cast %80 : vector<256xf32> to vector<256x1xf32>
    %82 = math.sqrt %81 : vector<256x1xf32>
    %cst_71 = arith.constant 1.000000e-10 : f32
    %83 = vector.broadcast %cst_71 : f32 to vector<256x1xf32>
    %84 = arith.addf %82, %83 : vector<256x1xf32>
    %85 = tpu.reciprocal %84 {approx = true} : vector<256x1xf32> -> vector<256x1xf32>
    %86 = vector.broadcast %78 : vector<256x1xf32> to vector<256x128xf32>
    %87 = arith.mulf %69, %86 : vector<256x128xf32>
    %88 = vector.broadcast %85 : vector<256x1xf32> to vector<256x128xf32>
    %89 = arith.mulf %70, %88 : vector<256x128xf32>
    %90 = arith.subf %87, %89 : vector<256x128xf32>
    %91 = arith.mulf %90, %90 : vector<256x128xf32>
    %92 = vector.broadcast %71 : vector<1x128xf32> to vector<256x128xf32>
    %93 = arith.mulf %91, %92 : vector<256x128xf32>
    %cst_72 = arith.constant dense<0.000000e+00> : vector<128xf32>
    %94 = vector.multi_reduction <add>, %93, %cst_72 [0] : vector<256x128xf32> to vector<128xf32>
    %95 = vector.shape_cast %94 : vector<128xf32> to vector<1x128xf32>
    %cst_73 = arith.constant 0.000000e+00 : f32
    %96 = vector.broadcast %cst_73 : f32 to vector<2x18x24x128xf32>
    %c0_74 = arith.constant 0 : index
    %c0_75 = arith.constant 0 : index
    %c0_76 = arith.constant 0 : index
    %c0_77 = arith.constant 0 : index
    %97 = vector.load %arg9[%c0_74, %c0_75, %c0_76, %c0_77] : memref<2x18x24x128xf32, #tpu.memory_space<vmem>>, vector<2x18x24x128xf32>
    tpu.vector_store %arg9[%c0_74, %c0_75, %c0_76, %c0_77], %96 {strides = array<i32>} : memref<2x18x24x128xf32, #tpu.memory_space<vmem>>, vector<2x18x24x128xf32>,
    %98 = vector.shape_cast %68 : vector<512x128xf32> to vector<2x16x16x128xf32>
    %c0_78 = arith.constant 0 : index
    %c1_79 = arith.constant 1 : index
    %c8_80 = arith.constant 8 : index
    %c0_81 = arith.constant 0 : index
    %99 = vector.load %arg9[%c0_78, %c1_79, %c8_80, %c0_81] : memref<2x18x24x128xf32, #tpu.memory_space<vmem>>, vector<2x16x16x128xf32>
    tpu.vector_store %arg9[%c0_78, %c1_79, %c8_80, %c0_81], %98 {strides = array<i32>} : memref<2x18x24x128xf32, #tpu.memory_space<vmem>>, vector<2x16x16x128xf32>,
    %cst_82 = arith.constant 0.000000e+00 : f32
    %100 = vector.broadcast %cst_82 : f32 to vector<128x128xf32>
    %c0_83 = arith.constant 0 : index
    %c0_84 = arith.constant 0 : index
    %c7_85 = arith.constant 7 : index
    %c0_86 = arith.constant 0 : index
    %101 = tpu.strided_load %arg9[%c0_83, %c0_84, %c7_85, %c0_86] {strides = array<i32: 1, 2, 2, 1>} : memref<2x18x24x128xf32, #tpu.memory_space<vmem>>, vector<2x8x8x128xf32>
    %102 = vector.shape_cast %101 : vector<2x8x8x128xf32> to vector<128x128xf32>
    %103 = arith.truncf %102 : vector<128x128xf32> to vector<128x128xbf16>
    %c0_87 = arith.constant 0 : index
    %c0_88 = arith.constant 0 : index
    %c0_89 = arith.constant 0 : index
    %104 = vector.load %arg5[%c0_87, %c0_88, %c0_89] : memref<9x128x128xbf16, #tpu.memory_space<vmem>>, vector<1x128x128xbf16>
    %105 = vector.shape_cast %104 : vector<1x128x128xbf16> to vector<128x128xbf16>
    %cst_90 = arith.constant dense<0.000000e+00> : vector<128x128xf32>
    %106 = tpu.matmul %103, %105, %cst_90 {dimension_numbers = #tpu.dot_dimension_numbers<[1], [0], [0], [1], [0, 0, 1, 1], [], []>} : vector<128x128xbf16>, vector<128x128xbf16>, vector<128x128xf32> -> vector<128x128xf32>
    %107 = arith.addf %100, %106 : vector<128x128xf32>
    %c0_91 = arith.constant 0 : index
    %c0_92 = arith.constant 0 : index
    %c8_93 = arith.constant 8 : index
    %c0_94 = arith.constant 0 : index
    %108 = tpu.strided_load %arg9[%c0_91, %c0_92, %c8_93, %c0_94] {strides = array<i32: 1, 2, 2, 1>} : memref<2x18x24x128xf32, #tpu.memory_space<vmem>>, vector<2x8x8x128xf32>
    %109 = vector.shape_cast %108 : vector<2x8x8x128xf32> to vector<128x128xf32>
    %110 = arith.truncf %109 : vector<128x128xf32> to vector<128x128xbf16>
    %c1_95 = arith.constant 1 : index
    %c0_96 = arith.constant 0 : index
    %c0_97 = arith.constant 0 : index
    %111 = vector.load %arg5[%c1_95, %c0_96, %c0_97] : memref<9x128x128xbf16, #tpu.memory_space<vmem>>, vector<1x128x128xbf16>
    %112 = vector.shape_cast %111 : vector<1x128x128xbf16> to vector<128x128xbf16>
    %cst_98 = arith.constant dense<0.000000e+00> : vector<128x128xf32>
    %113 = tpu.matmul %110, %112, %cst_98 {dimension_numbers = #tpu.dot_dimension_numbers<[1], [0], [0], [1], [0, 0, 1, 1], [], []>} : vector<128x128xbf16>, vector<128x128xbf16>, vector<128x128xf32> -> vector<128x128xf32>
    %114 = arith.addf %107, %113 : vector<128x128xf32>
    %c0_99 = arith.constant 0 : index
    %c0_100 = arith.constant 0 : index
    %c9 = arith.constant 9 : index
    %c0_101 = arith.constant 0 : index
    %115 = tpu.strided_load %arg9[%c0_99, %c0_100, %c9, %c0_101] {strides = array<i32: 1, 2, 2, 1>} : memref<2x18x24x128xf32, #tpu.memory_space<vmem>>, vector<2x8x8x128xf32>
    %116 = vector.shape_cast %115 : vector<2x8x8x128xf32> to vector<128x128xf32>
    %117 = arith.truncf %116 : vector<128x128xf32> to vector<128x128xbf16>
    %c2_102 = arith.constant 2 : index
    %c0_103 = arith.constant 0 : index
    %c0_104 = arith.constant 0 : index
    %118 = vector.load %arg5[%c2_102, %c0_103, %c0_104] : memref<9x128x128xbf16, #tpu.memory_space<vmem>>, vector<1x128x128xbf16>
    %119 = vector.shape_cast %118 : vector<1x128x128xbf16> to vector<128x128xbf16>
    %cst_105 = arith.constant dense<0.000000e+00> : vector<128x128xf32>
    %120 = tpu.matmul %117, %119, %cst_105 {dimension_numbers = #tpu.dot_dimension_numbers<[1], [0], [0], [1], [0, 0, 1, 1], [], []>} : vector<128x128xbf16>, vector<128x128xbf16>, vector<128x128xf32> -> vector<128x128xf32>
    %121 = arith.addf %114, %120 : vector<128x128xf32>
    %c0_106 = arith.constant 0 : index
    %c1_107 = arith.constant 1 : index
    %c7_108 = arith.constant 7 : index
    %c0_109 = arith.constant 0 : index
    %122 = tpu.strided_load %arg9[%c0_106, %c1_107, %c7_108, %c0_109] {strides = array<i32: 1, 2, 2, 1>} : memref<2x18x24x128xf32, #tpu.memory_space<vmem>>, vector<2x8x8x128xf32>
    %123 = vector.shape_cast %122 : vector<2x8x8x128xf32> to vector<128x128xf32>
    %124 = arith.truncf %123 : vector<128x128xf32> to vector<128x128xbf16>
    %c3_110 = arith.constant 3 : index
    %c0_111 = arith.constant 0 : index
    %c0_112 = arith.constant 0 : index
    %125 = vector.load %arg5[%c3_110, %c0_111, %c0_112] : memref<9x128x128xbf16, #tpu.memory_space<vmem>>, vector<1x128x128xbf16>
    %126 = vector.shape_cast %125 : vector<1x128x128xbf16> to vector<128x128xbf16>
    %cst_113 = arith.constant dense<0.000000e+00> : vector<128x128xf32>
    %127 = tpu.matmul %124, %126, %cst_113 {dimension_numbers = #tpu.dot_dimension_numbers<[1], [0], [0], [1], [0, 0, 1, 1], [], []>} : vector<128x128xbf16>, vector<128x128xbf16>, vector<128x128xf32> -> vector<128x128xf32>
    %128 = arith.addf %121, %127 : vector<128x128xf32>
    %c0_114 = arith.constant 0 : index
    %c1_115 = arith.constant 1 : index
    %c8_116 = arith.constant 8 : index
    %c0_117 = arith.constant 0 : index
    %129 = tpu.strided_load %arg9[%c0_114, %c1_115, %c8_116, %c0_117] {strides = array<i32: 1, 2, 2, 1>} : memref<2x18x24x128xf32, #tpu.memory_space<vmem>>, vector<2x8x8x128xf32>
    %130 = vector.shape_cast %129 : vector<2x8x8x128xf32> to vector<128x128xf32>
    %131 = arith.truncf %130 : vector<128x128xf32> to vector<128x128xbf16>
    %c4_118 = arith.constant 4 : index
    %c0_119 = arith.constant 0 : index
    %c0_120 = arith.constant 0 : index
    %132 = vector.load %arg5[%c4_118, %c0_119, %c0_120] : memref<9x128x128xbf16, #tpu.memory_space<vmem>>, vector<1x128x128xbf16>
    %133 = vector.shape_cast %132 : vector<1x128x128xbf16> to vector<128x128xbf16>
    %cst_121 = arith.constant dense<0.000000e+00> : vector<128x128xf32>
    %134 = tpu.matmul %131, %133, %cst_121 {dimension_numbers = #tpu.dot_dimension_numbers<[1], [0], [0], [1], [0, 0, 1, 1], [], []>} : vector<128x128xbf16>, vector<128x128xbf16>, vector<128x128xf32> -> vector<128x128xf32>
    %135 = arith.addf %128, %134 : vector<128x128xf32>
    %c0_122 = arith.constant 0 : index
    %c1_123 = arith.constant 1 : index
    %c9_124 = arith.constant 9 : index
    %c0_125 = arith.constant 0 : index
    %136 = tpu.strided_load %arg9[%c0_122, %c1_123, %c9_124, %c0_125] {strides = array<i32: 1, 2, 2, 1>} : memref<2x18x24x128xf32, #tpu.memory_space<vmem>>, vector<2x8x8x128xf32>
    %137 = vector.shape_cast %136 : vector<2x8x8x128xf32> to vector<128x128xf32>
    %138 = arith.truncf %137 : vector<128x128xf32> to vector<128x128xbf16>
    %c5_126 = arith.constant 5 : index
    %c0_127 = arith.constant 0 : index
    %c0_128 = arith.constant 0 : index
    %139 = vector.load %arg5[%c5_126, %c0_127, %c0_128] : memref<9x128x128xbf16, #tpu.memory_space<vmem>>, vector<1x128x128xbf16>
    %140 = vector.shape_cast %139 : vector<1x128x128xbf16> to vector<128x128xbf16>
    %cst_129 = arith.constant dense<0.000000e+00> : vector<128x128xf32>
    %141 = tpu.matmul %138, %140, %cst_129 {dimension_numbers = #tpu.dot_dimension_numbers<[1], [0], [0], [1], [0, 0, 1, 1], [], []>} : vector<128x128xbf16>, vector<128x128xbf16>, vector<128x128xf32> -> vector<128x128xf32>
    %142 = arith.addf %135, %141 : vector<128x128xf32>
    %c0_130 = arith.constant 0 : index
    %c2_131 = arith.constant 2 : index
    %c7_132 = arith.constant 7 : index
    %c0_133 = arith.constant 0 : index
    %143 = tpu.strided_load %arg9[%c0_130, %c2_131, %c7_132, %c0_133] {strides = array<i32: 1, 2, 2, 1>} : memref<2x18x24x128xf32, #tpu.memory_space<vmem>>, vector<2x8x8x128xf32>
    %144 = vector.shape_cast %143 : vector<2x8x8x128xf32> to vector<128x128xf32>
    %145 = arith.truncf %144 : vector<128x128xf32> to vector<128x128xbf16>
    %c6_134 = arith.constant 6 : index
    %c0_135 = arith.constant 0 : index
    %c0_136 = arith.constant 0 : index
    %146 = vector.load %arg5[%c6_134, %c0_135, %c0_136] : memref<9x128x128xbf16, #tpu.memory_space<vmem>>, vector<1x128x128xbf16>
    %147 = vector.shape_cast %146 : vector<1x128x128xbf16> to vector<128x128xbf16>
    %cst_137 = arith.constant dense<0.000000e+00> : vector<128x128xf32>
    %148 = tpu.matmul %145, %147, %cst_137 {dimension_numbers = #tpu.dot_dimension_numbers<[1], [0], [0], [1], [0, 0, 1, 1], [], []>} : vector<128x128xbf16>, vector<128x128xbf16>, vector<128x128xf32> -> vector<128x128xf32>
    %149 = arith.addf %142, %148 : vector<128x128xf32>
    %c0_138 = arith.constant 0 : index
    %c2_139 = arith.constant 2 : index
    %c8_140 = arith.constant 8 : index
    %c0_141 = arith.constant 0 : index
    %150 = tpu.strided_load %arg9[%c0_138, %c2_139, %c8_140, %c0_141] {strides = array<i32: 1, 2, 2, 1>} : memref<2x18x24x128xf32, #tpu.memory_space<vmem>>, vector<2x8x8x128xf32>
    %151 = vector.shape_cast %150 : vector<2x8x8x128xf32> to vector<128x128xf32>
    %152 = arith.truncf %151 : vector<128x128xf32> to vector<128x128xbf16>
    %c7_142 = arith.constant 7 : index
    %c0_143 = arith.constant 0 : index
    %c0_144 = arith.constant 0 : index
    %153 = vector.load %arg5[%c7_142, %c0_143, %c0_144] : memref<9x128x128xbf16, #tpu.memory_space<vmem>>, vector<1x128x128xbf16>
    %154 = vector.shape_cast %153 : vector<1x128x128xbf16> to vector<128x128xbf16>
    %cst_145 = arith.constant dense<0.000000e+00> : vector<128x128xf32>
    %155 = tpu.matmul %152, %154, %cst_145 {dimension_numbers = #tpu.dot_dimension_numbers<[1], [0], [0], [1], [0, 0, 1, 1], [], []>} : vector<128x128xbf16>, vector<128x128xbf16>, vector<128x128xf32> -> vector<128x128xf32>
    %156 = arith.addf %149, %155 : vector<128x128xf32>
    %c0_146 = arith.constant 0 : index
    %c2_147 = arith.constant 2 : index
    %c9_148 = arith.constant 9 : index
    %c0_149 = arith.constant 0 : index
    %157 = tpu.strided_load %arg9[%c0_146, %c2_147, %c9_148, %c0_149] {strides = array<i32: 1, 2, 2, 1>} : memref<2x18x24x128xf32, #tpu.memory_space<vmem>>, vector<2x8x8x128xf32>
    %158 = vector.shape_cast %157 : vector<2x8x8x128xf32> to vector<128x128xf32>
    %159 = arith.truncf %158 : vector<128x128xf32> to vector<128x128xbf16>
    %c8_150 = arith.constant 8 : index
    %c0_151 = arith.constant 0 : index
    %c0_152 = arith.constant 0 : index
    %160 = vector.load %arg5[%c8_150, %c0_151, %c0_152] : memref<9x128x128xbf16, #tpu.memory_space<vmem>>, vector<1x128x128xbf16>
    %161 = vector.shape_cast %160 : vector<1x128x128xbf16> to vector<128x128xbf16>
    %cst_153 = arith.constant dense<0.000000e+00> : vector<128x128xf32>
    %162 = tpu.matmul %159, %161, %cst_153 {dimension_numbers = #tpu.dot_dimension_numbers<[1], [0], [0], [1], [0, 0, 1, 1], [], []>} : vector<128x128xbf16>, vector<128x128xbf16>, vector<128x128xf32> -> vector<128x128xf32>
    %163 = arith.addf %156, %162 : vector<128x128xf32>
    %c0_154 = arith.constant 0 : index
    %c0_155 = arith.constant 0 : index
    %164 = vector.load %arg6[%c0_154, %c0_155] : memref<1x128xf32, #tpu.memory_space<vmem>>, vector<1x128xf32>
    %165 = vector.broadcast %164 : vector<1x128xf32> to vector<128x128xf32>
    %166 = arith.addf %163, %165 : vector<128x128xf32>
    %cst_156 = arith.constant 0.000000e+00 : f32
    %167 = vector.broadcast %cst_156 : f32 to vector<128x128xf32>
    %168 = arith.maximumf %166, %167 : vector<128x128xf32>
    %169 = vector.extract_strided_slice %168 {offsets = [0, 0], sizes = [64, 128], strides = [1, 1]} : vector<128x128xf32> to vector<64x128xf32>
    %170 = vector.extract_strided_slice %168 {offsets = [64, 0], sizes = [64, 128], strides = [1, 1]} : vector<128x128xf32> to vector<64x128xf32>
    %c0_157 = arith.constant 0 : index
    %c0_158 = arith.constant 0 : index
    %171 = vector.load %arg7[%c0_157, %c0_158] : memref<1x128xf32, #tpu.memory_space<vmem>>, vector<1x128xf32>
    %172 = arith.mulf %169, %169 : vector<64x128xf32>
    %cst_159 = arith.constant dense<0.000000e+00> : vector<64xf32>
    %173 = vector.multi_reduction <add>, %172, %cst_159 [1] : vector<64x128xf32> to vector<64xf32>
    %174 = vector.shape_cast %173 : vector<64xf32> to vector<64x1xf32>
    %175 = math.sqrt %174 : vector<64x1xf32>
    %cst_160 = arith.constant 1.000000e-10 : f32
    %176 = vector.broadcast %cst_160 : f32 to vector<64x1xf32>
    %177 = arith.addf %175, %176 : vector<64x1xf32>
    %178 = tpu.reciprocal %177 {approx = true} : vector<64x1xf32> -> vector<64x1xf32>
    %179 = arith.mulf %170, %170 : vector<64x128xf32>
    %cst_161 = arith.constant dense<0.000000e+00> : vector<64xf32>
    %180 = vector.multi_reduction <add>, %179, %cst_161 [1] : vector<64x128xf32> to vector<64xf32>
    %181 = vector.shape_cast %180 : vector<64xf32> to vector<64x1xf32>
    %182 = math.sqrt %181 : vector<64x1xf32>
    %cst_162 = arith.constant 1.000000e-10 : f32
    %183 = vector.broadcast %cst_162 : f32 to vector<64x1xf32>
    %184 = arith.addf %182, %183 : vector<64x1xf32>
    %185 = tpu.reciprocal %184 {approx = true} : vector<64x1xf32> -> vector<64x1xf32>
    %186 = vector.broadcast %178 : vector<64x1xf32> to vector<64x128xf32>
    %187 = arith.mulf %169, %186 : vector<64x128xf32>
    %188 = vector.broadcast %185 : vector<64x1xf32> to vector<64x128xf32>
    %189 = arith.mulf %170, %188 : vector<64x128xf32>
    %190 = arith.subf %187, %189 : vector<64x128xf32>
    %191 = arith.mulf %190, %190 : vector<64x128xf32>
    %192 = vector.broadcast %171 : vector<1x128xf32> to vector<64x128xf32>
    %193 = arith.mulf %191, %192 : vector<64x128xf32>
    %cst_163 = arith.constant dense<0.000000e+00> : vector<128xf32>
    %194 = vector.multi_reduction <add>, %193, %cst_163 [0] : vector<64x128xf32> to vector<128xf32>
    %195 = vector.shape_cast %194 : vector<128xf32> to vector<1x128xf32>
    %cst_164 = arith.constant 3.906250e-03 : f32
    %196 = vector.broadcast %cst_164 : f32 to vector<1x128xf32>
    %197 = arith.mulf %95, %196 : vector<1x128xf32>
    %cst_165 = arith.constant 1.562500e-02 : f32
    %198 = vector.broadcast %cst_165 : f32 to vector<1x128xf32>
    %199 = arith.mulf %195, %198 : vector<1x128xf32>
    %200 = arith.addf %197, %199 : vector<1x128xf32>
    %201 = vector.shape_cast %200 : vector<1x128xf32> to vector<1x1x128xf32>
    %c0_166 = arith.constant 0 : index
    %c0_167 = arith.constant 0 : index
    %c0_168 = arith.constant 0 : index
    %202 = vector.load %arg8[%c0_166, %c0_167, %c0_168] : memref<1x1x128xf32, #tpu.memory_space<vmem>>, vector<1x1x128xf32>
    tpu.vector_store %arg8[%c0_166, %c0_167, %c0_168], %201 {strides = array<i32>} : memref<1x1x128xf32, #tpu.memory_space<vmem>>, vector<1x1x128xf32>,
    return
  }
  func.func @transform_0(%arg0: i32) -> (i32, i32, i32, i32) {
    %c0_i32 = arith.constant 0 : i32
    %c0_i32_0 = arith.constant 0 : i32
    %c0_i32_1 = arith.constant 0 : i32
    %c0_i32_2 = arith.constant 0 : i32
    return %arg0, %c0_i32, %c0_i32_0, %c0_i32_1 : i32, i32, i32, i32
  }
  func.func @transform_1(%arg0: i32) -> (i32, i32, i32) {
    %c0_i32 = arith.constant 0 : i32
    %c0_i32_0 = arith.constant 0 : i32
    %c0_i32_1 = arith.constant 0 : i32
    %c0_i32_2 = arith.constant 0 : i32
    return %c0_i32, %c0_i32_0, %c0_i32_1 : i32, i32, i32
  }
  func.func @transform_2(%arg0: i32) -> (i32, i32) {
    %c0_i32 = arith.constant 0 : i32
    %c0_i32_0 = arith.constant 0 : i32
    %c0_i32_1 = arith.constant 0 : i32
    return %c0_i32, %c0_i32_0 : i32, i32
  }
  func.func @transform_3(%arg0: i32) -> (i32, i32) {
    %c0_i32 = arith.constant 0 : i32
    %c0_i32_0 = arith.constant 0 : i32
    %c0_i32_1 = arith.constant 0 : i32
    return %c0_i32, %c0_i32_0 : i32, i32
  }
  func.func @transform_4(%arg0: i32) -> (i32, i32, i32) {
    %c0_i32 = arith.constant 0 : i32
    %c0_i32_0 = arith.constant 0 : i32
    %c0_i32_1 = arith.constant 0 : i32
    %c0_i32_2 = arith.constant 0 : i32
    return %c0_i32, %c0_i32_0, %c0_i32_1 : i32, i32, i32
  }
  func.func @transform_5(%arg0: i32) -> (i32, i32) {
    %c0_i32 = arith.constant 0 : i32
    %c0_i32_0 = arith.constant 0 : i32
    %c0_i32_1 = arith.constant 0 : i32
    return %c0_i32, %c0_i32_0 : i32, i32
  }
  func.func @transform_6(%arg0: i32) -> (i32, i32) {
    %c0_i32 = arith.constant 0 : i32
    %c0_i32_0 = arith.constant 0 : i32
    %c0_i32_1 = arith.constant 0 : i32
    return %c0_i32, %c0_i32_0 : i32, i32
  }
  func.func @transform_7(%arg0: i32) -> (i32, i32, i32) {
    %c0_i32 = arith.constant 0 : i32
    %c0_i32_0 = arith.constant 0 : i32
    %c0_i32_1 = arith.constant 0 : i32
    return %arg0, %c0_i32, %c0_i32_0 : i32, i32, i32
  }
}

</mosaic_0001>

<llo_original>
// kernel: lpips_loss_forward.1
$region0: #{lpips_loss_forward.1}
  #allocation0 [shape = 'u32[]', space=smem, size = 0x4, offset = 0x4, fixed_abs, tag = 'smem constant byte address 0x4 - core index']
  #allocation1 [shape = 'u32[144,128]{1,0:T(1,128)}', space=vmem, size = 0x12000, scoped, tag = 'internal scratch']
  #allocation2 [shape = 'f32[2,18,24,128]{3,2,1,0:T(8,128)}', space=vmem, size = 0x6c000, scoped, tag = 'scratch operand']
  %s0 = inlined_call_operand.vmem [shape: f32[4,18,18,8], index: 0, kind: input, shape index: {}]
  %s1 = inlined_call_operand.vmem [shape: bf16[9,8,128], index: 1, kind: input, shape index: {}]
  %s2 = inlined_call_operand.vmem [shape: f32[1,128], index: 2, kind: input, shape index: {}]
  %s3 = inlined_call_operand.vmem [shape: f32[1,128], index: 3, kind: input, shape index: {}]
  %s4 = inlined_call_operand.vmem [shape: bf16[9,128,128], index: 4, kind: input, shape index: {}]
  %s5 = inlined_call_operand.vmem [shape: f32[1,128], index: 5, kind: input, shape index: {}]
  %s6 = inlined_call_operand.vmem [shape: f32[1,128], index: 6, kind: input, shape index: {}]
  %s7 = inlined_call_operand.vmem [shape: f32[2,1,128], index: 7, kind: output, shape index: {}]
  %s8 = sld [smem:[#allocation0]]
  $region61: #{lpips_loss_forward.1} parent=0
    _
  %s10 = ssub.s32 1, %s8
  %s11 = scalar_select 0, %s10, %s8
  loop: start=0, step=1, limit=4
  $region2: #{lpips_loss_forward.1} parent=0 // loop_pre_header
    _
  $region3: #{lpips_loss_forward.1} parent=0 // loop_header
    %s13 = sphi 0, %s17
    %p14 = scmp.ge.s32.totalorder %s13, 4
    %s23 = sphi 0, %s25
    %s26 = sphi 0, %s23
    %s27 = sphi 0, %s26
    %s43 = sphi 0, %s27
    %s47 = sphi 0, %s47
    %s49 = sphi 0, %s47
    %s50 = sphi 0, %s49
    %s64 = sphi 0, %s50
    %s68 = sphi 0, %s68
    %s70 = sphi 0, %s68
    %s71 = sphi 0, %s70
    %s85 = sphi 0, %s71
    %s89 = sphi 0, %s89
    %s91 = sphi 0, %s89
    %s92 = sphi 0, %s91
    %s106 = sphi 0, %s92
    %s110 = sphi 0, %s110
    %s112 = sphi 0, %s110
    %s113 = sphi 0, %s112
    %s127 = sphi 0, %s113
    %s131 = sphi 0, %s131
    %s133 = sphi 0, %s131
    %s134 = sphi 0, %s133
    %s148 = sphi 0, %s134
    %s152 = sphi 0, %s152
    %s154 = sphi 0, %s152
    %s155 = sphi 0, %s154
    %s169 = sphi 0, %s155
    %s175 = sphi 0, %s177
    %s178 = sphi 0, %s175
    %s179 = sphi 0, %s178
    %s195 = sphi 0, %s179
  $region4: #{lpips_loss_forward.1} parent=0 // loop_header_branch
    %16 = sbr.rel (%p14) target = $region8
  $region5: #{lpips_loss_forward.1} parent=0 // loop_body
    %s18 = ssub.s32 %s13, 1
    %s19 = ssub.s32 %s13, 2
    %s20 = sadd.s32 %s13, 1
    %s21 = ssub.s32 %s13, %s20
    %p22 = scmp.eq.s32.totalorder %s21, 0
    %s24 = sadd.s32 %s23, 1
    %s25 = scalar_select %p22, %s23, %s24
    %p28 = pneg %p22
    %p29 = scmp.eq.s32.totalorder %s13, 1
    %p30 = por %p28, %p29
    %p31 = scmp.ne.s32.totalorder %s23, %s26
    %p32 = scmp.eq.s32.totalorder %s13, 0
    %p33 = por %p31, %p32
    %p34 = scmp.ne.s32.totalorder %s23, %s26
    %p35 = scmp.eq.s32.totalorder %s18, 1
    %p36 = por %p34, %p35
    %p37 = scmp.ne.s32.totalorder %s26, %s27
    %p38 = scmp.eq.s32.totalorder %s18, 0
    %p39 = por %p37, %p38
    %p40 = scmp.ne.s32.totalorder %s26, %s27
    %p41 = scmp.eq.s32.totalorder %s19, 1
    %p42 = por %p40, %p41
    %p44 = scmp.ne.s32.totalorder %s27, %s43
    %p45 = scmp.eq.s32.totalorder %s19, 0
    %p46 = por %p44, %p45
    %s48 = sadd.s32 %s47, 1
    %p51 = scmp.eq.s32.totalorder %s13, 1
    %p52 = scmp.ne.s32.totalorder %s47, %s49
    %p53 = scmp.eq.s32.totalorder %s13, 0
    %p54 = por %p52, %p53
    %p55 = scmp.ne.s32.totalorder %s47, %s49
    %p56 = scmp.eq.s32.totalorder %s18, 1
    %p57 = por %p55, %p56
    %p58 = scmp.ne.s32.totalorder %s49, %s50
    %p59 = scmp.eq.s32.totalorder %s18, 0
    %p60 = por %p58, %p59
    %p61 = scmp.ne.s32.totalorder %s49, %s50
    %p62 = scmp.eq.s32.totalorder %s19, 1
    %p63 = por %p61, %p62
    %p65 = scmp.ne.s32.totalorder %s50, %s64
    %p66 = scmp.eq.s32.totalorder %s19, 0
    %p67 = por %p65, %p66
    %s69 = sadd.s32 %s68, 1
    %p72 = scmp.eq.s32.totalorder %s13, 1
    %p73 = scmp.ne.s32.totalorder %s68, %s70
    %p74 = scmp.eq.s32.totalorder %s13, 0
    %p75 = por %p73, %p74
    %p76 = scmp.ne.s32.totalorder %s68, %s70
    %p77 = scmp.eq.s32.totalorder %s18, 1
    %p78 = por %p76, %p77
    %p79 = scmp.ne.s32.totalorder %s70, %s71
    %p80 = scmp.eq.s32.totalorder %s18, 0
    %p81 = por %p79, %p80
    %p82 = scmp.ne.s32.totalorder %s70, %s71
    %p83 = scmp.eq.s32.totalorder %s19, 1
    %p84 = por %p82, %p83
    %p86 = scmp.ne.s32.totalorder %s71, %s85
    %p87 = scmp.eq.s32.totalorder %s19, 0
    %p88 = por %p86, %p87
    %s90 = sadd.s32 %s89, 1
    %p93 = scmp.eq.s32.totalorder %s13, 1
    %p94 = scmp.ne.s32.totalorder %s89, %s91
    %p95 = scmp.eq.s32.totalorder %s13, 0
    %p96 = por %p94, %p95
    %p97 = scmp.ne.s32.totalorder %s89, %s91
    %p98 = scmp.eq.s32.totalorder %s18, 1
    %p99 = por %p97, %p98
    %p100 = scmp.ne.s32.totalorder %s91, %s92
    %p101 = scmp.eq.s32.totalorder %s18, 0
    %p102 = por %p100, %p101
    %p103 = scmp.ne.s32.totalorder %s91, %s92
    %p104 = scmp.eq.s32.totalorder %s19, 1
    %p105 = por %p103, %p104
    %p107 = scmp.ne.s32.totalorder %s92, %s106
    %p108 = scmp.eq.s32.totalorder %s19, 0
    %p109 = por %p107, %p108
    %s111 = sadd.s32 %s110, 1
    %p114 = scmp.eq.s32.totalorder %s13, 1
    %p115 = scmp.ne.s32.totalorder %s110, %s112
    %p116 = scmp.eq.s32.totalorder %s13, 0
    %p117 = por %p115, %p116
    %p118 = scmp.ne.s32.totalorder %s110, %s112
    %p119 = scmp.eq.s32.totalorder %s18, 1
    %p120 = por %p118, %p119
    %p121 = scmp.ne.s32.totalorder %s112, %s113
    %p122 = scmp.eq.s32.totalorder %s18, 0
    %p123 = por %p121, %p122
    %p124 = scmp.ne.s32.totalorder %s112, %s113
    %p125 = scmp.eq.s32.totalorder %s19, 1
    %p126 = por %p124, %p125
    %p128 = scmp.ne.s32.totalorder %s113, %s127
    %p129 = scmp.eq.s32.totalorder %s19, 0
    %p130 = por %p128, %p129
    %s132 = sadd.s32 %s131, 1
    %p135 = scmp.eq.s32.totalorder %s13, 1
    %p136 = scmp.ne.s32.totalorder %s131, %s133
    %p137 = scmp.eq.s32.totalorder %s13, 0
    %p138 = por %p136, %p137
    %p139 = scmp.ne.s32.totalorder %s131, %s133
    %p140 = scmp.eq.s32.totalorder %s18, 1
    %p141 = por %p139, %p140
    %p142 = scmp.ne.s32.totalorder %s133, %s134
    %p143 = scmp.eq.s32.totalorder %s18, 0
    %p144 = por %p142, %p143
    %p145 = scmp.ne.s32.totalorder %s133, %s134
    %p146 = scmp.eq.s32.totalorder %s19, 1
    %p147 = por %p145, %p146
    %p149 = scmp.ne.s32.totalorder %s134, %s148
    %p150 = scmp.eq.s32.totalorder %s19, 0
    %p151 = por %p149, %p150
    %s153 = sadd.s32 %s152, 1
    %p156 = scmp.eq.s32.totalorder %s13, 1
    %p157 = scmp.ne.s32.totalorder %s152, %s154
    %p158 = scmp.eq.s32.totalorder %s13, 0
    %p159 = por %p157, %p158
    %p160 = scmp.ne.s32.totalorder %s152, %s154
    %p161 = scmp.eq.s32.totalorder %s18, 1
    %p162 = por %p160, %p161
    %p163 = scmp.ne.s32.totalorder %s154, %s155
    %p164 = scmp.eq.s32.totalorder %s18, 0
    %p165 = por %p163, %p164
    %p166 = scmp.ne.s32.totalorder %s154, %s155
    %p167 = scmp.eq.s32.totalorder %s19, 1
    %p168 = por %p166, %p167
    %p170 = scmp.ne.s32.totalorder %s155, %s169
    %p171 = scmp.eq.s32.totalorder %s19, 0
    %p172 = por %p170, %p171
    %s173 = ssub.s32 %s13, %s20
    %p174 = scmp.eq.s32.totalorder %s173, 0
    %s176 = sadd.s32 %s175, 1
    %s177 = scalar_select %p174, %s175, %s176
    %p180 = pneg %p174
    %p181 = scmp.eq.s32.totalorder %s13, 1
    %p182 = por %p180, %p181
    %p183 = scmp.ne.s32.totalorder %s175, %s178
    %p184 = scmp.eq.s32.totalorder %s13, 0
    %p185 = por %p183, %p184
    %p186 = scmp.ne.s32.totalorder %s175, %s178
    %p187 = scmp.eq.s32.totalorder %s18, 1
    %p188 = por %p186, %p187
    %p189 = scmp.ne.s32.totalorder %s178, %s179
    %p190 = scmp.eq.s32.totalorder %s18, 0
    %p191 = por %p189, %p190
    %p192 = scmp.ne.s32.totalorder %s178, %s179
    %p193 = scmp.eq.s32.totalorder %s19, 1
    %p194 = por %p192, %p193
    %p196 = scmp.ne.s32.totalorder %s179, %s195
    %p197 = scmp.eq.s32.totalorder %s19, 0
    %p198 = por %p196, %p197
    %p199 = scmp.le.s32.totalorder 1, %s13
    %p200 = scmp.lt.s32.totalorder %s13, 3
    %p201 = pnand %p199, %p200
    %p202 = pneg %p201
    // Predicated region
    $region9: #{lpips_loss_forward.1} parent=5 // pred_check
      _
    $region10: #{lpips_loss_forward.1} parent=5 // pred_check_branch
      %204 = sbr.rel (%p201) target = $region12
    $region11: #{lpips_loss_forward.1} parent=5 // pred_region
      %s205 = ssub.s32 %s13, 1
      // Predicated region
      $region13: #{lpips_loss_forward.1} parent=11 // pred_check
        %p206 = pneg %p60
      $region14: #{lpips_loss_forward.1} parent=11 // pred_check_branch
        %208 = sbr.rel (%p206) target = $region16
      $region15: #{lpips_loss_forward.1} parent=11 // pred_region
        _
      $region16: #{lpips_loss_forward.1} parent=11 // pred_fallthru
        _
      // Predicated region
      $region17: #{lpips_loss_forward.1} parent=11 // pred_check
        %p209 = pneg %p81
      $region18: #{lpips_loss_forward.1} parent=11 // pred_check_branch
        %211 = sbr.rel (%p209) target = $region20
      $region19: #{lpips_loss_forward.1} parent=11 // pred_region
        _
      $region20: #{lpips_loss_forward.1} parent=11 // pred_fallthru
        _
      // Predicated region
      $region21: #{lpips_loss_forward.1} parent=11 // pred_check
        %p212 = pneg %p102
      $region22: #{lpips_loss_forward.1} parent=11 // pred_check_branch
        %214 = sbr.rel (%p212) target = $region24
      $region23: #{lpips_loss_forward.1} parent=11 // pred_region
        _
      $region24: #{lpips_loss_forward.1} parent=11 // pred_fallthru
        _
      // Predicated region
      $region25: #{lpips_loss_forward.1} parent=11 // pred_check
        %p215 = pneg %p123
      $region26: #{lpips_loss_forward.1} parent=11 // pred_check_branch
        %217 = sbr.rel (%p215) target = $region28
      $region27: #{lpips_loss_forward.1} parent=11 // pred_region
        _
      $region28: #{lpips_loss_forward.1} parent=11 // pred_fallthru
        _
      // Predicated region
      $region29: #{lpips_loss_forward.1} parent=11 // pred_check
        %p218 = pneg %p144
      $region30: #{lpips_loss_forward.1} parent=11 // pred_check_branch
        %220 = sbr.rel (%p218) target = $region32
      $region31: #{lpips_loss_forward.1} parent=11 // pred_region
        _
      $region32: #{lpips_loss_forward.1} parent=11 // pred_fallthru
        _
      // Predicated region
      $region33: #{lpips_loss_forward.1} parent=11 // pred_check
        %p221 = pneg %p165
      $region34: #{lpips_loss_forward.1} parent=11 // pred_check_branch
        %223 = sbr.rel (%p221) target = $region36
      $region35: #{lpips_loss_forward.1} parent=11 // pred_region
        _
      $region36: #{lpips_loss_forward.1} parent=11 // pred_fallthru
        _
    $region12: #{lpips_loss_forward.1} parent=5 // pred_fallthru
      _
    %p224 = scmp.lt.s32.totalorder %s13, 2
    // Predicated region
    $region37: #{lpips_loss_forward.1} parent=5 // pred_check
      %p225 = pneg %p224
    $region38: #{lpips_loss_forward.1} parent=5 // pred_check_branch
      %227 = sbr.rel (%p225) target = $region40
    $region39: #{lpips_loss_forward.1} parent=5 // pred_region
      // Predicated region
      $region41: #{lpips_loss_forward.1} parent=39 // pred_check
        %p228 = pneg %p33
      $region42: #{lpips_loss_forward.1} parent=39 // pred_check_branch
        %230 = sbr.rel (%p228) target = $region44
      $region43: #{lpips_loss_forward.1} parent=39 // pred_region
        %s231 = smul.u32 2, %s13
        %p232 = scmp.lt.s32.totalorder %s231, 3
        %s233 = scalar_select %p232, %s231, 3
        %s234 = smul.addr %s233, 54
        %s235 = smul.addr %s234, 8
        %s236 = scalar_lea.vmem %s0, %s235
        %s237 = smul.u32 2, %s13
      $region44: #{lpips_loss_forward.1} parent=39 // pred_fallthru
        _
    $region40: #{lpips_loss_forward.1} parent=5 // pred_fallthru
      _
    %p238 = scmp.le.s32.totalorder 1, %s13
    %p239 = scmp.lt.s32.totalorder %s13, 3
    %p240 = pnand %p238, %p239
    %p241 = pneg %p240
    // Predicated region
    $region45: #{lpips_loss_forward.1} parent=5 // pred_check
      _
    $region46: #{lpips_loss_forward.1} parent=5 // pred_check_branch
      %243 = sbr.rel (%p240) target = $region48
    $region47: #{lpips_loss_forward.1} parent=5 // pred_region
      %s244 = ssub.s32 %s13, 1
      %s245 = smul.u32 2, %s18
      %p246 = scmp.lt.s32.totalorder %s245, 3
      %s247 = scalar_select %p246, %s245, 3
      %s248 = smul.addr %s247, 54
      %s249 = smul.addr %s248, 8
      %s250 = scalar_lea.vmem %s0, %s249
      %p251 = pneg %p39
      %p252 = pneg %p36
      %p253 = pneg %p60
      %p254 = pneg %p57
      %p255 = pneg %p81
      %p256 = pneg %p78
      %p257 = pneg %p102
      %p258 = pneg %p99
      %p259 = pneg %p123
      %p260 = pneg %p120
      %p261 = pneg %p144
      %p262 = pneg %p141
      %p263 = pneg %p165
      %p264 = pneg %p162
      %p265 = pneg %p191
      %p266 = pneg %p188
      %p267 = scmp.lt.s32.totalorder %s18, 1
      %s268 = scalar_select %p267, %s18, 1
      %s269 = scalar_lea.vmem %s7, %s268
      %s270 = smul.u32 2, %s18
      %p271 = scmp.lt.s32.totalorder %s270, 3
      %s272 = scalar_select %p271, %s270, 3
      %s273 = smul.addr %s272, 54
      %s274 = smul.addr %s273, 8
      %s275 = scalar_lea.vmem %s0, %s274
      %s276 = smul.u32 2, %s18
      %p277 = scmp.lt.s32.totalorder %s18, 1
      %s278 = scalar_select %p277, %s18, 1
      %s279 = scalar_lea.vmem %s7, %s278
      %v281 = vld [vmem:[%s275] sm:$0xff]
      %v282 = vld [vmem:[%s275 + $0x8] sm:$0xff]
      %v283 = vld [vmem:[%s275 + $0x18] sm:$0xff]
      %v284 = vld [vmem:[%s275 + $0x20] sm:$0xff]
      %v285 = vld [vmem:[%s275 + $0x30] sm:$0xff]
      %v286 = vld [vmem:[%s275 + $0x38] sm:$0xff]
      %v287 = vld [vmem:[%s275 + $0x48] sm:$0xff]
      %v288 = vld [vmem:[%s275 + $0x50] sm:$0xff]
      %v289 = vld [vmem:[%s275 + $0x60] sm:$0xff]
      %v290 = vld [vmem:[%s275 + $0x68] sm:$0xff]
      %v291 = vld [vmem:[%s275 + $0x78] sm:$0xff]
      %v292 = vld [vmem:[%s275 + $0x80] sm:$0xff]
      %v293 = vld [vmem:[%s275 + $0x90] sm:$0xff]
      %v294 = vld [vmem:[%s275 + $0x98] sm:$0xff]
      %v295 = vld [vmem:[%s275 + $0xa8] sm:$0xff]
      %v296 = vld [vmem:[%s275 + $0xb0] sm:$0xff]
      %v297 = vld [vmem:[%s275 + $0xc0] sm:$0xff]
      %v298 = vld [vmem:[%s275 + $0xc8] sm:$0xff]
      %v299 = vld [vmem:[%s275 + $0xd8] sm:$0xff]
      %v300 = vld [vmem:[%s275 + $0xe0] sm:$0xff]
      %v301 = vld [vmem:[%s275 + $0xf0] sm:$0xff]
      %v302 = vld [vmem:[%s275 + $0xf8] sm:$0xff]
      %v303 = vld [vmem:[%s275 + $0x108] sm:$0xff]
      %v304 = vld [vmem:[%s275 + $0x110] sm:$0xff]
      %v305 = vld [vmem:[%s275 + $0x120] sm:$0xff]
      %v306 = vld [vmem:[%s275 + $0x128] sm:$0xff]
      %v307 = vld [vmem:[%s275 + $0x138] sm:$0xff]
      %v308 = vld [vmem:[%s275 + $0x140] sm:$0xff]
      %v309 = vld [vmem:[%s275 + $0x150] sm:$0xff]
      %v310 = vld [vmem:[%s275 + $0x158] sm:$0xff]
      %v311 = vld [vmem:[%s275 + $0x168] sm:$0xff]
      %v312 = vld [vmem:[%s275 + $0x170] sm:$0xff]
      %v313 = vld [vmem:[%s275 + $0x1b0] sm:$0xff]
      %v314 = vld [vmem:[%s275 + $0x1b8] sm:$0xff]
      %v315 = vld [vmem:[%s275 + $0x1c8] sm:$0xff]
      %v316 = vld [vmem:[%s275 + $0x1d0] sm:$0xff]
      %v317 = vld [vmem:[%s275 + $0x1e0] sm:$0xff]
      %v318 = vld [vmem:[%s275 + $0x1e8] sm:$0xff]
      %v319 = vld [vmem:[%s275 + $0x1f8] sm:$0xff]
      %v320 = vld [vmem:[%s275 + $0x200] sm:$0xff]
      %v321 = vld [vmem:[%s275 + $0x210] sm:$0xff]
      %v322 = vld [vmem:[%s275 + $0x218] sm:$0xff]
      %v323 = vld [vmem:[%s275 + $0x228] sm:$0xff]
      %v324 = vld [vmem:[%s275 + $0x230] sm:$0xff]
      %v325 = vld [vmem:[%s275 + $0x240] sm:$0xff]
      %v326 = vld [vmem:[%s275 + $0x248] sm:$0xff]
      %v327 = vld [vmem:[%s275 + $0x258] sm:$0xff]
      %v328 = vld [vmem:[%s275 + $0x260] sm:$0xff]
      %v329 = vld [vmem:[%s275 + $0x270] sm:$0xff]
      %v330 = vld [vmem:[%s275 + $0x278] sm:$0xff]
      %v331 = vld [vmem:[%s275 + $0x288] sm:$0xff]
      %v332 = vld [vmem:[%s275 + $0x290] sm:$0xff]
      %v333 = vld [vmem:[%s275 + $0x2a0] sm:$0xff]
      %v334 = vld [vmem:[%s275 + $0x2a8] sm:$0xff]
      %v335 = vld [vmem:[%s275 + $0x2b8] sm:$0xff]
      %v336 = vld [vmem:[%s275 + $0x2c0] sm:$0xff]
      %v337 = vld [vmem:[%s275 + $0x2d0] sm:$0xff]
      %v338 = vld [vmem:[%s275 + $0x2d8] sm:$0xff]
      %v339 = vld [vmem:[%s275 + $0x2e8] sm:$0xff]
      %v340 = vld [vmem:[%s275 + $0x2f0] sm:$0xff]
      %v341 = vld [vmem:[%s275 + $0x300] sm:$0xff]
      %v342 = vld [vmem:[%s275 + $0x308] sm:$0xff]
      %v343 = vld [vmem:[%s275 + $0x318] sm:$0xff]
      %v344 = vld [vmem:[%s275 + $0x320] sm:$0xff]
      %v345 = vpack.c.bf16 %v282, %v281
      %v346 = vpack.c.bf16 %v284, %v283
      %v347 = vpack.c.bf16 %v286, %v285
      %v348 = vpack.c.bf16 %v288, %v287
      %v349 = vpack.c.bf16 %v290, %v289
      %v350 = vpack.c.bf16 %v292, %v291
      %v351 = vpack.c.bf16 %v294, %v293
      %v352 = vpack.c.bf16 %v296, %v295
      %v353 = vpack.c.bf16 %v298, %v297
      %v354 = vpack.c.bf16 %v300, %v299
      %v355 = vpack.c.bf16 %v302, %v301
      %v356 = vpack.c.bf16 %v304, %v303
      %v357 = vpack.c.bf16 %v306, %v305
      %v358 = vpack.c.bf16 %v308, %v307
      %v359 = vpack.c.bf16 %v310, %v309
      %v360 = vpack.c.bf16 %v312, %v311
      %v361 = vpack.c.bf16 %v314, %v313
      %v362 = vpack.c.bf16 %v316, %v315
      %v363 = vpack.c.bf16 %v318, %v317
      %v364 = vpack.c.bf16 %v320, %v319
      %v365 = vpack.c.bf16 %v322, %v321
      %v366 = vpack.c.bf16 %v324, %v323
      %v367 = vpack.c.bf16 %v326, %v325
      %v368 = vpack.c.bf16 %v328, %v327
      %v369 = vpack.c.bf16 %v330, %v329
      %v370 = vpack.c.bf16 %v332, %v331
      %v371 = vpack.c.bf16 %v334, %v333
      %v372 = vpack.c.bf16 %v336, %v335
      %v373 = vpack.c.bf16 %v338, %v337
      %v374 = vpack.c.bf16 %v340, %v339
      %v375 = vpack.c.bf16 %v342, %v341
      %v376 = vpack.c.bf16 %v344, %v343
      %v377 = vld [vmem:[%s1] sm:$0xf]
      %v378 = vld [vmem:[%s275 + $0x1] sm:$0xff]
      %v379 = vld [vmem:[%s275 + $0x9] sm:$0xff]
      %v380 = vld [vmem:[%s275 + $0x19] sm:$0xff]
      %v381 = vld [vmem:[%s275 + $0x21] sm:$0xff]
      %v382 = vld [vmem:[%s275 + $0x31] sm:$0xff]
      %v383 = vld [vmem:[%s275 + $0x39] sm:$0xff]
      %v384 = vld [vmem:[%s275 + $0x49] sm:$0xff]
      %v385 = vld [vmem:[%s275 + $0x51] sm:$0xff]
      %v386 = vld [vmem:[%s275 + $0x61] sm:$0xff]
      %v387 = vld [vmem:[%s275 + $0x69] sm:$0xff]
      %v388 = vld [vmem:[%s275 + $0x79] sm:$0xff]
      %v389 = vld [vmem:[%s275 + $0x81] sm:$0xff]
      %v390 = vld [vmem:[%s275 + $0x91] sm:$0xff]
      %v391 = vld [vmem:[%s275 + $0x99] sm:$0xff]
      %v392 = vld [vmem:[%s275 + $0xa9] sm:$0xff]
      %v393 = vld [vmem:[%s275 + $0xb1] sm:$0xff]
      %v394 = vld [vmem:[%s275 + $0xc1] sm:$0xff]
      %v395 = vld [vmem:[%s275 + $0xc9] sm:$0xff]
      %v396 = vld [vmem:[%s275 + $0xd9] sm:$0xff]
      %v397 = vld [vmem:[%s275 + $0xe1] sm:$0xff]
      %v398 = vld [vmem:[%s275 + $0xf1] sm:$0xff]
      %v399 = vld [vmem:[%s275 + $0xf9] sm:$0xff]
      %v400 = vld [vmem:[%s275 + $0x109] sm:$0xff]
      %v401 = vld [vmem:[%s275 + $0x111] sm:$0xff]
      %v402 = vld [vmem:[%s275 + $0x121] sm:$0xff]
      %v403 = vld [vmem:[%s275 + $0x129] sm:$0xff]
      %v404 = vld [vmem:[%s275 + $0x139] sm:$0xff]
      %v405 = vld [vmem:[%s275 + $0x141] sm:$0xff]
      %v406 = vld [vmem:[%s275 + $0x151] sm:$0xff]
      %v407 = vld [vmem:[%s275 + $0x159] sm:$0xff]
      %v408 = vld [vmem:[%s275 + $0x169] sm:$0xff]
      %v409 = vld [vmem:[%s275 + $0x171] sm:$0xff]
      %v410 = vld [vmem:[%s275 + $0x1b1] sm:$0xff]
      %v411 = vld [vmem:[%s275 + $0x1b9] sm:$0xff]
      %v412 = vld [vmem:[%s275 + $0x1c9] sm:$0xff]
      %v413 = vld [vmem:[%s275 + $0x1d1] sm:$0xff]
      %v414 = vld [vmem:[%s275 + $0x1e1] sm:$0xff]
      %v415 = vld [vmem:[%s275 + $0x1e9] sm:$0xff]
      %v416 = vld [vmem:[%s275 + $0x1f9] sm:$0xff]
      %v417 = vld [vmem:[%s275 + $0x201] sm:$0xff]
      %v418 = vld [vmem:[%s275 + $0x211] sm:$0xff]
      %v419 = vld [vmem:[%s275 + $0x219] sm:$0xff]
      %v420 = vld [vmem:[%s275 + $0x229] sm:$0xff]
      %v421 = vld [vmem:[%s275 + $0x231] sm:$0xff]
      %v422 = vld [vmem:[%s275 + $0x241] sm:$0xff]
      %v423 = vld [vmem:[%s275 + $0x249] sm:$0xff]
      %v424 = vld [vmem:[%s275 + $0x259] sm:$0xff]
      %v425 = vld [vmem:[%s275 + $0x261] sm:$0xff]
      %v426 = vld [vmem:[%s275 + $0x271] sm:$0xff]
      %v427 = vld [vmem:[%s275 + $0x279] sm:$0xff]
      %v428 = vld [vmem:[%s275 + $0x289] sm:$0xff]
      %v429 = vld [vmem:[%s275 + $0x291] sm:$0xff]
      %v430 = vld [vmem:[%s275 + $0x2a1] sm:$0xff]
      %v431 = vld [vmem:[%s275 + $0x2a9] sm:$0xff]
      %v432 = vld [vmem:[%s275 + $0x2b9] sm:$0xff]
      %v433 = vld [vmem:[%s275 + $0x2c1] sm:$0xff]
      %v434 = vld [vmem:[%s275 + $0x2d1] sm:$0xff]
      %v435 = vld [vmem:[%s275 + $0x2d9] sm:$0xff]
      %v436 = vld [vmem:[%s275 + $0x2e9] sm:$0xff]
      %v437 = vld [vmem:[%s275 + $0x2f1] sm:$0xff]
      %v438 = vld [vmem:[%s275 + $0x301] sm:$0xff]
      %v439 = vld [vmem:[%s275 + $0x309] sm:$0xff]
      %v440 = vld [vmem:[%s275 + $0x319] sm:$0xff]
      %v441 = vld [vmem:[%s275 + $0x321] sm:$0xff]
      %v442 = vpack.c.bf16 %v379, %v378
      %v443 = vpack.c.bf16 %v381, %v380
      %v444 = vpack.c.bf16 %v383, %v382
      %v445 = vpack.c.bf16 %v385, %v384
      %v446 = vpack.c.bf16 %v387, %v386
      %v447 = vpack.c.bf16 %v389, %v388
      %v448 = vpack.c.bf16 %v391, %v390
      %v449 = vpack.c.bf16 %v393, %v392
      %v450 = vpack.c.bf16 %v395, %v394
      %v451 = vpack.c.bf16 %v397, %v396
      %v452 = vpack.c.bf16 %v399, %v398
      %v453 = vpack.c.bf16 %v401, %v400
      %v454 = vpack.c.bf16 %v403, %v402
      %v455 = vpack.c.bf16 %v405, %v404
      %v456 = vpack.c.bf16 %v407, %v406
      %v457 = vpack.c.bf16 %v409, %v408
      %v458 = vpack.c.bf16 %v411, %v410
      %v459 = vpack.c.bf16 %v413, %v412
      %v460 = vpack.c.bf16 %v415, %v414
      %v461 = vpack.c.bf16 %v417, %v416
      %v462 = vpack.c.bf16 %v419, %v418
      %v463 = vpack.c.bf16 %v421, %v420
      %v464 = vpack.c.bf16 %v423, %v422
      %v465 = vpack.c.bf16 %v425, %v424
      %v466 = vpack.c.bf16 %v427, %v426
      %v467 = vpack.c.bf16 %v429, %v428
      %v468 = vpack.c.bf16 %v431, %v430
      %v469 = vpack.c.bf16 %v433, %v432
      %v470 = vpack.c.bf16 %v435, %v434
      %v471 = vpack.c.bf16 %v437, %v436
      %v472 = vpack.c.bf16 %v439, %v438
      %v473 = vpack.c.bf16 %v441, %v440
      %s474 = scalar_lea.vmem %s1, 4
      %v475 = vld [vmem:[%s474] sm:$0xf]
      %vm476 = vcmask 64512
      %v478 = vsel %vm476, %v442, 0
      %v481 = vsel %vm476, %v443, 0
      %v484 = vsel %vm476, %v444, 0
      %v487 = vsel %vm476, %v445, 0
      %v490 = vsel %vm476, %v446, 0
      %v493 = vsel %vm476, %v447, 0
      %v496 = vsel %vm476, %v448, 0
      %v499 = vsel %vm476, %v449, 0
      %v502 = vsel %vm476, %v450, 0
      %v505 = vsel %vm476, %v451, 0
      %v508 = vsel %vm476, %v452, 0
      %v511 = vsel %vm476, %v453, 0
      %v514 = vsel %vm476, %v454, 0
      %v517 = vsel %vm476, %v455, 0
      %v520 = vsel %vm476, %v456, 0
      %v523 = vsel %vm476, %v457, 0
      %v526 = vsel %vm476, %v458, 0
      %v529 = vsel %vm476, %v459, 0
      %v532 = vsel %vm476, %v460, 0
      %v535 = vsel %vm476, %v461, 0
      %v538 = vsel %vm476, %v462, 0
      %v541 = vsel %vm476, %v463, 0
      %v544 = vsel %vm476, %v464, 0
      %v547 = vsel %vm476, %v465, 0
      %v550 = vsel %vm476, %v466, 0
      %v553 = vsel %vm476, %v467, 0
      %v556 = vsel %vm476, %v468, 0
      %v559 = vsel %vm476, %v469, 0
      %v562 = vsel %vm476, %v470, 0
      %v565 = vsel %vm476, %v471, 0
      %v568 = vsel %vm476, %v472, 0
      %v571 = vsel %vm476, %v473, 0
      %vm573 = vcmask 1043456
      %v575 = vsel %vm573, %v475, 0
      %577 = vmatprep.subr.bf16.mxu0 0
      %578 = vmatpush1.bf16.msra.mxu0 %v575
      %579 = vmatprep.subr.bf16.mxu0 0
      %580 = vmatpush1.bf16.msra.mxu0 0
      %581 = vmatprep.subr.bf16.mxu0 0
      %582 = vmatpush1.bf16.msra.mxu0 0
      %583 = vmatprep.subr.bf16.mxu0 0
      %584 = vmatpush1.bf16.msra.mxu0 0
      %585 = vmatprep.subr.bf16.mxu0 0
      %586 = vmatpush1.bf16.msra.mxu0 0
      %587 = vmatprep.subr.bf16.mxu0 0
      %588 = vmatpush1.bf16.msra.mxu0 0
      %589 = vmatprep.subr.bf16.mxu0 0
      %590 = vmatpush1.bf16.msra.mxu0 0
      %591 = vmatprep.subr.bf16.mxu0 0
      %592 = vmatpush1.bf16.msra.mxu0 0
      %593 = vmatprep.subr.bf16.mxu0 0
      %594 = vmatpush1.bf16.msra.mxu0 0
      %595 = vmatprep.subr.bf16.mxu0 0
      %596 = vmatpush1.bf16.msra.mxu0 0
      %597 = vmatprep.subr.bf16.mxu0 0
      %598 = vmatpush1.bf16.msra.mxu0 0
      %599 = vmatprep.subr.bf16.mxu0 0
      %600 = vmatpush1.bf16.msra.mxu0 0
      %601 = vmatprep.subr.bf16.mxu0 0
      %602 = vmatpush1.bf16.msra.mxu0 0
      %603 = vmatprep.subr.bf16.mxu0 0
      %604 = vmatpush1.bf16.msra.mxu0 0
      %605 = vmatprep.subr.bf16.mxu0 0
      %606 = vmatpush1.bf16.msra.mxu0 0
      %607 = vmatprep.subr.bf16.mxu0 0
      %608 = vmatpush1.bf16.msra.mxu0 0
      %609 = vmatprep.mubr.bf16.mxu0 0
      %610 = vmatmul.mubr.bf16.gmra.mrb[0].mxu0 %v478
      %v611 = vpop.f32.mrb[0].mxu0
      %v612 = vadd.f32 0.0, %v611
      %v613 = vpop.f32.mrb[0].mxu0
      %v614 = vpop.f32.mrb[0].mxu0
      %v615 = vadd.f32 0.0, %v614
      %v616 = vpop.f32.mrb[0].mxu0
      %617 = vmatprep.mubr.bf16.mxu0 0
      %618 = vmatmul.mubr.bf16.gmra.mrb[0].mxu0 %v481
      %v619 = vpop.f32.mrb[0].mxu0
      %v620 = vadd.f32 0.0, %v619
      %v621 = vpop.f32.mrb[0].mxu0
      %v622 = vpop.f32.mrb[0].mxu0
      %v623 = vadd.f32 0.0, %v622
      %v624 = vpop.f32.mrb[0].mxu0
      %625 = vmatprep.mubr.bf16.mxu0 0
      %626 = vmatmul.mubr.bf16.gmra.mrb[0].mxu0 %v484
      %v627 = vpop.f32.mrb[0].mxu0
      %v628 = vadd.f32 0.0, %v627
      %v629 = vpop.f32.mrb[0].mxu0
      %v630 = vpop.f32.mrb[0].mxu0
      %v631 = vadd.f32 0.0, %v630
      %v632 = vpop.f32.mrb[0].mxu0
      %633 = vmatprep.mubr.bf16.mxu0 0
      %634 = vmatmul.mubr.bf16.gmra.mrb[0].mxu0 %v487
      %v635 = vpop.f32.mrb[0].mxu0
      %v636 = vadd.f32 0.0, %v635
      %v637 = vpop.f32.mrb[0].mxu0
      %v638 = vpop.f32.mrb[0].mxu0
      %v639 = vadd.f32 0.0, %v638
      %v640 = vpop.f32.mrb[0].mxu0
      %641 = vmatprep.mubr.bf16.mxu0 0
      %642 = vmatmul.mubr.bf16.gmra.mrb[0].mxu0 %v490
      %v643 = vpop.f32.mrb[0].mxu0
      %v644 = vadd.f32 0.0, %v643
      %v645 = vpop.f32.mrb[0].mxu0
      %v646 = vpop.f32.mrb[0].mxu0
      %v647 = vadd.f32 0.0, %v646
      %v648 = vpop.f32.mrb[0].mxu0
      %649 = vmatprep.mubr.bf16.mxu0 0
      %650 = vmatmul.mubr.bf16.gmra.mrb[0].mxu0 %v493
      %v651 = vpop.f32.mrb[0].mxu0
      %v652 = vadd.f32 0.0, %v651
      %v653 = vpop.f32.mrb[0].mxu0
      %v654 = vpop.f32.mrb[0].mxu0
      %v655 = vadd.f32 0.0, %v654
      %v656 = vpop.f32.mrb[0].mxu0
      %657 = vmatprep.mubr.bf16.mxu0 0
      %658 = vmatmul.mubr.bf16.gmra.mrb[0].mxu0 %v496
      %v659 = vpop.f32.mrb[0].mxu0
      %v660 = vadd.f32 0.0, %v659
      %v661 = vpop.f32.mrb[0].mxu0
      %v662 = vpop.f32.mrb[0].mxu0
      %v663 = vadd.f32 0.0, %v662
      %v664 = vpop.f32.mrb[0].mxu0
      %665 = vmatprep.mubr.bf16.mxu0 0
      %666 = vmatmul.mubr.bf16.gmra.mrb[0].mxu0 %v499
      %v667 = vpop.f32.mrb[0].mxu0
      %v668 = vadd.f32 0.0, %v667
      %v669 = vpop.f32.mrb[0].mxu0
      %v670 = vpop.f32.mrb[0].mxu0
      %v671 = vadd.f32 0.0, %v670
      %v672 = vpop.f32.mrb[0].mxu0
      %673 = vmatprep.mubr.bf16.mxu0 0
      %674 = vmatmul.mubr.bf16.gmra.mrb[0].mxu0 %v502
      %v675 = vpop.f32.mrb[0].mxu0
      %v676 = vadd.f32 0.0, %v675
      %v677 = vpop.f32.mrb[0].mxu0
      %v678 = vpop.f32.mrb[0].mxu0
      %v679 = vadd.f32 0.0, %v678
      %v680 = vpop.f32.mrb[0].mxu0
      %681 = vmatprep.mubr.bf16.mxu0 0
      %682 = vmatmul.mubr.bf16.gmra.mrb[0].mxu0 %v505
      %v683 = vpop.f32.mrb[0].mxu0
      %v684 = vadd.f32 0.0, %v683
      %v685 = vpop.f32.mrb[0].mxu0
      %v686 = vpop.f32.mrb[0].mxu0
      %v687 = vadd.f32 0.0, %v686
      %v688 = vpop.f32.mrb[0].mxu0
      %689 = vmatprep.mubr.bf16.mxu0 0
      %690 = vmatmul.mubr.bf16.gmra.mrb[0].mxu0 %v508
      %v691 = vpop.f32.mrb[0].mxu0
      %v692 = vadd.f32 0.0, %v691
      %v693 = vpop.f32.mrb[0].mxu0
      %v694 = vpop.f32.mrb[0].mxu0
      %v695 = vadd.f32 0.0, %v694
      %v696 = vpop.f32.mrb[0].mxu0
      %697 = vmatprep.mubr.bf16.mxu0 0
      %698 = vmatmul.mubr.bf16.gmra.mrb[0].mxu0 %v511
      %v699 = vpop.f32.mrb[0].mxu0
      %v700 = vadd.f32 0.0, %v699
      %v701 = vpop.f32.mrb[0].mxu0
      %v702 = vpop.f32.mrb[0].mxu0
      %v703 = vadd.f32 0.0, %v702
      %v704 = vpop.f32.mrb[0].mxu0
      %705 = vmatprep.mubr.bf16.mxu0 0
      %706 = vmatmul.mubr.bf16.gmra.mrb[0].mxu0 %v514
      %v707 = vpop.f32.mrb[0].mxu0
      %v708 = vadd.f32 0.0, %v707
      %v709 = vpop.f32.mrb[0].mxu0
      %v710 = vpop.f32.mrb[0].mxu0
      %v711 = vadd.f32 0.0, %v710
      %v712 = vpop.f32.mrb[0].mxu0
      %713 = vmatprep.mubr.bf16.mxu0 0
      %714 = vmatmul.mubr.bf16.gmra.mrb[0].mxu0 %v517
      %v715 = vpop.f32.mrb[0].mxu0
      %v716 = vadd.f32 0.0, %v715
      %v717 = vpop.f32.mrb[0].mxu0
      %v718 = vpop.f32.mrb[0].mxu0
      %v719 = vadd.f32 0.0, %v718
      %v720 = vpop.f32.mrb[0].mxu0
      %721 = vmatprep.mubr.bf16.mxu0 0
      %722 = vmatmul.mubr.bf16.gmra.mrb[0].mxu0 %v520
      %v723 = vpop.f32.mrb[0].mxu0
      %v724 = vadd.f32 0.0, %v723
      %v725 = vpop.f32.mrb[0].mxu0
      %v726 = vpop.f32.mrb[0].mxu0
      %v727 = vadd.f32 0.0, %v726
      %v728 = vpop.f32.mrb[0].mxu0
      %729 = vmatprep.mubr.bf16.mxu0 0
      %730 = vmatmul.mubr.bf16.gmra.mrb[0].mxu0 %v523
      %v731 = vpop.f32.mrb[0].mxu0
      %v732 = vadd.f32 0.0, %v731
      %v733 = vpop.f32.mrb[0].mxu0
      %v734 = vpop.f32.mrb[0].mxu0
      %v735 = vadd.f32 0.0, %v734
      %v736 = vpop.f32.mrb[0].mxu0
      %737 = vmatprep.mubr.bf16.mxu0 0
      %738 = vmatmul.mubr.bf16.gmra.mrb[0].mxu0 %v526
      %v739 = vpop.f32.mrb[0].mxu0
      %v740 = vadd.f32 0.0, %v739
      %v741 = vpop.f32.mrb[0].mxu0
      %v742 = vpop.f32.mrb[0].mxu0
      %v743 = vadd.f32 0.0, %v742
      %v744 = vpop.f32.mrb[0].mxu0
      %745 = vmatprep.mubr.bf16.mxu0 0
      %746 = vmatmul.mubr.bf16.gmra.mrb[0].mxu0 %v529
      %v747 = vpop.f32.mrb[0].mxu0
      %v748 = vadd.f32 0.0, %v747
      %v749 = vpop.f32.mrb[0].mxu0
      %v750 = vpop.f32.mrb[0].mxu0
      %v751 = vadd.f32 0.0, %v750
      %v752 = vpop.f32.mrb[0].mxu0
      %753 = vmatprep.mubr.bf16.mxu0 0
      %754 = vmatmul.mubr.bf16.gmra.mrb[0].mxu0 %v532
      %v755 = vpop.f32.mrb[0].mxu0
      %v756 = vadd.f32 0.0, %v755
      %v757 = vpop.f32.mrb[0].mxu0
      %v758 = vpop.f32.mrb[0].mxu0
      %v759 = vadd.f32 0.0, %v758
      %v760 = vpop.f32.mrb[0].mxu0
      %761 = vmatprep.mubr.bf16.mxu0 0
      %762 = vmatmul.mubr.bf16.gmra.mrb[0].mxu0 %v535
      %v763 = vpop.f32.mrb[0].mxu0
      %v764 = vadd.f32 0.0, %v763
      %v765 = vpop.f32.mrb[0].mxu0
      %v766 = vpop.f32.mrb[0].mxu0
      %v767 = vadd.f32 0.0, %v766
      %v768 = vpop.f32.mrb[0].mxu0
      %769 = vmatprep.mubr.bf16.mxu0 0
      %770 = vmatmul.mubr.bf16.gmra.mrb[0].mxu0 %v538
      %v771 = vpop.f32.mrb[0].mxu0
      %v772 = vadd.f32 0.0, %v771
      %v773 = vpop.f32.mrb[0].mxu0
      %v774 = vpop.f32.mrb[0].mxu0
      %v775 = vadd.f32 0.0, %v774
      %v776 = vpop.f32.mrb[0].mxu0
      %777 = vmatprep.mubr.bf16.mxu0 0
      %778 = vmatmul.mubr.bf16.gmra.mrb[0].mxu0 %v541
      %v779 = vpop.f32.mrb[0].mxu0
      %v780 = vadd.f32 0.0, %v779
      %v781 = vpop.f32.mrb[0].mxu0
      %v782 = vpop.f32.mrb[0].mxu0
      %v783 = vadd.f32 0.0, %v782
      %v784 = vpop.f32.mrb[0].mxu0
      %785 = vmatprep.mubr.bf16.mxu0 0
      %786 = vmatmul.mubr.bf16.gmra.mrb[0].mxu0 %v544
      %v787 = vpop.f32.mrb[0].mxu0
      %v788 = vadd.f32 0.0, %v787
      %v789 = vpop.f32.mrb[0].mxu0
      %v790 = vpop.f32.mrb[0].mxu0
      %v791 = vadd.f32 0.0, %v790
      %v792 = vpop.f32.mrb[0].mxu0
      %793 = vmatprep.mubr.bf16.mxu0 0
      %794 = vmatmul.mubr.bf16.gmra.mrb[0].mxu0 %v547
      %v795 = vpop.f32.mrb[0].mxu0
      %v796 = vadd.f32 0.0, %v795
      %v797 = vpop.f32.mrb[0].mxu0
      %v798 = vpop.f32.mrb[0].mxu0
      %v799 = vadd.f32 0.0, %v798
      %v800 = vpop.f32.mrb[0].mxu0
      %801 = vmatprep.mubr.bf16.mxu0 0
      %802 = vmatmul.mubr.bf16.gmra.mrb[0].mxu0 %v550
      %v803 = vpop.f32.mrb[0].mxu0
      %v804 = vadd.f32 0.0, %v803
      %v805 = vpop.f32.mrb[0].mxu0
      %v806 = vpop.f32.mrb[0].mxu0
      %v807 = vadd.f32 0.0, %v806
      %v808 = vpop.f32.mrb[0].mxu0
      %809 = vmatprep.mubr.bf16.mxu0 0
      %810 = vmatmul.mubr.bf16.gmra.mrb[0].mxu0 %v553
      %v811 = vpop.f32.mrb[0].mxu0
      %v812 = vadd.f32 0.0, %v811
      %v813 = vpop.f32.mrb[0].mxu0
      %v814 = vpop.f32.mrb[0].mxu0
      %v815 = vadd.f32 0.0, %v814
      %v816 = vpop.f32.mrb[0].mxu0
      %817 = vmatprep.mubr.bf16.mxu0 0
      %818 = vmatmul.mubr.bf16.gmra.mrb[0].mxu0 %v556
      %v819 = vpop.f32.mrb[0].mxu0
      %v820 = vadd.f32 0.0, %v819
      %v821 = vpop.f32.mrb[0].mxu0
      %v822 = vpop.f32.mrb[0].mxu0
      %v823 = vadd.f32 0.0, %v822
      %v824 = vpop.f32.mrb[0].mxu0
      %825 = vmatprep.mubr.bf16.mxu0 0
      %826 = vmatmul.mubr.bf16.gmra.mrb[0].mxu0 %v559
      %v827 = vpop.f32.mrb[0].mxu0
      %v828 = vadd.f32 0.0, %v827
      %v829 = vpop.f32.mrb[0].mxu0
      %v830 = vpop.f32.mrb[0].mxu0
      %v831 = vadd.f32 0.0, %v830
      %v832 = vpop.f32.mrb[0].mxu0
      %833 = vmatprep.mubr.bf16.mxu0 0
      %834 = vmatmul.mubr.bf16.gmra.mrb[0].mxu0 %v562
      %v835 = vpop.f32.mrb[0].mxu0
      %v836 = vadd.f32 0.0, %v835
      %v837 = vpop.f32.mrb[0].mxu0
      %v838 = vpop.f32.mrb[0].mxu0
      %v839 = vadd.f32 0.0, %v838
      %v840 = vpop.f32.mrb[0].mxu0
      %841 = vmatprep.mubr.bf16.mxu0 0
      %842 = vmatmul.mubr.bf16.gmra.mrb[0].mxu0 %v565
      %v843 = vpop.f32.mrb[0].mxu0
      %v844 = vadd.f32 0.0, %v843
      %v845 = vpop.f32.mrb[0].mxu0
      %v846 = vpop.f32.mrb[0].mxu0
      %v847 = vadd.f32 0.0, %v846
      %v848 = vpop.f32.mrb[0].mxu0
      %849 = vmatprep.mubr.bf16.mxu0 0
      %850 = vmatmul.mubr.bf16.gmra.mrb[0].mxu0 %v568
      %v851 = vpop.f32.mrb[0].mxu0
      %v852 = vadd.f32 0.0, %v851
      %v853 = vpop.f32.mrb[0].mxu0
      %v854 = vpop.f32.mrb[0].mxu0
      %v855 = vadd.f32 0.0, %v854
      %v856 = vpop.f32.mrb[0].mxu0
      %857 = vmatprep.mubr.bf16.mxu0 0
      %858 = vmatmul.mubr.bf16.gmra.mrb[0].mxu0 %v571
      %v859 = vpop.f32.mrb[0].mxu0
      %v860 = vadd.f32 0.0, %v859
      %v861 = vpop.f32.mrb[0].mxu0
      %v862 = vpop.f32.mrb[0].mxu0
      %v863 = vadd.f32 0.0, %v862
      %v864 = vpop.f32.mrb[0].mxu0
      %865 = vdwg.mxu0
      %v867 = vsel %vm476, %v345, 0
      %v870 = vsel %vm476, %v346, 0
      %v873 = vsel %vm476, %v347, 0
      %v876 = vsel %vm476, %v348, 0
      %v879 = vsel %vm476, %v349, 0
      %v882 = vsel %vm476, %v350, 0
      %v885 = vsel %vm476, %v351, 0
      %v888 = vsel %vm476, %v352, 0
      %v891 = vsel %vm476, %v353, 0
      %v894 = vsel %vm476, %v354, 0
      %v897 = vsel %vm476, %v355, 0
      %v900 = vsel %vm476, %v356, 0
      %v903 = vsel %vm476, %v357, 0
      %v906 = vsel %vm476, %v358, 0
      %v909 = vsel %vm476, %v359, 0
      %v912 = vsel %vm476, %v360, 0
      %v915 = vsel %vm476, %v361, 0
      %v918 = vsel %vm476, %v362, 0
      %v921 = vsel %vm476, %v363, 0
      %v924 = vsel %vm476, %v364, 0
      %v927 = vsel %vm476, %v365, 0
      %v930 = vsel %vm476, %v366, 0
      %v933 = vsel %vm476, %v367, 0
      %v936 = vsel %vm476, %v368, 0
      %v939 = vsel %vm476, %v369, 0
      %v942 = vsel %vm476, %v370, 0
      %v945 = vsel %vm476, %v371, 0
      %v948 = vsel %vm476, %v372, 0
      %v951 = vsel %vm476, %v373, 0
      %v954 = vsel %vm476, %v374, 0
      %v957 = vsel %vm476, %v375, 0
      %v960 = vsel %vm476, %v376, 0
      %v963 = vsel %vm573, %v377, 0
      %965 = vmatprep.subr.bf16.mxu0 0
      %966 = vmatpush1.bf16.msra.mxu0 %v963
      %967 = vmatprep.subr.bf16.mxu0 0
      %968 = vmatpush1.bf16.msra.mxu0 0
      %969 = vmatprep.subr.bf16.mxu0 0
      %970 = vmatpush1.bf16.msra.mxu0 0
      %971 = vmatprep.subr.bf16.mxu0 0
      %972 = vmatpush1.bf16.msra.mxu0 0
      %973 = vmatprep.subr.bf16.mxu0 0
      %974 = vmatpush1.bf16.msra.mxu0 0
      %975 = vmatprep.subr.bf16.mxu0 0
      %976 = vmatpush1.bf16.msra.mxu0 0
      %977 = vmatprep.subr.bf16.mxu0 0
      %978 = vmatpush1.bf16.msra.mxu0 0
      %979 = vmatprep.subr.bf16.mxu0 0
      %980 = vmatpush1.bf16.msra.mxu0 0
      %981 = vmatprep.subr.bf16.mxu0 0
      %982 = vmatpush1.bf16.msra.mxu0 0
      %983 = vmatprep.subr.bf16.mxu0 0
      %984 = vmatpush1.bf16.msra.mxu0 0
      %985 = vmatprep.subr.bf16.mxu0 0
      %986 = vmatpush1.bf16.msra.mxu0 0
      %987 = vmatprep.subr.bf16.mxu0 0
      %988 = vmatpush1.bf16.msra.mxu0 0
      %989 = vmatprep.subr.bf16.mxu0 0
      %990 = vmatpush1.bf16.msra.mxu0 0
      %991 = vmatprep.subr.bf16.mxu0 0
      %992 = vmatpush1.bf16.msra.mxu0 0
      %993 = vmatprep.subr.bf16.mxu0 0
      %994 = vmatpush1.bf16.msra.mxu0 0
      %995 = vmatprep.subr.bf16.mxu0 0
      %996 = vmatpush1.bf16.msra.mxu0 0
      %997 = vmatprep.mubr.bf16.mxu0 0
      %998 = vmatmul.mubr.bf16.gmra.mrb[0].mxu0 %v867
      %v999 = vpop.f32.mrb[0].mxu0
      %v1000 = vadd.f32 %v612, %v999
      %v1001 = vpop.f32.mrb[0].mxu0
      %v1002 = vpop.f32.mrb[0].mxu0
      %v1003 = vadd.f32 %v615, %v1002
      %v1004 = vpop.f32.mrb[0].mxu0
      %1005 = vmatprep.mubr.bf16.mxu0 0
      %1006 = vmatmul.mubr.bf16.gmra.mrb[0].mxu0 %v870
      %v1007 = vpop.f32.mrb[0].mxu0
      %v1008 = vadd.f32 %v620, %v1007
      %v1009 = vpop.f32.mrb[0].mxu0
      %v1010 = vpop.f32.mrb[0].mxu0
      %v1011 = vadd.f32 %v623, %v1010
      %v1012 = vpop.f32.mrb[0].mxu0
      %1013 = vmatprep.mubr.bf16.mxu0 0
      %1014 = vmatmul.mubr.bf16.gmra.mrb[0].mxu0 %v873
      %v1015 = vpop.f32.mrb[0].mxu0
      %v1016 = vadd.f32 %v628, %v1015
      %v1017 = vpop.f32.mrb[0].mxu0
      %v1018 = vpop.f32.mrb[0].mxu0
      %v1019 = vadd.f32 %v631, %v1018
      %v1020 = vpop.f32.mrb[0].mxu0
      %1021 = vmatprep.mubr.bf16.mxu0 0
      %1022 = vmatmul.mubr.bf16.gmra.mrb[0].mxu0 %v876
      %v1023 = vpop.f32.mrb[0].mxu0
      %v1024 = vadd.f32 %v636, %v1023
      %v1025 = vpop.f32.mrb[0].mxu0
      %v1026 = vpop.f32.mrb[0].mxu0
      %v1027 = vadd.f32 %v639, %v1026
      %v1028 = vpop.f32.mrb[0].mxu0
      %1029 = vmatprep.mubr.bf16.mxu0 0
      %1030 = vmatmul.mubr.bf16.gmra.mrb[0].mxu0 %v879
      %v1031 = vpop.f32.mrb[0].mxu0
      %v1032 = vadd.f32 %v644, %v1031
      %v1033 = vpop.f32.mrb[0].mxu0
      %v1034 = vpop.f32.mrb[0].mxu0
      %v1035 = vadd.f32 %v647, %v1034
      %v1036 = vpop.f32.mrb[0].mxu0
      %1037 = vmatprep.mubr.bf16.mxu0 0
      %1038 = vmatmul.mubr.bf16.gmra.mrb[0].mxu0 %v882
      %v1039 = vpop.f32.mrb[0].mxu0
      %v1040 = vadd.f32 %v652, %v1039
      %v1041 = vpop.f32.mrb[0].mxu0
      %v1042 = vpop.f32.mrb[0].mxu0
      %v1043 = vadd.f32 %v655, %v1042
      %v1044 = vpop.f32.mrb[0].mxu0
      %1045 = vmatprep.mubr.bf16.mxu0 0
      %1046 = vmatmul.mubr.bf16.gmra.mrb[0].mxu0 %v885
      %v1047 = vpop.f32.mrb[0].mxu0
      %v1048 = vadd.f32 %v660, %v1047
      %v1049 = vpop.f32.mrb[0].mxu0
      %v1050 = vpop.f32.mrb[0].mxu0
      %v1051 = vadd.f32 %v663, %v1050
      %v1052 = vpop.f32.mrb[0].mxu0
      %1053 = vmatprep.mubr.bf16.mxu0 0
      %1054 = vmatmul.mubr.bf16.gmra.mrb[0].mxu0 %v888
      %v1055 = vpop.f32.mrb[0].mxu0
      %v1056 = vadd.f32 %v668, %v1055
      %v1057 = vpop.f32.mrb[0].mxu0
      %v1058 = vpop.f32.mrb[0].mxu0
      %v1059 = vadd.f32 %v671, %v1058
      %v1060 = vpop.f32.mrb[0].mxu0
      %1061 = vmatprep.mubr.bf16.mxu0 0
      %1062 = vmatmul.mubr.bf16.gmra.mrb[0].mxu0 %v891
      %v1063 = vpop.f32.mrb[0].mxu0
      %v1064 = vadd.f32 %v676, %v1063
      %v1065 = vpop.f32.mrb[0].mxu0
      %v1066 = vpop.f32.mrb[0].mxu0
      %v1067 = vadd.f32 %v679, %v1066
      %v1068 = vpop.f32.mrb[0].mxu0
      %1069 = vmatprep.mubr.bf16.mxu0 0
      %1070 = vmatmul.mubr.bf16.gmra.mrb[0].mxu0 %v894
      %v1071 = vpop.f32.mrb[0].mxu0
      %v1072 = vadd.f32 %v684, %v1071
      %v1073 = vpop.f32.mrb[0].mxu0
      %v1074 = vpop.f32.mrb[0].mxu0
      %v1075 = vadd.f32 %v687, %v1074
      %v1076 = vpop.f32.mrb[0].mxu0
      %1077 = vmatprep.mubr.bf16.mxu0 0
      %1078 = vmatmul.mubr.bf16.gmra.mrb[0].mxu0 %v897
      %v1079 = vpop.f32.mrb[0].mxu0
      %v1080 = vadd.f32 %v692, %v1079
      %v1081 = vpop.f32.mrb[0].mxu0
      %v1082 = vpop.f32.mrb[0].mxu0
      %v1083 = vadd.f32 %v695, %v1082
      %v1084 = vpop.f32.mrb[0].mxu0
      %1085 = vmatprep.mubr.bf16.mxu0 0
      %1086 = vmatmul.mubr.bf16.gmra.mrb[0].mxu0 %v900
      %v1087 = vpop.f32.mrb[0].mxu0
      %v1088 = vadd.f32 %v700, %v1087
      %v1089 = vpop.f32.mrb[0].mxu0
      %v1090 = vpop.f32.mrb[0].mxu0
      %v1091 = vadd.f32 %v703, %v1090
      %v1092 = vpop.f32.mrb[0].mxu0
      %1093 = vmatprep.mubr.bf16.mxu0 0
      %1094 = vmatmul.mubr.bf16.gmra.mrb[0].mxu0 %v903
      %v1095 = vpop.f32.mrb[0].mxu0
      %v1096 = vadd.f32 %v708, %v1095
      %v1097 = vpop.f32.mrb[0].mxu0
      %v1098 = vpop.f32.mrb[0].mxu0
      %v1099 = vadd.f32 %v711, %v1098
      %v1100 = vpop.f32.mrb[0].mxu0
      %1101 = vmatprep.mubr.bf16.mxu0 0
      %1102 = vmatmul.mubr.bf16.gmra.mrb[0].mxu0 %v906
      %v1103 = vpop.f32.mrb[0].mxu0
      %v1104 = vadd.f32 %v716, %v1103
      %v1105 = vpop.f32.mrb[0].mxu0
      %v1106 = vpop.f32.mrb[0].mxu0
      %v1107 = vadd.f32 %v719, %v1106
      %v1108 = vpop.f32.mrb[0].mxu0
      %1109 = vmatprep.mubr.bf16.mxu0 0
      %1110 = vmatmul.mubr.bf16.gmra.mrb[0].mxu0 %v909
      %v1111 = vpop.f32.mrb[0].mxu0
      %v1112 = vadd.f32 %v724, %v1111
      %v1113 = vpop.f32.mrb[0].mxu0
      %v1114 = vpop.f32.mrb[0].mxu0
      %v1115 = vadd.f32 %v727, %v1114
      %v1116 = vpop.f32.mrb[0].mxu0
      %1117 = vmatprep.mubr.bf16.mxu0 0
      %1118 = vmatmul.mubr.bf16.gmra.mrb[0].mxu0 %v912
      %v1119 = vpop.f32.mrb[0].mxu0
      %v1120 = vadd.f32 %v732, %v1119
      %v1121 = vpop.f32.mrb[0].mxu0
      %v1122 = vpop.f32.mrb[0].mxu0
      %v1123 = vadd.f32 %v735, %v1122
      %v1124 = vpop.f32.mrb[0].mxu0
      %1125 = vmatprep.mubr.bf16.mxu0 0
      %1126 = vmatmul.mubr.bf16.gmra.mrb[0].mxu0 %v915
      %v1127 = vpop.f32.mrb[0].mxu0
      %v1128 = vadd.f32 %v740, %v1127
      %v1129 = vpop.f32.mrb[0].mxu0
      %v1130 = vpop.f32.mrb[0].mxu0
      %v1131 = vadd.f32 %v743, %v1130
      %v1132 = vpop.f32.mrb[0].mxu0
      %1133 = vmatprep.mubr.bf16.mxu0 0
      %1134 = vmatmul.mubr.bf16.gmra.mrb[0].mxu0 %v918
      %v1135 = vpop.f32.mrb[0].mxu0
      %v1136 = vadd.f32 %v748, %v1135
      %v1137 = vpop.f32.mrb[0].mxu0
      %v1138 = vpop.f32.mrb[0].mxu0
      %v1139 = vadd.f32 %v751, %v1138
      %v1140 = vpop.f32.mrb[0].mxu0
      %1141 = vmatprep.mubr.bf16.mxu0 0
      %1142 = vmatmul.mubr.bf16.gmra.mrb[0].mxu0 %v921
      %v1143 = vpop.f32.mrb[0].mxu0
      %v1144 = vadd.f32 %v756, %v1143
      %v1145 = vpop.f32.mrb[0].mxu0
      %v1146 = vpop.f32.mrb[0].mxu0
      %v1147 = vadd.f32 %v759, %v1146
      %v1148 = vpop.f32.mrb[0].mxu0
      %1149 = vmatprep.mubr.bf16.mxu0 0
      %1150 = vmatmul.mubr.bf16.gmra.mrb[0].mxu0 %v924
      %v1151 = vpop.f32.mrb[0].mxu0
      %v1152 = vadd.f32 %v764, %v1151
      %v1153 = vpop.f32.mrb[0].mxu0
      %v1154 = vpop.f32.mrb[0].mxu0
      %v1155 = vadd.f32 %v767, %v1154
      %v1156 = vpop.f32.mrb[0].mxu0
      %1157 = vmatprep.mubr.bf16.mxu0 0
      %1158 = vmatmul.mubr.bf16.gmra.mrb[0].mxu0 %v927
      %v1159 = vpop.f32.mrb[0].mxu0
      %v1160 = vadd.f32 %v772, %v1159
      %v1161 = vpop.f32.mrb[0].mxu0
      %v1162 = vpop.f32.mrb[0].mxu0
      %v1163 = vadd.f32 %v775, %v1162
      %v1164 = vpop.f32.mrb[0].mxu0
      %1165 = vmatprep.mubr.bf16.mxu0 0
      %1166 = vmatmul.mubr.bf16.gmra.mrb[0].mxu0 %v930
      %v1167 = vpop.f32.mrb[0].mxu0
      %v1168 = vadd.f32 %v780, %v1167
      %v1169 = vpop.f32.mrb[0].mxu0
      %v1170 = vpop.f32.mrb[0].mxu0
      %v1171 = vadd.f32 %v783, %v1170
      %v1172 = vpop.f32.mrb[0].mxu0
      %1173 = vmatprep.mubr.bf16.mxu0 0
      %1174 = vmatmul.mubr.bf16.gmra.mrb[0].mxu0 %v933
      %v1175 = vpop.f32.mrb[0].mxu0
      %v1176 = vadd.f32 %v788, %v1175
      %v1177 = vpop.f32.mrb[0].mxu0
      %v1178 = vpop.f32.mrb[0].mxu0
      %v1179 = vadd.f32 %v791, %v1178
      %v1180 = vpop.f32.mrb[0].mxu0
      %1181 = vmatprep.mubr.bf16.mxu0 0
      %1182 = vmatmul.mubr.bf16.gmra.mrb[0].mxu0 %v936
      %v1183 = vpop.f32.mrb[0].mxu0
      %v1184 = vadd.f32 %v796, %v1183
      %v1185 = vpop.f32.mrb[0].mxu0
      %v1186 = vpop.f32.mrb[0].mxu0
      %v1187 = vadd.f32 %v799, %v1186
      %v1188 = vpop.f32.mrb[0].mxu0
      %1189 = vmatprep.mubr.bf16.mxu0 0
      %1190 = vmatmul.mubr.bf16.gmra.mrb[0].mxu0 %v939
      %v1191 = vpop.f32.mrb[0].mxu0
      %v1192 = vadd.f32 %v804, %v1191
      %v1193 = vpop.f32.mrb[0].mxu0
      %v1194 = vpop.f32.mrb[0].mxu0
      %v1195 = vadd.f32 %v807, %v1194
      %v1196 = vpop.f32.mrb[0].mxu0
      %1197 = vmatprep.mubr.bf16.mxu0 0
      %1198 = vmatmul.mubr.bf16.gmra.mrb[0].mxu0 %v942
      %v1199 = vpop.f32.mrb[0].mxu0
      %v1200 = vadd.f32 %v812, %v1199
      %v1201 = vpop.f32.mrb[0].mxu0
      %v1202 = vpop.f32.mrb[0].mxu0
      %v1203 = vadd.f32 %v815, %v1202
      %v1204 = vpop.f32.mrb[0].mxu0
      %1205 = vmatprep.mubr.bf16.mxu0 0
      %1206 = vmatmul.mubr.bf16.gmra.mrb[0].mxu0 %v945
      %v1207 = vpop.f32.mrb[0].mxu0
      %v1208 = vadd.f32 %v820, %v1207
      %v1209 = vpop.f32.mrb[0].mxu0
      %v1210 = vpop.f32.mrb[0].mxu0
      %v1211 = vadd.f32 %v823, %v1210
      %v1212 = vpop.f32.mrb[0].mxu0
      %1213 = vmatprep.mubr.bf16.mxu0 0
      %1214 = vmatmul.mubr.bf16.gmra.mrb[0].mxu0 %v948
      %v1215 = vpop.f32.mrb[0].mxu0
      %v1216 = vadd.f32 %v828, %v1215
      %v1217 = vpop.f32.mrb[0].mxu0
      %v1218 = vpop.f32.mrb[0].mxu0
      %v1219 = vadd.f32 %v831, %v1218
      %v1220 = vpop.f32.mrb[0].mxu0
      %1221 = vmatprep.mubr.bf16.mxu0 0
      %1222 = vmatmul.mubr.bf16.gmra.mrb[0].mxu0 %v951
      %v1223 = vpop.f32.mrb[0].mxu0
      %v1224 = vadd.f32 %v836, %v1223
      %v1225 = vpop.f32.mrb[0].mxu0
      %v1226 = vpop.f32.mrb[0].mxu0
      %v1227 = vadd.f32 %v839, %v1226
      %v1228 = vpop.f32.mrb[0].mxu0
      %1229 = vmatprep.mubr.bf16.mxu0 0
      %1230 = vmatmul.mubr.bf16.gmra.mrb[0].mxu0 %v954
      %v1231 = vpop.f32.mrb[0].mxu0
      %v1232 = vadd.f32 %v844, %v1231
      %v1233 = vpop.f32.mrb[0].mxu0
      %v1234 = vpop.f32.mrb[0].mxu0
      %v1235 = vadd.f32 %v847, %v1234
      %v1236 = vpop.f32.mrb[0].mxu0
      %1237 = vmatprep.mubr.bf16.mxu0 0
      %1238 = vmatmul.mubr.bf16.gmra.mrb[0].mxu0 %v957
      %v1239 = vpop.f32.mrb[0].mxu0
      %v1240 = vadd.f32 %v852, %v1239
      %v1241 = vpop.f32.mrb[0].mxu0
      %v1242 = vpop.f32.mrb[0].mxu0
      %v1243 = vadd.f32 %v855, %v1242
      %v1244 = vpop.f32.mrb[0].mxu0
      %1245 = vmatprep.mubr.bf16.mxu0 0
      %1246 = vmatmul.mubr.bf16.gmra.mrb[0].mxu0 %v960
      %v1247 = vpop.f32.mrb[0].mxu0
      %v1248 = vadd.f32 %v860, %v1247
      %v1249 = vpop.f32.mrb[0].mxu0
      %v1250 = vpop.f32.mrb[0].mxu0
      %v1251 = vadd.f32 %v863, %v1250
      %v1252 = vpop.f32.mrb[0].mxu0
      %1253 = vdwg.mxu0
      %v1254 = vld [vmem:[%s275 + $0x2] sm:$0xff]
      %v1255 = vld [vmem:[%s275 + $0xa] sm:$0xff]
      %v1256 = vld [vmem:[%s275 + $0x1a] sm:$0xff]
      %v1257 = vld [vmem:[%s275 + $0x22] sm:$0xff]
      %v1258 = vld [vmem:[%s275 + $0x32] sm:$0xff]
      %v1259 = vld [vmem:[%s275 + $0x3a] sm:$0xff]
      %v1260 = vld [vmem:[%s275 + $0x4a] sm:$0xff]
      %v1261 = vld [vmem:[%s275 + $0x52] sm:$0xff]
      %v1262 = vld [vmem:[%s275 + $0x62] sm:$0xff]
      %v1263 = vld [vmem:[%s275 + $0x6a] sm:$0xff]
      %v1264 = vld [vmem:[%s275 + $0x7a] sm:$0xff]
      %v1265 = vld [vmem:[%s275 + $0x82] sm:$0xff]
      %v1266 = vld [vmem:[%s275 + $0x92] sm:$0xff]
      %v1267 = vld [vmem:[%s275 + $0x9a] sm:$0xff]
      %v1268 = vld [vmem:[%s275 + $0xaa] sm:$0xff]
      %v1269 = vld [vmem:[%s275 + $0xb2] sm:$0xff]
      %v1270 = vld [vmem:[%s275 + $0xc2] sm:$0xff]
      %v1271 = vld [vmem:[%s275 + $0xca] sm:$0xff]
      %v1272 = vld [vmem:[%s275 + $0xda] sm:$0xff]
      %v1273 = vld [vmem:[%s275 + $0xe2] sm:$0xff]
      %v1274 = vld [vmem:[%s275 + $0xf2] sm:$0xff]
      %v1275 = vld [vmem:[%s275 + $0xfa] sm:$0xff]
      %v1276 = vld [vmem:[%s275 + $0x10a] sm:$0xff]
      %v1277 = vld [vmem:[%s275 + $0x112] sm:$0xff]
      %v1278 = vld [vmem:[%s275 + $0x122] sm:$0xff]
      %v1279 = vld [vmem:[%s275 + $0x12a] sm:$0xff]
      %v1280 = vld [vmem:[%s275 + $0x13a] sm:$0xff]
      %v1281 = vld [vmem:[%s275 + $0x142] sm:$0xff]
      %v1282 = vld [vmem:[%s275 + $0x152] sm:$0xff]
      %v1283 = vld [vmem:[%s275 + $0x15a] sm:$0xff]
      %v1284 = vld [vmem:[%s275 + $0x16a] sm:$0xff]
      %v1285 = vld [vmem:[%s275 + $0x172] sm:$0xff]
      %v1286 = vld [vmem:[%s275 + $0x1b2] sm:$0xff]
      %v1287 = vld [vmem:[%s275 + $0x1ba] sm:$0xff]
      %v1288 = vld [vmem:[%s275 + $0x1ca] sm:$0xff]
      %v1289 = vld [vmem:[%s275 + $0x1d2] sm:$0xff]
      %v1290 = vld [vmem:[%s275 + $0x1e2] sm:$0xff]
      %v1291 = vld [vmem:[%s275 + $0x1ea] sm:$0xff]
      %v1292 = vld [vmem:[%s275 + $0x1fa] sm:$0xff]
      %v1293 = vld [vmem:[%s275 + $0x202] sm:$0xff]
      %v1294 = vld [vmem:[%s275 + $0x212] sm:$0xff]
      %v1295 = vld [vmem:[%s275 + $0x21a] sm:$0xff]
      %v1296 = vld [vmem:[%s275 + $0x22a] sm:$0xff]
      %v1297 = vld [vmem:[%s275 + $0x232] sm:$0xff]
      %v1298 = vld [vmem:[%s275 + $0x242] sm:$0xff]
      %v1299 = vld [vmem:[%s275 + $0x24a] sm:$0xff]
      %v1300 = vld [vmem:[%s275 + $0x25a] sm:$0xff]
      %v1301 = vld [vmem:[%s275 + $0x262] sm:$0xff]
      %v1302 = vld [vmem:[%s275 + $0x272] sm:$0xff]
      %v1303 = vld [vmem:[%s275 + $0x27a] sm:$0xff]
      %v1304 = vld [vmem:[%s275 + $0x28a] sm:$0xff]
      %v1305 = vld [vmem:[%s275 + $0x292] sm:$0xff]
      %v1306 = vld [vmem:[%s275 + $0x2a2] sm:$0xff]
      %v1307 = vld [vmem:[%s275 + $0x2aa] sm:$0xff]
      %v1308 = vld [vmem:[%s275 + $0x2ba] sm:$0xff]
      %v1309 = vld [vmem:[%s275 + $0x2c2] sm:$0xff]
      %v1310 = vld [vmem:[%s275 + $0x2d2] sm:$0xff]
      %v1311 = vld [vmem:[%s275 + $0x2da] sm:$0xff]
      %v1312 = vld [vmem:[%s275 + $0x2ea] sm:$0xff]
      %v1313 = vld [vmem:[%s275 + $0x2f2] sm:$0xff]
      %v1314 = vld [vmem:[%s275 + $0x302] sm:$0xff]
      %v1315 = vld [vmem:[%s275 + $0x30a] sm:$0xff]
      %v1316 = vld [vmem:[%s275 + $0x31a] sm:$0xff]
      %v1317 = vld [vmem:[%s275 + $0x322] sm:$0xff]
      %v1318 = vpack.c.bf16 %v1255, %v1254
      %v1319 = vpack.c.bf16 %v1257, %v1256
      %v1320 = vpack.c.bf16 %v1259, %v1258
      %v1321 = vpack.c.bf16 %v1261, %v1260
      %v1322 = vpack.c.bf16 %v1263, %v1262
      %v1323 = vpack.c.bf16 %v1265, %v1264
      %v1324 = vpack.c.bf16 %v1267, %v1266
      %v1325 = vpack.c.bf16 %v1269, %v1268
      %v1326 = vpack.c.bf16 %v1271, %v1270
      %v1327 = vpack.c.bf16 %v1273, %v1272
      %v1328 = vpack.c.bf16 %v1275, %v1274
      %v1329 = vpack.c.bf16 %v1277, %v1276
      %v1330 = vpack.c.bf16 %v1279, %v1278
      %v1331 = vpack.c.bf16 %v1281, %v1280
      %v1332 = vpack.c.bf16 %v1283, %v1282
      %v1333 = vpack.c.bf16 %v1285, %v1284
      %v1334 = vpack.c.bf16 %v1287, %v1286
      %v1335 = vpack.c.bf16 %v1289, %v1288
      %v1336 = vpack.c.bf16 %v1291, %v1290
      %v1337 = vpack.c.bf16 %v1293, %v1292
      %v1338 = vpack.c.bf16 %v1295, %v1294
      %v1339 = vpack.c.bf16 %v1297, %v1296
      %v1340 = vpack.c.bf16 %v1299, %v1298
      %v1341 = vpack.c.bf16 %v1301, %v1300
      %v1342 = vpack.c.bf16 %v1303, %v1302
      %v1343 = vpack.c.bf16 %v1305, %v1304
      %v1344 = vpack.c.bf16 %v1307, %v1306
      %v1345 = vpack.c.bf16 %v1309, %v1308
      %v1346 = vpack.c.bf16 %v1311, %v1310
      %v1347 = vpack.c.bf16 %v1313, %v1312
      %v1348 = vpack.c.bf16 %v1315, %v1314
      %v1349 = vpack.c.bf16 %v1317, %v1316
      %s1350 = scalar_lea.vmem %s1, 8
      %v1351 = vld [vmem:[%s1350] sm:$0xf]
      %v1353 = vsel %vm476, %v1318, 0
      %v1356 = vsel %vm476, %v1319, 0
      %v1359 = vsel %vm476, %v1320, 0
      %v1362 = vsel %vm476, %v1321, 0
      %v1365 = vsel %vm476, %v1322, 0
      %v1368 = vsel %vm476, %v1323, 0
      %v1371 = vsel %vm476, %v1324, 0
      %v1374 = vsel %vm476, %v1325, 0
      %v1377 = vsel %vm476, %v1326, 0
      %v1380 = vsel %vm476, %v1327, 0
      %v1383 = vsel %vm476, %v1328, 0
      %v1386 = vsel %vm476, %v1329, 0
      %v1389 = vsel %vm476, %v1330, 0
      %v1392 = vsel %vm476, %v1331, 0
      %v1395 = vsel %vm476, %v1332, 0
      %v1398 = vsel %vm476, %v1333, 0
      %v1401 = vsel %vm476, %v1334, 0
      %v1404 = vsel %vm476, %v1335, 0
      %v1407 = vsel %vm476, %v1336, 0
      %v1410 = vsel %vm476, %v1337, 0
      %v1413 = vsel %vm476, %v1338, 0
      %v1416 = vsel %vm476, %v1339, 0
      %v1419 = vsel %vm476, %v1340, 0
      %v1422 = vsel %vm476, %v1341, 0
      %v1425 = vsel %vm476, %v1342, 0
      %v1428 = vsel %vm476, %v1343, 0
      %v1431 = vsel %vm476, %v1344, 0
      %v1434 = vsel %vm476, %v1345, 0
      %v1437 = vsel %vm476, %v1346, 0
      %v1440 = vsel %vm476, %v1347, 0
      %v1443 = vsel %vm476, %v1348, 0
      %v1446 = vsel %vm476, %v1349, 0
      %v1449 = vsel %vm573, %v1351, 0
      %1451 = vmatprep.subr.bf16.mxu0 0
      %1452 = vmatpush1.bf16.msra.mxu0 %v1449
      %1453 = vmatprep.subr.bf16.mxu0 0
      %1454 = vmatpush1.bf16.msra.mxu0 0
      %1455 = vmatprep.subr.bf16.mxu0 0
      %1456 = vmatpush1.bf16.msra.mxu0 0
      %1457 = vmatprep.subr.bf16.mxu0 0
      %1458 = vmatpush1.bf16.msra.mxu0 0
      %1459 = vmatprep.subr.bf16.mxu0 0
      %1460 = vmatpush1.bf16.msra.mxu0 0
      %1461 = vmatprep.subr.bf16.mxu0 0
      %1462 = vmatpush1.bf16.msra.mxu0 0
      %1463 = vmatprep.subr.bf16.mxu0 0
      %1464 = vmatpush1.bf16.msra.mxu0 0
      %1465 = vmatprep.subr.bf16.mxu0 0
      %1466 = vmatpush1.bf16.msra.mxu0 0
      %1467 = vmatprep.subr.bf16.mxu0 0
      %1468 = vmatpush1.bf16.msra.mxu0 0
      %1469 = vmatprep.subr.bf16.mxu0 0
      %1470 = vmatpush1.bf16.msra.mxu0 0
      %1471 = vmatprep.subr.bf16.mxu0 0
      %1472 = vmatpush1.bf16.msra.mxu0 0
      %1473 = vmatprep.subr.bf16.mxu0 0
      %1474 = vmatpush1.bf16.msra.mxu0 0
      %1475 = vmatprep.subr.bf16.mxu0 0
      %1476 = vmatpush1.bf16.msra.mxu0 0
      %1477 = vmatprep.subr.bf16.mxu0 0
      %1478 = vmatpush1.bf16.msra.mxu0 0
      %1479 = vmatprep.subr.bf16.mxu0 0
      %1480 = vmatpush1.bf16.msra.mxu0 0
      %1481 = vmatprep.subr.bf16.mxu0 0
      %1482 = vmatpush1.bf16.msra.mxu0 0
      %1483 = vmatprep.mubr.bf16.mxu0 0
      %1484 = vmatmul.mubr.bf16.gmra.mrb[0].mxu0 %v1353
      %v1485 = vpop.f32.mrb[0].mxu0
      %v1486 = vadd.f32 0.0, %v1485
      %v1487 = vpop.f32.mrb[0].mxu0
      %v1488 = vpop.f32.mrb[0].mxu0
      %v1489 = vadd.f32 0.0, %v1488
      %v1490 = vpop.f32.mrb[0].mxu0
      %1491 = vmatprep.mubr.bf16.mxu0 0
      %1492 = vmatmul.mubr.bf16.gmra.mrb[0].mxu0 %v1356
      %v1493 = vpop.f32.mrb[0].mxu0
      %v1494 = vadd.f32 0.0, %v1493
      %v1495 = vpop.f32.mrb[0].mxu0
      %v1496 = vpop.f32.mrb[0].mxu0
      %v1497 = vadd.f32 0.0, %v1496
      %v1498 = vpop.f32.mrb[0].mxu0
      %1499 = vmatprep.mubr.bf16.mxu0 0
      %1500 = vmatmul.mubr.bf16.gmra.mrb[0].mxu0 %v1359
      %v1501 = vpop.f32.mrb[0].mxu0
      %v1502 = vadd.f32 0.0, %v1501
      %v1503 = vpop.f32.mrb[0].mxu0
      %v1504 = vpop.f32.mrb[0].mxu0
      %v1505 = vadd.f32 0.0, %v1504
      %v1506 = vpop.f32.mrb[0].mxu0
      %1507 = vmatprep.mubr.bf16.mxu0 0
      %1508 = vmatmul.mubr.bf16.gmra.mrb[0].mxu0 %v1362
      %v1509 = vpop.f32.mrb[0].mxu0
      %v1510 = vadd.f32 0.0, %v1509
      %v1511 = vpop.f32.mrb[0].mxu0
      %v1512 = vpop.f32.mrb[0].mxu0
      %v1513 = vadd.f32 0.0, %v1512
      %v1514 = vpop.f32.mrb[0].mxu0
      %1515 = vmatprep.mubr.bf16.mxu0 0
      %1516 = vmatmul.mubr.bf16.gmra.mrb[0].mxu0 %v1365
      %v1517 = vpop.f32.mrb[0].mxu0
      %v1518 = vadd.f32 0.0, %v1517
      %v1519 = vpop.f32.mrb[0].mxu0
      %v1520 = vpop.f32.mrb[0].mxu0
      %v1521 = vadd.f32 0.0, %v1520
      %v1522 = vpop.f32.mrb[0].mxu0
      %1523 = vmatprep.mubr.bf16.mxu0 0
      %1524 = vmatmul.mubr.bf16.gmra.mrb[0].mxu0 %v1368
      %v1525 = vpop.f32.mrb[0].mxu0
      %v1526 = vadd.f32 0.0, %v1525
      %v1527 = vpop.f32.mrb[0].mxu0
      %v1528 = vpop.f32.mrb[0].mxu0
      %v1529 = vadd.f32 0.0, %v1528
      %v1530 = vpop.f32.mrb[0].mxu0
      %1531 = vmatprep.mubr.bf16.mxu0 0
      %1532 = vmatmul.mubr.bf16.gmra.mrb[0].mxu0 %v1371
      %v1533 = vpop.f32.mrb[0].mxu0
      %v1534 = vadd.f32 0.0, %v1533
      %v1535 = vpop.f32.mrb[0].mxu0
      %v1536 = vpop.f32.mrb[0].mxu0
      %v1537 = vadd.f32 0.0, %v1536
      %v1538 = vpop.f32.mrb[0].mxu0
      %1539 = vmatprep.mubr.bf16.mxu0 0
      %1540 = vmatmul.mubr.bf16.gmra.mrb[0].mxu0 %v1374
      %v1541 = vpop.f32.mrb[0].mxu0
      %v1542 = vadd.f32 0.0, %v1541
      %v1543 = vpop.f32.mrb[0].mxu0
      %v1544 = vpop.f32.mrb[0].mxu0
      %v1545 = vadd.f32 0.0, %v1544
      %v1546 = vpop.f32.mrb[0].mxu0
      %1547 = vmatprep.mubr.bf16.mxu0 0
      %1548 = vmatmul.mubr.bf16.gmra.mrb[0].mxu0 %v1377
      %v1549 = vpop.f32.mrb[0].mxu0
      %v1550 = vadd.f32 0.0, %v1549
      %v1551 = vpop.f32.mrb[0].mxu0
      %v1552 = vpop.f32.mrb[0].mxu0
      %v1553 = vadd.f32 0.0, %v1552
      %v1554 = vpop.f32.mrb[0].mxu0
      %1555 = vmatprep.mubr.bf16.mxu0 0
      %1556 = vmatmul.mubr.bf16.gmra.mrb[0].mxu0 %v1380
      %v1557 = vpop.f32.mrb[0].mxu0
      %v1558 = vadd.f32 0.0, %v1557
      %v1559 = vpop.f32.mrb[0].mxu0
      %v1560 = vpop.f32.mrb[0].mxu0
      %v1561 = vadd.f32 0.0, %v1560
      %v1562 = vpop.f32.mrb[0].mxu0
      %1563 = vmatprep.mubr.bf16.mxu0 0
      %1564 = vmatmul.mubr.bf16.gmra.mrb[0].mxu0 %v1383
      %v1565 = vpop.f32.mrb[0].mxu0
      %v1566 = vadd.f32 0.0, %v1565
      %v1567 = vpop.f32.mrb[0].mxu0
      %v1568 = vpop.f32.mrb[0].mxu0
      %v1569 = vadd.f32 0.0, %v1568
      %v1570 = vpop.f32.mrb[0].mxu0
      %1571 = vmatprep.mubr.bf16.mxu0 0
      %1572 = vmatmul.mubr.bf16.gmra.mrb[0].mxu0 %v1386
      %v1573 = vpop.f32.mrb[0].mxu0
      %v1574 = vadd.f32 0.0, %v1573
      %v1575 = vpop.f32.mrb[0].mxu0
      %v1576 = vpop.f32.mrb[0].mxu0
      %v1577 = vadd.f32 0.0, %v1576
      %v1578 = vpop.f32.mrb[0].mxu0
      %1579 = vmatprep.mubr.bf16.mxu0 0
      %1580 = vmatmul.mubr.bf16.gmra.mrb[0].mxu0 %v1389
      %v1581 = vpop.f32.mrb[0].mxu0
      %v1582 = vadd.f32 0.0, %v1581
      %v1583 = vpop.f32.mrb[0].mxu0
      %v1584 = vpop.f32.mrb[0].mxu0
      %v1585 = vadd.f32 0.0, %v1584
      %v1586 = vpop.f32.mrb[0].mxu0
      %1587 = vmatprep.mubr.bf16.mxu0 0
      %1588 = vmatmul.mubr.bf16.gmra.mrb[0].mxu0 %v1392
      %v1589 = vpop.f32.mrb[0].mxu0
      %v1590 = vadd.f32 0.0, %v1589
      %v1591 = vpop.f32.mrb[0].mxu0
      %v1592 = vpop.f32.mrb[0].mxu0
      %v1593 = vadd.f32 0.0, %v1592
      %v1594 = vpop.f32.mrb[0].mxu0
      %1595 = vmatprep.mubr.bf16.mxu0 0
      %1596 = vmatmul.mubr.bf16.gmra.mrb[0].mxu0 %v1395
      %v1597 = vpop.f32.mrb[0].mxu0
      %v1598 = vadd.f32 0.0, %v1597
      %v1599 = vpop.f32.mrb[0].mxu0
      %v1600 = vpop.f32.mrb[0].mxu0
      %v1601 = vadd.f32 0.0, %v1600
      %v1602 = vpop.f32.mrb[0].mxu0
      %1603 = vmatprep.mubr.bf16.mxu0 0
      %1604 = vmatmul.mubr.bf16.gmra.mrb[0].mxu0 %v1398
      %v1605 = vpop.f32.mrb[0].mxu0
      %v1606 = vadd.f32 0.0, %v1605
      %v1607 = vpop.f32.mrb[0].mxu0
      %v1608 = vpop.f32.mrb[0].mxu0
      %v1609 = vadd.f32 0.0, %v1608
      %v1610 = vpop.f32.mrb[0].mxu0
      %1611 = vmatprep.mubr.bf16.mxu0 0
      %1612 = vmatmul.mubr.bf16.gmra.mrb[0].mxu0 %v1401
      %v1613 = vpop.f32.mrb[0].mxu0
      %v1614 = vadd.f32 0.0, %v1613
      %v1615 = vpop.f32.mrb[0].mxu0
      %v1616 = vpop.f32.mrb[0].mxu0
      %v1617 = vadd.f32 0.0, %v1616
      %v1618 = vpop.f32.mrb[0].mxu0
      %1619 = vmatprep.mubr.bf16.mxu0 0
      %1620 = vmatmul.mubr.bf16.gmra.mrb[0].mxu0 %v1404
      %v1621 = vpop.f32.mrb[0].mxu0
      %v1622 = vadd.f32 0.0, %v1621
      %v1623 = vpop.f32.mrb[0].mxu0
      %v1624 = vpop.f32.mrb[0].mxu0
      %v1625 = vadd.f32 0.0, %v1624
      %v1626 = vpop.f32.mrb[0].mxu0
      %1627 = vmatprep.mubr.bf16.mxu0 0
      %1628 = vmatmul.mubr.bf16.gmra.mrb[0].mxu0 %v1407
      %v1629 = vpop.f32.mrb[0].mxu0
      %v1630 = vadd.f32 0.0, %v1629
      %v1631 = vpop.f32.mrb[0].mxu0
      %v1632 = vpop.f32.mrb[0].mxu0
      %v1633 = vadd.f32 0.0, %v1632
      %v1634 = vpop.f32.mrb[0].mxu0
      %1635 = vmatprep.mubr.bf16.mxu0 0
      %1636 = vmatmul.mubr.bf16.gmra.mrb[0].mxu0 %v1410
      %v1637 = vpop.f32.mrb[0].mxu0
      %v1638 = vadd.f32 0.0, %v1637
      %v1639 = vpop.f32.mrb[0].mxu0
      %v1640 = vpop.f32.mrb[0].mxu0
      %v1641 = vadd.f32 0.0, %v1640
      %v1642 = vpop.f32.mrb[0].mxu0
      %1643 = vmatprep.mubr.bf16.mxu0 0
      %1644 = vmatmul.mubr.bf16.gmra.mrb[0].mxu0 %v1413
      %v1645 = vpop.f32.mrb[0].mxu0
      %v1646 = vadd.f32 0.0, %v1645
      %v1647 = vpop.f32.mrb[0].mxu0
      %v1648 = vpop.f32.mrb[0].mxu0
      %v1649 = vadd.f32 0.0, %v1648
      %v1650 = vpop.f32.mrb[0].mxu0
      %1651 = vmatprep.mubr.bf16.mxu0 0
      %1652 = vmatmul.mubr.bf16.gmra.mrb[0].mxu0 %v1416
      %v1653 = vpop.f32.mrb[0].mxu0
      %v1654 = vadd.f32 0.0, %v1653
      %v1655 = vpop.f32.mrb[0].mxu0
      %v1656 = vpop.f32.mrb[0].mxu0
      %v1657 = vadd.f32 0.0, %v1656
      %v1658 = vpop.f32.mrb[0].mxu0
      %1659 = vmatprep.mubr.bf16.mxu0 0
      %1660 = vmatmul.mubr.bf16.gmra.mrb[0].mxu0 %v1419
      %v1661 = vpop.f32.mrb[0].mxu0
      %v1662 = vadd.f32 0.0, %v1661
      %v1663 = vpop.f32.mrb[0].mxu0
      %v1664 = vpop.f32.mrb[0].mxu0
      %v1665 = vadd.f32 0.0, %v1664
      %v1666 = vpop.f32.mrb[0].mxu0
      %1667 = vmatprep.mubr.bf16.mxu0 0
      %1668 = vmatmul.mubr.bf16.gmra.mrb[0].mxu0 %v1422
      %v1669 = vpop.f32.mrb[0].mxu0
      %v1670 = vadd.f32 0.0, %v1669
      %v1671 = vpop.f32.mrb[0].mxu0
      %v1672 = vpop.f32.mrb[0].mxu0
      %v1673 = vadd.f32 0.0, %v1672
      %v1674 = vpop.f32.mrb[0].mxu0
      %1675 = vmatprep.mubr.bf16.mxu0 0
      %1676 = vmatmul.mubr.bf16.gmra.mrb[0].mxu0 %v1425
      %v1677 = vpop.f32.mrb[0].mxu0
      %v1678 = vadd.f32 0.0, %v1677
      %v1679 = vpop.f32.mrb[0].mxu0
      %v1680 = vpop.f32.mrb[0].mxu0
      %v1681 = vadd.f32 0.0, %v1680
      %v1682 = vpop.f32.mrb[0].mxu0
      %1683 = vmatprep.mubr.bf16.mxu0 0
      %1684 = vmatmul.mubr.bf16.gmra.mrb[0].mxu0 %v1428
      %v1685 = vpop.f32.mrb[0].mxu0
      %v1686 = vadd.f32 0.0, %v1685
      %v1687 = vpop.f32.mrb[0].mxu0
      %v1688 = vpop.f32.mrb[0].mxu0
      %v1689 = vadd.f32 0.0, %v1688
      %v1690 = vpop.f32.mrb[0].mxu0
      %1691 = vmatprep.mubr.bf16.mxu0 0
      %1692 = vmatmul.mubr.bf16.gmra.mrb[0].mxu0 %v1431
      %v1693 = vpop.f32.mrb[0].mxu0
      %v1694 = vadd.f32 0.0, %v1693
      %v1695 = vpop.f32.mrb[0].mxu0
      %v1696 = vpop.f32.mrb[0].mxu0
      %v1697 = vadd.f32 0.0, %v1696
      %v1698 = vpop.f32.mrb[0].mxu0
      %1699 = vmatprep.mubr.bf16.mxu0 0
      %1700 = vmatmul.mubr.bf16.gmra.mrb[0].mxu0 %v1434
      %v1701 = vpop.f32.mrb[0].mxu0
      %v1702 = vadd.f32 0.0, %v1701
      %v1703 = vpop.f32.mrb[0].mxu0
      %v1704 = vpop.f32.mrb[0].mxu0
      %v1705 = vadd.f32 0.0, %v1704
      %v1706 = vpop.f32.mrb[0].mxu0
      %1707 = vmatprep.mubr.bf16.mxu0 0
      %1708 = vmatmul.mubr.bf16.gmra.mrb[0].mxu0 %v1437
      %v1709 = vpop.f32.mrb[0].mxu0
      %v1710 = vadd.f32 0.0, %v1709
      %v1711 = vpop.f32.mrb[0].mxu0
      %v1712 = vpop.f32.mrb[0].mxu0
      %v1713 = vadd.f32 0.0, %v1712
      %v1714 = vpop.f32.mrb[0].mxu0
      %1715 = vmatprep.mubr.bf16.mxu0 0
      %1716 = vmatmul.mubr.bf16.gmra.mrb[0].mxu0 %v1440
      %v1717 = vpop.f32.mrb[0].mxu0
      %v1718 = vadd.f32 0.0, %v1717
      %v1719 = vpop.f32.mrb[0].mxu0
      %v1720 = vpop.f32.mrb[0].mxu0
      %v1721 = vadd.f32 0.0, %v1720
      %v1722 = vpop.f32.mrb[0].mxu0
      %1723 = vmatprep.mubr.bf16.mxu0 0
      %1724 = vmatmul.mubr.bf16.gmra.mrb[0].mxu0 %v1443
      %v1725 = vpop.f32.mrb[0].mxu0
      %v1726 = vadd.f32 0.0, %v1725
      %v1727 = vpop.f32.mrb[0].mxu0
      %v1728 = vpop.f32.mrb[0].mxu0
      %v1729 = vadd.f32 0.0, %v1728
      %v1730 = vpop.f32.mrb[0].mxu0
      %1731 = vmatprep.mubr.bf16.mxu0 0
      %1732 = vmatmul.mubr.bf16.gmra.mrb[0].mxu0 %v1446
      %v1733 = vpop.f32.mrb[0].mxu0
      %v1734 = vadd.f32 0.0, %v1733
      %v1735 = vpop.f32.mrb[0].mxu0
      %v1736 = vpop.f32.mrb[0].mxu0
      %v1737 = vadd.f32 0.0, %v1736
      %v1738 = vpop.f32.mrb[0].mxu0
      %1739 = vdwg.mxu0
      %v1740 = vadd.f32 %v1000, %v1486
      %v1741 = vadd.f32 %v1003, %v1489
      %v1742 = vadd.f32 %v1008, %v1494
      %v1743 = vadd.f32 %v1011, %v1497
      %v1744 = vadd.f32 %v1016, %v1502
      %v1745 = vadd.f32 %v1019, %v1505
      %v1746 = vadd.f32 %v1024, %v1510
      %v1747 = vadd.f32 %v1027, %v1513
      %v1748 = vadd.f32 %v1032, %v1518
      %v1749 = vadd.f32 %v1035, %v1521
      %v1750 = vadd.f32 %v1040, %v1526
      %v1751 = vadd.f32 %v1043, %v1529
      %v1752 = vadd.f32 %v1048, %v1534
      %v1753 = vadd.f32 %v1051, %v1537
      %v1754 = vadd.f32 %v1056, %v1542
      %v1755 = vadd.f32 %v1059, %v1545
      %v1756 = vadd.f32 %v1064, %v1550
      %v1757 = vadd.f32 %v1067, %v1553
      %v1758 = vadd.f32 %v1072, %v1558
      %v1759 = vadd.f32 %v1075, %v1561
      %v1760 = vadd.f32 %v1080, %v1566
      %v1761 = vadd.f32 %v1083, %v1569
      %v1762 = vadd.f32 %v1088, %v1574
      %v1763 = vadd.f32 %v1091, %v1577
      %v1764 = vadd.f32 %v1096, %v1582
      %v1765 = vadd.f32 %v1099, %v1585
      %v1766 = vadd.f32 %v1104, %v1590
      %v1767 = vadd.f32 %v1107, %v1593
      %v1768 = vadd.f32 %v1112, %v1598
      %v1769 = vadd.f32 %v1115, %v1601
      %v1770 = vadd.f32 %v1120, %v1606
      %v1771 = vadd.f32 %v1123, %v1609
      %v1772 = vadd.f32 %v1128, %v1614
      %v1773 = vadd.f32 %v1131, %v1617
      %v1774 = vadd.f32 %v1136, %v1622
      %v1775 = vadd.f32 %v1139, %v1625
      %v1776 = vadd.f32 %v1144, %v1630
      %v1777 = vadd.f32 %v1147, %v1633
      %v1778 = vadd.f32 %v1152, %v1638
      %v1779 = vadd.f32 %v1155, %v1641
      %v1780 = vadd.f32 %v1160, %v1646
      %v1781 = vadd.f32 %v1163, %v1649
      %v1782 = vadd.f32 %v1168, %v1654
      %v1783 = vadd.f32 %v1171, %v1657
      %v1784 = vadd.f32 %v1176, %v1662
      %v1785 = vadd.f32 %v1179, %v1665
      %v1786 = vadd.f32 %v1184, %v1670
      %v1787 = vadd.f32 %v1187, %v1673
      %v1788 = vadd.f32 %v1192, %v1678
      %v1789 = vadd.f32 %v1195, %v1681
      %v1790 = vadd.f32 %v1200, %v1686
      %v1791 = vadd.f32 %v1203, %v1689
      %v1792 = vadd.f32 %v1208, %v1694
      %v1793 = vadd.f32 %v1211, %v1697
      %v1794 = vadd.f32 %v1216, %v1702
      %v1795 = vadd.f32 %v1219, %v1705
      %v1796 = vadd.f32 %v1224, %v1710
      %v1797 = vadd.f32 %v1227, %v1713
      %v1798 = vadd.f32 %v1232, %v1718
      %v1799 = vadd.f32 %v1235, %v1721
      %v1800 = vadd.f32 %v1240, %v1726
      %v1801 = vadd.f32 %v1243, %v1729
      %v1802 = vadd.f32 %v1248, %v1734
      %v1803 = vadd.f32 %v1251, %v1737
      %s1804 = scalar_lea.vmem %s275, 24
      %v1805 = vld [vmem:[%s1804] sm:$0xff]
      %v1806 = vld [vmem:[%s1804 + $0x8] sm:$0xff]
      %v1807 = vld [vmem:[%s1804 + $0x18] sm:$0xff]
      %v1808 = vld [vmem:[%s1804 + $0x20] sm:$0xff]
      %v1809 = vld [vmem:[%s1804 + $0x30] sm:$0xff]
      %v1810 = vld [vmem:[%s1804 + $0x38] sm:$0xff]
      %v1811 = vld [vmem:[%s1804 + $0x48] sm:$0xff]
      %v1812 = vld [vmem:[%s1804 + $0x50] sm:$0xff]
      %v1813 = vld [vmem:[%s1804 + $0x60] sm:$0xff]
      %v1814 = vld [vmem:[%s1804 + $0x68] sm:$0xff]
      %v1815 = vld [vmem:[%s1804 + $0x78] sm:$0xff]
      %v1816 = vld [vmem:[%s1804 + $0x80] sm:$0xff]
      %v1817 = vld [vmem:[%s1804 + $0x90] sm:$0xff]
      %v1818 = vld [vmem:[%s1804 + $0x98] sm:$0xff]
      %v1819 = vld [vmem:[%s1804 + $0xa8] sm:$0xff]
      %v1820 = vld [vmem:[%s1804 + $0xb0] sm:$0xff]
      %v1821 = vld [vmem:[%s1804 + $0xc0] sm:$0xff]
      %v1822 = vld [vmem:[%s1804 + $0xc8] sm:$0xff]
      %v1823 = vld [vmem:[%s1804 + $0xd8] sm:$0xff]
      %v1824 = vld [vmem:[%s1804 + $0xe0] sm:$0xff]
      %v1825 = vld [vmem:[%s1804 + $0xf0] sm:$0xff]
      %v1826 = vld [vmem:[%s1804 + $0xf8] sm:$0xff]
      %v1827 = vld [vmem:[%s1804 + $0x108] sm:$0xff]
      %v1828 = vld [vmem:[%s1804 + $0x110] sm:$0xff]
      %v1829 = vld [vmem:[%s1804 + $0x120] sm:$0xff]
      %v1830 = vld [vmem:[%s1804 + $0x128] sm:$0xff]
      %v1831 = vld [vmem:[%s1804 + $0x138] sm:$0xff]
      %v1832 = vld [vmem:[%s1804 + $0x140] sm:$0xff]
      %v1833 = vld [vmem:[%s1804 + $0x150] sm:$0xff]
      %v1834 = vld [vmem:[%s1804 + $0x158] sm:$0xff]
      %v1835 = vld [vmem:[%s1804 + $0x168] sm:$0xff]
      %v1836 = vld [vmem:[%s1804 + $0x170] sm:$0xff]
      %v1837 = vld [vmem:[%s1804 + $0x1b0] sm:$0xff]
      %v1838 = vld [vmem:[%s1804 + $0x1b8] sm:$0xff]
      %v1839 = vld [vmem:[%s1804 + $0x1c8] sm:$0xff]
      %v1840 = vld [vmem:[%s1804 + $0x1d0] sm:$0xff]
      %v1841 = vld [vmem:[%s1804 + $0x1e0] sm:$0xff]
      %v1842 = vld [vmem:[%s1804 + $0x1e8] sm:$0xff]
      %v1843 = vld [vmem:[%s1804 + $0x1f8] sm:$0xff]
      %v1844 = vld [vmem:[%s1804 + $0x200] sm:$0xff]
      %v1845 = vld [vmem:[%s1804 + $0x210] sm:$0xff]
      %v1846 = vld [vmem:[%s1804 + $0x218] sm:$0xff]
      %v1847 = vld [vmem:[%s1804 + $0x228] sm:$0xff]
      %v1848 = vld [vmem:[%s1804 + $0x230] sm:$0xff]
      %v1849 = vld [vmem:[%s1804 + $0x240] sm:$0xff]
      %v1850 = vld [vmem:[%s1804 + $0x248] sm:$0xff]
      %v1851 = vld [vmem:[%s1804 + $0x258] sm:$0xff]
      %v1852 = vld [vmem:[%s1804 + $0x260] sm:$0xff]
      %v1853 = vld [vmem:[%s1804 + $0x270] sm:$0xff]
      %v1854 = vld [vmem:[%s1804 + $0x278] sm:$0xff]
      %v1855 = vld [vmem:[%s1804 + $0x288] sm:$0xff]
      %v1856 = vld [vmem:[%s1804 + $0x290] sm:$0xff]
      %v1857 = vld [vmem:[%s1804 + $0x2a0] sm:$0xff]
      %v1858 = vld [vmem:[%s1804 + $0x2a8] sm:$0xff]
      %v1859 = vld [vmem:[%s1804 + $0x2b8] sm:$0xff]
      %v1860 = vld [vmem:[%s1804 + $0x2c0] sm:$0xff]
      %v1861 = vld [vmem:[%s1804 + $0x2d0] sm:$0xff]
      %v1862 = vld [vmem:[%s1804 + $0x2d8] sm:$0xff]
      %v1863 = vld [vmem:[%s1804 + $0x2e8] sm:$0xff]
      %v1864 = vld [vmem:[%s1804 + $0x2f0] sm:$0xff]
      %v1865 = vld [vmem:[%s1804 + $0x300] sm:$0xff]
      %v1866 = vld [vmem:[%s1804 + $0x308] sm:$0xff]
      %v1867 = vld [vmem:[%s1804 + $0x318] sm:$0xff]
      %v1868 = vld [vmem:[%s1804 + $0x320] sm:$0xff]
      %v1869 = vpack.c.bf16 %v1806, %v1805
      %v1870 = vpack.c.bf16 %v1808, %v1807
      %v1871 = vpack.c.bf16 %v1810, %v1809
      %v1872 = vpack.c.bf16 %v1812, %v1811
      %v1873 = vpack.c.bf16 %v1814, %v1813
      %v1874 = vpack.c.bf16 %v1816, %v1815
      %v1875 = vpack.c.bf16 %v1818, %v1817
      %v1876 = vpack.c.bf16 %v1820, %v1819
      %v1877 = vpack.c.bf16 %v1822, %v1821
      %v1878 = vpack.c.bf16 %v1824, %v1823
      %v1879 = vpack.c.bf16 %v1826, %v1825
      %v1880 = vpack.c.bf16 %v1828, %v1827
      %v1881 = vpack.c.bf16 %v1830, %v1829
      %v1882 = vpack.c.bf16 %v1832, %v1831
      %v1883 = vpack.c.bf16 %v1834, %v1833
      %v1884 = vpack.c.bf16 %v1836, %v1835
      %v1885 = vpack.c.bf16 %v1838, %v1837
      %v1886 = vpack.c.bf16 %v1840, %v1839
      %v1887 = vpack.c.bf16 %v1842, %v1841
      %v1888 = vpack.c.bf16 %v1844, %v1843
      %v1889 = vpack.c.bf16 %v1846, %v1845
      %v1890 = vpack.c.bf16 %v1848, %v1847
      %v1891 = vpack.c.bf16 %v1850, %v1849
      %v1892 = vpack.c.bf16 %v1852, %v1851
      %v1893 = vpack.c.bf16 %v1854, %v1853
      %v1894 = vpack.c.bf16 %v1856, %v1855
      %v1895 = vpack.c.bf16 %v1858, %v1857
      %v1896 = vpack.c.bf16 %v1860, %v1859
      %v1897 = vpack.c.bf16 %v1862, %v1861
      %v1898 = vpack.c.bf16 %v1864, %v1863
      %v1899 = vpack.c.bf16 %v1866, %v1865
      %v1900 = vpack.c.bf16 %v1868, %v1867
      %s1901 = scalar_lea.vmem %s1, 12
      %v1902 = vld [vmem:[%s1901] sm:$0xf]
      %v1904 = vsel %vm476, %v1869, 0
      %v1907 = vsel %vm476, %v1870, 0
      %v1910 = vsel %vm476, %v1871, 0
      %v1913 = vsel %vm476, %v1872, 0
      %v1916 = vsel %vm476, %v1873, 0
      %v1919 = vsel %vm476, %v1874, 0
      %v1922 = vsel %vm476, %v1875, 0
      %v1925 = vsel %vm476, %v1876, 0
      %v1928 = vsel %vm476, %v1877, 0
      %v1931 = vsel %vm476, %v1878, 0
      %v1934 = vsel %vm476, %v1879, 0
      %v1937 = vsel %vm476, %v1880, 0
      %v1940 = vsel %vm476, %v1881, 0
      %v1943 = vsel %vm476, %v1882, 0
      %v1946 = vsel %vm476, %v1883, 0
      %v1949 = vsel %vm476, %v1884, 0
      %v1952 = vsel %vm476, %v1885, 0
      %v1955 = vsel %vm476, %v1886, 0
      %v1958 = vsel %vm476, %v1887, 0
      %v1961 = vsel %vm476, %v1888, 0
      %v1964 = vsel %vm476, %v1889, 0
      %v1967 = vsel %vm476, %v1890, 0
      %v1970 = vsel %vm476, %v1891, 0
      %v1973 = vsel %vm476, %v1892, 0
      %v1976 = vsel %vm476, %v1893, 0
      %v1979 = vsel %vm476, %v1894, 0
      %v1982 = vsel %vm476, %v1895, 0
      %v1985 = vsel %vm476, %v1896, 0
      %v1988 = vsel %vm476, %v1897, 0
      %v1991 = vsel %vm476, %v1898, 0
      %v1994 = vsel %vm476, %v1899, 0
      %v1997 = vsel %vm476, %v1900, 0
      %v2000 = vsel %vm573, %v1902, 0
      %2002 = vmatprep.subr.bf16.mxu0 0
      %2003 = vmatpush1.bf16.msra.mxu0 %v2000
      %2004 = vmatprep.subr.bf16.mxu0 0
      %2005 = vmatpush1.bf16.msra.mxu0 0
      %2006 = vmatprep.subr.bf16.mxu0 0
      %2007 = vmatpush1.bf16.msra.mxu0 0
      %2008 = vmatprep.subr.bf16.mxu0 0
      %2009 = vmatpush1.bf16.msra.mxu0 0
      %2010 = vmatprep.subr.bf16.mxu0 0
      %2011 = vmatpush1.bf16.msra.mxu0 0
      %2012 = vmatprep.subr.bf16.mxu0 0
      %2013 = vmatpush1.bf16.msra.mxu0 0
      %2014 = vmatprep.subr.bf16.mxu0 0
      %2015 = vmatpush1.bf16.msra.mxu0 0
      %2016 = vmatprep.subr.bf16.mxu0 0
      %2017 = vmatpush1.bf16.msra.mxu0 0
      %2018 = vmatprep.subr.bf16.mxu0 0
      %2019 = vmatpush1.bf16.msra.mxu0 0
      %2020 = vmatprep.subr.bf16.mxu0 0
      %2021 = vmatpush1.bf16.msra.mxu0 0
      %2022 = vmatprep.subr.bf16.mxu0 0
      %2023 = vmatpush1.bf16.msra.mxu0 0
      %2024 = vmatprep.subr.bf16.mxu0 0
      %2025 = vmatpush1.bf16.msra.mxu0 0
      %2026 = vmatprep.subr.bf16.mxu0 0
      %2027 = vmatpush1.bf16.msra.mxu0 0
      %2028 = vmatprep.subr.bf16.mxu0 0
      %2029 = vmatpush1.bf16.msra.mxu0 0
      %2030 = vmatprep.subr.bf16.mxu0 0
      %2031 = vmatpush1.bf16.msra.mxu0 0
      %2032 = vmatprep.subr.bf16.mxu0 0
      %2033 = vmatpush1.bf16.msra.mxu0 0
      %2034 = vmatprep.mubr.bf16.mxu0 0
      %2035 = vmatmul.mubr.bf16.gmra.mrb[0].mxu0 %v1904
      %v2036 = vpop.f32.mrb[0].mxu0
      %v2037 = vadd.f32 0.0, %v2036
      %v2038 = vpop.f32.mrb[0].mxu0
      %v2039 = vpop.f32.mrb[0].mxu0
      %v2040 = vadd.f32 0.0, %v2039
      %v2041 = vpop.f32.mrb[0].mxu0
      %2042 = vmatprep.mubr.bf16.mxu0 0
      %2043 = vmatmul.mubr.bf16.gmra.mrb[0].mxu0 %v1907
      %v2044 = vpop.f32.mrb[0].mxu0
      %v2045 = vadd.f32 0.0, %v2044
      %v2046 = vpop.f32.mrb[0].mxu0
      %v2047 = vpop.f32.mrb[0].mxu0
      %v2048 = vadd.f32 0.0, %v2047
      %v2049 = vpop.f32.mrb[0].mxu0
      %2050 = vmatprep.mubr.bf16.mxu0 0
      %2051 = vmatmul.mubr.bf16.gmra.mrb[0].mxu0 %v1910
      %v2052 = vpop.f32.mrb[0].mxu0
      %v2053 = vadd.f32 0.0, %v2052
      %v2054 = vpop.f32.mrb[0].mxu0
      %v2055 = vpop.f32.mrb[0].mxu0
      %v2056 = vadd.f32 0.0, %v2055
      %v2057 = vpop.f32.mrb[0].mxu0
      %2058 = vmatprep.mubr.bf16.mxu0 0
      %2059 = vmatmul.mubr.bf16.gmra.mrb[0].mxu0 %v1913
      %v2060 = vpop.f32.mrb[0].mxu0
      %v2061 = vadd.f32 0.0, %v2060
      %v2062 = vpop.f32.mrb[0].mxu0
      %v2063 = vpop.f32.mrb[0].mxu0
      %v2064 = vadd.f32 0.0, %v2063
      %v2065 = vpop.f32.mrb[0].mxu0
      %2066 = vmatprep.mubr.bf16.mxu0 0
      %2067 = vmatmul.mubr.bf16.gmra.mrb[0].mxu0 %v1916
      %v2068 = vpop.f32.mrb[0].mxu0
      %v2069 = vadd.f32 0.0, %v2068
      %v2070 = vpop.f32.mrb[0].mxu0
      %v2071 = vpop.f32.mrb[0].mxu0
      %v2072 = vadd.f32 0.0, %v2071
      %v2073 = vpop.f32.mrb[0].mxu0
      %2074 = vmatprep.mubr.bf16.mxu0 0
      %2075 = vmatmul.mubr.bf16.gmra.mrb[0].mxu0 %v1919
      %v2076 = vpop.f32.mrb[0].mxu0
      %v2077 = vadd.f32 0.0, %v2076
      %v2078 = vpop.f32.mrb[0].mxu0
      %v2079 = vpop.f32.mrb[0].mxu0
      %v2080 = vadd.f32 0.0, %v2079
      %v2081 = vpop.f32.mrb[0].mxu0
      %2082 = vmatprep.mubr.bf16.mxu0 0
      %2083 = vmatmul.mubr.bf16.gmra.mrb[0].mxu0 %v1922
      %v2084 = vpop.f32.mrb[0].mxu0
      %v2085 = vadd.f32 0.0, %v2084
      %v2086 = vpop.f32.mrb[0].mxu0
      %v2087 = vpop.f32.mrb[0].mxu0
      %v2088 = vadd.f32 0.0, %v2087
      %v2089 = vpop.f32.mrb[0].mxu0
      %2090 = vmatprep.mubr.bf16.mxu0 0
      %2091 = vmatmul.mubr.bf16.gmra.mrb[0].mxu0 %v1925
      %v2092 = vpop.f32.mrb[0].mxu0
      %v2093 = vadd.f32 0.0, %v2092
      %v2094 = vpop.f32.mrb[0].mxu0
      %v2095 = vpop.f32.mrb[0].mxu0
      %v2096 = vadd.f32 0.0, %v2095
      %v2097 = vpop.f32.mrb[0].mxu0
      %2098 = vmatprep.mubr.bf16.mxu0 0
      %2099 = vmatmul.mubr.bf16.gmra.mrb[0].mxu0 %v1928
      %v2100 = vpop.f32.mrb[0].mxu0
      %v2101 = vadd.f32 0.0, %v2100
      %v2102 = vpop.f32.mrb[0].mxu0
      %v2103 = vpop.f32.mrb[0].mxu0
      %v2104 = vadd.f32 0.0, %v2103
      %v2105 = vpop.f32.mrb[0].mxu0
      %2106 = vmatprep.mubr.bf16.mxu0 0
      %2107 = vmatmul.mubr.bf16.gmra.mrb[0].mxu0 %v1931
      %v2108 = vpop.f32.mrb[0].mxu0
      %v2109 = vadd.f32 0.0, %v2108
      %v2110 = vpop.f32.mrb[0].mxu0
      %v2111 = vpop.f32.mrb[0].mxu0
      %v2112 = vadd.f32 0.0, %v2111
      %v2113 = vpop.f32.mrb[0].mxu0
      %2114 = vmatprep.mubr.bf16.mxu0 0
      %2115 = vmatmul.mubr.bf16.gmra.mrb[0].mxu0 %v1934
      %v2116 = vpop.f32.mrb[0].mxu0
      %v2117 = vadd.f32 0.0, %v2116
      %v2118 = vpop.f32.mrb[0].mxu0
      %v2119 = vpop.f32.mrb[0].mxu0
      %v2120 = vadd.f32 0.0, %v2119
      %v2121 = vpop.f32.mrb[0].mxu0
      %2122 = vmatprep.mubr.bf16.mxu0 0
      %2123 = vmatmul.mubr.bf16.gmra.mrb[0].mxu0 %v1937
      %v2124 = vpop.f32.mrb[0].mxu0
      %v2125 = vadd.f32 0.0, %v2124
      %v2126 = vpop.f32.mrb[0].mxu0
      %v2127 = vpop.f32.mrb[0].mxu0
      %v2128 = vadd.f32 0.0, %v2127
      %v2129 = vpop.f32.mrb[0].mxu0
      %2130 = vmatprep.mubr.bf16.mxu0 0
      %2131 = vmatmul.mubr.bf16.gmra.mrb[0].mxu0 %v1940
      %v2132 = vpop.f32.mrb[0].mxu0
      %v2133 = vadd.f32 0.0, %v2132
      %v2134 = vpop.f32.mrb[0].mxu0
      %v2135 = vpop.f32.mrb[0].mxu0
      %v2136 = vadd.f32 0.0, %v2135
      %v2137 = vpop.f32.mrb[0].mxu0
      %2138 = vmatprep.mubr.bf16.mxu0 0
      %2139 = vmatmul.mubr.bf16.gmra.mrb[0].mxu0 %v1943
      %v2140 = vpop.f32.mrb[0].mxu0
      %v2141 = vadd.f32 0.0, %v2140
      %v2142 = vpop.f32.mrb[0].mxu0
      %v2143 = vpop.f32.mrb[0].mxu0
      %v2144 = vadd.f32 0.0, %v2143
      %v2145 = vpop.f32.mrb[0].mxu0
      %2146 = vmatprep.mubr.bf16.mxu0 0
      %2147 = vmatmul.mubr.bf16.gmra.mrb[0].mxu0 %v1946
      %v2148 = vpop.f32.mrb[0].mxu0
      %v2149 = vadd.f32 0.0, %v2148
      %v2150 = vpop.f32.mrb[0].mxu0
      %v2151 = vpop.f32.mrb[0].mxu0
      %v2152 = vadd.f32 0.0, %v2151
      %v2153 = vpop.f32.mrb[0].mxu0
      %2154 = vmatprep.mubr.bf16.mxu0 0
      %2155 = vmatmul.mubr.bf16.gmra.mrb[0].mxu0 %v1949
      %v2156 = vpop.f32.mrb[0].mxu0
      %v2157 = vadd.f32 0.0, %v2156
      %v2158 = vpop.f32.mrb[0].mxu0
      %v2159 = vpop.f32.mrb[0].mxu0
      %v2160 = vadd.f32 0.0, %v2159
      %v2161 = vpop.f32.mrb[0].mxu0
      %2162 = vmatprep.mubr.bf16.mxu0 0
      %2163 = vmatmul.mubr.bf16.gmra.mrb[0].mxu0 %v1952
      %v2164 = vpop.f32.mrb[0].mxu0
      %v2165 = vadd.f32 0.0, %v2164
      %v2166 = vpop.f32.mrb[0].mxu0
      %v2167 = vpop.f32.mrb[0].mxu0
      %v2168 = vadd.f32 0.0, %v2167
      %v2169 = vpop.f32.mrb[0].mxu0
      %2170 = vmatprep.mubr.bf16.mxu0 0
      %2171 = vmatmul.mubr.bf16.gmra.mrb[0].mxu0 %v1955
      %v2172 = vpop.f32.mrb[0].mxu0
      %v2173 = vadd.f32 0.0, %v2172
      %v2174 = vpop.f32.mrb[0].mxu0
      %v2175 = vpop.f32.mrb[0].mxu0
      %v2176 = vadd.f32 0.0, %v2175
      %v2177 = vpop.f32.mrb[0].mxu0
      %2178 = vmatprep.mubr.bf16.mxu0 0
      %2179 = vmatmul.mubr.bf16.gmra.mrb[0].mxu0 %v1958
      %v2180 = vpop.f32.mrb[0].mxu0
      %v2181 = vadd.f32 0.0, %v2180
      %v2182 = vpop.f32.mrb[0].mxu0
      %v2183 = vpop.f32.mrb[0].mxu0
      %v2184 = vadd.f32 0.0, %v2183
      %v2185 = vpop.f32.mrb[0].mxu0
      %2186 = vmatprep.mubr.bf16.mxu0 0
      %2187 = vmatmul.mubr.bf16.gmra.mrb[0].mxu0 %v1961
      %v2188 = vpop.f32.mrb[0].mxu0
      %v2189 = vadd.f32 0.0, %v2188
      %v2190 = vpop.f32.mrb[0].mxu0
      %v2191 = vpop.f32.mrb[0].mxu0
      %v2192 = vadd.f32 0.0, %v2191
      %v2193 = vpop.f32.mrb[0].mxu0
      %2194 = vmatprep.mubr.bf16.mxu0 0
      %2195 = vmatmul.mubr.bf16.gmra.mrb[0].mxu0 %v1964
      %v2196 = vpop.f32.mrb[0].mxu0
      %v2197 = vadd.f32 0.0, %v2196
      %v2198 = vpop.f32.mrb[0].mxu0
      %v2199 = vpop.f32.mrb[0].mxu0
      %v2200 = vadd.f32 0.0, %v2199
      %v2201 = vpop.f32.mrb[0].mxu0
      %2202 = vmatprep.mubr.bf16.mxu0 0
      %2203 = vmatmul.mubr.bf16.gmra.mrb[0].mxu0 %v1967
      %v2204 = vpop.f32.mrb[0].mxu0
      %v2205 = vadd.f32 0.0, %v2204
      %v2206 = vpop.f32.mrb[0].mxu0
      %v2207 = vpop.f32.mrb[0].mxu0
      %v2208 = vadd.f32 0.0, %v2207
      %v2209 = vpop.f32.mrb[0].mxu0
      %2210 = vmatprep.mubr.bf16.mxu0 0
      %2211 = vmatmul.mubr.bf16.gmra.mrb[0].mxu0 %v1970
      %v2212 = vpop.f32.mrb[0].mxu0
      %v2213 = vadd.f32 0.0, %v2212
      %v2214 = vpop.f32.mrb[0].mxu0
      %v2215 = vpop.f32.mrb[0].mxu0
      %v2216 = vadd.f32 0.0, %v2215
      %v2217 = vpop.f32.mrb[0].mxu0
      %2218 = vmatprep.mubr.bf16.mxu0 0
      %2219 = vmatmul.mubr.bf16.gmra.mrb[0].mxu0 %v1973
      %v2220 = vpop.f32.mrb[0].mxu0
      %v2221 = vadd.f32 0.0, %v2220
      %v2222 = vpop.f32.mrb[0].mxu0
      %v2223 = vpop.f32.mrb[0].mxu0
      %v2224 = vadd.f32 0.0, %v2223
      %v2225 = vpop.f32.mrb[0].mxu0
      %2226 = vmatprep.mubr.bf16.mxu0 0
      %2227 = vmatmul.mubr.bf16.gmra.mrb[0].mxu0 %v1976
      %v2228 = vpop.f32.mrb[0].mxu0
      %v2229 = vadd.f32 0.0, %v2228
      %v2230 = vpop.f32.mrb[0].mxu0
      %v2231 = vpop.f32.mrb[0].mxu0
      %v2232 = vadd.f32 0.0, %v2231
      %v2233 = vpop.f32.mrb[0].mxu0
      %2234 = vmatprep.mubr.bf16.mxu0 0
      %2235 = vmatmul.mubr.bf16.gmra.mrb[0].mxu0 %v1979
      %v2236 = vpop.f32.mrb[0].mxu0
      %v2237 = vadd.f32 0.0, %v2236
      %v2238 = vpop.f32.mrb[0].mxu0
      %v2239 = vpop.f32.mrb[0].mxu0
      %v2240 = vadd.f32 0.0, %v2239
      %v2241 = vpop.f32.mrb[0].mxu0
      %2242 = vmatprep.mubr.bf16.mxu0 0
      %2243 = vmatmul.mubr.bf16.gmra.mrb[0].mxu0 %v1982
      %v2244 = vpop.f32.mrb[0].mxu0
      %v2245 = vadd.f32 0.0, %v2244
      %v2246 = vpop.f32.mrb[0].mxu0
      %v2247 = vpop.f32.mrb[0].mxu0
      %v2248 = vadd.f32 0.0, %v2247
      %v2249 = vpop.f32.mrb[0].mxu0
      %2250 = vmatprep.mubr.bf16.mxu0 0
      %2251 = vmatmul.mubr.bf16.gmra.mrb[0].mxu0 %v1985
      %v2252 = vpop.f32.mrb[0].mxu0
      %v2253 = vadd.f32 0.0, %v2252
      %v2254 = vpop.f32.mrb[0].mxu0
      %v2255 = vpop.f32.mrb[0].mxu0
      %v2256 = vadd.f32 0.0, %v2255
      %v2257 = vpop.f32.mrb[0].mxu0
      %2258 = vmatprep.mubr.bf16.mxu0 0
      %2259 = vmatmul.mubr.bf16.gmra.mrb[0].mxu0 %v1988
      %v2260 = vpop.f32.mrb[0].mxu0
      %v2261 = vadd.f32 0.0, %v2260
      %v2262 = vpop.f32.mrb[0].mxu0
      %v2263 = vpop.f32.mrb[0].mxu0
      %v2264 = vadd.f32 0.0, %v2263
      %v2265 = vpop.f32.mrb[0].mxu0
      %2266 = vmatprep.mubr.bf16.mxu0 0
      %2267 = vmatmul.mubr.bf16.gmra.mrb[0].mxu0 %v1991
      %v2268 = vpop.f32.mrb[0].mxu0
      %v2269 = vadd.f32 0.0, %v2268
      %v2270 = vpop.f32.mrb[0].mxu0
      %v2271 = vpop.f32.mrb[0].mxu0
      %v2272 = vadd.f32 0.0, %v2271
      %v2273 = vpop.f32.mrb[0].mxu0
      %2274 = vmatprep.mubr.bf16.mxu0 0
      %2275 = vmatmul.mubr.bf16.gmra.mrb[0].mxu0 %v1994
      %v2276 = vpop.f32.mrb[0].mxu0
      %v2277 = vadd.f32 0.0, %v2276
      %v2278 = vpop.f32.mrb[0].mxu0
      %v2279 = vpop.f32.mrb[0].mxu0
      %v2280 = vadd.f32 0.0, %v2279
      %v2281 = vpop.f32.mrb[0].mxu0
      %2282 = vmatprep.mubr.bf16.mxu0 0
      %2283 = vmatmul.mubr.bf16.gmra.mrb[0].mxu0 %v1997
      %v2284 = vpop.f32.mrb[0].mxu0
      %v2285 = vadd.f32 0.0, %v2284
      %v2286 = vpop.f32.mrb[0].mxu0
      %v2287 = vpop.f32.mrb[0].mxu0
      %v2288 = vadd.f32 0.0, %v2287
      %v2289 = vpop.f32.mrb[0].mxu0
      %2290 = vdwg.mxu0
      %v2291 = vadd.f32 %v1740, %v2037
      %v2292 = vadd.f32 %v1741, %v2040
      %v2293 = vadd.f32 %v1742, %v2045
      %v2294 = vadd.f32 %v1743, %v2048
      %v2295 = vadd.f32 %v1744, %v2053
      %v2296 = vadd.f32 %v1745, %v2056
      %v2297 = vadd.f32 %v1746, %v2061
      %v2298 = vadd.f32 %v1747, %v2064
      %v2299 = vadd.f32 %v1748, %v2069
      %v2300 = vadd.f32 %v1749, %v2072
      %v2301 = vadd.f32 %v1750, %v2077
      %v2302 = vadd.f32 %v1751, %v2080
      %v2303 = vadd.f32 %v1752, %v2085
      %v2304 = vadd.f32 %v1753, %v2088
      %v2305 = vadd.f32 %v1754, %v2093
      %v2306 = vadd.f32 %v1755, %v2096
      %v2307 = vadd.f32 %v1756, %v2101
      %v2308 = vadd.f32 %v1757, %v2104
      %v2309 = vadd.f32 %v1758, %v2109
      %v2310 = vadd.f32 %v1759, %v2112
      %v2311 = vadd.f32 %v1760, %v2117
      %v2312 = vadd.f32 %v1761, %v2120
      %v2313 = vadd.f32 %v1762, %v2125
      %v2314 = vadd.f32 %v1763, %v2128
      %v2315 = vadd.f32 %v1764, %v2133
      %v2316 = vadd.f32 %v1765, %v2136
      %v2317 = vadd.f32 %v1766, %v2141
      %v2318 = vadd.f32 %v1767, %v2144
      %v2319 = vadd.f32 %v1768, %v2149
      %v2320 = vadd.f32 %v1769, %v2152
      %v2321 = vadd.f32 %v1770, %v2157
      %v2322 = vadd.f32 %v1771, %v2160
      %v2323 = vadd.f32 %v1772, %v2165
      %v2324 = vadd.f32 %v1773, %v2168
      %v2325 = vadd.f32 %v1774, %v2173
      %v2326 = vadd.f32 %v1775, %v2176
      %v2327 = vadd.f32 %v1776, %v2181
      %v2328 = vadd.f32 %v1777, %v2184
      %v2329 = vadd.f32 %v1778, %v2189
      %v2330 = vadd.f32 %v1779, %v2192
      %v2331 = vadd.f32 %v1780, %v2197
      %v2332 = vadd.f32 %v1781, %v2200
      %v2333 = vadd.f32 %v1782, %v2205
      %v2334 = vadd.f32 %v1783, %v2208
      %v2335 = vadd.f32 %v1784, %v2213
      %v2336 = vadd.f32 %v1785, %v2216
      %v2337 = vadd.f32 %v1786, %v2221
      %v2338 = vadd.f32 %v1787, %v2224
      %v2339 = vadd.f32 %v1788, %v2229
      %v2340 = vadd.f32 %v1789, %v2232
      %v2341 = vadd.f32 %v1790, %v2237
      %v2342 = vadd.f32 %v1791, %v2240
      %v2343 = vadd.f32 %v1792, %v2245
      %v2344 = vadd.f32 %v1793, %v2248
      %v2345 = vadd.f32 %v1794, %v2253
      %v2346 = vadd.f32 %v1795, %v2256
      %v2347 = vadd.f32 %v1796, %v2261
      %v2348 = vadd.f32 %v1797, %v2264
      %v2349 = vadd.f32 %v1798, %v2269
      %v2350 = vadd.f32 %v1799, %v2272
      %v2351 = vadd.f32 %v1800, %v2277
      %v2352 = vadd.f32 %v1801, %v2280
      %v2353 = vadd.f32 %v1802, %v2285
      %v2354 = vadd.f32 %v1803, %v2288
      %v2355 = vld [vmem:[%s1804 + $0x1] sm:$0xff]
      %v2356 = vld [vmem:[%s1804 + $0x9] sm:$0xff]
      %v2357 = vld [vmem:[%s1804 + $0x19] sm:$0xff]
      %v2358 = vld [vmem:[%s1804 + $0x21] sm:$0xff]
      %v2359 = vld [vmem:[%s1804 + $0x31] sm:$0xff]
      %v2360 = vld [vmem:[%s1804 + $0x39] sm:$0xff]
      %v2361 = vld [vmem:[%s1804 + $0x49] sm:$0xff]
      %v2362 = vld [vmem:[%s1804 + $0x51] sm:$0xff]
      %v2363 = vld [vmem:[%s1804 + $0x61] sm:$0xff]
      %v2364 = vld [vmem:[%s1804 + $0x69] sm:$0xff]
      %v2365 = vld [vmem:[%s1804 + $0x79] sm:$0xff]
      %v2366 = vld [vmem:[%s1804 + $0x81] sm:$0xff]
      %v2367 = vld [vmem:[%s1804 + $0x91] sm:$0xff]
      %v2368 = vld [vmem:[%s1804 + $0x99] sm:$0xff]
      %v2369 = vld [vmem:[%s1804 + $0xa9] sm:$0xff]
      %v2370 = vld [vmem:[%s1804 + $0xb1] sm:$0xff]
      %v2371 = vld [vmem:[%s1804 + $0xc1] sm:$0xff]
      %v2372 = vld [vmem:[%s1804 + $0xc9] sm:$0xff]
      %v2373 = vld [vmem:[%s1804 + $0xd9] sm:$0xff]
      %v2374 = vld [vmem:[%s1804 + $0xe1] sm:$0xff]
      %v2375 = vld [vmem:[%s1804 + $0xf1] sm:$0xff]
      %v2376 = vld [vmem:[%s1804 + $0xf9] sm:$0xff]
      %v2377 = vld [vmem:[%s1804 + $0x109] sm:$0xff]
      %v2378 = vld [vmem:[%s1804 + $0x111] sm:$0xff]
      %v2379 = vld [vmem:[%s1804 + $0x121] sm:$0xff]
      %v2380 = vld [vmem:[%s1804 + $0x129] sm:$0xff]
      %v2381 = vld [vmem:[%s1804 + $0x139] sm:$0xff]
      %v2382 = vld [vmem:[%s1804 + $0x141] sm:$0xff]
      %v2383 = vld [vmem:[%s1804 + $0x151] sm:$0xff]
      %v2384 = vld [vmem:[%s1804 + $0x159] sm:$0xff]
      %v2385 = vld [vmem:[%s1804 + $0x169] sm:$0xff]
      %v2386 = vld [vmem:[%s1804 + $0x171] sm:$0xff]
      %v2387 = vld [vmem:[%s1804 + $0x1b1] sm:$0xff]
      %v2388 = vld [vmem:[%s1804 + $0x1b9] sm:$0xff]
      %v2389 = vld [vmem:[%s1804 + $0x1c9] sm:$0xff]
      %v2390 = vld [vmem:[%s1804 + $0x1d1] sm:$0xff]
      %v2391 = vld [vmem:[%s1804 + $0x1e1] sm:$0xff]
      %v2392 = vld [vmem:[%s1804 + $0x1e9] sm:$0xff]
      %v2393 = vld [vmem:[%s1804 + $0x1f9] sm:$0xff]
      %v2394 = vld [vmem:[%s1804 + $0x201] sm:$0xff]
      %v2395 = vld [vmem:[%s1804 + $0x211] sm:$0xff]
      %v2396 = vld [vmem:[%s1804 + $0x219] sm:$0xff]
      %v2397 = vld [vmem:[%s1804 + $0x229] sm:$0xff]
      %v2398 = vld [vmem:[%s1804 + $0x231] sm:$0xff]
      %v2399 = vld [vmem:[%s1804 + $0x241] sm:$0xff]
      %v2400 = vld [vmem:[%s1804 + $0x249] sm:$0xff]
      %v2401 = vld [vmem:[%s1804 + $0x259] sm:$0xff]
      %v2402 = vld [vmem:[%s1804 + $0x261] sm:$0xff]
      %v2403 = vld [vmem:[%s1804 + $0x271] sm:$0xff]
      %v2404 = vld [vmem:[%s1804 + $0x279] sm:$0xff]
      %v2405 = vld [vmem:[%s1804 + $0x289] sm:$0xff]
      %v2406 = vld [vmem:[%s1804 + $0x291] sm:$0xff]
      %v2407 = vld [vmem:[%s1804 + $0x2a1] sm:$0xff]
      %v2408 = vld [vmem:[%s1804 + $0x2a9] sm:$0xff]
      %v2409 = vld [vmem:[%s1804 + $0x2b9] sm:$0xff]
      %v2410 = vld [vmem:[%s1804 + $0x2c1] sm:$0xff]
      %v2411 = vld [vmem:[%s1804 + $0x2d1] sm:$0xff]
      %v2412 = vld [vmem:[%s1804 + $0x2d9] sm:$0xff]
      %v2413 = vld [vmem:[%s1804 + $0x2e9] sm:$0xff]
      %v2414 = vld [vmem:[%s1804 + $0x2f1] sm:$0xff]
      %v2415 = vld [vmem:[%s1804 + $0x301] sm:$0xff]
      %v2416 = vld [vmem:[%s1804 + $0x309] sm:$0xff]
      %v2417 = vld [vmem:[%s1804 + $0x319] sm:$0xff]
      %v2418 = vld [vmem:[%s1804 + $0x321] sm:$0xff]
      %v2419 = vpack.c.bf16 %v2356, %v2355
      %v2420 = vpack.c.bf16 %v2358, %v2357
      %v2421 = vpack.c.bf16 %v2360, %v2359
      %v2422 = vpack.c.bf16 %v2362, %v2361
      %v2423 = vpack.c.bf16 %v2364, %v2363
      %v2424 = vpack.c.bf16 %v2366, %v2365
      %v2425 = vpack.c.bf16 %v2368, %v2367
      %v2426 = vpack.c.bf16 %v2370, %v2369
      %v2427 = vpack.c.bf16 %v2372, %v2371
      %v2428 = vpack.c.bf16 %v2374, %v2373
      %v2429 = vpack.c.bf16 %v2376, %v2375
      %v2430 = vpack.c.bf16 %v2378, %v2377
      %v2431 = vpack.c.bf16 %v2380, %v2379
      %v2432 = vpack.c.bf16 %v2382, %v2381
      %v2433 = vpack.c.bf16 %v2384, %v2383
      %v2434 = vpack.c.bf16 %v2386, %v2385
      %v2435 = vpack.c.bf16 %v2388, %v2387
      %v2436 = vpack.c.bf16 %v2390, %v2389
      %v2437 = vpack.c.bf16 %v2392, %v2391
      %v2438 = vpack.c.bf16 %v2394, %v2393
      %v2439 = vpack.c.bf16 %v2396, %v2395
      %v2440 = vpack.c.bf16 %v2398, %v2397
      %v2441 = vpack.c.bf16 %v2400, %v2399
      %v2442 = vpack.c.bf16 %v2402, %v2401
      %v2443 = vpack.c.bf16 %v2404, %v2403
      %v2444 = vpack.c.bf16 %v2406, %v2405
      %v2445 = vpack.c.bf16 %v2408, %v2407
      %v2446 = vpack.c.bf16 %v2410, %v2409
      %v2447 = vpack.c.bf16 %v2412, %v2411
      %v2448 = vpack.c.bf16 %v2414, %v2413
      %v2449 = vpack.c.bf16 %v2416, %v2415
      %v2450 = vpack.c.bf16 %v2418, %v2417
      %s2451 = scalar_lea.vmem %s1, 16
      %v2452 = vld [vmem:[%s2451] sm:$0xf]
      %v2454 = vsel %vm476, %v2419, 0
      %v2457 = vsel %vm476, %v2420, 0
      %v2460 = vsel %vm476, %v2421, 0
      %v2463 = vsel %vm476, %v2422, 0
      %v2466 = vsel %vm476, %v2423, 0
      %v2469 = vsel %vm476, %v2424, 0
      %v2472 = vsel %vm476, %v2425, 0
      %v2475 = vsel %vm476, %v2426, 0
      %v2478 = vsel %vm476, %v2427, 0
      %v2481 = vsel %vm476, %v2428, 0
      %v2484 = vsel %vm476, %v2429, 0
      %v2487 = vsel %vm476, %v2430, 0
      %v2490 = vsel %vm476, %v2431, 0
      %v2493 = vsel %vm476, %v2432, 0
      %v2496 = vsel %vm476, %v2433, 0
      %v2499 = vsel %vm476, %v2434, 0
      %v2502 = vsel %vm476, %v2435, 0
      %v2505 = vsel %vm476, %v2436, 0
      %v2508 = vsel %vm476, %v2437, 0
      %v2511 = vsel %vm476, %v2438, 0
      %v2514 = vsel %vm476, %v2439, 0
      %v2517 = vsel %vm476, %v2440, 0
      %v2520 = vsel %vm476, %v2441, 0
      %v2523 = vsel %vm476, %v2442, 0
      %v2526 = vsel %vm476, %v2443, 0
      %v2529 = vsel %vm476, %v2444, 0
      %v2532 = vsel %vm476, %v2445, 0
      %v2535 = vsel %vm476, %v2446, 0
      %v2538 = vsel %vm476, %v2447, 0
      %v2541 = vsel %vm476, %v2448, 0
      %v2544 = vsel %vm476, %v2449, 0
      %v2547 = vsel %vm476, %v2450, 0
      %v2550 = vsel %vm573, %v2452, 0
      %2552 = vmatprep.subr.bf16.mxu0 0
      %2553 = vmatpush1.bf16.msra.mxu0 %v2550
      %2554 = vmatprep.subr.bf16.mxu0 0
      %2555 = vmatpush1.bf16.msra.mxu0 0
      %2556 = vmatprep.subr.bf16.mxu0 0
      %2557 = vmatpush1.bf16.msra.mxu0 0
      %2558 = vmatprep.subr.bf16.mxu0 0
      %2559 = vmatpush1.bf16.msra.mxu0 0
      %2560 = vmatprep.subr.bf16.mxu0 0
      %2561 = vmatpush1.bf16.msra.mxu0 0
      %2562 = vmatprep.subr.bf16.mxu0 0
      %2563 = vmatpush1.bf16.msra.mxu0 0
      %2564 = vmatprep.subr.bf16.mxu0 0
      %2565 = vmatpush1.bf16.msra.mxu0 0
      %2566 = vmatprep.subr.bf16.mxu0 0
      %2567 = vmatpush1.bf16.msra.mxu0 0
      %2568 = vmatprep.subr.bf16.mxu0 0
      %2569 = vmatpush1.bf16.msra.mxu0 0
      %2570 = vmatprep.subr.bf16.mxu0 0
      %2571 = vmatpush1.bf16.msra.mxu0 0
      %2572 = vmatprep.subr.bf16.mxu0 0
      %2573 = vmatpush1.bf16.msra.mxu0 0
      %2574 = vmatprep.subr.bf16.mxu0 0
      %2575 = vmatpush1.bf16.msra.mxu0 0
      %2576 = vmatprep.subr.bf16.mxu0 0
      %2577 = vmatpush1.bf16.msra.mxu0 0
      %2578 = vmatprep.subr.bf16.mxu0 0
      %2579 = vmatpush1.bf16.msra.mxu0 0
      %2580 = vmatprep.subr.bf16.mxu0 0
      %2581 = vmatpush1.bf16.msra.mxu0 0
      %2582 = vmatprep.subr.bf16.mxu0 0
      %2583 = vmatpush1.bf16.msra.mxu0 0
      %2584 = vmatprep.mubr.bf16.mxu0 0
      %2585 = vmatmul.mubr.bf16.gmra.mrb[0].mxu0 %v2454
      %v2586 = vpop.f32.mrb[0].mxu0
      %v2587 = vadd.f32 0.0, %v2586
      %v2588 = vpop.f32.mrb[0].mxu0
      %v2589 = vpop.f32.mrb[0].mxu0
      %v2590 = vadd.f32 0.0, %v2589
      %v2591 = vpop.f32.mrb[0].mxu0
      %2592 = vmatprep.mubr.bf16.mxu0 0
      %2593 = vmatmul.mubr.bf16.gmra.mrb[0].mxu0 %v2457
      %v2594 = vpop.f32.mrb[0].mxu0
      %v2595 = vadd.f32 0.0, %v2594
      %v2596 = vpop.f32.mrb[0].mxu0
      %v2597 = vpop.f32.mrb[0].mxu0
      %v2598 = vadd.f32 0.0, %v2597
      %v2599 = vpop.f32.mrb[0].mxu0
      %2600 = vmatprep.mubr.bf16.mxu0 0
      %2601 = vmatmul.mubr.bf16.gmra.mrb[0].mxu0 %v2460
      %v2602 = vpop.f32.mrb[0].mxu0
      %v2603 = vadd.f32 0.0, %v2602
      %v2604 = vpop.f32.mrb[0].mxu0
      %v2605 = vpop.f32.mrb[0].mxu0
      %v2606 = vadd.f32 0.0, %v2605
      %v2607 = vpop.f32.mrb[0].mxu0
      %2608 = vmatprep.mubr.bf16.mxu0 0
      %2609 = vmatmul.mubr.bf16.gmra.mrb[0].mxu0 %v2463
      %v2610 = vpop.f32.mrb[0].mxu0
      %v2611 = vadd.f32 0.0, %v2610
      %v2612 = vpop.f32.mrb[0].mxu0
      %v2613 = vpop.f32.mrb[0].mxu0
      %v2614 = vadd.f32 0.0, %v2613
      %v2615 = vpop.f32.mrb[0].mxu0
      %2616 = vmatprep.mubr.bf16.mxu0 0
      %2617 = vmatmul.mubr.bf16.gmra.mrb[0].mxu0 %v2466
      %v2618 = vpop.f32.mrb[0].mxu0
      %v2619 = vadd.f32 0.0, %v2618
      %v2620 = vpop.f32.mrb[0].mxu0
      %v2621 = vpop.f32.mrb[0].mxu0
      %v2622 = vadd.f32 0.0, %v2621
      %v2623 = vpop.f32.mrb[0].mxu0
      %2624 = vmatprep.mubr.bf16.mxu0 0
      %2625 = vmatmul.mubr.bf16.gmra.mrb[0].mxu0 %v2469
      %v2626 = vpop.f32.mrb[0].mxu0
      %v2627 = vadd.f32 0.0, %v2626
      %v2628 = vpop.f32.mrb[0].mxu0
      %v2629 = vpop.f32.mrb[0].mxu0
      %v2630 = vadd.f32 0.0, %v2629
      %v2631 = vpop.f32.mrb[0].mxu0
      %2632 = vmatprep.mubr.bf16.mxu0 0
      %2633 = vmatmul.mubr.bf16.gmra.mrb[0].mxu0 %v2472
      %v2634 = vpop.f32.mrb[0].mxu0
      %v2635 = vadd.f32 0.0, %v2634
      %v2636 = vpop.f32.mrb[0].mxu0
      %v2637 = vpop.f32.mrb[0].mxu0
      %v2638 = vadd.f32 0.0, %v2637
      %v2639 = vpop.f32.mrb[0].mxu0
      %2640 = vmatprep.mubr.bf16.mxu0 0
      %2641 = vmatmul.mubr.bf16.gmra.mrb[0].mxu0 %v2475
      %v2642 = vpop.f32.mrb[0].mxu0
      %v2643 = vadd.f32 0.0, %v2642
      %v2644 = vpop.f32.mrb[0].mxu0
      %v2645 = vpop.f32.mrb[0].mxu0
      %v2646 = vadd.f32 0.0, %v2645
      %v2647 = vpop.f32.mrb[0].mxu0
      %2648 = vmatprep.mubr.bf16.mxu0 0
      %2649 = vmatmul.mubr.bf16.gmra.mrb[0].mxu0 %v2478
      %v2650 = vpop.f32.mrb[0].mxu0
      %v2651 = vadd.f32 0.0, %v2650
      %v2652 = vpop.f32.mrb[0].mxu0
      %v2653 = vpop.f32.mrb[0].mxu0
      %v2654 = vadd.f32 0.0, %v2653
      %v2655 = vpop.f32.mrb[0].mxu0
      %2656 = vmatprep.mubr.bf16.mxu0 0
      %2657 = vmatmul.mubr.bf16.gmra.mrb[0].mxu0 %v2481
      %v2658 = vpop.f32.mrb[0].mxu0
      %v2659 = vadd.f32 0.0, %v2658
      %v2660 = vpop.f32.mrb[0].mxu0
      %v2661 = vpop.f32.mrb[0].mxu0
      %v2662 = vadd.f32 0.0, %v2661
      %v2663 = vpop.f32.mrb[0].mxu0
      %2664 = vmatprep.mubr.bf16.mxu0 0
      %2665 = vmatmul.mubr.bf16.gmra.mrb[0].mxu0 %v2484
      %v2666 = vpop.f32.mrb[0].mxu0
      %v2667 = vadd.f32 0.0, %v2666
      %v2668 = vpop.f32.mrb[0].mxu0
      %v2669 = vpop.f32.mrb[0].mxu0
      %v2670 = vadd.f32 0.0, %v2669
      %v2671 = vpop.f32.mrb[0].mxu0
      %2672 = vmatprep.mubr.bf16.mxu0 0
      %2673 = vmatmul.mubr.bf16.gmra.mrb[0].mxu0 %v2487
      %v2674 = vpop.f32.mrb[0].mxu0
      %v2675 = vadd.f32 0.0, %v2674
      %v2676 = vpop.f32.mrb[0].mxu0
      %v2677 = vpop.f32.mrb[0].mxu0
      %v2678 = vadd.f32 0.0, %v2677
      %v2679 = vpop.f32.mrb[0].mxu0
      %2680 = vmatprep.mubr.bf16.mxu0 0
      %2681 = vmatmul.mubr.bf16.gmra.mrb[0].mxu0 %v2490
      %v2682 = vpop.f32.mrb[0].mxu0
      %v2683 = vadd.f32 0.0, %v2682
      %v2684 = vpop.f32.mrb[0].mxu0
      %v2685 = vpop.f32.mrb[0].mxu0
      %v2686 = vadd.f32 0.0, %v2685
      %v2687 = vpop.f32.mrb[0].mxu0
      %2688 = vmatprep.mubr.bf16.mxu0 0
      %2689 = vmatmul.mubr.bf16.gmra.mrb[0].mxu0 %v2493
      %v2690 = vpop.f32.mrb[0].mxu0
      %v2691 = vadd.f32 0.0, %v2690
      %v2692 = vpop.f32.mrb[0].mxu0
      %v2693 = vpop.f32.mrb[0].mxu0
      %v2694 = vadd.f32 0.0, %v2693
      %v2695 = vpop.f32.mrb[0].mxu0
      %2696 = vmatprep.mubr.bf16.mxu0 0
      %2697 = vmatmul.mubr.bf16.gmra.mrb[0].mxu0 %v2496
      %v2698 = vpop.f32.mrb[0].mxu0
      %v2699 = vadd.f32 0.0, %v2698
      %v2700 = vpop.f32.mrb[0].mxu0
      %v2701 = vpop.f32.mrb[0].mxu0
      %v2702 = vadd.f32 0.0, %v2701
      %v2703 = vpop.f32.mrb[0].mxu0
      %2704 = vmatprep.mubr.bf16.mxu0 0
      %2705 = vmatmul.mubr.bf16.gmra.mrb[0].mxu0 %v2499
      %v2706 = vpop.f32.mrb[0].mxu0
      %v2707 = vadd.f32 0.0, %v2706
      %v2708 = vpop.f32.mrb[0].mxu0
      %v2709 = vpop.f32.mrb[0].mxu0
      %v2710 = vadd.f32 0.0, %v2709
      %v2711 = vpop.f32.mrb[0].mxu0
      %2712 = vmatprep.mubr.bf16.mxu0 0
      %2713 = vmatmul.mubr.bf16.gmra.mrb[0].mxu0 %v2502
      %v2714 = vpop.f32.mrb[0].mxu0
      %v2715 = vadd.f32 0.0, %v2714
      %v2716 = vpop.f32.mrb[0].mxu0
      %v2717 = vpop.f32.mrb[0].mxu0
      %v2718 = vadd.f32 0.0, %v2717
      %v2719 = vpop.f32.mrb[0].mxu0
      %2720 = vmatprep.mubr.bf16.mxu0 0
      %2721 = vmatmul.mubr.bf16.gmra.mrb[0].mxu0 %v2505
      %v2722 = vpop.f32.mrb[0].mxu0
      %v2723 = vadd.f32 0.0, %v2722
      %v2724 = vpop.f32.mrb[0].mxu0
      %v2725 = vpop.f32.mrb[0].mxu0
      %v2726 = vadd.f32 0.0, %v2725
      %v2727 = vpop.f32.mrb[0].mxu0
      %2728 = vmatprep.mubr.bf16.mxu0 0
      %2729 = vmatmul.mubr.bf16.gmra.mrb[0].mxu0 %v2508
      %v2730 = vpop.f32.mrb[0].mxu0
      %v2731 = vadd.f32 0.0, %v2730
      %v2732 = vpop.f32.mrb[0].mxu0
      %v2733 = vpop.f32.mrb[0].mxu0
      %v2734 = vadd.f32 0.0, %v2733
      %v2735 = vpop.f32.mrb[0].mxu0
      %2736 = vmatprep.mubr.bf16.mxu0 0
      %2737 = vmatmul.mubr.bf16.gmra.mrb[0].mxu0 %v2511
      %v2738 = vpop.f32.mrb[0].mxu0
      %v2739 = vadd.f32 0.0, %v2738
      %v2740 = vpop.f32.mrb[0].mxu0
      %v2741 = vpop.f32.mrb[0].mxu0
      %v2742 = vadd.f32 0.0, %v2741
      %v2743 = vpop.f32.mrb[0].mxu0
      %2744 = vmatprep.mubr.bf16.mxu0 0
      %2745 = vmatmul.mubr.bf16.gmra.mrb[0].mxu0 %v2514
      %v2746 = vpop.f32.mrb[0].mxu0
      %v2747 = vadd.f32 0.0, %v2746
      %v2748 = vpop.f32.mrb[0].mxu0
      %v2749 = vpop.f32.mrb[0].mxu0
      %v2750 = vadd.f32 0.0, %v2749
      %v2751 = vpop.f32.mrb[0].mxu0
      %2752 = vmatprep.mubr.bf16.mxu0 0
      %2753 = vmatmul.mubr.bf16.gmra.mrb[0].mxu0 %v2517
      %v2754 = vpop.f32.mrb[0].mxu0
      %v2755 = vadd.f32 0.0, %v2754
      %v2756 = vpop.f32.mrb[0].mxu0
      %v2757 = vpop.f32.mrb[0].mxu0
      %v2758 = vadd.f32 0.0, %v2757
      %v2759 = vpop.f32.mrb[0].mxu0
      %2760 = vmatprep.mubr.bf16.mxu0 0
      %2761 = vmatmul.mubr.bf16.gmra.mrb[0].mxu0 %v2520
      %v2762 = vpop.f32.mrb[0].mxu0
      %v2763 = vadd.f32 0.0, %v2762
      %v2764 = vpop.f32.mrb[0].mxu0
      %v2765 = vpop.f32.mrb[0].mxu0
      %v2766 = vadd.f32 0.0, %v2765
      %v2767 = vpop.f32.mrb[0].mxu0
      %2768 = vmatprep.mubr.bf16.mxu0 0
      %2769 = vmatmul.mubr.bf16.gmra.mrb[0].mxu0 %v2523
      %v2770 = vpop.f32.mrb[0].mxu0
      %v2771 = vadd.f32 0.0, %v2770
      %v2772 = vpop.f32.mrb[0].mxu0
      %v2773 = vpop.f32.mrb[0].mxu0
      %v2774 = vadd.f32 0.0, %v2773
      %v2775 = vpop.f32.mrb[0].mxu0
      %2776 = vmatprep.mubr.bf16.mxu0 0
      %2777 = vmatmul.mubr.bf16.gmra.mrb[0].mxu0 %v2526
      %v2778 = vpop.f32.mrb[0].mxu0
      %v2779 = vadd.f32 0.0, %v2778
      %v2780 = vpop.f32.mrb[0].mxu0
      %v2781 = vpop.f32.mrb[0].mxu0
      %v2782 = vadd.f32 0.0, %v2781
      %v2783 = vpop.f32.mrb[0].mxu0
      %2784 = vmatprep.mubr.bf16.mxu0 0
      %2785 = vmatmul.mubr.bf16.gmra.mrb[0].mxu0 %v2529
      %v2786 = vpop.f32.mrb[0].mxu0
      %v2787 = vadd.f32 0.0, %v2786
      %v2788 = vpop.f32.mrb[0].mxu0
      %v2789 = vpop.f32.mrb[0].mxu0
      %v2790 = vadd.f32 0.0, %v2789
      %v2791 = vpop.f32.mrb[0].mxu0
      %2792 = vmatprep.mubr.bf16.mxu0 0
      %2793 = vmatmul.mubr.bf16.gmra.mrb[0].mxu0 %v2532
      %v2794 = vpop.f32.mrb[0].mxu0
      %v2795 = vadd.f32 0.0, %v2794
      %v2796 = vpop.f32.mrb[0].mxu0
      %v2797 = vpop.f32.mrb[0].mxu0
      %v2798 = vadd.f32 0.0, %v2797
      %v2799 = vpop.f32.mrb[0].mxu0
      %2800 = vmatprep.mubr.bf16.mxu0 0
      %2801 = vmatmul.mubr.bf16.gmra.mrb[0].mxu0 %v2535
      %v2802 = vpop.f32.mrb[0].mxu0
      %v2803 = vadd.f32 0.0, %v2802
      %v2804 = vpop.f32.mrb[0].mxu0
      %v2805 = vpop.f32.mrb[0].mxu0
      %v2806 = vadd.f32 0.0, %v2805
      %v2807 = vpop.f32.mrb[0].mxu0
      %2808 = vmatprep.mubr.bf16.mxu0 0
      %2809 = vmatmul.mubr.bf16.gmra.mrb[0].mxu0 %v2538
      %v2810 = vpop.f32.mrb[0].mxu0
      %v2811 = vadd.f32 0.0, %v2810
      %v2812 = vpop.f32.mrb[0].mxu0
      %v2813 = vpop.f32.mrb[0].mxu0
      %v2814 = vadd.f32 0.0, %v2813
      %v2815 = vpop.f32.mrb[0].mxu0
      %2816 = vmatprep.mubr.bf16.mxu0 0
      %2817 = vmatmul.mubr.bf16.gmra.mrb[0].mxu0 %v2541
      %v2818 = vpop.f32.mrb[0].mxu0
      %v2819 = vadd.f32 0.0, %v2818
      %v2820 = vpop.f32.mrb[0].mxu0
      %v2821 = vpop.f32.mrb[0].mxu0
      %v2822 = vadd.f32 0.0, %v2821
      %v2823 = vpop.f32.mrb[0].mxu0
      %2824 = vmatprep.mubr.bf16.mxu0 0
      %2825 = vmatmul.mubr.bf16.gmra.mrb[0].mxu0 %v2544
      %v2826 = vpop.f32.mrb[0].mxu0
      %v2827 = vadd.f32 0.0, %v2826
      %v2828 = vpop.f32.mrb[0].mxu0
      %v2829 = vpop.f32.mrb[0].mxu0
      %v2830 = vadd.f32 0.0, %v2829
      %v2831 = vpop.f32.mrb[0].mxu0
      %2832 = vmatprep.mubr.bf16.mxu0 0
      %2833 = vmatmul.mubr.bf16.gmra.mrb[0].mxu0 %v2547
      %v2834 = vpop.f32.mrb[0].mxu0
      %v2835 = vadd.f32 0.0, %v2834
      %v2836 = vpop.f32.mrb[0].mxu0
      %v2837 = vpop.f32.mrb[0].mxu0
      %v2838 = vadd.f32 0.0, %v2837
      %v2839 = vpop.f32.mrb[0].mxu0
      %2840 = vdwg.mxu0
      %v2841 = vadd.f32 %v2291, %v2587
      %v2842 = vadd.f32 %v2292, %v2590
      %v2843 = vadd.f32 %v2293, %v2595
      %v2844 = vadd.f32 %v2294, %v2598
      %v2845 = vadd.f32 %v2295, %v2603
      %v2846 = vadd.f32 %v2296, %v2606
      %v2847 = vadd.f32 %v2297, %v2611
      %v2848 = vadd.f32 %v2298, %v2614
      %v2849 = vadd.f32 %v2299, %v2619
      %v2850 = vadd.f32 %v2300, %v2622
      %v2851 = vadd.f32 %v2301, %v2627
      %v2852 = vadd.f32 %v2302, %v2630
      %v2853 = vadd.f32 %v2303, %v2635
      %v2854 = vadd.f32 %v2304, %v2638
      %v2855 = vadd.f32 %v2305, %v2643
      %v2856 = vadd.f32 %v2306, %v2646
      %v2857 = vadd.f32 %v2307, %v2651
      %v2858 = vadd.f32 %v2308, %v2654
      %v2859 = vadd.f32 %v2309, %v2659
      %v2860 = vadd.f32 %v2310, %v2662
      %v2861 = vadd.f32 %v2311, %v2667
      %v2862 = vadd.f32 %v2312, %v2670
      %v2863 = vadd.f32 %v2313, %v2675
      %v2864 = vadd.f32 %v2314, %v2678
      %v2865 = vadd.f32 %v2315, %v2683
      %v2866 = vadd.f32 %v2316, %v2686
      %v2867 = vadd.f32 %v2317, %v2691
      %v2868 = vadd.f32 %v2318, %v2694
      %v2869 = vadd.f32 %v2319, %v2699
      %v2870 = vadd.f32 %v2320, %v2702
      %v2871 = vadd.f32 %v2321, %v2707
      %v2872 = vadd.f32 %v2322, %v2710
      %v2873 = vadd.f32 %v2323, %v2715
      %v2874 = vadd.f32 %v2324, %v2718
      %v2875 = vadd.f32 %v2325, %v2723
      %v2876 = vadd.f32 %v2326, %v2726
      %v2877 = vadd.f32 %v2327, %v2731
      %v2878 = vadd.f32 %v2328, %v2734
      %v2879 = vadd.f32 %v2329, %v2739
      %v2880 = vadd.f32 %v2330, %v2742
      %v2881 = vadd.f32 %v2331, %v2747
      %v2882 = vadd.f32 %v2332, %v2750
      %v2883 = vadd.f32 %v2333, %v2755
      %v2884 = vadd.f32 %v2334, %v2758
      %v2885 = vadd.f32 %v2335, %v2763
      %v2886 = vadd.f32 %v2336, %v2766
      %v2887 = vadd.f32 %v2337, %v2771
      %v2888 = vadd.f32 %v2338, %v2774
      %v2889 = vadd.f32 %v2339, %v2779
      %v2890 = vadd.f32 %v2340, %v2782
      %v2891 = vadd.f32 %v2341, %v2787
      %v2892 = vadd.f32 %v2342, %v2790
      %v2893 = vadd.f32 %v2343, %v2795
      %v2894 = vadd.f32 %v2344, %v2798
      %v2895 = vadd.f32 %v2345, %v2803
      %v2896 = vadd.f32 %v2346, %v2806
      %v2897 = vadd.f32 %v2347, %v2811
      %v2898 = vadd.f32 %v2348, %v2814
      %v2899 = vadd.f32 %v2349, %v2819
      %v2900 = vadd.f32 %v2350, %v2822
      %v2901 = vadd.f32 %v2351, %v2827
      %v2902 = vadd.f32 %v2352, %v2830
      %v2903 = vadd.f32 %v2353, %v2835
      %v2904 = vadd.f32 %v2354, %v2838
      %v2905 = vld [vmem:[%s1804 + $0x2] sm:$0xff]
      %v2906 = vld [vmem:[%s1804 + $0xa] sm:$0xff]
      %v2907 = vld [vmem:[%s1804 + $0x1a] sm:$0xff]
      %v2908 = vld [vmem:[%s1804 + $0x22] sm:$0xff]
      %v2909 = vld [vmem:[%s1804 + $0x32] sm:$0xff]
      %v2910 = vld [vmem:[%s1804 + $0x3a] sm:$0xff]
      %v2911 = vld [vmem:[%s1804 + $0x4a] sm:$0xff]
      %v2912 = vld [vmem:[%s1804 + $0x52] sm:$0xff]
      %v2913 = vld [vmem:[%s1804 + $0x62] sm:$0xff]
      %v2914 = vld [vmem:[%s1804 + $0x6a] sm:$0xff]
      %v2915 = vld [vmem:[%s1804 + $0x7a] sm:$0xff]
      %v2916 = vld [vmem:[%s1804 + $0x82] sm:$0xff]
      %v2917 = vld [vmem:[%s1804 + $0x92] sm:$0xff]
      %v2918 = vld [vmem:[%s1804 + $0x9a] sm:$0xff]
      %v2919 = vld [vmem:[%s1804 + $0xaa] sm:$0xff]
      %v2920 = vld [vmem:[%s1804 + $0xb2] sm:$0xff]
      %v2921 = vld [vmem:[%s1804 + $0xc2] sm:$0xff]
      %v2922 = vld [vmem:[%s1804 + $0xca] sm:$0xff]
      %v2923 = vld [vmem:[%s1804 + $0xda] sm:$0xff]
      %v2924 = vld [vmem:[%s1804 + $0xe2] sm:$0xff]
      %v2925 = vld [vmem:[%s1804 + $0xf2] sm:$0xff]
      %v2926 = vld [vmem:[%s1804 + $0xfa] sm:$0xff]
      %v2927 = vld [vmem:[%s1804 + $0x10a] sm:$0xff]
      %v2928 = vld [vmem:[%s1804 + $0x112] sm:$0xff]
      %v2929 = vld [vmem:[%s1804 + $0x122] sm:$0xff]
      %v2930 = vld [vmem:[%s1804 + $0x12a] sm:$0xff]
      %v2931 = vld [vmem:[%s1804 + $0x13a] sm:$0xff]
      %v2932 = vld [vmem:[%s1804 + $0x142] sm:$0xff]
      %v2933 = vld [vmem:[%s1804 + $0x152] sm:$0xff]
      %v2934 = vld [vmem:[%s1804 + $0x15a] sm:$0xff]
      %v2935 = vld [vmem:[%s1804 + $0x16a] sm:$0xff]
      %v2936 = vld [vmem:[%s1804 + $0x172] sm:$0xff]
      %v2937 = vld [vmem:[%s1804 + $0x1b2] sm:$0xff]
      %v2938 = vld [vmem:[%s1804 + $0x1ba] sm:$0xff]
      %v2939 = vld [vmem:[%s1804 + $0x1ca] sm:$0xff]
      %v2940 = vld [vmem:[%s1804 + $0x1d2] sm:$0xff]
      %v2941 = vld [vmem:[%s1804 + $0x1e2] sm:$0xff]
      %v2942 = vld [vmem:[%s1804 + $0x1ea] sm:$0xff]
      %v2943 = vld [vmem:[%s1804 + $0x1fa] sm:$0xff]
      %v2944 = vld [vmem:[%s1804 + $0x202] sm:$0xff]
      %v2945 = vld [vmem:[%s1804 + $0x212] sm:$0xff]
      %v2946 = vld [vmem:[%s1804 + $0x21a] sm:$0xff]
      %v2947 = vld [vmem:[%s1804 + $0x22a] sm:$0xff]
      %v2948 = vld [vmem:[%s1804 + $0x232] sm:$0xff]
      %v2949 = vld [vmem:[%s1804 + $0x242] sm:$0xff]
      %v2950 = vld [vmem:[%s1804 + $0x24a] sm:$0xff]
      %v2951 = vld [vmem:[%s1804 + $0x25a] sm:$0xff]
      %v2952 = vld [vmem:[%s1804 + $0x262] sm:$0xff]
      %v2953 = vld [vmem:[%s1804 + $0x272] sm:$0xff]
      %v2954 = vld [vmem:[%s1804 + $0x27a] sm:$0xff]
      %v2955 = vld [vmem:[%s1804 + $0x28a] sm:$0xff]
      %v2956 = vld [vmem:[%s1804 + $0x292] sm:$0xff]
      %v2957 = vld [vmem:[%s1804 + $0x2a2] sm:$0xff]
      %v2958 = vld [vmem:[%s1804 + $0x2aa] sm:$0xff]
      %v2959 = vld [vmem:[%s1804 + $0x2ba] sm:$0xff]
      %v2960 = vld [vmem:[%s1804 + $0x2c2] sm:$0xff]
      %v2961 = vld [vmem:[%s1804 + $0x2d2] sm:$0xff]
      %v2962 = vld [vmem:[%s1804 + $0x2da] sm:$0xff]
      %v2963 = vld [vmem:[%s1804 + $0x2ea] sm:$0xff]
      %v2964 = vld [vmem:[%s1804 + $0x2f2] sm:$0xff]
      %v2965 = vld [vmem:[%s1804 + $0x302] sm:$0xff]
      %v2966 = vld [vmem:[%s1804 + $0x30a] sm:$0xff]
      %v2967 = vld [vmem:[%s1804 + $0x31a] sm:$0xff]
      %v2968 = vld [vmem:[%s1804 + $0x322] sm:$0xff]
      %v2969 = vpack.c.bf16 %v2906, %v2905
      %v2970 = vpack.c.bf16 %v2908, %v2907
      %v2971 = vpack.c.bf16 %v2910, %v2909
      %v2972 = vpack.c.bf16 %v2912, %v2911
      %v2973 = vpack.c.bf16 %v2914, %v2913
      %v2974 = vpack.c.bf16 %v2916, %v2915
      %v2975 = vpack.c.bf16 %v2918, %v2917
      %v2976 = vpack.c.bf16 %v2920, %v2919
      %v2977 = vpack.c.bf16 %v2922, %v2921
      %v2978 = vpack.c.bf16 %v2924, %v2923
      %v2979 = vpack.c.bf16 %v2926, %v2925
      %v2980 = vpack.c.bf16 %v2928, %v2927
      %v2981 = vpack.c.bf16 %v2930, %v2929
      %v2982 = vpack.c.bf16 %v2932, %v2931
      %v2983 = vpack.c.bf16 %v2934, %v2933
      %v2984 = vpack.c.bf16 %v2936, %v2935
      %v2985 = vpack.c.bf16 %v2938, %v2937
      %v2986 = vpack.c.bf16 %v2940, %v2939
      %v2987 = vpack.c.bf16 %v2942, %v2941
      %v2988 = vpack.c.bf16 %v2944, %v2943
      %v2989 = vpack.c.bf16 %v2946, %v2945
      %v2990 = vpack.c.bf16 %v2948, %v2947
      %v2991 = vpack.c.bf16 %v2950, %v2949
      %v2992 = vpack.c.bf16 %v2952, %v2951
      %v2993 = vpack.c.bf16 %v2954, %v2953
      %v2994 = vpack.c.bf16 %v2956, %v2955
      %v2995 = vpack.c.bf16 %v2958, %v2957
      %v2996 = vpack.c.bf16 %v2960, %v2959
      %v2997 = vpack.c.bf16 %v2962, %v2961
      %v2998 = vpack.c.bf16 %v2964, %v2963
      %v2999 = vpack.c.bf16 %v2966, %v2965
      %v3000 = vpack.c.bf16 %v2968, %v2967
      %s3001 = scalar_lea.vmem %s1, 20
      %v3002 = vld [vmem:[%s3001] sm:$0xf]
      %v3004 = vsel %vm476, %v2969, 0
      %v3007 = vsel %vm476, %v2970, 0
      %v3010 = vsel %vm476, %v2971, 0
      %v3013 = vsel %vm476, %v2972, 0
      %v3016 = vsel %vm476, %v2973, 0
      %v3019 = vsel %vm476, %v2974, 0
      %v3022 = vsel %vm476, %v2975, 0
      %v3025 = vsel %vm476, %v2976, 0
      %v3028 = vsel %vm476, %v2977, 0
      %v3031 = vsel %vm476, %v2978, 0
      %v3034 = vsel %vm476, %v2979, 0
      %v3037 = vsel %vm476, %v2980, 0
      %v3040 = vsel %vm476, %v2981, 0
      %v3043 = vsel %vm476, %v2982, 0
      %v3046 = vsel %vm476, %v2983, 0
      %v3049 = vsel %vm476, %v2984, 0
      %v3052 = vsel %vm476, %v2985, 0
      %v3055 = vsel %vm476, %v2986, 0
      %v3058 = vsel %vm476, %v2987, 0
      %v3061 = vsel %vm476, %v2988, 0
      %v3064 = vsel %vm476, %v2989, 0
      %v3067 = vsel %vm476, %v2990, 0
      %v3070 = vsel %vm476, %v2991, 0
      %v3073 = vsel %vm476, %v2992, 0
      %v3076 = vsel %vm476, %v2993, 0
      %v3079 = vsel %vm476, %v2994, 0
      %v3082 = vsel %vm476, %v2995, 0
      %v3085 = vsel %vm476, %v2996, 0
      %v3088 = vsel %vm476, %v2997, 0
      %v3091 = vsel %vm476, %v2998, 0
      %v3094 = vsel %vm476, %v2999, 0
      %v3097 = vsel %vm476, %v3000, 0
      %v3100 = vsel %vm573, %v3002, 0
      %3102 = vmatprep.subr.bf16.mxu0 0
      %3103 = vmatpush1.bf16.msra.mxu0 %v3100
      %3104 = vmatprep.subr.bf16.mxu0 0
      %3105 = vmatpush1.bf16.msra.mxu0 0
      %3106 = vmatprep.subr.bf16.mxu0 0
      %3107 = vmatpush1.bf16.msra.mxu0 0
      %3108 = vmatprep.subr.bf16.mxu0 0
      %3109 = vmatpush1.bf16.msra.mxu0 0
      %3110 = vmatprep.subr.bf16.mxu0 0
      %3111 = vmatpush1.bf16.msra.mxu0 0
      %3112 = vmatprep.subr.bf16.mxu0 0
      %3113 = vmatpush1.bf16.msra.mxu0 0
      %3114 = vmatprep.subr.bf16.mxu0 0
      %3115 = vmatpush1.bf16.msra.mxu0 0
      %3116 = vmatprep.subr.bf16.mxu0 0
      %3117 = vmatpush1.bf16.msra.mxu0 0
      %3118 = vmatprep.subr.bf16.mxu0 0
      %3119 = vmatpush1.bf16.msra.mxu0 0
      %3120 = vmatprep.subr.bf16.mxu0 0
      %3121 = vmatpush1.bf16.msra.mxu0 0
      %3122 = vmatprep.subr.bf16.mxu0 0
      %3123 = vmatpush1.bf16.msra.mxu0 0
      %3124 = vmatprep.subr.bf16.mxu0 0
      %3125 = vmatpush1.bf16.msra.mxu0 0
      %3126 = vmatprep.subr.bf16.mxu0 0
      %3127 = vmatpush1.bf16.msra.mxu0 0
      %3128 = vmatprep.subr.bf16.mxu0 0
      %3129 = vmatpush1.bf16.msra.mxu0 0
      %3130 = vmatprep.subr.bf16.mxu0 0
      %3131 = vmatpush1.bf16.msra.mxu0 0
      %3132 = vmatprep.subr.bf16.mxu0 0
      %3133 = vmatpush1.bf16.msra.mxu0 0
      %3134 = vmatprep.mubr.bf16.mxu0 0
      %3135 = vmatmul.mubr.bf16.gmra.mrb[0].mxu0 %v3004
      %v3136 = vpop.f32.mrb[0].mxu0
      %v3137 = vadd.f32 0.0, %v3136
      %v3138 = vpop.f32.mrb[0].mxu0
      %v3139 = vpop.f32.mrb[0].mxu0
      %v3140 = vadd.f32 0.0, %v3139
      %v3141 = vpop.f32.mrb[0].mxu0
      %3142 = vmatprep.mubr.bf16.mxu0 0
      %3143 = vmatmul.mubr.bf16.gmra.mrb[0].mxu0 %v3007
      %v3144 = vpop.f32.mrb[0].mxu0
      %v3145 = vadd.f32 0.0, %v3144
      %v3146 = vpop.f32.mrb[0].mxu0
      %v3147 = vpop.f32.mrb[0].mxu0
      %v3148 = vadd.f32 0.0, %v3147
      %v3149 = vpop.f32.mrb[0].mxu0
      %3150 = vmatprep.mubr.bf16.mxu0 0
      %3151 = vmatmul.mubr.bf16.gmra.mrb[0].mxu0 %v3010
      %v3152 = vpop.f32.mrb[0].mxu0
      %v3153 = vadd.f32 0.0, %v3152
      %v3154 = vpop.f32.mrb[0].mxu0
      %v3155 = vpop.f32.mrb[0].mxu0
      %v3156 = vadd.f32 0.0, %v3155
      %v3157 = vpop.f32.mrb[0].mxu0
      %3158 = vmatprep.mubr.bf16.mxu0 0
      %3159 = vmatmul.mubr.bf16.gmra.mrb[0].mxu0 %v3013
      %v3160 = vpop.f32.mrb[0].mxu0
      %v3161 = vadd.f32 0.0, %v3160
      %v3162 = vpop.f32.mrb[0].mxu0
      %v3163 = vpop.f32.mrb[0].mxu0
      %v3164 = vadd.f32 0.0, %v3163
      %v3165 = vpop.f32.mrb[0].mxu0
      %3166 = vmatprep.mubr.bf16.mxu0 0
      %3167 = vmatmul.mubr.bf16.gmra.mrb[0].mxu0 %v3016
      %v3168 = vpop.f32.mrb[0].mxu0
      %v3169 = vadd.f32 0.0, %v3168
      %v3170 = vpop.f32.mrb[0].mxu0
      %v3171 = vpop.f32.mrb[0].mxu0
      %v3172 = vadd.f32 0.0, %v3171
      %v3173 = vpop.f32.mrb[0].mxu0
      %3174 = vmatprep.mubr.bf16.mxu0 0
      %3175 = vmatmul.mubr.bf16.gmra.mrb[0].mxu0 %v3019
      %v3176 = vpop.f32.mrb[0].mxu0
      %v3177 = vadd.f32 0.0, %v3176
      %v3178 = vpop.f32.mrb[0].mxu0
      %v3179 = vpop.f32.mrb[0].mxu0
      %v3180 = vadd.f32 0.0, %v3179
      %v3181 = vpop.f32.mrb[0].mxu0
      %3182 = vmatprep.mubr.bf16.mxu0 0
      %3183 = vmatmul.mubr.bf16.gmra.mrb[0].mxu0 %v3022
      %v3184 = vpop.f32.mrb[0].mxu0
      %v3185 = vadd.f32 0.0, %v3184
      %v3186 = vpop.f32.mrb[0].mxu0
      %v3187 = vpop.f32.mrb[0].mxu0
      %v3188 = vadd.f32 0.0, %v3187
      %v3189 = vpop.f32.mrb[0].mxu0
      %3190 = vmatprep.mubr.bf16.mxu0 0
      %3191 = vmatmul.mubr.bf16.gmra.mrb[0].mxu0 %v3025
      %v3192 = vpop.f32.mrb[0].mxu0
      %v3193 = vadd.f32 0.0, %v3192
      %v3194 = vpop.f32.mrb[0].mxu0
      %v3195 = vpop.f32.mrb[0].mxu0
      %v3196 = vadd.f32 0.0, %v3195
      %v3197 = vpop.f32.mrb[0].mxu0
      %3198 = vmatprep.mubr.bf16.mxu0 0
      %3199 = vmatmul.mubr.bf16.gmra.mrb[0].mxu0 %v3028
      %v3200 = vpop.f32.mrb[0].mxu0
      %v3201 = vadd.f32 0.0, %v3200
      %v3202 = vpop.f32.mrb[0].mxu0
      %v3203 = vpop.f32.mrb[0].mxu0
      %v3204 = vadd.f32 0.0, %v3203
      %v3205 = vpop.f32.mrb[0].mxu0
      %3206 = vmatprep.mubr.bf16.mxu0 0
      %3207 = vmatmul.mubr.bf16.gmra.mrb[0].mxu0 %v3031
      %v3208 = vpop.f32.mrb[0].mxu0
      %v3209 = vadd.f32 0.0, %v3208
      %v3210 = vpop.f32.mrb[0].mxu0
      %v3211 = vpop.f32.mrb[0].mxu0
      %v3212 = vadd.f32 0.0, %v3211
      %v3213 = vpop.f32.mrb[0].mxu0
      %3214 = vmatprep.mubr.bf16.mxu0 0
      %3215 = vmatmul.mubr.bf16.gmra.mrb[0].mxu0 %v3034
      %v3216 = vpop.f32.mrb[0].mxu0
      %v3217 = vadd.f32 0.0, %v3216
      %v3218 = vpop.f32.mrb[0].mxu0
      %v3219 = vpop.f32.mrb[0].mxu0
      %v3220 = vadd.f32 0.0, %v3219
      %v3221 = vpop.f32.mrb[0].mxu0
      %3222 = vmatprep.mubr.bf16.mxu0 0
      %3223 = vmatmul.mubr.bf16.gmra.mrb[0].mxu0 %v3037
      %v3224 = vpop.f32.mrb[0].mxu0
      %v3225 = vadd.f32 0.0, %v3224
      %v3226 = vpop.f32.mrb[0].mxu0
      %v3227 = vpop.f32.mrb[0].mxu0
      %v3228 = vadd.f32 0.0, %v3227
      %v3229 = vpop.f32.mrb[0].mxu0
      %3230 = vmatprep.mubr.bf16.mxu0 0
      %3231 = vmatmul.mubr.bf16.gmra.mrb[0].mxu0 %v3040
      %v3232 = vpop.f32.mrb[0].mxu0
      %v3233 = vadd.f32 0.0, %v3232
      %v3234 = vpop.f32.mrb[0].mxu0
      %v3235 = vpop.f32.mrb[0].mxu0
      %v3236 = vadd.f32 0.0, %v3235
      %v3237 = vpop.f32.mrb[0].mxu0
      %3238 = vmatprep.mubr.bf16.mxu0 0
      %3239 = vmatmul.mubr.bf16.gmra.mrb[0].mxu0 %v3043
      %v3240 = vpop.f32.mrb[0].mxu0
      %v3241 = vadd.f32 0.0, %v3240
      %v3242 = vpop.f32.mrb[0].mxu0
      %v3243 = vpop.f32.mrb[0].mxu0
      %v3244 = vadd.f32 0.0, %v3243
      %v3245 = vpop.f32.mrb[0].mxu0
      %3246 = vmatprep.mubr.bf16.mxu0 0
      %3247 = vmatmul.mubr.bf16.gmra.mrb[0].mxu0 %v3046
      %v3248 = vpop.f32.mrb[0].mxu0
      %v3249 = vadd.f32 0.0, %v3248
      %v3250 = vpop.f32.mrb[0].mxu0
      %v3251 = vpop.f32.mrb[0].mxu0
      %v3252 = vadd.f32 0.0, %v3251
      %v3253 = vpop.f32.mrb[0].mxu0
      %3254 = vmatprep.mubr.bf16.mxu0 0
      %3255 = vmatmul.mubr.bf16.gmra.mrb[0].mxu0 %v3049
      %v3256 = vpop.f32.mrb[0].mxu0
      %v3257 = vadd.f32 0.0, %v3256
      %v3258 = vpop.f32.mrb[0].mxu0
      %v3259 = vpop.f32.mrb[0].mxu0
      %v3260 = vadd.f32 0.0, %v3259
      %v3261 = vpop.f32.mrb[0].mxu0
      %3262 = vmatprep.mubr.bf16.mxu0 0
      %3263 = vmatmul.mubr.bf16.gmra.mrb[0].mxu0 %v3052
      %v3264 = vpop.f32.mrb[0].mxu0
      %v3265 = vadd.f32 0.0, %v3264
      %v3266 = vpop.f32.mrb[0].mxu0
      %v3267 = vpop.f32.mrb[0].mxu0
      %v3268 = vadd.f32 0.0, %v3267
      %v3269 = vpop.f32.mrb[0].mxu0
      %3270 = vmatprep.mubr.bf16.mxu0 0
      %3271 = vmatmul.mubr.bf16.gmra.mrb[0].mxu0 %v3055
      %v3272 = vpop.f32.mrb[0].mxu0
      %v3273 = vadd.f32 0.0, %v3272
      %v3274 = vpop.f32.mrb[0].mxu0
      %v3275 = vpop.f32.mrb[0].mxu0
      %v3276 = vadd.f32 0.0, %v3275
      %v3277 = vpop.f32.mrb[0].mxu0
      %3278 = vmatprep.mubr.bf16.mxu0 0
      %3279 = vmatmul.mubr.bf16.gmra.mrb[0].mxu0 %v3058
      %v3280 = vpop.f32.mrb[0].mxu0
      %v3281 = vadd.f32 0.0, %v3280
      %v3282 = vpop.f32.mrb[0].mxu0
      %v3283 = vpop.f32.mrb[0].mxu0
      %v3284 = vadd.f32 0.0, %v3283
      %v3285 = vpop.f32.mrb[0].mxu0
      %3286 = vmatprep.mubr.bf16.mxu0 0
      %3287 = vmatmul.mubr.bf16.gmra.mrb[0].mxu0 %v3061
      %v3288 = vpop.f32.mrb[0].mxu0
      %v3289 = vadd.f32 0.0, %v3288
      %v3290 = vpop.f32.mrb[0].mxu0
      %v3291 = vpop.f32.mrb[0].mxu0
      %v3292 = vadd.f32 0.0, %v3291
      %v3293 = vpop.f32.mrb[0].mxu0
      %3294 = vmatprep.mubr.bf16.mxu0 0
      %3295 = vmatmul.mubr.bf16.gmra.mrb[0].mxu0 %v3064
      %v3296 = vpop.f32.mrb[0].mxu0
      %v3297 = vadd.f32 0.0, %v3296
      %v3298 = vpop.f32.mrb[0].mxu0
      %v3299 = vpop.f32.mrb[0].mxu0
      %v3300 = vadd.f32 0.0, %v3299
      %v3301 = vpop.f32.mrb[0].mxu0
      %3302 = vmatprep.mubr.bf16.mxu0 0
      %3303 = vmatmul.mubr.bf16.gmra.mrb[0].mxu0 %v3067
      %v3304 = vpop.f32.mrb[0].mxu0
      %v3305 = vadd.f32 0.0, %v3304
      %v3306 = vpop.f32.mrb[0].mxu0
      %v3307 = vpop.f32.mrb[0].mxu0
      %v3308 = vadd.f32 0.0, %v3307
      %v3309 = vpop.f32.mrb[0].mxu0
      %3310 = vmatprep.mubr.bf16.mxu0 0
      %3311 = vmatmul.mubr.bf16.gmra.mrb[0].mxu0 %v3070
      %v3312 = vpop.f32.mrb[0].mxu0
      %v3313 = vadd.f32 0.0, %v3312
      %v3314 = vpop.f32.mrb[0].mxu0
      %v3315 = vpop.f32.mrb[0].mxu0
      %v3316 = vadd.f32 0.0, %v3315
      %v3317 = vpop.f32.mrb[0].mxu0
      %3318 = vmatprep.mubr.bf16.mxu0 0
      %3319 = vmatmul.mubr.bf16.gmra.mrb[0].mxu0 %v3073
      %v3320 = vpop.f32.mrb[0].mxu0
      %v3321 = vadd.f32 0.0, %v3320
      %v3322 = vpop.f32.mrb[0].mxu0
      %v3323 = vpop.f32.mrb[0].mxu0
      %v3324 = vadd.f32 0.0, %v3323
      %v3325 = vpop.f32.mrb[0].mxu0
      %3326 = vmatprep.mubr.bf16.mxu0 0
      %3327 = vmatmul.mubr.bf16.gmra.mrb[0].mxu0 %v3076
      %v3328 = vpop.f32.mrb[0].mxu0
      %v3329 = vadd.f32 0.0, %v3328
      %v3330 = vpop.f32.mrb[0].mxu0
      %v3331 = vpop.f32.mrb[0].mxu0
      %v3332 = vadd.f32 0.0, %v3331
      %v3333 = vpop.f32.mrb[0].mxu0
      %3334 = vmatprep.mubr.bf16.mxu0 0
      %3335 = vmatmul.mubr.bf16.gmra.mrb[0].mxu0 %v3079
      %v3336 = vpop.f32.mrb[0].mxu0
      %v3337 = vadd.f32 0.0, %v3336
      %v3338 = vpop.f32.mrb[0].mxu0
      %v3339 = vpop.f32.mrb[0].mxu0
      %v3340 = vadd.f32 0.0, %v3339
      %v3341 = vpop.f32.mrb[0].mxu0
      %3342 = vmatprep.mubr.bf16.mxu0 0
      %3343 = vmatmul.mubr.bf16.gmra.mrb[0].mxu0 %v3082
      %v3344 = vpop.f32.mrb[0].mxu0
      %v3345 = vadd.f32 0.0, %v3344
      %v3346 = vpop.f32.mrb[0].mxu0
      %v3347 = vpop.f32.mrb[0].mxu0
      %v3348 = vadd.f32 0.0, %v3347
      %v3349 = vpop.f32.mrb[0].mxu0
      %3350 = vmatprep.mubr.bf16.mxu0 0
      %3351 = vmatmul.mubr.bf16.gmra.mrb[0].mxu0 %v3085
      %v3352 = vpop.f32.mrb[0].mxu0
      %v3353 = vadd.f32 0.0, %v3352
      %v3354 = vpop.f32.mrb[0].mxu0
      %v3355 = vpop.f32.mrb[0].mxu0
      %v3356 = vadd.f32 0.0, %v3355
      %v3357 = vpop.f32.mrb[0].mxu0
      %3358 = vmatprep.mubr.bf16.mxu0 0
      %3359 = vmatmul.mubr.bf16.gmra.mrb[0].mxu0 %v3088
      %v3360 = vpop.f32.mrb[0].mxu0
      %v3361 = vadd.f32 0.0, %v3360
      %v3362 = vpop.f32.mrb[0].mxu0
      %v3363 = vpop.f32.mrb[0].mxu0
      %v3364 = vadd.f32 0.0, %v3363
      %v3365 = vpop.f32.mrb[0].mxu0
      %3366 = vmatprep.mubr.bf16.mxu0 0
      %3367 = vmatmul.mubr.bf16.gmra.mrb[0].mxu0 %v3091
      %v3368 = vpop.f32.mrb[0].mxu0
      %v3369 = vadd.f32 0.0, %v3368
      %v3370 = vpop.f32.mrb[0].mxu0
      %v3371 = vpop.f32.mrb[0].mxu0
      %v3372 = vadd.f32 0.0, %v3371
      %v3373 = vpop.f32.mrb[0].mxu0
      %3374 = vmatprep.mubr.bf16.mxu0 0
      %3375 = vmatmul.mubr.bf16.gmra.mrb[0].mxu0 %v3094
      %v3376 = vpop.f32.mrb[0].mxu0
      %v3377 = vadd.f32 0.0, %v3376
      %v3378 = vpop.f32.mrb[0].mxu0
      %v3379 = vpop.f32.mrb[0].mxu0
      %v3380 = vadd.f32 0.0, %v3379
      %v3381 = vpop.f32.mrb[0].mxu0
      %3382 = vmatprep.mubr.bf16.mxu0 0
      %3383 = vmatmul.mubr.bf16.gmra.mrb[0].mxu0 %v3097
      %v3384 = vpop.f32.mrb[0].mxu0
      %v3385 = vadd.f32 0.0, %v3384
      %v3386 = vpop.f32.mrb[0].mxu0
      %v3387 = vpop.f32.mrb[0].mxu0
      %v3388 = vadd.f32 0.0, %v3387
      %v3389 = vpop.f32.mrb[0].mxu0
      %3390 = vdwg.mxu0
      %v3391 = vadd.f32 %v2841, %v3137
      %v3392 = vadd.f32 %v2842, %v3140
      %v3393 = vadd.f32 %v2843, %v3145
      %v3394 = vadd.f32 %v2844, %v3148
      %v3395 = vadd.f32 %v2845, %v3153
      %v3396 = vadd.f32 %v2846, %v3156
      %v3397 = vadd.f32 %v2847, %v3161
      %v3398 = vadd.f32 %v2848, %v3164
      %v3399 = vadd.f32 %v2849, %v3169
      %v3400 = vadd.f32 %v2850, %v3172
      %v3401 = vadd.f32 %v2851, %v3177
      %v3402 = vadd.f32 %v2852, %v3180
      %v3403 = vadd.f32 %v2853, %v3185
      %v3404 = vadd.f32 %v2854, %v3188
      %v3405 = vadd.f32 %v2855, %v3193
      %v3406 = vadd.f32 %v2856, %v3196
      %v3407 = vadd.f32 %v2857, %v3201
      %v3408 = vadd.f32 %v2858, %v3204
      %v3409 = vadd.f32 %v2859, %v3209
      %v3410 = vadd.f32 %v2860, %v3212
      %v3411 = vadd.f32 %v2861, %v3217
      %v3412 = vadd.f32 %v2862, %v3220
      %v3413 = vadd.f32 %v2863, %v3225
      %v3414 = vadd.f32 %v2864, %v3228
      %v3415 = vadd.f32 %v2865, %v3233
      %v3416 = vadd.f32 %v2866, %v3236
      %v3417 = vadd.f32 %v2867, %v3241
      %v3418 = vadd.f32 %v2868, %v3244
      %v3419 = vadd.f32 %v2869, %v3249
      %v3420 = vadd.f32 %v2870, %v3252
      %v3421 = vadd.f32 %v2871, %v3257
      %v3422 = vadd.f32 %v2872, %v3260
      %v3423 = vadd.f32 %v2873, %v3265
      %v3424 = vadd.f32 %v2874, %v3268
      %v3425 = vadd.f32 %v2875, %v3273
      %v3426 = vadd.f32 %v2876, %v3276
      %v3427 = vadd.f32 %v2877, %v3281
      %v3428 = vadd.f32 %v2878, %v3284
      %v3429 = vadd.f32 %v2879, %v3289
      %v3430 = vadd.f32 %v2880, %v3292
      %v3431 = vadd.f32 %v2881, %v3297
      %v3432 = vadd.f32 %v2882, %v3300
      %v3433 = vadd.f32 %v2883, %v3305
      %v3434 = vadd.f32 %v2884, %v3308
      %v3435 = vadd.f32 %v2885, %v3313
      %v3436 = vadd.f32 %v2886, %v3316
      %v3437 = vadd.f32 %v2887, %v3321
      %v3438 = vadd.f32 %v2888, %v3324
      %v3439 = vadd.f32 %v2889, %v3329
      %v3440 = vadd.f32 %v2890, %v3332
      %v3441 = vadd.f32 %v2891, %v3337
      %v3442 = vadd.f32 %v2892, %v3340
      %v3443 = vadd.f32 %v2893, %v3345
      %v3444 = vadd.f32 %v2894, %v3348
      %v3445 = vadd.f32 %v2895, %v3353
      %v3446 = vadd.f32 %v2896, %v3356
      %v3447 = vadd.f32 %v2897, %v3361
      %v3448 = vadd.f32 %v2898, %v3364
      %v3449 = vadd.f32 %v2899, %v3369
      %v3450 = vadd.f32 %v2900, %v3372
      %v3451 = vadd.f32 %v2901, %v3377
      %v3452 = vadd.f32 %v2902, %v3380
      %v3453 = vadd.f32 %v2903, %v3385
      %v3454 = vadd.f32 %v2904, %v3388
      %s3455 = scalar_lea.vmem %s275, 48
      %v3456 = vld [vmem:[%s3455] sm:$0xff]
      %v3457 = vld [vmem:[%s3455 + $0x8] sm:$0xff]
      %v3458 = vld [vmem:[%s3455 + $0x18] sm:$0xff]
      %v3459 = vld [vmem:[%s3455 + $0x20] sm:$0xff]
      %v3460 = vld [vmem:[%s3455 + $0x30] sm:$0xff]
      %v3461 = vld [vmem:[%s3455 + $0x38] sm:$0xff]
      %v3462 = vld [vmem:[%s3455 + $0x48] sm:$0xff]
      %v3463 = vld [vmem:[%s3455 + $0x50] sm:$0xff]
      %v3464 = vld [vmem:[%s3455 + $0x60] sm:$0xff]
      %v3465 = vld [vmem:[%s3455 + $0x68] sm:$0xff]
      %v3466 = vld [vmem:[%s3455 + $0x78] sm:$0xff]
      %v3467 = vld [vmem:[%s3455 + $0x80] sm:$0xff]
      %v3468 = vld [vmem:[%s3455 + $0x90] sm:$0xff]
      %v3469 = vld [vmem:[%s3455 + $0x98] sm:$0xff]
      %v3470 = vld [vmem:[%s3455 + $0xa8] sm:$0xff]
      %v3471 = vld [vmem:[%s3455 + $0xb0] sm:$0xff]
      %v3472 = vld [vmem:[%s3455 + $0xc0] sm:$0xff]
      %v3473 = vld [vmem:[%s3455 + $0xc8] sm:$0xff]
      %v3474 = vld [vmem:[%s3455 + $0xd8] sm:$0xff]
      %v3475 = vld [vmem:[%s3455 + $0xe0] sm:$0xff]
      %v3476 = vld [vmem:[%s3455 + $0xf0] sm:$0xff]
      %v3477 = vld [vmem:[%s3455 + $0xf8] sm:$0xff]
      %v3478 = vld [vmem:[%s3455 + $0x108] sm:$0xff]
      %v3479 = vld [vmem:[%s3455 + $0x110] sm:$0xff]
      %v3480 = vld [vmem:[%s3455 + $0x120] sm:$0xff]
      %v3481 = vld [vmem:[%s3455 + $0x128] sm:$0xff]
      %v3482 = vld [vmem:[%s3455 + $0x138] sm:$0xff]
      %v3483 = vld [vmem:[%s3455 + $0x140] sm:$0xff]
      %v3484 = vld [vmem:[%s3455 + $0x150] sm:$0xff]
      %v3485 = vld [vmem:[%s3455 + $0x158] sm:$0xff]
      %v3486 = vld [vmem:[%s3455 + $0x168] sm:$0xff]
      %v3487 = vld [vmem:[%s3455 + $0x170] sm:$0xff]
      %v3488 = vld [vmem:[%s3455 + $0x1b0] sm:$0xff]
      %v3489 = vld [vmem:[%s3455 + $0x1b8] sm:$0xff]
      %v3490 = vld [vmem:[%s3455 + $0x1c8] sm:$0xff]
      %v3491 = vld [vmem:[%s3455 + $0x1d0] sm:$0xff]
      %v3492 = vld [vmem:[%s3455 + $0x1e0] sm:$0xff]
      %v3493 = vld [vmem:[%s3455 + $0x1e8] sm:$0xff]
      %v3494 = vld [vmem:[%s3455 + $0x1f8] sm:$0xff]
      %v3495 = vld [vmem:[%s3455 + $0x200] sm:$0xff]
      %v3496 = vld [vmem:[%s3455 + $0x210] sm:$0xff]
      %v3497 = vld [vmem:[%s3455 + $0x218] sm:$0xff]
      %v3498 = vld [vmem:[%s3455 + $0x228] sm:$0xff]
      %v3499 = vld [vmem:[%s3455 + $0x230] sm:$0xff]
      %v3500 = vld [vmem:[%s3455 + $0x240] sm:$0xff]
      %v3501 = vld [vmem:[%s3455 + $0x248] sm:$0xff]
      %v3502 = vld [vmem:[%s3455 + $0x258] sm:$0xff]
      %v3503 = vld [vmem:[%s3455 + $0x260] sm:$0xff]
      %v3504 = vld [vmem:[%s3455 + $0x270] sm:$0xff]
      %v3505 = vld [vmem:[%s3455 + $0x278] sm:$0xff]
      %v3506 = vld [vmem:[%s3455 + $0x288] sm:$0xff]
      %v3507 = vld [vmem:[%s3455 + $0x290] sm:$0xff]
      %v3508 = vld [vmem:[%s3455 + $0x2a0] sm:$0xff]
      %v3509 = vld [vmem:[%s3455 + $0x2a8] sm:$0xff]
      %v3510 = vld [vmem:[%s3455 + $0x2b8] sm:$0xff]
      %v3511 = vld [vmem:[%s3455 + $0x2c0] sm:$0xff]
      %v3512 = vld [vmem:[%s3455 + $0x2d0] sm:$0xff]
      %v3513 = vld [vmem:[%s3455 + $0x2d8] sm:$0xff]
      %v3514 = vld [vmem:[%s3455 + $0x2e8] sm:$0xff]
      %v3515 = vld [vmem:[%s3455 + $0x2f0] sm:$0xff]
      %v3516 = vld [vmem:[%s3455 + $0x300] sm:$0xff]
      %v3517 = vld [vmem:[%s3455 + $0x308] sm:$0xff]
      %v3518 = vld [vmem:[%s3455 + $0x318] sm:$0xff]
      %v3519 = vld [vmem:[%s3455 + $0x320] sm:$0xff]
      %v3520 = vpack.c.bf16 %v3457, %v3456
      %v3521 = vpack.c.bf16 %v3459, %v3458
      %v3522 = vpack.c.bf16 %v3461, %v3460
      %v3523 = vpack.c.bf16 %v3463, %v3462
      %v3524 = vpack.c.bf16 %v3465, %v3464
      %v3525 = vpack.c.bf16 %v3467, %v3466
      %v3526 = vpack.c.bf16 %v3469, %v3468
      %v3527 = vpack.c.bf16 %v3471, %v3470
      %v3528 = vpack.c.bf16 %v3473, %v3472
      %v3529 = vpack.c.bf16 %v3475, %v3474
      %v3530 = vpack.c.bf16 %v3477, %v3476
      %v3531 = vpack.c.bf16 %v3479, %v3478
      %v3532 = vpack.c.bf16 %v3481, %v3480
      %v3533 = vpack.c.bf16 %v3483, %v3482
      %v3534 = vpack.c.bf16 %v3485, %v3484
      %v3535 = vpack.c.bf16 %v3487, %v3486
      %v3536 = vpack.c.bf16 %v3489, %v3488
      %v3537 = vpack.c.bf16 %v3491, %v3490
      %v3538 = vpack.c.bf16 %v3493, %v3492
      %v3539 = vpack.c.bf16 %v3495, %v3494
      %v3540 = vpack.c.bf16 %v3497, %v3496
      %v3541 = vpack.c.bf16 %v3499, %v3498
      %v3542 = vpack.c.bf16 %v3501, %v3500
      %v3543 = vpack.c.bf16 %v3503, %v3502
      %v3544 = vpack.c.bf16 %v3505, %v3504
      %v3545 = vpack.c.bf16 %v3507, %v3506
      %v3546 = vpack.c.bf16 %v3509, %v3508
      %v3547 = vpack.c.bf16 %v3511, %v3510
      %v3548 = vpack.c.bf16 %v3513, %v3512
      %v3549 = vpack.c.bf16 %v3515, %v3514
      %v3550 = vpack.c.bf16 %v3517, %v3516
      %v3551 = vpack.c.bf16 %v3519, %v3518
      %s3552 = scalar_lea.vmem %s1, 24
      %v3553 = vld [vmem:[%s3552] sm:$0xf]
      %v3555 = vsel %vm476, %v3520, 0
      %v3558 = vsel %vm476, %v3521, 0
      %v3561 = vsel %vm476, %v3522, 0
      %v3564 = vsel %vm476, %v3523, 0
      %v3567 = vsel %vm476, %v3524, 0
      %v3570 = vsel %vm476, %v3525, 0
      %v3573 = vsel %vm476, %v3526, 0
      %v3576 = vsel %vm476, %v3527, 0
      %v3579 = vsel %vm476, %v3528, 0
      %v3582 = vsel %vm476, %v3529, 0
      %v3585 = vsel %vm476, %v3530, 0
      %v3588 = vsel %vm476, %v3531, 0
      %v3591 = vsel %vm476, %v3532, 0
      %v3594 = vsel %vm476, %v3533, 0
      %v3597 = vsel %vm476, %v3534, 0
      %v3600 = vsel %vm476, %v3535, 0
      %v3603 = vsel %vm476, %v3536, 0
      %v3606 = vsel %vm476, %v3537, 0
      %v3609 = vsel %vm476, %v3538, 0
      %v3612 = vsel %vm476, %v3539, 0
      %v3615 = vsel %vm476, %v3540, 0
      %v3618 = vsel %vm476, %v3541, 0
      %v3621 = vsel %vm476, %v3542, 0
      %v3624 = vsel %vm476, %v3543, 0
      %v3627 = vsel %vm476, %v3544, 0
      %v3630 = vsel %vm476, %v3545, 0
      %v3633 = vsel %vm476, %v3546, 0
      %v3636 = vsel %vm476, %v3547, 0
      %v3639 = vsel %vm476, %v3548, 0
      %v3642 = vsel %vm476, %v3549, 0
      %v3645 = vsel %vm476, %v3550, 0
      %v3648 = vsel %vm476, %v3551, 0
      %v3651 = vsel %vm573, %v3553, 0
      %3653 = vmatprep.subr.bf16.mxu0 0
      %3654 = vmatpush1.bf16.msra.mxu0 %v3651
      %3655 = vmatprep.subr.bf16.mxu0 0
      %3656 = vmatpush1.bf16.msra.mxu0 0
      %3657 = vmatprep.subr.bf16.mxu0 0
      %3658 = vmatpush1.bf16.msra.mxu0 0
      %3659 = vmatprep.subr.bf16.mxu0 0
      %3660 = vmatpush1.bf16.msra.mxu0 0
      %3661 = vmatprep.subr.bf16.mxu0 0
      %3662 = vmatpush1.bf16.msra.mxu0 0
      %3663 = vmatprep.subr.bf16.mxu0 0
      %3664 = vmatpush1.bf16.msra.mxu0 0
      %3665 = vmatprep.subr.bf16.mxu0 0
      %3666 = vmatpush1.bf16.msra.mxu0 0
      %3667 = vmatprep.subr.bf16.mxu0 0
      %3668 = vmatpush1.bf16.msra.mxu0 0
      %3669 = vmatprep.subr.bf16.mxu0 0
      %3670 = vmatpush1.bf16.msra.mxu0 0
      %3671 = vmatprep.subr.bf16.mxu0 0
      %3672 = vmatpush1.bf16.msra.mxu0 0
      %3673 = vmatprep.subr.bf16.mxu0 0
      %3674 = vmatpush1.bf16.msra.mxu0 0
      %3675 = vmatprep.subr.bf16.mxu0 0
      %3676 = vmatpush1.bf16.msra.mxu0 0
      %3677 = vmatprep.subr.bf16.mxu0 0
      %3678 = vmatpush1.bf16.msra.mxu0 0
      %3679 = vmatprep.subr.bf16.mxu0 0
      %3680 = vmatpush1.bf16.msra.mxu0 0
      %3681 = vmatprep.subr.bf16.mxu0 0
      %3682 = vmatpush1.bf16.msra.mxu0 0
      %3683 = vmatprep.subr.bf16.mxu0 0
      %3684 = vmatpush1.bf16.msra.mxu0 0
      %3685 = vmatprep.mubr.bf16.mxu0 0
      %3686 = vmatmul.mubr.bf16.gmra.mrb[0].mxu0 %v3555
      %v3687 = vpop.f32.mrb[0].mxu0
      %v3688 = vadd.f32 0.0, %v3687
      %v3689 = vpop.f32.mrb[0].mxu0
      %v3690 = vpop.f32.mrb[0].mxu0
      %v3691 = vadd.f32 0.0, %v3690
      %v3692 = vpop.f32.mrb[0].mxu0
      %3693 = vmatprep.mubr.bf16.mxu0 0
      %3694 = vmatmul.mubr.bf16.gmra.mrb[0].mxu0 %v3558
      %v3695 = vpop.f32.mrb[0].mxu0
      %v3696 = vadd.f32 0.0, %v3695
      %v3697 = vpop.f32.mrb[0].mxu0
      %v3698 = vpop.f32.mrb[0].mxu0
      %v3699 = vadd.f32 0.0, %v3698
      %v3700 = vpop.f32.mrb[0].mxu0
      %3701 = vmatprep.mubr.bf16.mxu0 0
      %3702 = vmatmul.mubr.bf16.gmra.mrb[0].mxu0 %v3561
      %v3703 = vpop.f32.mrb[0].mxu0
      %v3704 = vadd.f32 0.0, %v3703
      %v3705 = vpop.f32.mrb[0].mxu0
      %v3706 = vpop.f32.mrb[0].mxu0
      %v3707 = vadd.f32 0.0, %v3706
      %v3708 = vpop.f32.mrb[0].mxu0
      %3709 = vmatprep.mubr.bf16.mxu0 0
      %3710 = vmatmul.mubr.bf16.gmra.mrb[0].mxu0 %v3564
      %v3711 = vpop.f32.mrb[0].mxu0
      %v3712 = vadd.f32 0.0, %v3711
      %v3713 = vpop.f32.mrb[0].mxu0
      %v3714 = vpop.f32.mrb[0].mxu0
      %v3715 = vadd.f32 0.0, %v3714
      %v3716 = vpop.f32.mrb[0].mxu0
      %3717 = vmatprep.mubr.bf16.mxu0 0
      %3718 = vmatmul.mubr.bf16.gmra.mrb[0].mxu0 %v3567
      %v3719 = vpop.f32.mrb[0].mxu0
      %v3720 = vadd.f32 0.0, %v3719
      %v3721 = vpop.f32.mrb[0].mxu0
      %v3722 = vpop.f32.mrb[0].mxu0
      %v3723 = vadd.f32 0.0, %v3722
      %v3724 = vpop.f32.mrb[0].mxu0
      %3725 = vmatprep.mubr.bf16.mxu0 0
      %3726 = vmatmul.mubr.bf16.gmra.mrb[0].mxu0 %v3570
      %v3727 = vpop.f32.mrb[0].mxu0
      %v3728 = vadd.f32 0.0, %v3727
      %v3729 = vpop.f32.mrb[0].mxu0
      %v3730 = vpop.f32.mrb[0].mxu0
      %v3731 = vadd.f32 0.0, %v3730
      %v3732 = vpop.f32.mrb[0].mxu0
      %3733 = vmatprep.mubr.bf16.mxu0 0
      %3734 = vmatmul.mubr.bf16.gmra.mrb[0].mxu0 %v3573
      %v3735 = vpop.f32.mrb[0].mxu0
      %v3736 = vadd.f32 0.0, %v3735
      %v3737 = vpop.f32.mrb[0].mxu0
      %v3738 = vpop.f32.mrb[0].mxu0
      %v3739 = vadd.f32 0.0, %v3738
      %v3740 = vpop.f32.mrb[0].mxu0
      %3741 = vmatprep.mubr.bf16.mxu0 0
      %3742 = vmatmul.mubr.bf16.gmra.mrb[0].mxu0 %v3576
      %v3743 = vpop.f32.mrb[0].mxu0
      %v3744 = vadd.f32 0.0, %v3743
      %v3745 = vpop.f32.mrb[0].mxu0
      %v3746 = vpop.f32.mrb[0].mxu0
      %v3747 = vadd.f32 0.0, %v3746
      %v3748 = vpop.f32.mrb[0].mxu0
      %3749 = vmatprep.mubr.bf16.mxu0 0
      %3750 = vmatmul.mubr.bf16.gmra.mrb[0].mxu0 %v3579
      %v3751 = vpop.f32.mrb[0].mxu0
      %v3752 = vadd.f32 0.0, %v3751
      %v3753 = vpop.f32.mrb[0].mxu0
      %v3754 = vpop.f32.mrb[0].mxu0
      %v3755 = vadd.f32 0.0, %v3754
      %v3756 = vpop.f32.mrb[0].mxu0
      %3757 = vmatprep.mubr.bf16.mxu0 0
      %3758 = vmatmul.mubr.bf16.gmra.mrb[0].mxu0 %v3582
      %v3759 = vpop.f32.mrb[0].mxu0
      %v3760 = vadd.f32 0.0, %v3759
      %v3761 = vpop.f32.mrb[0].mxu0
      %v3762 = vpop.f32.mrb[0].mxu0
      %v3763 = vadd.f32 0.0, %v3762
      %v3764 = vpop.f32.mrb[0].mxu0
      %3765 = vmatprep.mubr.bf16.mxu0 0
      %3766 = vmatmul.mubr.bf16.gmra.mrb[0].mxu0 %v3585
      %v3767 = vpop.f32.mrb[0].mxu0
      %v3768 = vadd.f32 0.0, %v3767
      %v3769 = vpop.f32.mrb[0].mxu0
      %v3770 = vpop.f32.mrb[0].mxu0
      %v3771 = vadd.f32 0.0, %v3770
      %v3772 = vpop.f32.mrb[0].mxu0
      %3773 = vmatprep.mubr.bf16.mxu0 0
      %3774 = vmatmul.mubr.bf16.gmra.mrb[0].mxu0 %v3588
      %v3775 = vpop.f32.mrb[0].mxu0
      %v3776 = vadd.f32 0.0, %v3775
      %v3777 = vpop.f32.mrb[0].mxu0
      %v3778 = vpop.f32.mrb[0].mxu0
      %v3779 = vadd.f32 0.0, %v3778
      %v3780 = vpop.f32.mrb[0].mxu0
      %3781 = vmatprep.mubr.bf16.mxu0 0
      %3782 = vmatmul.mubr.bf16.gmra.mrb[0].mxu0 %v3591
      %v3783 = vpop.f32.mrb[0].mxu0
      %v3784 = vadd.f32 0.0, %v3783
      %v3785 = vpop.f32.mrb[0].mxu0
      %v3786 = vpop.f32.mrb[0].mxu0
      %v3787 = vadd.f32 0.0, %v3786
      %v3788 = vpop.f32.mrb[0].mxu0
      %3789 = vmatprep.mubr.bf16.mxu0 0
      %3790 = vmatmul.mubr.bf16.gmra.mrb[0].mxu0 %v3594
      %v3791 = vpop.f32.mrb[0].mxu0
      %v3792 = vadd.f32 0.0, %v3791
      %v3793 = vpop.f32.mrb[0].mxu0
      %v3794 = vpop.f32.mrb[0].mxu0
      %v3795 = vadd.f32 0.0, %v3794
      %v3796 = vpop.f32.mrb[0].mxu0
      %3797 = vmatprep.mubr.bf16.mxu0 0
      %3798 = vmatmul.mubr.bf16.gmra.mrb[0].mxu0 %v3597
      %v3799 = vpop.f32.mrb[0].mxu0
      %v3800 = vadd.f32 0.0, %v3799
      %v3801 = vpop.f32.mrb[0].mxu0
      %v3802 = vpop.f32.mrb[0].mxu0
      %v3803 = vadd.f32 0.0, %v3802
      %v3804 = vpop.f32.mrb[0].mxu0
      %3805 = vmatprep.mubr.bf16.mxu0 0
      %3806 = vmatmul.mubr.bf16.gmra.mrb[0].mxu0 %v3600
      %v3807 = vpop.f32.mrb[0].mxu0
      %v3808 = vadd.f32 0.0, %v3807
      %v3809 = vpop.f32.mrb[0].mxu0
      %v3810 = vpop.f32.mrb[0].mxu0
      %v3811 = vadd.f32 0.0, %v3810
      %v3812 = vpop.f32.mrb[0].mxu0
      %3813 = vmatprep.mubr.bf16.mxu0 0
      %3814 = vmatmul.mubr.bf16.gmra.mrb[0].mxu0 %v3603
      %v3815 = vpop.f32.mrb[0].mxu0
      %v3816 = vadd.f32 0.0, %v3815
      %v3817 = vpop.f32.mrb[0].mxu0
      %v3818 = vpop.f32.mrb[0].mxu0
      %v3819 = vadd.f32 0.0, %v3818
      %v3820 = vpop.f32.mrb[0].mxu0
      %3821 = vmatprep.mubr.bf16.mxu0 0
      %3822 = vmatmul.mubr.bf16.gmra.mrb[0].mxu0 %v3606
      %v3823 = vpop.f32.mrb[0].mxu0
      %v3824 = vadd.f32 0.0, %v3823
      %v3825 = vpop.f32.mrb[0].mxu0
      %v3826 = vpop.f32.mrb[0].mxu0
      %v3827 = vadd.f32 0.0, %v3826
      %v3828 = vpop.f32.mrb[0].mxu0
      %3829 = vmatprep.mubr.bf16.mxu0 0
      %3830 = vmatmul.mubr.bf16.gmra.mrb[0].mxu0 %v3609
      %v3831 = vpop.f32.mrb[0].mxu0
      %v3832 = vadd.f32 0.0, %v3831
      %v3833 = vpop.f32.mrb[0].mxu0
      %v3834 = vpop.f32.mrb[0].mxu0
      %v3835 = vadd.f32 0.0, %v3834
      %v3836 = vpop.f32.mrb[0].mxu0
      %3837 = vmatprep.mubr.bf16.mxu0 0
      %3838 = vmatmul.mubr.bf16.gmra.mrb[0].mxu0 %v3612
      %v3839 = vpop.f32.mrb[0].mxu0
      %v3840 = vadd.f32 0.0, %v3839
      %v3841 = vpop.f32.mrb[0].mxu0
      %v3842 = vpop.f32.mrb[0].mxu0
      %v3843 = vadd.f32 0.0, %v3842
      %v3844 = vpop.f32.mrb[0].mxu0
      %3845 = vmatprep.mubr.bf16.mxu0 0
      %3846 = vmatmul.mubr.bf16.gmra.mrb[0].mxu0 %v3615
      %v3847 = vpop.f32.mrb[0].mxu0
      %v3848 = vadd.f32 0.0, %v3847
      %v3849 = vpop.f32.mrb[0].mxu0
      %v3850 = vpop.f32.mrb[0].mxu0
      %v3851 = vadd.f32 0.0, %v3850
      %v3852 = vpop.f32.mrb[0].mxu0
      %3853 = vmatprep.mubr.bf16.mxu0 0
      %3854 = vmatmul.mubr.bf16.gmra.mrb[0].mxu0 %v3618
      %v3855 = vpop.f32.mrb[0].mxu0
      %v3856 = vadd.f32 0.0, %v3855
      %v3857 = vpop.f32.mrb[0].mxu0
      %v3858 = vpop.f32.mrb[0].mxu0
      %v3859 = vadd.f32 0.0, %v3858
      %v3860 = vpop.f32.mrb[0].mxu0
      %3861 = vmatprep.mubr.bf16.mxu0 0
      %3862 = vmatmul.mubr.bf16.gmra.mrb[0].mxu0 %v3621
      %v3863 = vpop.f32.mrb[0].mxu0
      %v3864 = vadd.f32 0.0, %v3863
      %v3865 = vpop.f32.mrb[0].mxu0
      %v3866 = vpop.f32.mrb[0].mxu0
      %v3867 = vadd.f32 0.0, %v3866
      %v3868 = vpop.f32.mrb[0].mxu0
      %3869 = vmatprep.mubr.bf16.mxu0 0
      %3870 = vmatmul.mubr.bf16.gmra.mrb[0].mxu0 %v3624
      %v3871 = vpop.f32.mrb[0].mxu0
      %v3872 = vadd.f32 0.0, %v3871
      %v3873 = vpop.f32.mrb[0].mxu0
      %v3874 = vpop.f32.mrb[0].mxu0
      %v3875 = vadd.f32 0.0, %v3874
      %v3876 = vpop.f32.mrb[0].mxu0
      %3877 = vmatprep.mubr.bf16.mxu0 0
      %3878 = vmatmul.mubr.bf16.gmra.mrb[0].mxu0 %v3627
      %v3879 = vpop.f32.mrb[0].mxu0
      %v3880 = vadd.f32 0.0, %v3879
      %v3881 = vpop.f32.mrb[0].mxu0
      %v3882 = vpop.f32.mrb[0].mxu0
      %v3883 = vadd.f32 0.0, %v3882
      %v3884 = vpop.f32.mrb[0].mxu0
      %3885 = vmatprep.mubr.bf16.mxu0 0
      %3886 = vmatmul.mubr.bf16.gmra.mrb[0].mxu0 %v3630
      %v3887 = vpop.f32.mrb[0].mxu0
      %v3888 = vadd.f32 0.0, %v3887
      %v3889 = vpop.f32.mrb[0].mxu0
      %v3890 = vpop.f32.mrb[0].mxu0
      %v3891 = vadd.f32 0.0, %v3890
      %v3892 = vpop.f32.mrb[0].mxu0
      %3893 = vmatprep.mubr.bf16.mxu0 0
      %3894 = vmatmul.mubr.bf16.gmra.mrb[0].mxu0 %v3633
      %v3895 = vpop.f32.mrb[0].mxu0
      %v3896 = vadd.f32 0.0, %v3895
      %v3897 = vpop.f32.mrb[0].mxu0
      %v3898 = vpop.f32.mrb[0].mxu0
      %v3899 = vadd.f32 0.0, %v3898
      %v3900 = vpop.f32.mrb[0].mxu0
      %3901 = vmatprep.mubr.bf16.mxu0 0
      %3902 = vmatmul.mubr.bf16.gmra.mrb[0].mxu0 %v3636
      %v3903 = vpop.f32.mrb[0].mxu0
      %v3904 = vadd.f32 0.0, %v3903
      %v3905 = vpop.f32.mrb[0].mxu0
      %v3906 = vpop.f32.mrb[0].mxu0
      %v3907 = vadd.f32 0.0, %v3906
      %v3908 = vpop.f32.mrb[0].mxu0
      %3909 = vmatprep.mubr.bf16.mxu0 0
      %3910 = vmatmul.mubr.bf16.gmra.mrb[0].mxu0 %v3639
      %v3911 = vpop.f32.mrb[0].mxu0
      %v3912 = vadd.f32 0.0, %v3911
      %v3913 = vpop.f32.mrb[0].mxu0
      %v3914 = vpop.f32.mrb[0].mxu0
      %v3915 = vadd.f32 0.0, %v3914
      %v3916 = vpop.f32.mrb[0].mxu0
      %3917 = vmatprep.mubr.bf16.mxu0 0
      %3918 = vmatmul.mubr.bf16.gmra.mrb[0].mxu0 %v3642
      %v3919 = vpop.f32.mrb[0].mxu0
      %v3920 = vadd.f32 0.0, %v3919
      %v3921 = vpop.f32.mrb[0].mxu0
      %v3922 = vpop.f32.mrb[0].mxu0
      %v3923 = vadd.f32 0.0, %v3922
      %v3924 = vpop.f32.mrb[0].mxu0
      %3925 = vmatprep.mubr.bf16.mxu0 0
      %3926 = vmatmul.mubr.bf16.gmra.mrb[0].mxu0 %v3645
      %v3927 = vpop.f32.mrb[0].mxu0
      %v3928 = vadd.f32 0.0, %v3927
      %v3929 = vpop.f32.mrb[0].mxu0
      %v3930 = vpop.f32.mrb[0].mxu0
      %v3931 = vadd.f32 0.0, %v3930
      %v3932 = vpop.f32.mrb[0].mxu0
      %3933 = vmatprep.mubr.bf16.mxu0 0
      %3934 = vmatmul.mubr.bf16.gmra.mrb[0].mxu0 %v3648
      %v3935 = vpop.f32.mrb[0].mxu0
      %v3936 = vadd.f32 0.0, %v3935
      %v3937 = vpop.f32.mrb[0].mxu0
      %v3938 = vpop.f32.mrb[0].mxu0
      %v3939 = vadd.f32 0.0, %v3938
      %v3940 = vpop.f32.mrb[0].mxu0
      %3941 = vdwg.mxu0
      %v3942 = vadd.f32 %v3391, %v3688
      %v3943 = vadd.f32 %v3392, %v3691
      %v3944 = vadd.f32 %v3393, %v3696
      %v3945 = vadd.f32 %v3394, %v3699
      %v3946 = vadd.f32 %v3395, %v3704
      %v3947 = vadd.f32 %v3396, %v3707
      %v3948 = vadd.f32 %v3397, %v3712
      %v3949 = vadd.f32 %v3398, %v3715
      %v3950 = vadd.f32 %v3399, %v3720
      %v3951 = vadd.f32 %v3400, %v3723
      %v3952 = vadd.f32 %v3401, %v3728
      %v3953 = vadd.f32 %v3402, %v3731
      %v3954 = vadd.f32 %v3403, %v3736
      %v3955 = vadd.f32 %v3404, %v3739
      %v3956 = vadd.f32 %v3405, %v3744
      %v3957 = vadd.f32 %v3406, %v3747
      %v3958 = vadd.f32 %v3407, %v3752
      %v3959 = vadd.f32 %v3408, %v3755
      %v3960 = vadd.f32 %v3409, %v3760
      %v3961 = vadd.f32 %v3410, %v3763
      %v3962 = vadd.f32 %v3411, %v3768
      %v3963 = vadd.f32 %v3412, %v3771
      %v3964 = vadd.f32 %v3413, %v3776
      %v3965 = vadd.f32 %v3414, %v3779
      %v3966 = vadd.f32 %v3415, %v3784
      %v3967 = vadd.f32 %v3416, %v3787
      %v3968 = vadd.f32 %v3417, %v3792
      %v3969 = vadd.f32 %v3418, %v3795
      %v3970 = vadd.f32 %v3419, %v3800
      %v3971 = vadd.f32 %v3420, %v3803
      %v3972 = vadd.f32 %v3421, %v3808
      %v3973 = vadd.f32 %v3422, %v3811
      %v3974 = vadd.f32 %v3423, %v3816
      %v3975 = vadd.f32 %v3424, %v3819
      %v3976 = vadd.f32 %v3425, %v3824
      %v3977 = vadd.f32 %v3426, %v3827
      %v3978 = vadd.f32 %v3427, %v3832
      %v3979 = vadd.f32 %v3428, %v3835
      %v3980 = vadd.f32 %v3429, %v3840
      %v3981 = vadd.f32 %v3430, %v3843
      %v3982 = vadd.f32 %v3431, %v3848
      %v3983 = vadd.f32 %v3432, %v3851
      %v3984 = vadd.f32 %v3433, %v3856
      %v3985 = vadd.f32 %v3434, %v3859
      %v3986 = vadd.f32 %v3435, %v3864
      %v3987 = vadd.f32 %v3436, %v3867
      %v3988 = vadd.f32 %v3437, %v3872
      %v3989 = vadd.f32 %v3438, %v3875
      %v3990 = vadd.f32 %v3439, %v3880
      %v3991 = vadd.f32 %v3440, %v3883
      %v3992 = vadd.f32 %v3441, %v3888
      %v3993 = vadd.f32 %v3442, %v3891
      %v3994 = vadd.f32 %v3443, %v3896
      %v3995 = vadd.f32 %v3444, %v3899
      %v3996 = vadd.f32 %v3445, %v3904
      %v3997 = vadd.f32 %v3446, %v3907
      %v3998 = vadd.f32 %v3447, %v3912
      %v3999 = vadd.f32 %v3448, %v3915
      %v4000 = vadd.f32 %v3449, %v3920
      %v4001 = vadd.f32 %v3450, %v3923
      %v4002 = vadd.f32 %v3451, %v3928
      %v4003 = vadd.f32 %v3452, %v3931
      %v4004 = vadd.f32 %v3453, %v3936
      %v4005 = vadd.f32 %v3454, %v3939
      %v4006 = vld [vmem:[%s3455 + $0x1] sm:$0xff]
      %v4007 = vld [vmem:[%s3455 + $0x9] sm:$0xff]
      %v4008 = vld [vmem:[%s3455 + $0x19] sm:$0xff]
      %v4009 = vld [vmem:[%s3455 + $0x21] sm:$0xff]
      %v4010 = vld [vmem:[%s3455 + $0x31] sm:$0xff]
      %v4011 = vld [vmem:[%s3455 + $0x39] sm:$0xff]
      %v4012 = vld [vmem:[%s3455 + $0x49] sm:$0xff]
      %v4013 = vld [vmem:[%s3455 + $0x51] sm:$0xff]
      %v4014 = vld [vmem:[%s3455 + $0x61] sm:$0xff]
      %v4015 = vld [vmem:[%s3455 + $0x69] sm:$0xff]
      %v4016 = vld [vmem:[%s3455 + $0x79] sm:$0xff]
      %v4017 = vld [vmem:[%s3455 + $0x81] sm:$0xff]
      %v4018 = vld [vmem:[%s3455 + $0x91] sm:$0xff]
      %v4019 = vld [vmem:[%s3455 + $0x99] sm:$0xff]
      %v4020 = vld [vmem:[%s3455 + $0xa9] sm:$0xff]
      %v4021 = vld [vmem:[%s3455 + $0xb1] sm:$0xff]
      %v4022 = vld [vmem:[%s3455 + $0xc1] sm:$0xff]
      %v4023 = vld [vmem:[%s3455 + $0xc9] sm:$0xff]
      %v4024 = vld [vmem:[%s3455 + $0xd9] sm:$0xff]
      %v4025 = vld [vmem:[%s3455 + $0xe1] sm:$0xff]
      %v4026 = vld [vmem:[%s3455 + $0xf1] sm:$0xff]
      %v4027 = vld [vmem:[%s3455 + $0xf9] sm:$0xff]
      %v4028 = vld [vmem:[%s3455 + $0x109] sm:$0xff]
      %v4029 = vld [vmem:[%s3455 + $0x111] sm:$0xff]
      %v4030 = vld [vmem:[%s3455 + $0x121] sm:$0xff]
      %v4031 = vld [vmem:[%s3455 + $0x129] sm:$0xff]
      %v4032 = vld [vmem:[%s3455 + $0x139] sm:$0xff]
      %v4033 = vld [vmem:[%s3455 + $0x141] sm:$0xff]
      %v4034 = vld [vmem:[%s3455 + $0x151] sm:$0xff]
      %v4035 = vld [vmem:[%s3455 + $0x159] sm:$0xff]
      %v4036 = vld [vmem:[%s3455 + $0x169] sm:$0xff]
      %v4037 = vld [vmem:[%s3455 + $0x171] sm:$0xff]
      %v4038 = vld [vmem:[%s3455 + $0x1b1] sm:$0xff]
      %v4039 = vld [vmem:[%s3455 + $0x1b9] sm:$0xff]
      %v4040 = vld [vmem:[%s3455 + $0x1c9] sm:$0xff]
      %v4041 = vld [vmem:[%s3455 + $0x1d1] sm:$0xff]
      %v4042 = vld [vmem:[%s3455 + $0x1e1] sm:$0xff]
      %v4043 = vld [vmem:[%s3455 + $0x1e9] sm:$0xff]
      %v4044 = vld [vmem:[%s3455 + $0x1f9] sm:$0xff]
      %v4045 = vld [vmem:[%s3455 + $0x201] sm:$0xff]
      %v4046 = vld [vmem:[%s3455 + $0x211] sm:$0xff]
      %v4047 = vld [vmem:[%s3455 + $0x219] sm:$0xff]
      %v4048 = vld [vmem:[%s3455 + $0x229] sm:$0xff]
      %v4049 = vld [vmem:[%s3455 + $0x231] sm:$0xff]
      %v4050 = vld [vmem:[%s3455 + $0x241] sm:$0xff]
      %v4051 = vld [vmem:[%s3455 + $0x249] sm:$0xff]
      %v4052 = vld [vmem:[%s3455 + $0x259] sm:$0xff]
      %v4053 = vld [vmem:[%s3455 + $0x261] sm:$0xff]
      %v4054 = vld [vmem:[%s3455 + $0x271] sm:$0xff]
      %v4055 = vld [vmem:[%s3455 + $0x279] sm:$0xff]
      %v4056 = vld [vmem:[%s3455 + $0x289] sm:$0xff]
      %v4057 = vld [vmem:[%s3455 + $0x291] sm:$0xff]
      %v4058 = vld [vmem:[%s3455 + $0x2a1] sm:$0xff]
      %v4059 = vld [vmem:[%s3455 + $0x2a9] sm:$0xff]
      %v4060 = vld [vmem:[%s3455 + $0x2b9] sm:$0xff]
      %v4061 = vld [vmem:[%s3455 + $0x2c1] sm:$0xff]
      %v4062 = vld [vmem:[%s3455 + $0x2d1] sm:$0xff]
      %v4063 = vld [vmem:[%s3455 + $0x2d9] sm:$0xff]
      %v4064 = vld [vmem:[%s3455 + $0x2e9] sm:$0xff]
      %v4065 = vld [vmem:[%s3455 + $0x2f1] sm:$0xff]
      %v4066 = vld [vmem:[%s3455 + $0x301] sm:$0xff]
      %v4067 = vld [vmem:[%s3455 + $0x309] sm:$0xff]
      %v4068 = vld [vmem:[%s3455 + $0x319] sm:$0xff]
      %v4069 = vld [vmem:[%s3455 + $0x321] sm:$0xff]
      %v4070 = vpack.c.bf16 %v4007, %v4006
      %v4071 = vpack.c.bf16 %v4009, %v4008
      %v4072 = vpack.c.bf16 %v4011, %v4010
      %v4073 = vpack.c.bf16 %v4013, %v4012
      %v4074 = vpack.c.bf16 %v4015, %v4014
      %v4075 = vpack.c.bf16 %v4017, %v4016
      %v4076 = vpack.c.bf16 %v4019, %v4018
      %v4077 = vpack.c.bf16 %v4021, %v4020
      %v4078 = vpack.c.bf16 %v4023, %v4022
      %v4079 = vpack.c.bf16 %v4025, %v4024
      %v4080 = vpack.c.bf16 %v4027, %v4026
      %v4081 = vpack.c.bf16 %v4029, %v4028
      %v4082 = vpack.c.bf16 %v4031, %v4030
      %v4083 = vpack.c.bf16 %v4033, %v4032
      %v4084 = vpack.c.bf16 %v4035, %v4034
      %v4085 = vpack.c.bf16 %v4037, %v4036
      %v4086 = vpack.c.bf16 %v4039, %v4038
      %v4087 = vpack.c.bf16 %v4041, %v4040
      %v4088 = vpack.c.bf16 %v4043, %v4042
      %v4089 = vpack.c.bf16 %v4045, %v4044
      %v4090 = vpack.c.bf16 %v4047, %v4046
      %v4091 = vpack.c.bf16 %v4049, %v4048
      %v4092 = vpack.c.bf16 %v4051, %v4050
      %v4093 = vpack.c.bf16 %v4053, %v4052
      %v4094 = vpack.c.bf16 %v4055, %v4054
      %v4095 = vpack.c.bf16 %v4057, %v4056
      %v4096 = vpack.c.bf16 %v4059, %v4058
      %v4097 = vpack.c.bf16 %v4061, %v4060
      %v4098 = vpack.c.bf16 %v4063, %v4062
      %v4099 = vpack.c.bf16 %v4065, %v4064
      %v4100 = vpack.c.bf16 %v4067, %v4066
      %v4101 = vpack.c.bf16 %v4069, %v4068
      %s4102 = scalar_lea.vmem %s1, 28
      %v4103 = vld [vmem:[%s4102] sm:$0xf]
      %v4105 = vsel %vm476, %v4070, 0
      %v4108 = vsel %vm476, %v4071, 0
      %v4111 = vsel %vm476, %v4072, 0
      %v4114 = vsel %vm476, %v4073, 0
      %v4117 = vsel %vm476, %v4074, 0
      %v4120 = vsel %vm476, %v4075, 0
      %v4123 = vsel %vm476, %v4076, 0
      %v4126 = vsel %vm476, %v4077, 0
      %v4129 = vsel %vm476, %v4078, 0
      %v4132 = vsel %vm476, %v4079, 0
      %v4135 = vsel %vm476, %v4080, 0
      %v4138 = vsel %vm476, %v4081, 0
      %v4141 = vsel %vm476, %v4082, 0
      %v4144 = vsel %vm476, %v4083, 0
      %v4147 = vsel %vm476, %v4084, 0
      %v4150 = vsel %vm476, %v4085, 0
      %v4153 = vsel %vm476, %v4086, 0
      %v4156 = vsel %vm476, %v4087, 0
      %v4159 = vsel %vm476, %v4088, 0
      %v4162 = vsel %vm476, %v4089, 0
      %v4165 = vsel %vm476, %v4090, 0
      %v4168 = vsel %vm476, %v4091, 0
      %v4171 = vsel %vm476, %v4092, 0
      %v4174 = vsel %vm476, %v4093, 0
      %v4177 = vsel %vm476, %v4094, 0
      %v4180 = vsel %vm476, %v4095, 0
      %v4183 = vsel %vm476, %v4096, 0
      %v4186 = vsel %vm476, %v4097, 0
      %v4189 = vsel %vm476, %v4098, 0
      %v4192 = vsel %vm476, %v4099, 0
      %v4195 = vsel %vm476, %v4100, 0
      %v4198 = vsel %vm476, %v4101, 0
      %v4201 = vsel %vm573, %v4103, 0
      %4203 = vmatprep.subr.bf16.mxu0 0
      %4204 = vmatpush1.bf16.msra.mxu0 %v4201
      %4205 = vmatprep.subr.bf16.mxu0 0
      %4206 = vmatpush1.bf16.msra.mxu0 0
      %4207 = vmatprep.subr.bf16.mxu0 0
      %4208 = vmatpush1.bf16.msra.mxu0 0
      %4209 = vmatprep.subr.bf16.mxu0 0
      %4210 = vmatpush1.bf16.msra.mxu0 0
      %4211 = vmatprep.subr.bf16.mxu0 0
      %4212 = vmatpush1.bf16.msra.mxu0 0
      %4213 = vmatprep.subr.bf16.mxu0 0
      %4214 = vmatpush1.bf16.msra.mxu0 0
      %4215 = vmatprep.subr.bf16.mxu0 0
      %4216 = vmatpush1.bf16.msra.mxu0 0
      %4217 = vmatprep.subr.bf16.mxu0 0
      %4218 = vmatpush1.bf16.msra.mxu0 0
      %4219 = vmatprep.subr.bf16.mxu0 0
      %4220 = vmatpush1.bf16.msra.mxu0 0
      %4221 = vmatprep.subr.bf16.mxu0 0
      %4222 = vmatpush1.bf16.msra.mxu0 0
      %4223 = vmatprep.subr.bf16.mxu0 0
      %4224 = vmatpush1.bf16.msra.mxu0 0
      %4225 = vmatprep.subr.bf16.mxu0 0
      %4226 = vmatpush1.bf16.msra.mxu0 0
      %4227 = vmatprep.subr.bf16.mxu0 0
      %4228 = vmatpush1.bf16.msra.mxu0 0
      %4229 = vmatprep.subr.bf16.mxu0 0
      %4230 = vmatpush1.bf16.msra.mxu0 0
      %4231 = vmatprep.subr.bf16.mxu0 0
      %4232 = vmatpush1.bf16.msra.mxu0 0
      %4233 = vmatprep.subr.bf16.mxu0 0
      %4234 = vmatpush1.bf16.msra.mxu0 0
      %4235 = vmatprep.mubr.bf16.mxu0 0
      %4236 = vmatmul.mubr.bf16.gmra.mrb[0].mxu0 %v4105
      %v4237 = vpop.f32.mrb[0].mxu0
      %v4238 = vadd.f32 0.0, %v4237
      %v4239 = vpop.f32.mrb[0].mxu0
      %v4240 = vpop.f32.mrb[0].mxu0
      %v4241 = vadd.f32 0.0, %v4240
      %v4242 = vpop.f32.mrb[0].mxu0
      %4243 = vmatprep.mubr.bf16.mxu0 0
      %4244 = vmatmul.mubr.bf16.gmra.mrb[0].mxu0 %v4108
      %v4245 = vpop.f32.mrb[0].mxu0
      %v4246 = vadd.f32 0.0, %v4245
      %v4247 = vpop.f32.mrb[0].mxu0
      %v4248 = vpop.f32.mrb[0].mxu0
      %v4249 = vadd.f32 0.0, %v4248
      %v4250 = vpop.f32.mrb[0].mxu0
      %4251 = vmatprep.mubr.bf16.mxu0 0
      %4252 = vmatmul.mubr.bf16.gmra.mrb[0].mxu0 %v4111
      %v4253 = vpop.f32.mrb[0].mxu0
      %v4254 = vadd.f32 0.0, %v4253
      %v4255 = vpop.f32.mrb[0].mxu0
      %v4256 = vpop.f32.mrb[0].mxu0
      %v4257 = vadd.f32 0.0, %v4256
      %v4258 = vpop.f32.mrb[0].mxu0
      %4259 = vmatprep.mubr.bf16.mxu0 0
      %4260 = vmatmul.mubr.bf16.gmra.mrb[0].mxu0 %v4114
      %v4261 = vpop.f32.mrb[0].mxu0
      %v4262 = vadd.f32 0.0, %v4261
      %v4263 = vpop.f32.mrb[0].mxu0
      %v4264 = vpop.f32.mrb[0].mxu0
      %v4265 = vadd.f32 0.0, %v4264
      %v4266 = vpop.f32.mrb[0].mxu0
      %4267 = vmatprep.mubr.bf16.mxu0 0
      %4268 = vmatmul.mubr.bf16.gmra.mrb[0].mxu0 %v4117
      %v4269 = vpop.f32.mrb[0].mxu0
      %v4270 = vadd.f32 0.0, %v4269
      %v4271 = vpop.f32.mrb[0].mxu0
      %v4272 = vpop.f32.mrb[0].mxu0
      %v4273 = vadd.f32 0.0, %v4272
      %v4274 = vpop.f32.mrb[0].mxu0
      %4275 = vmatprep.mubr.bf16.mxu0 0
      %4276 = vmatmul.mubr.bf16.gmra.mrb[0].mxu0 %v4120
      %v4277 = vpop.f32.mrb[0].mxu0
      %v4278 = vadd.f32 0.0, %v4277
      %v4279 = vpop.f32.mrb[0].mxu0
      %v4280 = vpop.f32.mrb[0].mxu0
      %v4281 = vadd.f32 0.0, %v4280
      %v4282 = vpop.f32.mrb[0].mxu0
      %4283 = vmatprep.mubr.bf16.mxu0 0
      %4284 = vmatmul.mubr.bf16.gmra.mrb[0].mxu0 %v4123
      %v4285 = vpop.f32.mrb[0].mxu0
      %v4286 = vadd.f32 0.0, %v4285
      %v4287 = vpop.f32.mrb[0].mxu0
      %v4288 = vpop.f32.mrb[0].mxu0
      %v4289 = vadd.f32 0.0, %v4288
      %v4290 = vpop.f32.mrb[0].mxu0
      %4291 = vmatprep.mubr.bf16.mxu0 0
      %4292 = vmatmul.mubr.bf16.gmra.mrb[0].mxu0 %v4126
      %v4293 = vpop.f32.mrb[0].mxu0
      %v4294 = vadd.f32 0.0, %v4293
      %v4295 = vpop.f32.mrb[0].mxu0
      %v4296 = vpop.f32.mrb[0].mxu0
      %v4297 = vadd.f32 0.0, %v4296
      %v4298 = vpop.f32.mrb[0].mxu0
      %4299 = vmatprep.mubr.bf16.mxu0 0
      %4300 = vmatmul.mubr.bf16.gmra.mrb[0].mxu0 %v4129
      %v4301 = vpop.f32.mrb[0].mxu0
      %v4302 = vadd.f32 0.0, %v4301
      %v4303 = vpop.f32.mrb[0].mxu0
      %v4304 = vpop.f32.mrb[0].mxu0
      %v4305 = vadd.f32 0.0, %v4304
      %v4306 = vpop.f32.mrb[0].mxu0
      %4307 = vmatprep.mubr.bf16.mxu0 0
      %4308 = vmatmul.mubr.bf16.gmra.mrb[0].mxu0 %v4132
      %v4309 = vpop.f32.mrb[0].mxu0
      %v4310 = vadd.f32 0.0, %v4309
      %v4311 = vpop.f32.mrb[0].mxu0
      %v4312 = vpop.f32.mrb[0].mxu0
      %v4313 = vadd.f32 0.0, %v4312
      %v4314 = vpop.f32.mrb[0].mxu0
      %4315 = vmatprep.mubr.bf16.mxu0 0
      %4316 = vmatmul.mubr.bf16.gmra.mrb[0].mxu0 %v4135
      %v4317 = vpop.f32.mrb[0].mxu0
      %v4318 = vadd.f32 0.0, %v4317
      %v4319 = vpop.f32.mrb[0].mxu0
      %v4320 = vpop.f32.mrb[0].mxu0
      %v4321 = vadd.f32 0.0, %v4320
      %v4322 = vpop.f32.mrb[0].mxu0
      %4323 = vmatprep.mubr.bf16.mxu0 0
      %4324 = vmatmul.mubr.bf16.gmra.mrb[0].mxu0 %v4138
      %v4325 = vpop.f32.mrb[0].mxu0
      %v4326 = vadd.f32 0.0, %v4325
      %v4327 = vpop.f32.mrb[0].mxu0
      %v4328 = vpop.f32.mrb[0].mxu0
      %v4329 = vadd.f32 0.0, %v4328
      %v4330 = vpop.f32.mrb[0].mxu0
      %4331 = vmatprep.mubr.bf16.mxu0 0
      %4332 = vmatmul.mubr.bf16.gmra.mrb[0].mxu0 %v4141
      %v4333 = vpop.f32.mrb[0].mxu0
      %v4334 = vadd.f32 0.0, %v4333
      %v4335 = vpop.f32.mrb[0].mxu0
      %v4336 = vpop.f32.mrb[0].mxu0
      %v4337 = vadd.f32 0.0, %v4336
      %v4338 = vpop.f32.mrb[0].mxu0
      %4339 = vmatprep.mubr.bf16.mxu0 0
      %4340 = vmatmul.mubr.bf16.gmra.mrb[0].mxu0 %v4144
      %v4341 = vpop.f32.mrb[0].mxu0
      %v4342 = vadd.f32 0.0, %v4341
      %v4343 = vpop.f32.mrb[0].mxu0
      %v4344 = vpop.f32.mrb[0].mxu0
      %v4345 = vadd.f32 0.0, %v4344
      %v4346 = vpop.f32.mrb[0].mxu0
      %4347 = vmatprep.mubr.bf16.mxu0 0
      %4348 = vmatmul.mubr.bf16.gmra.mrb[0].mxu0 %v4147
      %v4349 = vpop.f32.mrb[0].mxu0
      %v4350 = vadd.f32 0.0, %v4349
      %v4351 = vpop.f32.mrb[0].mxu0
      %v4352 = vpop.f32.mrb[0].mxu0
      %v4353 = vadd.f32 0.0, %v4352
      %v4354 = vpop.f32.mrb[0].mxu0
      %4355 = vmatprep.mubr.bf16.mxu0 0
      %4356 = vmatmul.mubr.bf16.gmra.mrb[0].mxu0 %v4150
      %v4357 = vpop.f32.mrb[0].mxu0
      %v4358 = vadd.f32 0.0, %v4357
      %v4359 = vpop.f32.mrb[0].mxu0
      %v4360 = vpop.f32.mrb[0].mxu0
      %v4361 = vadd.f32 0.0, %v4360
      %v4362 = vpop.f32.mrb[0].mxu0
      %4363 = vmatprep.mubr.bf16.mxu0 0
      %4364 = vmatmul.mubr.bf16.gmra.mrb[0].mxu0 %v4153
      %v4365 = vpop.f32.mrb[0].mxu0
      %v4366 = vadd.f32 0.0, %v4365
      %v4367 = vpop.f32.mrb[0].mxu0
      %v4368 = vpop.f32.mrb[0].mxu0
      %v4369 = vadd.f32 0.0, %v4368
      %v4370 = vpop.f32.mrb[0].mxu0
      %4371 = vmatprep.mubr.bf16.mxu0 0
      %4372 = vmatmul.mubr.bf16.gmra.mrb[0].mxu0 %v4156
      %v4373 = vpop.f32.mrb[0].mxu0
      %v4374 = vadd.f32 0.0, %v4373
      %v4375 = vpop.f32.mrb[0].mxu0
      %v4376 = vpop.f32.mrb[0].mxu0
      %v4377 = vadd.f32 0.0, %v4376
      %v4378 = vpop.f32.mrb[0].mxu0
      %4379 = vmatprep.mubr.bf16.mxu0 0
      %4380 = vmatmul.mubr.bf16.gmra.mrb[0].mxu0 %v4159
      %v4381 = vpop.f32.mrb[0].mxu0
      %v4382 = vadd.f32 0.0, %v4381
      %v4383 = vpop.f32.mrb[0].mxu0
      %v4384 = vpop.f32.mrb[0].mxu0
      %v4385 = vadd.f32 0.0, %v4384
      %v4386 = vpop.f32.mrb[0].mxu0
      %4387 = vmatprep.mubr.bf16.mxu0 0
      %4388 = vmatmul.mubr.bf16.gmra.mrb[0].mxu0 %v4162
      %v4389 = vpop.f32.mrb[0].mxu0
      %v4390 = vadd.f32 0.0, %v4389
      %v4391 = vpop.f32.mrb[0].mxu0
      %v4392 = vpop.f32.mrb[0].mxu0
      %v4393 = vadd.f32 0.0, %v4392
      %v4394 = vpop.f32.mrb[0].mxu0
      %4395 = vmatprep.mubr.bf16.mxu0 0
      %4396 = vmatmul.mubr.bf16.gmra.mrb[0].mxu0 %v4165
      %v4397 = vpop.f32.mrb[0].mxu0
      %v4398 = vadd.f32 0.0, %v4397
      %v4399 = vpop.f32.mrb[0].mxu0
      %v4400 = vpop.f32.mrb[0].mxu0
      %v4401 = vadd.f32 0.0, %v4400
      %v4402 = vpop.f32.mrb[0].mxu0
      %4403 = vmatprep.mubr.bf16.mxu0 0
      %4404 = vmatmul.mubr.bf16.gmra.mrb[0].mxu0 %v4168
      %v4405 = vpop.f32.mrb[0].mxu0
      %v4406 = vadd.f32 0.0, %v4405
      %v4407 = vpop.f32.mrb[0].mxu0
      %v4408 = vpop.f32.mrb[0].mxu0
      %v4409 = vadd.f32 0.0, %v4408
      %v4410 = vpop.f32.mrb[0].mxu0
      %4411 = vmatprep.mubr.bf16.mxu0 0
      %4412 = vmatmul.mubr.bf16.gmra.mrb[0].mxu0 %v4171
      %v4413 = vpop.f32.mrb[0].mxu0
      %v4414 = vadd.f32 0.0, %v4413
      %v4415 = vpop.f32.mrb[0].mxu0
      %v4416 = vpop.f32.mrb[0].mxu0
      %v4417 = vadd.f32 0.0, %v4416
      %v4418 = vpop.f32.mrb[0].mxu0
      %4419 = vmatprep.mubr.bf16.mxu0 0
      %4420 = vmatmul.mubr.bf16.gmra.mrb[0].mxu0 %v4174
      %v4421 = vpop.f32.mrb[0].mxu0
      %v4422 = vadd.f32 0.0, %v4421
      %v4423 = vpop.f32.mrb[0].mxu0
      %v4424 = vpop.f32.mrb[0].mxu0
      %v4425 = vadd.f32 0.0, %v4424
      %v4426 = vpop.f32.mrb[0].mxu0
      %4427 = vmatprep.mubr.bf16.mxu0 0
      %4428 = vmatmul.mubr.bf16.gmra.mrb[0].mxu0 %v4177
      %v4429 = vpop.f32.mrb[0].mxu0
      %v4430 = vadd.f32 0.0, %v4429
      %v4431 = vpop.f32.mrb[0].mxu0
      %v4432 = vpop.f32.mrb[0].mxu0
      %v4433 = vadd.f32 0.0, %v4432
      %v4434 = vpop.f32.mrb[0].mxu0
      %4435 = vmatprep.mubr.bf16.mxu0 0
      %4436 = vmatmul.mubr.bf16.gmra.mrb[0].mxu0 %v4180
      %v4437 = vpop.f32.mrb[0].mxu0
      %v4438 = vadd.f32 0.0, %v4437
      %v4439 = vpop.f32.mrb[0].mxu0
      %v4440 = vpop.f32.mrb[0].mxu0
      %v4441 = vadd.f32 0.0, %v4440
      %v4442 = vpop.f32.mrb[0].mxu0
      %4443 = vmatprep.mubr.bf16.mxu0 0
      %4444 = vmatmul.mubr.bf16.gmra.mrb[0].mxu0 %v4183
      %v4445 = vpop.f32.mrb[0].mxu0
      %v4446 = vadd.f32 0.0, %v4445
      %v4447 = vpop.f32.mrb[0].mxu0
      %v4448 = vpop.f32.mrb[0].mxu0
      %v4449 = vadd.f32 0.0, %v4448
      %v4450 = vpop.f32.mrb[0].mxu0
      %4451 = vmatprep.mubr.bf16.mxu0 0
      %4452 = vmatmul.mubr.bf16.gmra.mrb[0].mxu0 %v4186
      %v4453 = vpop.f32.mrb[0].mxu0
      %v4454 = vadd.f32 0.0, %v4453
      %v4455 = vpop.f32.mrb[0].mxu0
      %v4456 = vpop.f32.mrb[0].mxu0
      %v4457 = vadd.f32 0.0, %v4456
      %v4458 = vpop.f32.mrb[0].mxu0
      %4459 = vmatprep.mubr.bf16.mxu0 0
      %4460 = vmatmul.mubr.bf16.gmra.mrb[0].mxu0 %v4189
      %v4461 = vpop.f32.mrb[0].mxu0
      %v4462 = vadd.f32 0.0, %v4461
      %v4463 = vpop.f32.mrb[0].mxu0
      %v4464 = vpop.f32.mrb[0].mxu0
      %v4465 = vadd.f32 0.0, %v4464
      %v4466 = vpop.f32.mrb[0].mxu0
      %4467 = vmatprep.mubr.bf16.mxu0 0
      %4468 = vmatmul.mubr.bf16.gmra.mrb[0].mxu0 %v4192
      %v4469 = vpop.f32.mrb[0].mxu0
      %v4470 = vadd.f32 0.0, %v4469
      %v4471 = vpop.f32.mrb[0].mxu0
      %v4472 = vpop.f32.mrb[0].mxu0
      %v4473 = vadd.f32 0.0, %v4472
      %v4474 = vpop.f32.mrb[0].mxu0
      %4475 = vmatprep.mubr.bf16.mxu0 0
      %4476 = vmatmul.mubr.bf16.gmra.mrb[0].mxu0 %v4195
      %v4477 = vpop.f32.mrb[0].mxu0
      %v4478 = vadd.f32 0.0, %v4477
      %v4479 = vpop.f32.mrb[0].mxu0
      %v4480 = vpop.f32.mrb[0].mxu0
      %v4481 = vadd.f32 0.0, %v4480
      %v4482 = vpop.f32.mrb[0].mxu0
      %4483 = vmatprep.mubr.bf16.mxu0 0
      %4484 = vmatmul.mubr.bf16.gmra.mrb[0].mxu0 %v4198
      %v4485 = vpop.f32.mrb[0].mxu0
      %v4486 = vadd.f32 0.0, %v4485
      %v4487 = vpop.f32.mrb[0].mxu0
      %v4488 = vpop.f32.mrb[0].mxu0
      %v4489 = vadd.f32 0.0, %v4488
      %v4490 = vpop.f32.mrb[0].mxu0
      %4491 = vdwg.mxu0
      %v4492 = vadd.f32 %v3942, %v4238
      %v4493 = vadd.f32 %v3943, %v4241
      %v4494 = vadd.f32 %v3944, %v4246
      %v4495 = vadd.f32 %v3945, %v4249
      %v4496 = vadd.f32 %v3946, %v4254
      %v4497 = vadd.f32 %v3947, %v4257
      %v4498 = vadd.f32 %v3948, %v4262
      %v4499 = vadd.f32 %v3949, %v4265
      %v4500 = vadd.f32 %v3950, %v4270
      %v4501 = vadd.f32 %v3951, %v4273
      %v4502 = vadd.f32 %v3952, %v4278
      %v4503 = vadd.f32 %v3953, %v4281
      %v4504 = vadd.f32 %v3954, %v4286
      %v4505 = vadd.f32 %v3955, %v4289
      %v4506 = vadd.f32 %v3956, %v4294
      %v4507 = vadd.f32 %v3957, %v4297
      %v4508 = vadd.f32 %v3958, %v4302
      %v4509 = vadd.f32 %v3959, %v4305
      %v4510 = vadd.f32 %v3960, %v4310
      %v4511 = vadd.f32 %v3961, %v4313
      %v4512 = vadd.f32 %v3962, %v4318
      %v4513 = vadd.f32 %v3963, %v4321
      %v4514 = vadd.f32 %v3964, %v4326
      %v4515 = vadd.f32 %v3965, %v4329
      %v4516 = vadd.f32 %v3966, %v4334
      %v4517 = vadd.f32 %v3967, %v4337
      %v4518 = vadd.f32 %v3968, %v4342
      %v4519 = vadd.f32 %v3969, %v4345
      %v4520 = vadd.f32 %v3970, %v4350
      %v4521 = vadd.f32 %v3971, %v4353
      %v4522 = vadd.f32 %v3972, %v4358
      %v4523 = vadd.f32 %v3973, %v4361
      %v4524 = vadd.f32 %v3974, %v4366
      %v4525 = vadd.f32 %v3975, %v4369
      %v4526 = vadd.f32 %v3976, %v4374
      %v4527 = vadd.f32 %v3977, %v4377
      %v4528 = vadd.f32 %v3978, %v4382
      %v4529 = vadd.f32 %v3979, %v4385
      %v4530 = vadd.f32 %v3980, %v4390
      %v4531 = vadd.f32 %v3981, %v4393
      %v4532 = vadd.f32 %v3982, %v4398
      %v4533 = vadd.f32 %v3983, %v4401
      %v4534 = vadd.f32 %v3984, %v4406
      %v4535 = vadd.f32 %v3985, %v4409
      %v4536 = vadd.f32 %v3986, %v4414
      %v4537 = vadd.f32 %v3987, %v4417
      %v4538 = vadd.f32 %v3988, %v4422
      %v4539 = vadd.f32 %v3989, %v4425
      %v4540 = vadd.f32 %v3990, %v4430
      %v4541 = vadd.f32 %v3991, %v4433
      %v4542 = vadd.f32 %v3992, %v4438
      %v4543 = vadd.f32 %v3993, %v4441
      %v4544 = vadd.f32 %v3994, %v4446
      %v4545 = vadd.f32 %v3995, %v4449
      %v4546 = vadd.f32 %v3996, %v4454
      %v4547 = vadd.f32 %v3997, %v4457
      %v4548 = vadd.f32 %v3998, %v4462
      %v4549 = vadd.f32 %v3999, %v4465
      %v4550 = vadd.f32 %v4000, %v4470
      %v4551 = vadd.f32 %v4001, %v4473
      %v4552 = vadd.f32 %v4002, %v4478
      %v4553 = vadd.f32 %v4003, %v4481
      %v4554 = vadd.f32 %v4004, %v4486
      %v4555 = vadd.f32 %v4005, %v4489
      %v4556 = vld [vmem:[%s3455 + $0x2] sm:$0xff]
      %v4557 = vld [vmem:[%s3455 + $0xa] sm:$0xff]
      %v4558 = vld [vmem:[%s3455 + $0x1a] sm:$0xff]
      %v4559 = vld [vmem:[%s3455 + $0x22] sm:$0xff]
      %v4560 = vld [vmem:[%s3455 + $0x32] sm:$0xff]
      %v4561 = vld [vmem:[%s3455 + $0x3a] sm:$0xff]
      %v4562 = vld [vmem:[%s3455 + $0x4a] sm:$0xff]
      %v4563 = vld [vmem:[%s3455 + $0x52] sm:$0xff]
      %v4564 = vld [vmem:[%s3455 + $0x62] sm:$0xff]
      %v4565 = vld [vmem:[%s3455 + $0x6a] sm:$0xff]
      %v4566 = vld [vmem:[%s3455 + $0x7a] sm:$0xff]
      %v4567 = vld [vmem:[%s3455 + $0x82] sm:$0xff]
      %v4568 = vld [vmem:[%s3455 + $0x92] sm:$0xff]
      %v4569 = vld [vmem:[%s3455 + $0x9a] sm:$0xff]
      %v4570 = vld [vmem:[%s3455 + $0xaa] sm:$0xff]
      %v4571 = vld [vmem:[%s3455 + $0xb2] sm:$0xff]
      %v4572 = vld [vmem:[%s3455 + $0xc2] sm:$0xff]
      %v4573 = vld [vmem:[%s3455 + $0xca] sm:$0xff]
      %v4574 = vld [vmem:[%s3455 + $0xda] sm:$0xff]
      %v4575 = vld [vmem:[%s3455 + $0xe2] sm:$0xff]
      %v4576 = vld [vmem:[%s3455 + $0xf2] sm:$0xff]
      %v4577 = vld [vmem:[%s3455 + $0xfa] sm:$0xff]
      %v4578 = vld [vmem:[%s3455 + $0x10a] sm:$0xff]
      %v4579 = vld [vmem:[%s3455 + $0x112] sm:$0xff]
      %v4580 = vld [vmem:[%s3455 + $0x122] sm:$0xff]
      %v4581 = vld [vmem:[%s3455 + $0x12a] sm:$0xff]
      %v4582 = vld [vmem:[%s3455 + $0x13a] sm:$0xff]
      %v4583 = vld [vmem:[%s3455 + $0x142] sm:$0xff]
      %v4584 = vld [vmem:[%s3455 + $0x152] sm:$0xff]
      %v4585 = vld [vmem:[%s3455 + $0x15a] sm:$0xff]
      %v4586 = vld [vmem:[%s3455 + $0x16a] sm:$0xff]
      %v4587 = vld [vmem:[%s3455 + $0x172] sm:$0xff]
      %v4588 = vld [vmem:[%s3455 + $0x1b2] sm:$0xff]
      %v4589 = vld [vmem:[%s3455 + $0x1ba] sm:$0xff]
      %v4590 = vld [vmem:[%s3455 + $0x1ca] sm:$0xff]
      %v4591 = vld [vmem:[%s3455 + $0x1d2] sm:$0xff]
      %v4592 = vld [vmem:[%s3455 + $0x1e2] sm:$0xff]
      %v4593 = vld [vmem:[%s3455 + $0x1ea] sm:$0xff]
      %v4594 = vld [vmem:[%s3455 + $0x1fa] sm:$0xff]
      %v4595 = vld [vmem:[%s3455 + $0x202] sm:$0xff]
      %v4596 = vld [vmem:[%s3455 + $0x212] sm:$0xff]
      %v4597 = vld [vmem:[%s3455 + $0x21a] sm:$0xff]
      %v4598 = vld [vmem:[%s3455 + $0x22a] sm:$0xff]
      %v4599 = vld [vmem:[%s3455 + $0x232] sm:$0xff]
      %v4600 = vld [vmem:[%s3455 + $0x242] sm:$0xff]
      %v4601 = vld [vmem:[%s3455 + $0x24a] sm:$0xff]
      %v4602 = vld [vmem:[%s3455 + $0x25a] sm:$0xff]
      %v4603 = vld [vmem:[%s3455 + $0x262] sm:$0xff]
      %v4604 = vld [vmem:[%s3455 + $0x272] sm:$0xff]
      %v4605 = vld [vmem:[%s3455 + $0x27a] sm:$0xff]
      %v4606 = vld [vmem:[%s3455 + $0x28a] sm:$0xff]
      %v4607 = vld [vmem:[%s3455 + $0x292] sm:$0xff]
      %v4608 = vld [vmem:[%s3455 + $0x2a2] sm:$0xff]
      %v4609 = vld [vmem:[%s3455 + $0x2aa] sm:$0xff]
      %v4610 = vld [vmem:[%s3455 + $0x2ba] sm:$0xff]
      %v4611 = vld [vmem:[%s3455 + $0x2c2] sm:$0xff]
      %v4612 = vld [vmem:[%s3455 + $0x2d2] sm:$0xff]
      %v4613 = vld [vmem:[%s3455 + $0x2da] sm:$0xff]
      %v4614 = vld [vmem:[%s3455 + $0x2ea] sm:$0xff]
      %v4615 = vld [vmem:[%s3455 + $0x2f2] sm:$0xff]
      %v4616 = vld [vmem:[%s3455 + $0x302] sm:$0xff]
      %v4617 = vld [vmem:[%s3455 + $0x30a] sm:$0xff]
      %v4618 = vld [vmem:[%s3455 + $0x31a] sm:$0xff]
      %v4619 = vld [vmem:[%s3455 + $0x322] sm:$0xff]
      %v4620 = vpack.c.bf16 %v4557, %v4556
      %v4621 = vpack.c.bf16 %v4559, %v4558
      %v4622 = vpack.c.bf16 %v4561, %v4560
      %v4623 = vpack.c.bf16 %v4563, %v4562
      %v4624 = vpack.c.bf16 %v4565, %v4564
      %v4625 = vpack.c.bf16 %v4567, %v4566
      %v4626 = vpack.c.bf16 %v4569, %v4568
      %v4627 = vpack.c.bf16 %v4571, %v4570
      %v4628 = vpack.c.bf16 %v4573, %v4572
      %v4629 = vpack.c.bf16 %v4575, %v4574
      %v4630 = vpack.c.bf16 %v4577, %v4576
      %v4631 = vpack.c.bf16 %v4579, %v4578
      %v4632 = vpack.c.bf16 %v4581, %v4580
      %v4633 = vpack.c.bf16 %v4583, %v4582
      %v4634 = vpack.c.bf16 %v4585, %v4584
      %v4635 = vpack.c.bf16 %v4587, %v4586
      %v4636 = vpack.c.bf16 %v4589, %v4588
      %v4637 = vpack.c.bf16 %v4591, %v4590
      %v4638 = vpack.c.bf16 %v4593, %v4592
      %v4639 = vpack.c.bf16 %v4595, %v4594
      %v4640 = vpack.c.bf16 %v4597, %v4596
      %v4641 = vpack.c.bf16 %v4599, %v4598
      %v4642 = vpack.c.bf16 %v4601, %v4600
      %v4643 = vpack.c.bf16 %v4603, %v4602
      %v4644 = vpack.c.bf16 %v4605, %v4604
      %v4645 = vpack.c.bf16 %v4607, %v4606
      %v4646 = vpack.c.bf16 %v4609, %v4608
      %v4647 = vpack.c.bf16 %v4611, %v4610
      %v4648 = vpack.c.bf16 %v4613, %v4612
      %v4649 = vpack.c.bf16 %v4615, %v4614
      %v4650 = vpack.c.bf16 %v4617, %v4616
      %v4651 = vpack.c.bf16 %v4619, %v4618
      %s4652 = scalar_lea.vmem %s1, 32
      %v4653 = vld [vmem:[%s4652] sm:$0xf]
      %v4655 = vsel %vm476, %v4620, 0
      %v4658 = vsel %vm476, %v4621, 0
      %v4661 = vsel %vm476, %v4622, 0
      %v4664 = vsel %vm476, %v4623, 0
      %v4667 = vsel %vm476, %v4624, 0
      %v4670 = vsel %vm476, %v4625, 0
      %v4673 = vsel %vm476, %v4626, 0
      %v4676 = vsel %vm476, %v4627, 0
      %v4679 = vsel %vm476, %v4628, 0
      %v4682 = vsel %vm476, %v4629, 0
      %v4685 = vsel %vm476, %v4630, 0
      %v4688 = vsel %vm476, %v4631, 0
      %v4691 = vsel %vm476, %v4632, 0
      %v4694 = vsel %vm476, %v4633, 0
      %v4697 = vsel %vm476, %v4634, 0
      %v4700 = vsel %vm476, %v4635, 0
      %v4703 = vsel %vm476, %v4636, 0
      %v4706 = vsel %vm476, %v4637, 0
      %v4709 = vsel %vm476, %v4638, 0
      %v4712 = vsel %vm476, %v4639, 0
      %v4715 = vsel %vm476, %v4640, 0
      %v4718 = vsel %vm476, %v4641, 0
      %v4721 = vsel %vm476, %v4642, 0
      %v4724 = vsel %vm476, %v4643, 0
      %v4727 = vsel %vm476, %v4644, 0
      %v4730 = vsel %vm476, %v4645, 0
      %v4733 = vsel %vm476, %v4646, 0
      %v4736 = vsel %vm476, %v4647, 0
      %v4739 = vsel %vm476, %v4648, 0
      %v4742 = vsel %vm476, %v4649, 0
      %v4745 = vsel %vm476, %v4650, 0
      %v4748 = vsel %vm476, %v4651, 0
      %v4751 = vsel %vm573, %v4653, 0
      %4753 = vmatprep.subr.bf16.mxu0 0
      %4754 = vmatpush1.bf16.msra.mxu0 %v4751
      %4755 = vmatprep.subr.bf16.mxu0 0
      %4756 = vmatpush1.bf16.msra.mxu0 0
      %4757 = vmatprep.subr.bf16.mxu0 0
      %4758 = vmatpush1.bf16.msra.mxu0 0
      %4759 = vmatprep.subr.bf16.mxu0 0
      %4760 = vmatpush1.bf16.msra.mxu0 0
      %4761 = vmatprep.subr.bf16.mxu0 0
      %4762 = vmatpush1.bf16.msra.mxu0 0
      %4763 = vmatprep.subr.bf16.mxu0 0
      %4764 = vmatpush1.bf16.msra.mxu0 0
      %4765 = vmatprep.subr.bf16.mxu0 0
      %4766 = vmatpush1.bf16.msra.mxu0 0
      %4767 = vmatprep.subr.bf16.mxu0 0
      %4768 = vmatpush1.bf16.msra.mxu0 0
      %4769 = vmatprep.subr.bf16.mxu0 0
      %4770 = vmatpush1.bf16.msra.mxu0 0
      %4771 = vmatprep.subr.bf16.mxu0 0
      %4772 = vmatpush1.bf16.msra.mxu0 0
      %4773 = vmatprep.subr.bf16.mxu0 0
      %4774 = vmatpush1.bf16.msra.mxu0 0
      %4775 = vmatprep.subr.bf16.mxu0 0
      %4776 = vmatpush1.bf16.msra.mxu0 0
      %4777 = vmatprep.subr.bf16.mxu0 0
      %4778 = vmatpush1.bf16.msra.mxu0 0
      %4779 = vmatprep.subr.bf16.mxu0 0
      %4780 = vmatpush1.bf16.msra.mxu0 0
      %4781 = vmatprep.subr.bf16.mxu0 0
      %4782 = vmatpush1.bf16.msra.mxu0 0
      %4783 = vmatprep.subr.bf16.mxu0 0
      %4784 = vmatpush1.bf16.msra.mxu0 0
      %4785 = vmatprep.mubr.bf16.mxu0 0
      %4786 = vmatmul.mubr.bf16.gmra.mrb[0].mxu0 %v4655
      %v4787 = vpop.f32.mrb[0].mxu0
      %v4788 = vadd.f32 0.0, %v4787
      %v4789 = vpop.f32.mrb[0].mxu0
      %v4790 = vpop.f32.mrb[0].mxu0
      %v4791 = vadd.f32 0.0, %v4790
      %v4792 = vpop.f32.mrb[0].mxu0
      %4793 = vmatprep.mubr.bf16.mxu0 0
      %4794 = vmatmul.mubr.bf16.gmra.mrb[0].mxu0 %v4658
      %v4795 = vpop.f32.mrb[0].mxu0
      %v4796 = vadd.f32 0.0, %v4795
      %v4797 = vpop.f32.mrb[0].mxu0
      %v4798 = vpop.f32.mrb[0].mxu0
      %v4799 = vadd.f32 0.0, %v4798
      %v4800 = vpop.f32.mrb[0].mxu0
      %4801 = vmatprep.mubr.bf16.mxu0 0
      %4802 = vmatmul.mubr.bf16.gmra.mrb[0].mxu0 %v4661
      %v4803 = vpop.f32.mrb[0].mxu0
      %v4804 = vadd.f32 0.0, %v4803
      %v4805 = vpop.f32.mrb[0].mxu0
      %v4806 = vpop.f32.mrb[0].mxu0
      %v4807 = vadd.f32 0.0, %v4806
      %v4808 = vpop.f32.mrb[0].mxu0
      %4809 = vmatprep.mubr.bf16.mxu0 0
      %4810 = vmatmul.mubr.bf16.gmra.mrb[0].mxu0 %v4664
      %v4811 = vpop.f32.mrb[0].mxu0
      %v4812 = vadd.f32 0.0, %v4811
      %v4813 = vpop.f32.mrb[0].mxu0
      %v4814 = vpop.f32.mrb[0].mxu0
      %v4815 = vadd.f32 0.0, %v4814
      %v4816 = vpop.f32.mrb[0].mxu0
      %4817 = vmatprep.mubr.bf16.mxu0 0
      %4818 = vmatmul.mubr.bf16.gmra.mrb[0].mxu0 %v4667
      %v4819 = vpop.f32.mrb[0].mxu0
      %v4820 = vadd.f32 0.0, %v4819
      %v4821 = vpop.f32.mrb[0].mxu0
      %v4822 = vpop.f32.mrb[0].mxu0
      %v4823 = vadd.f32 0.0, %v4822
      %v4824 = vpop.f32.mrb[0].mxu0
      %4825 = vmatprep.mubr.bf16.mxu0 0
      %4826 = vmatmul.mubr.bf16.gmra.mrb[0].mxu0 %v4670
      %v4827 = vpop.f32.mrb[0].mxu0
      %v4828 = vadd.f32 0.0, %v4827
      %v4829 = vpop.f32.mrb[0].mxu0
      %v4830 = vpop.f32.mrb[0].mxu0
      %v4831 = vadd.f32 0.0, %v4830
      %v4832 = vpop.f32.mrb[0].mxu0
      %4833 = vmatprep.mubr.bf16.mxu0 0
      %4834 = vmatmul.mubr.bf16.gmra.mrb[0].mxu0 %v4673
      %v4835 = vpop.f32.mrb[0].mxu0
      %v4836 = vadd.f32 0.0, %v4835
      %v4837 = vpop.f32.mrb[0].mxu0
      %v4838 = vpop.f32.mrb[0].mxu0
      %v4839 = vadd.f32 0.0, %v4838
      %v4840 = vpop.f32.mrb[0].mxu0
      %4841 = vmatprep.mubr.bf16.mxu0 0
      %4842 = vmatmul.mubr.bf16.gmra.mrb[0].mxu0 %v4676
      %v4843 = vpop.f32.mrb[0].mxu0
      %v4844 = vadd.f32 0.0, %v4843
      %v4845 = vpop.f32.mrb[0].mxu0
      %v4846 = vpop.f32.mrb[0].mxu0
      %v4847 = vadd.f32 0.0, %v4846
      %v4848 = vpop.f32.mrb[0].mxu0
      %4849 = vmatprep.mubr.bf16.mxu0 0
      %4850 = vmatmul.mubr.bf16.gmra.mrb[0].mxu0 %v4679
      %v4851 = vpop.f32.mrb[0].mxu0
      %v4852 = vadd.f32 0.0, %v4851
      %v4853 = vpop.f32.mrb[0].mxu0
      %v4854 = vpop.f32.mrb[0].mxu0
      %v4855 = vadd.f32 0.0, %v4854
      %v4856 = vpop.f32.mrb[0].mxu0
      %4857 = vmatprep.mubr.bf16.mxu0 0
      %4858 = vmatmul.mubr.bf16.gmra.mrb[0].mxu0 %v4682
      %v4859 = vpop.f32.mrb[0].mxu0
      %v4860 = vadd.f32 0.0, %v4859
      %v4861 = vpop.f32.mrb[0].mxu0
      %v4862 = vpop.f32.mrb[0].mxu0
      %v4863 = vadd.f32 0.0, %v4862
      %v4864 = vpop.f32.mrb[0].mxu0
      %4865 = vmatprep.mubr.bf16.mxu0 0
      %4866 = vmatmul.mubr.bf16.gmra.mrb[0].mxu0 %v4685
      %v4867 = vpop.f32.mrb[0].mxu0
      %v4868 = vadd.f32 0.0, %v4867
      %v4869 = vpop.f32.mrb[0].mxu0
      %v4870 = vpop.f32.mrb[0].mxu0
      %v4871 = vadd.f32 0.0, %v4870
      %v4872 = vpop.f32.mrb[0].mxu0
      %4873 = vmatprep.mubr.bf16.mxu0 0
      %4874 = vmatmul.mubr.bf16.gmra.mrb[0].mxu0 %v4688
      %v4875 = vpop.f32.mrb[0].mxu0
      %v4876 = vadd.f32 0.0, %v4875
      %v4877 = vpop.f32.mrb[0].mxu0
      %v4878 = vpop.f32.mrb[0].mxu0
      %v4879 = vadd.f32 0.0, %v4878
      %v4880 = vpop.f32.mrb[0].mxu0
      %4881 = vmatprep.mubr.bf16.mxu0 0
      %4882 = vmatmul.mubr.bf16.gmra.mrb[0].mxu0 %v4691
      %v4883 = vpop.f32.mrb[0].mxu0
      %v4884 = vadd.f32 0.0, %v4883
      %v4885 = vpop.f32.mrb[0].mxu0
      %v4886 = vpop.f32.mrb[0].mxu0
      %v4887 = vadd.f32 0.0, %v4886
      %v4888 = vpop.f32.mrb[0].mxu0
      %4889 = vmatprep.mubr.bf16.mxu0 0
      %4890 = vmatmul.mubr.bf16.gmra.mrb[0].mxu0 %v4694
      %v4891 = vpop.f32.mrb[0].mxu0
      %v4892 = vadd.f32 0.0, %v4891
      %v4893 = vpop.f32.mrb[0].mxu0
      %v4894 = vpop.f32.mrb[0].mxu0
      %v4895 = vadd.f32 0.0, %v4894
      %v4896 = vpop.f32.mrb[0].mxu0
      %4897 = vmatprep.mubr.bf16.mxu0 0
      %4898 = vmatmul.mubr.bf16.gmra.mrb[0].mxu0 %v4697
      %v4899 = vpop.f32.mrb[0].mxu0
      %v4900 = vadd.f32 0.0, %v4899
      %v4901 = vpop.f32.mrb[0].mxu0
      %v4902 = vpop.f32.mrb[0].mxu0
      %v4903 = vadd.f32 0.0, %v4902
      %v4904 = vpop.f32.mrb[0].mxu0
      %4905 = vmatprep.mubr.bf16.mxu0 0
      %4906 = vmatmul.mubr.bf16.gmra.mrb[0].mxu0 %v4700
      %v4907 = vpop.f32.mrb[0].mxu0
      %v4908 = vadd.f32 0.0, %v4907
      %v4909 = vpop.f32.mrb[0].mxu0
      %v4910 = vpop.f32.mrb[0].mxu0
      %v4911 = vadd.f32 0.0, %v4910
      %v4912 = vpop.f32.mrb[0].mxu0
      %4913 = vmatprep.mubr.bf16.mxu0 0
      %4914 = vmatmul.mubr.bf16.gmra.mrb[0].mxu0 %v4703
      %v4915 = vpop.f32.mrb[0].mxu0
      %v4916 = vadd.f32 0.0, %v4915
      %v4917 = vpop.f32.mrb[0].mxu0
      %v4918 = vpop.f32.mrb[0].mxu0
      %v4919 = vadd.f32 0.0, %v4918
      %v4920 = vpop.f32.mrb[0].mxu0
      %4921 = vmatprep.mubr.bf16.mxu0 0
      %4922 = vmatmul.mubr.bf16.gmra.mrb[0].mxu0 %v4706
      %v4923 = vpop.f32.mrb[0].mxu0
      %v4924 = vadd.f32 0.0, %v4923
      %v4925 = vpop.f32.mrb[0].mxu0
      %v4926 = vpop.f32.mrb[0].mxu0
      %v4927 = vadd.f32 0.0, %v4926
      %v4928 = vpop.f32.mrb[0].mxu0
      %4929 = vmatprep.mubr.bf16.mxu0 0
      %4930 = vmatmul.mubr.bf16.gmra.mrb[0].mxu0 %v4709
      %v4931 = vpop.f32.mrb[0].mxu0
      %v4932 = vadd.f32 0.0, %v4931
      %v4933 = vpop.f32.mrb[0].mxu0
      %v4934 = vpop.f32.mrb[0].mxu0
      %v4935 = vadd.f32 0.0, %v4934
      %v4936 = vpop.f32.mrb[0].mxu0
      %4937 = vmatprep.mubr.bf16.mxu0 0
      %4938 = vmatmul.mubr.bf16.gmra.mrb[0].mxu0 %v4712
      %v4939 = vpop.f32.mrb[0].mxu0
      %v4940 = vadd.f32 0.0, %v4939
      %v4941 = vpop.f32.mrb[0].mxu0
      %v4942 = vpop.f32.mrb[0].mxu0
      %v4943 = vadd.f32 0.0, %v4942
      %v4944 = vpop.f32.mrb[0].mxu0
      %4945 = vmatprep.mubr.bf16.mxu0 0
      %4946 = vmatmul.mubr.bf16.gmra.mrb[0].mxu0 %v4715
      %v4947 = vpop.f32.mrb[0].mxu0
      %v4948 = vadd.f32 0.0, %v4947
      %v4949 = vpop.f32.mrb[0].mxu0
      %v4950 = vpop.f32.mrb[0].mxu0
      %v4951 = vadd.f32 0.0, %v4950
      %v4952 = vpop.f32.mrb[0].mxu0
      %4953 = vmatprep.mubr.bf16.mxu0 0
      %4954 = vmatmul.mubr.bf16.gmra.mrb[0].mxu0 %v4718
      %v4955 = vpop.f32.mrb[0].mxu0
      %v4956 = vadd.f32 0.0, %v4955
      %v4957 = vpop.f32.mrb[0].mxu0
      %v4958 = vpop.f32.mrb[0].mxu0
      %v4959 = vadd.f32 0.0, %v4958
      %v4960 = vpop.f32.mrb[0].mxu0
      %4961 = vmatprep.mubr.bf16.mxu0 0
      %4962 = vmatmul.mubr.bf16.gmra.mrb[0].mxu0 %v4721
      %v4963 = vpop.f32.mrb[0].mxu0
      %v4964 = vadd.f32 0.0, %v4963
      %v4965 = vpop.f32.mrb[0].mxu0
      %v4966 = vpop.f32.mrb[0].mxu0
      %v4967 = vadd.f32 0.0, %v4966
      %v4968 = vpop.f32.mrb[0].mxu0
      %4969 = vmatprep.mubr.bf16.mxu0 0
      %4970 = vmatmul.mubr.bf16.gmra.mrb[0].mxu0 %v4724
      %v4971 = vpop.f32.mrb[0].mxu0
      %v4972 = vadd.f32 0.0, %v4971
      %v4973 = vpop.f32.mrb[0].mxu0
      %v4974 = vpop.f32.mrb[0].mxu0
      %v4975 = vadd.f32 0.0, %v4974
      %v4976 = vpop.f32.mrb[0].mxu0
      %4977 = vmatprep.mubr.bf16.mxu0 0
      %4978 = vmatmul.mubr.bf16.gmra.mrb[0].mxu0 %v4727
      %v4979 = vpop.f32.mrb[0].mxu0
      %v4980 = vadd.f32 0.0, %v4979
      %v4981 = vpop.f32.mrb[0].mxu0
      %v4982 = vpop.f32.mrb[0].mxu0
      %v4983 = vadd.f32 0.0, %v4982
      %v4984 = vpop.f32.mrb[0].mxu0
      %4985 = vmatprep.mubr.bf16.mxu0 0
      %4986 = vmatmul.mubr.bf16.gmra.mrb[0].mxu0 %v4730
      %v4987 = vpop.f32.mrb[0].mxu0
      %v4988 = vadd.f32 0.0, %v4987
      %v4989 = vpop.f32.mrb[0].mxu0
      %v4990 = vpop.f32.mrb[0].mxu0
      %v4991 = vadd.f32 0.0, %v4990
      %v4992 = vpop.f32.mrb[0].mxu0
      %4993 = vmatprep.mubr.bf16.mxu0 0
      %4994 = vmatmul.mubr.bf16.gmra.mrb[0].mxu0 %v4733
      %v4995 = vpop.f32.mrb[0].mxu0
      %v4996 = vadd.f32 0.0, %v4995
      %v4997 = vpop.f32.mrb[0].mxu0
      %v4998 = vpop.f32.mrb[0].mxu0
      %v4999 = vadd.f32 0.0, %v4998
      %v5000 = vpop.f32.mrb[0].mxu0
      %5001 = vmatprep.mubr.bf16.mxu0 0
      %5002 = vmatmul.mubr.bf16.gmra.mrb[0].mxu0 %v4736
      %v5003 = vpop.f32.mrb[0].mxu0
      %v5004 = vadd.f32 0.0, %v5003
      %v5005 = vpop.f32.mrb[0].mxu0
      %v5006 = vpop.f32.mrb[0].mxu0
      %v5007 = vadd.f32 0.0, %v5006
      %v5008 = vpop.f32.mrb[0].mxu0
      %5009 = vmatprep.mubr.bf16.mxu0 0
      %5010 = vmatmul.mubr.bf16.gmra.mrb[0].mxu0 %v4739
      %v5011 = vpop.f32.mrb[0].mxu0
      %v5012 = vadd.f32 0.0, %v5011
      %v5013 = vpop.f32.mrb[0].mxu0
      %v5014 = vpop.f32.mrb[0].mxu0
      %v5015 = vadd.f32 0.0, %v5014
      %v5016 = vpop.f32.mrb[0].mxu0
      %5017 = vmatprep.mubr.bf16.mxu0 0
      %5018 = vmatmul.mubr.bf16.gmra.mrb[0].mxu0 %v4742
      %v5019 = vpop.f32.mrb[0].mxu0
      %v5020 = vadd.f32 0.0, %v5019
      %v5021 = vpop.f32.mrb[0].mxu0
      %v5022 = vpop.f32.mrb[0].mxu0
      %v5023 = vadd.f32 0.0, %v5022
      %v5024 = vpop.f32.mrb[0].mxu0
      %5025 = vmatprep.mubr.bf16.mxu0 0
      %5026 = vmatmul.mubr.bf16.gmra.mrb[0].mxu0 %v4745
      %v5027 = vpop.f32.mrb[0].mxu0
      %v5028 = vadd.f32 0.0, %v5027
      %v5029 = vpop.f32.mrb[0].mxu0
      %v5030 = vpop.f32.mrb[0].mxu0
      %v5031 = vadd.f32 0.0, %v5030
      %v5032 = vpop.f32.mrb[0].mxu0
      %5033 = vmatprep.mubr.bf16.mxu0 0
      %5034 = vmatmul.mubr.bf16.gmra.mrb[0].mxu0 %v4748
      %v5035 = vpop.f32.mrb[0].mxu0
      %v5036 = vadd.f32 0.0, %v5035
      %v5037 = vpop.f32.mrb[0].mxu0
      %v5038 = vpop.f32.mrb[0].mxu0
      %v5039 = vadd.f32 0.0, %v5038
      %v5040 = vpop.f32.mrb[0].mxu0
      %5041 = vdwg.mxu0
      %v5042 = vadd.f32 %v4492, %v4788
      %v5043 = vadd.f32 %v4493, %v4791
      %v5044 = vadd.f32 %v4494, %v4796
      %v5045 = vadd.f32 %v4495, %v4799
      %v5046 = vadd.f32 %v4496, %v4804
      %v5047 = vadd.f32 %v4497, %v4807
      %v5048 = vadd.f32 %v4498, %v4812
      %v5049 = vadd.f32 %v4499, %v4815
      %v5050 = vadd.f32 %v4500, %v4820
      %v5051 = vadd.f32 %v4501, %v4823
      %v5052 = vadd.f32 %v4502, %v4828
      %v5053 = vadd.f32 %v4503, %v4831
      %v5054 = vadd.f32 %v4504, %v4836
      %v5055 = vadd.f32 %v4505, %v4839
      %v5056 = vadd.f32 %v4506, %v4844
      %v5057 = vadd.f32 %v4507, %v4847
      %v5058 = vadd.f32 %v4508, %v4852
      %v5059 = vadd.f32 %v4509, %v4855
      %v5060 = vadd.f32 %v4510, %v4860
      %v5061 = vadd.f32 %v4511, %v4863
      %v5062 = vadd.f32 %v4512, %v4868
      %v5063 = vadd.f32 %v4513, %v4871
      %v5064 = vadd.f32 %v4514, %v4876
      %v5065 = vadd.f32 %v4515, %v4879
      %v5066 = vadd.f32 %v4516, %v4884
      %v5067 = vadd.f32 %v4517, %v4887
      %v5068 = vadd.f32 %v4518, %v4892
      %v5069 = vadd.f32 %v4519, %v4895
      %v5070 = vadd.f32 %v4520, %v4900
      %v5071 = vadd.f32 %v4521, %v4903
      %v5072 = vadd.f32 %v4522, %v4908
      %v5073 = vadd.f32 %v4523, %v4911
      %v5074 = vadd.f32 %v4524, %v4916
      %v5075 = vadd.f32 %v4525, %v4919
      %v5076 = vadd.f32 %v4526, %v4924
      %v5077 = vadd.f32 %v4527, %v4927
      %v5078 = vadd.f32 %v4528, %v4932
      %v5079 = vadd.f32 %v4529, %v4935
      %v5080 = vadd.f32 %v4530, %v4940
      %v5081 = vadd.f32 %v4531, %v4943
      %v5082 = vadd.f32 %v4532, %v4948
      %v5083 = vadd.f32 %v4533, %v4951
      %v5084 = vadd.f32 %v4534, %v4956
      %v5085 = vadd.f32 %v4535, %v4959
      %v5086 = vadd.f32 %v4536, %v4964
      %v5087 = vadd.f32 %v4537, %v4967
      %v5088 = vadd.f32 %v4538, %v4972
      %v5089 = vadd.f32 %v4539, %v4975
      %v5090 = vadd.f32 %v4540, %v4980
      %v5091 = vadd.f32 %v4541, %v4983
      %v5092 = vadd.f32 %v4542, %v4988
      %v5093 = vadd.f32 %v4543, %v4991
      %v5094 = vadd.f32 %v4544, %v4996
      %v5095 = vadd.f32 %v4545, %v4999
      %v5096 = vadd.f32 %v4546, %v5004
      %v5097 = vadd.f32 %v4547, %v5007
      %v5098 = vadd.f32 %v4548, %v5012
      %v5099 = vadd.f32 %v4549, %v5015
      %v5100 = vadd.f32 %v4550, %v5020
      %v5101 = vadd.f32 %v4551, %v5023
      %v5102 = vadd.f32 %v4552, %v5028
      %v5103 = vadd.f32 %v4553, %v5031
      %v5104 = vadd.f32 %v4554, %v5036
      %v5105 = vadd.f32 %v4555, %v5039
      %v5106 = vld [vmem:[%s2] sm:$0x1]
      %v5108 = vlaneseq
      %v5109 = vshrl.u32 %v5108, 7
      %v5110 = vsub.s32 0, %v5109
      %v5111 = vrot.slane %v5106, %v5110
      %v5113 = vadd.f32 %v5042, %v5111
      %v5114 = vadd.f32 %v5043, %v5111
      %v5115 = vadd.f32 %v5044, %v5111
      %v5116 = vadd.f32 %v5045, %v5111
      %v5117 = vadd.f32 %v5046, %v5111
      %v5118 = vadd.f32 %v5047, %v5111
      %v5119 = vadd.f32 %v5048, %v5111
      %v5120 = vadd.f32 %v5049, %v5111
      %v5121 = vadd.f32 %v5050, %v5111
      %v5122 = vadd.f32 %v5051, %v5111
      %v5123 = vadd.f32 %v5052, %v5111
      %v5124 = vadd.f32 %v5053, %v5111
      %v5125 = vadd.f32 %v5054, %v5111
      %v5126 = vadd.f32 %v5055, %v5111
      %v5127 = vadd.f32 %v5056, %v5111
      %v5128 = vadd.f32 %v5057, %v5111
      %v5129 = vadd.f32 %v5058, %v5111
      %v5130 = vadd.f32 %v5059, %v5111
      %v5131 = vadd.f32 %v5060, %v5111
      %v5132 = vadd.f32 %v5061, %v5111
      %v5133 = vadd.f32 %v5062, %v5111
      %v5134 = vadd.f32 %v5063, %v5111
      %v5135 = vadd.f32 %v5064, %v5111
      %v5136 = vadd.f32 %v5065, %v5111
      %v5137 = vadd.f32 %v5066, %v5111
      %v5138 = vadd.f32 %v5067, %v5111
      %v5139 = vadd.f32 %v5068, %v5111
      %v5140 = vadd.f32 %v5069, %v5111
      %v5141 = vadd.f32 %v5070, %v5111
      %v5142 = vadd.f32 %v5071, %v5111
      %v5143 = vadd.f32 %v5072, %v5111
      %v5144 = vadd.f32 %v5073, %v5111
      %v5145 = vadd.f32 %v5074, %v5111
      %v5146 = vadd.f32 %v5075, %v5111
      %v5147 = vadd.f32 %v5076, %v5111
      %v5148 = vadd.f32 %v5077, %v5111
      %v5149 = vadd.f32 %v5078, %v5111
      %v5150 = vadd.f32 %v5079, %v5111
      %v5151 = vadd.f32 %v5080, %v5111
      %v5152 = vadd.f32 %v5081, %v5111
      %v5153 = vadd.f32 %v5082, %v5111
      %v5154 = vadd.f32 %v5083, %v5111
      %v5155 = vadd.f32 %v5084, %v5111
      %v5156 = vadd.f32 %v5085, %v5111
      %v5157 = vadd.f32 %v5086, %v5111
      %v5158 = vadd.f32 %v5087, %v5111
      %v5159 = vadd.f32 %v5088, %v5111
      %v5160 = vadd.f32 %v5089, %v5111
      %v5161 = vadd.f32 %v5090, %v5111
      %v5162 = vadd.f32 %v5091, %v5111
      %v5163 = vadd.f32 %v5092, %v5111
      %v5164 = vadd.f32 %v5093, %v5111
      %v5165 = vadd.f32 %v5094, %v5111
      %v5166 = vadd.f32 %v5095, %v5111
      %v5167 = vadd.f32 %v5096, %v5111
      %v5168 = vadd.f32 %v5097, %v5111
      %v5169 = vadd.f32 %v5098, %v5111
      %v5170 = vadd.f32 %v5099, %v5111
      %v5171 = vadd.f32 %v5100, %v5111
      %v5172 = vadd.f32 %v5101, %v5111
      %v5173 = vadd.f32 %v5102, %v5111
      %v5174 = vadd.f32 %v5103, %v5111
      %v5175 = vadd.f32 %v5104, %v5111
      %v5176 = vadd.f32 %v5105, %v5111
      %v5177 = vmax.f32 %v5113, 0.0
      %v5178 = vmax.f32 %v5114, 0.0
      %v5179 = vmax.f32 %v5115, 0.0
      %v5180 = vmax.f32 %v5116, 0.0
      %v5181 = vmax.f32 %v5117, 0.0
      %v5182 = vmax.f32 %v5118, 0.0
      %v5183 = vmax.f32 %v5119, 0.0
      %v5184 = vmax.f32 %v5120, 0.0
      %v5185 = vmax.f32 %v5121, 0.0
      %v5186 = vmax.f32 %v5122, 0.0
      %v5187 = vmax.f32 %v5123, 0.0
      %v5188 = vmax.f32 %v5124, 0.0
      %v5189 = vmax.f32 %v5125, 0.0
      %v5190 = vmax.f32 %v5126, 0.0
      %v5191 = vmax.f32 %v5127, 0.0
      %v5192 = vmax.f32 %v5128, 0.0
      %v5193 = vmax.f32 %v5129, 0.0
      %v5194 = vmax.f32 %v5130, 0.0
      %v5195 = vmax.f32 %v5131, 0.0
      %v5196 = vmax.f32 %v5132, 0.0
      %v5197 = vmax.f32 %v5133, 0.0
      %v5198 = vmax.f32 %v5134, 0.0
      %v5199 = vmax.f32 %v5135, 0.0
      %v5200 = vmax.f32 %v5136, 0.0
      %v5201 = vmax.f32 %v5137, 0.0
      %v5202 = vmax.f32 %v5138, 0.0
      %v5203 = vmax.f32 %v5139, 0.0
      %v5204 = vmax.f32 %v5140, 0.0
      %v5205 = vmax.f32 %v5141, 0.0
      %v5206 = vmax.f32 %v5142, 0.0
      %v5207 = vmax.f32 %v5143, 0.0
      %v5208 = vmax.f32 %v5144, 0.0
      %v5209 = vmax.f32 %v5145, 0.0
      %v5210 = vmax.f32 %v5146, 0.0
      %v5211 = vmax.f32 %v5147, 0.0
      %v5212 = vmax.f32 %v5148, 0.0
      %v5213 = vmax.f32 %v5149, 0.0
      %v5214 = vmax.f32 %v5150, 0.0
      %v5215 = vmax.f32 %v5151, 0.0
      %v5216 = vmax.f32 %v5152, 0.0
      %v5217 = vmax.f32 %v5153, 0.0
      %v5218 = vmax.f32 %v5154, 0.0
      %v5219 = vmax.f32 %v5155, 0.0
      %v5220 = vmax.f32 %v5156, 0.0
      %v5221 = vmax.f32 %v5157, 0.0
      %v5222 = vmax.f32 %v5158, 0.0
      %v5223 = vmax.f32 %v5159, 0.0
      %v5224 = vmax.f32 %v5160, 0.0
      %v5225 = vmax.f32 %v5161, 0.0
      %v5226 = vmax.f32 %v5162, 0.0
      %v5227 = vmax.f32 %v5163, 0.0
      %v5228 = vmax.f32 %v5164, 0.0
      %v5229 = vmax.f32 %v5165, 0.0
      %v5230 = vmax.f32 %v5166, 0.0
      %v5231 = vmax.f32 %v5167, 0.0
      %v5232 = vmax.f32 %v5168, 0.0
      %v5233 = vmax.f32 %v5169, 0.0
      %v5234 = vmax.f32 %v5170, 0.0
      %v5235 = vmax.f32 %v5171, 0.0
      %v5236 = vmax.f32 %v5172, 0.0
      %v5237 = vmax.f32 %v5173, 0.0
      %v5238 = vmax.f32 %v5174, 0.0
      %v5239 = vmax.f32 %v5175, 0.0
      %v5240 = vmax.f32 %v5176, 0.0
      %v5241 = vld [vmem:[%s3] sm:$0x1]
      %v5242 = vmul.f32 %v5177, %v5177
      %v5243 = vmul.f32 %v5178, %v5178
      %v5244 = vmul.f32 %v5179, %v5179
      %v5245 = vmul.f32 %v5180, %v5180
      %v5246 = vmul.f32 %v5181, %v5181
      %v5247 = vmul.f32 %v5182, %v5182
      %v5248 = vmul.f32 %v5183, %v5183
      %v5249 = vmul.f32 %v5184, %v5184
      %v5250 = vmul.f32 %v5185, %v5185
      %v5251 = vmul.f32 %v5186, %v5186
      %v5252 = vmul.f32 %v5187, %v5187
      %v5253 = vmul.f32 %v5188, %v5188
      %v5254 = vmul.f32 %v5189, %v5189
      %v5255 = vmul.f32 %v5190, %v5190
      %v5256 = vmul.f32 %v5191, %v5191
      %v5257 = vmul.f32 %v5192, %v5192
      %v5258 = vmul.f32 %v5193, %v5193
      %v5259 = vmul.f32 %v5194, %v5194
      %v5260 = vmul.f32 %v5195, %v5195
      %v5261 = vmul.f32 %v5196, %v5196
      %v5262 = vmul.f32 %v5197, %v5197
      %v5263 = vmul.f32 %v5198, %v5198
      %v5264 = vmul.f32 %v5199, %v5199
      %v5265 = vmul.f32 %v5200, %v5200
      %v5266 = vmul.f32 %v5201, %v5201
      %v5267 = vmul.f32 %v5202, %v5202
      %v5268 = vmul.f32 %v5203, %v5203
      %v5269 = vmul.f32 %v5204, %v5204
      %v5270 = vmul.f32 %v5205, %v5205
      %v5271 = vmul.f32 %v5206, %v5206
      %v5272 = vmul.f32 %v5207, %v5207
      %v5273 = vmul.f32 %v5208, %v5208
      %5274 = vadd.xlane.f32.xlu0 %v5242
      %v5275 = vpop.xlane.xlu0 %5274
      %5276 = vadd.xlane.f32.xlu0 %v5243
      %v5277 = vpop.xlane.xlu0 %5276
      %5278 = vadd.xlane.f32.xlu0 %v5244
      %v5279 = vpop.xlane.xlu0 %5278
      %5280 = vadd.xlane.f32.xlu0 %v5245
      %v5281 = vpop.xlane.xlu0 %5280
      %5282 = vadd.xlane.f32.xlu0 %v5246
      %v5283 = vpop.xlane.xlu0 %5282
      %5284 = vadd.xlane.f32.xlu0 %v5247
      %v5285 = vpop.xlane.xlu0 %5284
      %5286 = vadd.xlane.f32.xlu0 %v5248
      %v5287 = vpop.xlane.xlu0 %5286
      %5288 = vadd.xlane.f32.xlu0 %v5249
      %v5289 = vpop.xlane.xlu0 %5288
      %5290 = vadd.xlane.f32.xlu0 %v5250
      %v5291 = vpop.xlane.xlu0 %5290
      %5292 = vadd.xlane.f32.xlu0 %v5251
      %v5293 = vpop.xlane.xlu0 %5292
      %5294 = vadd.xlane.f32.xlu0 %v5252
      %v5295 = vpop.xlane.xlu0 %5294
      %5296 = vadd.xlane.f32.xlu0 %v5253
      %v5297 = vpop.xlane.xlu0 %5296
      %5298 = vadd.xlane.f32.xlu0 %v5254
      %v5299 = vpop.xlane.xlu0 %5298
      %5300 = vadd.xlane.f32.xlu0 %v5255
      %v5301 = vpop.xlane.xlu0 %5300
      %5302 = vadd.xlane.f32.xlu0 %v5256
      %v5303 = vpop.xlane.xlu0 %5302
      %5304 = vadd.xlane.f32.xlu0 %v5257
      %v5305 = vpop.xlane.xlu0 %5304
      %5306 = vadd.xlane.f32.xlu0 %v5258
      %v5307 = vpop.xlane.xlu0 %5306
      %5308 = vadd.xlane.f32.xlu0 %v5259
      %v5309 = vpop.xlane.xlu0 %5308
      %5310 = vadd.xlane.f32.xlu0 %v5260
      %v5311 = vpop.xlane.xlu0 %5310
      %5312 = vadd.xlane.f32.xlu0 %v5261
      %v5313 = vpop.xlane.xlu0 %5312
      %5314 = vadd.xlane.f32.xlu0 %v5262
      %v5315 = vpop.xlane.xlu0 %5314
      %5316 = vadd.xlane.f32.xlu0 %v5263
      %v5317 = vpop.xlane.xlu0 %5316
      %5318 = vadd.xlane.f32.xlu0 %v5264
      %v5319 = vpop.xlane.xlu0 %5318
      %5320 = vadd.xlane.f32.xlu0 %v5265
      %v5321 = vpop.xlane.xlu0 %5320
      %5322 = vadd.xlane.f32.xlu0 %v5266
      %v5323 = vpop.xlane.xlu0 %5322
      %5324 = vadd.xlane.f32.xlu0 %v5267
      %v5325 = vpop.xlane.xlu0 %5324
      %5326 = vadd.xlane.f32.xlu0 %v5268
      %v5327 = vpop.xlane.xlu0 %5326
      %5328 = vadd.xlane.f32.xlu0 %v5269
      %v5329 = vpop.xlane.xlu0 %5328
      %5330 = vadd.xlane.f32.xlu0 %v5270
      %v5331 = vpop.xlane.xlu0 %5330
      %5332 = vadd.xlane.f32.xlu0 %v5271
      %v5333 = vpop.xlane.xlu0 %5332
      %5334 = vadd.xlane.f32.xlu0 %v5272
      %v5335 = vpop.xlane.xlu0 %5334
      %5336 = vadd.xlane.f32.xlu0 %v5273
      %v5337 = vpop.xlane.xlu0 %5336
      %v5338 = vrsqrt.pop %v5275
      %v5339 = vmul.f32 %v5275, %v5338
      %vm5340 = vcmp.eq.f32.partialorder %v5275, inf
      %v5341 = vsel %vm5340, %v5275, %v5339
      %vm5342 = vcmp.eq.f32.partialorder %v5275, 0.0
      %v5343 = vand.u32 %v5275, 2147483648
      %v5344 = vsel %vm5342, %v5343, %v5341
      %v5345 = vrsqrt.pop %v5277
      %v5346 = vmul.f32 %v5277, %v5345
      %vm5347 = vcmp.eq.f32.partialorder %v5277, inf
      %v5348 = vsel %vm5347, %v5277, %v5346
      %vm5349 = vcmp.eq.f32.partialorder %v5277, 0.0
      %v5350 = vand.u32 %v5277, 2147483648
      %v5351 = vsel %vm5349, %v5350, %v5348
      %v5352 = vrsqrt.pop %v5279
      %v5353 = vmul.f32 %v5279, %v5352
      %vm5354 = vcmp.eq.f32.partialorder %v5279, inf
      %v5355 = vsel %vm5354, %v5279, %v5353
      %vm5356 = vcmp.eq.f32.partialorder %v5279, 0.0
      %v5357 = vand.u32 %v5279, 2147483648
      %v5358 = vsel %vm5356, %v5357, %v5355
      %v5359 = vrsqrt.pop %v5281
      %v5360 = vmul.f32 %v5281, %v5359
      %vm5361 = vcmp.eq.f32.partialorder %v5281, inf
      %v5362 = vsel %vm5361, %v5281, %v5360
      %vm5363 = vcmp.eq.f32.partialorder %v5281, 0.0
      %v5364 = vand.u32 %v5281, 2147483648
      %v5365 = vsel %vm5363, %v5364, %v5362
      %v5366 = vrsqrt.pop %v5283
      %v5367 = vmul.f32 %v5283, %v5366
      %vm5368 = vcmp.eq.f32.partialorder %v5283, inf
      %v5369 = vsel %vm5368, %v5283, %v5367
      %vm5370 = vcmp.eq.f32.partialorder %v5283, 0.0
      %v5371 = vand.u32 %v5283, 2147483648
      %v5372 = vsel %vm5370, %v5371, %v5369
      %v5373 = vrsqrt.pop %v5285
      %v5374 = vmul.f32 %v5285, %v5373
      %vm5375 = vcmp.eq.f32.partialorder %v5285, inf
      %v5376 = vsel %vm5375, %v5285, %v5374
      %vm5377 = vcmp.eq.f32.partialorder %v5285, 0.0
      %v5378 = vand.u32 %v5285, 2147483648
      %v5379 = vsel %vm5377, %v5378, %v5376
      %v5380 = vrsqrt.pop %v5287
      %v5381 = vmul.f32 %v5287, %v5380
      %vm5382 = vcmp.eq.f32.partialorder %v5287, inf
      %v5383 = vsel %vm5382, %v5287, %v5381
      %vm5384 = vcmp.eq.f32.partialorder %v5287, 0.0
      %v5385 = vand.u32 %v5287, 2147483648
      %v5386 = vsel %vm5384, %v5385, %v5383
      %v5387 = vrsqrt.pop %v5289
      %v5388 = vmul.f32 %v5289, %v5387
      %vm5389 = vcmp.eq.f32.partialorder %v5289, inf
      %v5390 = vsel %vm5389, %v5289, %v5388
      %vm5391 = vcmp.eq.f32.partialorder %v5289, 0.0
      %v5392 = vand.u32 %v5289, 2147483648
      %v5393 = vsel %vm5391, %v5392, %v5390
      %v5394 = vrsqrt.pop %v5291
      %v5395 = vmul.f32 %v5291, %v5394
      %vm5396 = vcmp.eq.f32.partialorder %v5291, inf
      %v5397 = vsel %vm5396, %v5291, %v5395
      %vm5398 = vcmp.eq.f32.partialorder %v5291, 0.0
      %v5399 = vand.u32 %v5291, 2147483648
      %v5400 = vsel %vm5398, %v5399, %v5397
      %v5401 = vrsqrt.pop %v5293
      %v5402 = vmul.f32 %v5293, %v5401
      %vm5403 = vcmp.eq.f32.partialorder %v5293, inf
      %v5404 = vsel %vm5403, %v5293, %v5402
      %vm5405 = vcmp.eq.f32.partialorder %v5293, 0.0
      %v5406 = vand.u32 %v5293, 2147483648
      %v5407 = vsel %vm5405, %v5406, %v5404
      %v5408 = vrsqrt.pop %v5295
      %v5409 = vmul.f32 %v5295, %v5408
      %vm5410 = vcmp.eq.f32.partialorder %v5295, inf
      %v5411 = vsel %vm5410, %v5295, %v5409
      %vm5412 = vcmp.eq.f32.partialorder %v5295, 0.0
      %v5413 = vand.u32 %v5295, 2147483648
      %v5414 = vsel %vm5412, %v5413, %v5411
      %v5415 = vrsqrt.pop %v5297
      %v5416 = vmul.f32 %v5297, %v5415
      %vm5417 = vcmp.eq.f32.partialorder %v5297, inf
      %v5418 = vsel %vm5417, %v5297, %v5416
      %vm5419 = vcmp.eq.f32.partialorder %v5297, 0.0
      %v5420 = vand.u32 %v5297, 2147483648
      %v5421 = vsel %vm5419, %v5420, %v5418
      %v5422 = vrsqrt.pop %v5299
      %v5423 = vmul.f32 %v5299, %v5422
      %vm5424 = vcmp.eq.f32.partialorder %v5299, inf
      %v5425 = vsel %vm5424, %v5299, %v5423
      %vm5426 = vcmp.eq.f32.partialorder %v5299, 0.0
      %v5427 = vand.u32 %v5299, 2147483648
      %v5428 = vsel %vm5426, %v5427, %v5425
      %v5429 = vrsqrt.pop %v5301
      %v5430 = vmul.f32 %v5301, %v5429
      %vm5431 = vcmp.eq.f32.partialorder %v5301, inf
      %v5432 = vsel %vm5431, %v5301, %v5430
      %vm5433 = vcmp.eq.f32.partialorder %v5301, 0.0
      %v5434 = vand.u32 %v5301, 2147483648
      %v5435 = vsel %vm5433, %v5434, %v5432
      %v5436 = vrsqrt.pop %v5303
      %v5437 = vmul.f32 %v5303, %v5436
      %vm5438 = vcmp.eq.f32.partialorder %v5303, inf
      %v5439 = vsel %vm5438, %v5303, %v5437
      %vm5440 = vcmp.eq.f32.partialorder %v5303, 0.0
      %v5441 = vand.u32 %v5303, 2147483648
      %v5442 = vsel %vm5440, %v5441, %v5439
      %v5443 = vrsqrt.pop %v5305
      %v5444 = vmul.f32 %v5305, %v5443
      %vm5445 = vcmp.eq.f32.partialorder %v5305, inf
      %v5446 = vsel %vm5445, %v5305, %v5444
      %vm5447 = vcmp.eq.f32.partialorder %v5305, 0.0
      %v5448 = vand.u32 %v5305, 2147483648
      %v5449 = vsel %vm5447, %v5448, %v5446
      %v5450 = vrsqrt.pop %v5307
      %v5451 = vmul.f32 %v5307, %v5450
      %vm5452 = vcmp.eq.f32.partialorder %v5307, inf
      %v5453 = vsel %vm5452, %v5307, %v5451
      %vm5454 = vcmp.eq.f32.partialorder %v5307, 0.0
      %v5455 = vand.u32 %v5307, 2147483648
      %v5456 = vsel %vm5454, %v5455, %v5453
      %v5457 = vrsqrt.pop %v5309
      %v5458 = vmul.f32 %v5309, %v5457
      %vm5459 = vcmp.eq.f32.partialorder %v5309, inf
      %v5460 = vsel %vm5459, %v5309, %v5458
      %vm5461 = vcmp.eq.f32.partialorder %v5309, 0.0
      %v5462 = vand.u32 %v5309, 2147483648
      %v5463 = vsel %vm5461, %v5462, %v5460
      %v5464 = vrsqrt.pop %v5311
      %v5465 = vmul.f32 %v5311, %v5464
      %vm5466 = vcmp.eq.f32.partialorder %v5311, inf
      %v5467 = vsel %vm5466, %v5311, %v5465
      %vm5468 = vcmp.eq.f32.partialorder %v5311, 0.0
      %v5469 = vand.u32 %v5311, 2147483648
      %v5470 = vsel %vm5468, %v5469, %v5467
      %v5471 = vrsqrt.pop %v5313
      %v5472 = vmul.f32 %v5313, %v5471
      %vm5473 = vcmp.eq.f32.partialorder %v5313, inf
      %v5474 = vsel %vm5473, %v5313, %v5472
      %vm5475 = vcmp.eq.f32.partialorder %v5313, 0.0
      %v5476 = vand.u32 %v5313, 2147483648
      %v5477 = vsel %vm5475, %v5476, %v5474
      %v5478 = vrsqrt.pop %v5315
      %v5479 = vmul.f32 %v5315, %v5478
      %vm5480 = vcmp.eq.f32.partialorder %v5315, inf
      %v5481 = vsel %vm5480, %v5315, %v5479
      %vm5482 = vcmp.eq.f32.partialorder %v5315, 0.0
      %v5483 = vand.u32 %v5315, 2147483648
      %v5484 = vsel %vm5482, %v5483, %v5481
      %v5485 = vrsqrt.pop %v5317
      %v5486 = vmul.f32 %v5317, %v5485
      %vm5487 = vcmp.eq.f32.partialorder %v5317, inf
      %v5488 = vsel %vm5487, %v5317, %v5486
      %vm5489 = vcmp.eq.f32.partialorder %v5317, 0.0
      %v5490 = vand.u32 %v5317, 2147483648
      %v5491 = vsel %vm5489, %v5490, %v5488
      %v5492 = vrsqrt.pop %v5319
      %v5493 = vmul.f32 %v5319, %v5492
      %vm5494 = vcmp.eq.f32.partialorder %v5319, inf
      %v5495 = vsel %vm5494, %v5319, %v5493
      %vm5496 = vcmp.eq.f32.partialorder %v5319, 0.0
      %v5497 = vand.u32 %v5319, 2147483648
      %v5498 = vsel %vm5496, %v5497, %v5495
      %v5499 = vrsqrt.pop %v5321
      %v5500 = vmul.f32 %v5321, %v5499
      %vm5501 = vcmp.eq.f32.partialorder %v5321, inf
      %v5502 = vsel %vm5501, %v5321, %v5500
      %vm5503 = vcmp.eq.f32.partialorder %v5321, 0.0
      %v5504 = vand.u32 %v5321, 2147483648
      %v5505 = vsel %vm5503, %v5504, %v5502
      %v5506 = vrsqrt.pop %v5323
      %v5507 = vmul.f32 %v5323, %v5506
      %vm5508 = vcmp.eq.f32.partialorder %v5323, inf
      %v5509 = vsel %vm5508, %v5323, %v5507
      %vm5510 = vcmp.eq.f32.partialorder %v5323, 0.0
      %v5511 = vand.u32 %v5323, 2147483648
      %v5512 = vsel %vm5510, %v5511, %v5509
      %v5513 = vrsqrt.pop %v5325
      %v5514 = vmul.f32 %v5325, %v5513
      %vm5515 = vcmp.eq.f32.partialorder %v5325, inf
      %v5516 = vsel %vm5515, %v5325, %v5514
      %vm5517 = vcmp.eq.f32.partialorder %v5325, 0.0
      %v5518 = vand.u32 %v5325, 2147483648
      %v5519 = vsel %vm5517, %v5518, %v5516
      %v5520 = vrsqrt.pop %v5327
      %v5521 = vmul.f32 %v5327, %v5520
      %vm5522 = vcmp.eq.f32.partialorder %v5327, inf
      %v5523 = vsel %vm5522, %v5327, %v5521
      %vm5524 = vcmp.eq.f32.partialorder %v5327, 0.0
      %v5525 = vand.u32 %v5327, 2147483648
      %v5526 = vsel %vm5524, %v5525, %v5523
      %v5527 = vrsqrt.pop %v5329
      %v5528 = vmul.f32 %v5329, %v5527
      %vm5529 = vcmp.eq.f32.partialorder %v5329, inf
      %v5530 = vsel %vm5529, %v5329, %v5528
      %vm5531 = vcmp.eq.f32.partialorder %v5329, 0.0
      %v5532 = vand.u32 %v5329, 2147483648
      %v5533 = vsel %vm5531, %v5532, %v5530
      %v5534 = vrsqrt.pop %v5331
      %v5535 = vmul.f32 %v5331, %v5534
      %vm5536 = vcmp.eq.f32.partialorder %v5331, inf
      %v5537 = vsel %vm5536, %v5331, %v5535
      %vm5538 = vcmp.eq.f32.partialorder %v5331, 0.0
      %v5539 = vand.u32 %v5331, 2147483648
      %v5540 = vsel %vm5538, %v5539, %v5537
      %v5541 = vrsqrt.pop %v5333
      %v5542 = vmul.f32 %v5333, %v5541
      %vm5543 = vcmp.eq.f32.partialorder %v5333, inf
      %v5544 = vsel %vm5543, %v5333, %v5542
      %vm5545 = vcmp.eq.f32.partialorder %v5333, 0.0
      %v5546 = vand.u32 %v5333, 2147483648
      %v5547 = vsel %vm5545, %v5546, %v5544
      %v5548 = vrsqrt.pop %v5335
      %v5549 = vmul.f32 %v5335, %v5548
      %vm5550 = vcmp.eq.f32.partialorder %v5335, inf
      %v5551 = vsel %vm5550, %v5335, %v5549
      %vm5552 = vcmp.eq.f32.partialorder %v5335, 0.0
      %v5553 = vand.u32 %v5335, 2147483648
      %v5554 = vsel %vm5552, %v5553, %v5551
      %v5555 = vrsqrt.pop %v5337
      %v5556 = vmul.f32 %v5337, %v5555
      %vm5557 = vcmp.eq.f32.partialorder %v5337, inf
      %v5558 = vsel %vm5557, %v5337, %v5556
      %vm5559 = vcmp.eq.f32.partialorder %v5337, 0.0
      %v5560 = vand.u32 %v5337, 2147483648
      %v5561 = vsel %vm5559, %v5560, %v5558
      %v5562 = vadd.f32 %v5344, 1e-10
      %v5563 = vadd.f32 %v5351, 1e-10
      %v5564 = vadd.f32 %v5358, 1e-10
      %v5565 = vadd.f32 %v5365, 1e-10
      %v5566 = vadd.f32 %v5372, 1e-10
      %v5567 = vadd.f32 %v5379, 1e-10
      %v5568 = vadd.f32 %v5386, 1e-10
      %v5569 = vadd.f32 %v5393, 1e-10
      %v5570 = vadd.f32 %v5400, 1e-10
      %v5571 = vadd.f32 %v5407, 1e-10
      %v5572 = vadd.f32 %v5414, 1e-10
      %v5573 = vadd.f32 %v5421, 1e-10
      %v5574 = vadd.f32 %v5428, 1e-10
      %v5575 = vadd.f32 %v5435, 1e-10
      %v5576 = vadd.f32 %v5442, 1e-10
      %v5577 = vadd.f32 %v5449, 1e-10
      %v5578 = vadd.f32 %v5456, 1e-10
      %v5579 = vadd.f32 %v5463, 1e-10
      %v5580 = vadd.f32 %v5470, 1e-10
      %v5581 = vadd.f32 %v5477, 1e-10
      %v5582 = vadd.f32 %v5484, 1e-10
      %v5583 = vadd.f32 %v5491, 1e-10
      %v5584 = vadd.f32 %v5498, 1e-10
      %v5585 = vadd.f32 %v5505, 1e-10
      %v5586 = vadd.f32 %v5512, 1e-10
      %v5587 = vadd.f32 %v5519, 1e-10
      %v5588 = vadd.f32 %v5526, 1e-10
      %v5589 = vadd.f32 %v5533, 1e-10
      %v5590 = vadd.f32 %v5540, 1e-10
      %v5591 = vadd.f32 %v5547, 1e-10
      %v5592 = vadd.f32 %v5554, 1e-10
      %v5593 = vadd.f32 %v5561, 1e-10
      %v5594 = vrcp.pop %v5562
      %v5595 = vrcp.pop %v5563
      %v5596 = vrcp.pop %v5564
      %v5597 = vrcp.pop %v5565
      %v5598 = vrcp.pop %v5566
      %v5599 = vrcp.pop %v5567
      %v5600 = vrcp.pop %v5568
      %v5601 = vrcp.pop %v5569
      %v5602 = vrcp.pop %v5570
      %v5603 = vrcp.pop %v5571
      %v5604 = vrcp.pop %v5572
      %v5605 = vrcp.pop %v5573
      %v5606 = vrcp.pop %v5574
      %v5607 = vrcp.pop %v5575
      %v5608 = vrcp.pop %v5576
      %v5609 = vrcp.pop %v5577
      %v5610 = vrcp.pop %v5578
      %v5611 = vrcp.pop %v5579
      %v5612 = vrcp.pop %v5580
      %v5613 = vrcp.pop %v5581
      %v5614 = vrcp.pop %v5582
      %v5615 = vrcp.pop %v5583
      %v5616 = vrcp.pop %v5584
      %v5617 = vrcp.pop %v5585
      %v5618 = vrcp.pop %v5586
      %v5619 = vrcp.pop %v5587
      %v5620 = vrcp.pop %v5588
      %v5621 = vrcp.pop %v5589
      %v5622 = vrcp.pop %v5590
      %v5623 = vrcp.pop %v5591
      %v5624 = vrcp.pop %v5592
      %v5625 = vrcp.pop %v5593
      %v5626 = vmul.f32 %v5209, %v5209
      %v5627 = vmul.f32 %v5210, %v5210
      %v5628 = vmul.f32 %v5211, %v5211
      %v5629 = vmul.f32 %v5212, %v5212
      %v5630 = vmul.f32 %v5213, %v5213
      %v5631 = vmul.f32 %v5214, %v5214
      %v5632 = vmul.f32 %v5215, %v5215
      %v5633 = vmul.f32 %v5216, %v5216
      %v5634 = vmul.f32 %v5217, %v5217
      %v5635 = vmul.f32 %v5218, %v5218
      %v5636 = vmul.f32 %v5219, %v5219
      %v5637 = vmul.f32 %v5220, %v5220
      %v5638 = vmul.f32 %v5221, %v5221
      %v5639 = vmul.f32 %v5222, %v5222
      %v5640 = vmul.f32 %v5223, %v5223
      %v5641 = vmul.f32 %v5224, %v5224
      %v5642 = vmul.f32 %v5225, %v5225
      %v5643 = vmul.f32 %v5226, %v5226
      %v5644 = vmul.f32 %v5227, %v5227
      %v5645 = vmul.f32 %v5228, %v5228
      %v5646 = vmul.f32 %v5229, %v5229
      %v5647 = vmul.f32 %v5230, %v5230
      %v5648 = vmul.f32 %v5231, %v5231
      %v5649 = vmul.f32 %v5232, %v5232
      %v5650 = vmul.f32 %v5233, %v5233
      %v5651 = vmul.f32 %v5234, %v5234
      %v5652 = vmul.f32 %v5235, %v5235
      %v5653 = vmul.f32 %v5236, %v5236
      %v5654 = vmul.f32 %v5237, %v5237
      %v5655 = vmul.f32 %v5238, %v5238
      %v5656 = vmul.f32 %v5239, %v5239
      %v5657 = vmul.f32 %v5240, %v5240
      %5658 = vadd.xlane.f32.xlu0 %v5626
      %v5659 = vpop.xlane.xlu0 %5658
      %5660 = vadd.xlane.f32.xlu0 %v5627
      %v5661 = vpop.xlane.xlu0 %5660
      %5662 = vadd.xlane.f32.xlu0 %v5628
      %v5663 = vpop.xlane.xlu0 %5662
      %5664 = vadd.xlane.f32.xlu0 %v5629
      %v5665 = vpop.xlane.xlu0 %5664
      %5666 = vadd.xlane.f32.xlu0 %v5630
      %v5667 = vpop.xlane.xlu0 %5666
      %5668 = vadd.xlane.f32.xlu0 %v5631
      %v5669 = vpop.xlane.xlu0 %5668
      %5670 = vadd.xlane.f32.xlu0 %v5632
      %v5671 = vpop.xlane.xlu0 %5670
      %5672 = vadd.xlane.f32.xlu0 %v5633
      %v5673 = vpop.xlane.xlu0 %5672
      %5674 = vadd.xlane.f32.xlu0 %v5634
      %v5675 = vpop.xlane.xlu0 %5674
      %5676 = vadd.xlane.f32.xlu0 %v5635
      %v5677 = vpop.xlane.xlu0 %5676
      %5678 = vadd.xlane.f32.xlu0 %v5636
      %v5679 = vpop.xlane.xlu0 %5678
      %5680 = vadd.xlane.f32.xlu0 %v5637
      %v5681 = vpop.xlane.xlu0 %5680
      %5682 = vadd.xlane.f32.xlu0 %v5638
      %v5683 = vpop.xlane.xlu0 %5682
      %5684 = vadd.xlane.f32.xlu0 %v5639
      %v5685 = vpop.xlane.xlu0 %5684
      %5686 = vadd.xlane.f32.xlu0 %v5640
      %v5687 = vpop.xlane.xlu0 %5686
      %5688 = vadd.xlane.f32.xlu0 %v5641
      %v5689 = vpop.xlane.xlu0 %5688
      %5690 = vadd.xlane.f32.xlu0 %v5642
      %v5691 = vpop.xlane.xlu0 %5690
      %5692 = vadd.xlane.f32.xlu0 %v5643
      %v5693 = vpop.xlane.xlu0 %5692
      %5694 = vadd.xlane.f32.xlu0 %v5644
      %v5695 = vpop.xlane.xlu0 %5694
      %5696 = vadd.xlane.f32.xlu0 %v5645
      %v5697 = vpop.xlane.xlu0 %5696
      %5698 = vadd.xlane.f32.xlu0 %v5646
      %v5699 = vpop.xlane.xlu0 %5698
      %5700 = vadd.xlane.f32.xlu0 %v5647
      %v5701 = vpop.xlane.xlu0 %5700
      %5702 = vadd.xlane.f32.xlu0 %v5648
      %v5703 = vpop.xlane.xlu0 %5702
      %5704 = vadd.xlane.f32.xlu0 %v5649
      %v5705 = vpop.xlane.xlu0 %5704
      %5706 = vadd.xlane.f32.xlu0 %v5650
      %v5707 = vpop.xlane.xlu0 %5706
      %5708 = vadd.xlane.f32.xlu0 %v5651
      %v5709 = vpop.xlane.xlu0 %5708
      %5710 = vadd.xlane.f32.xlu0 %v5652
      %v5711 = vpop.xlane.xlu0 %5710
      %5712 = vadd.xlane.f32.xlu0 %v5653
      %v5713 = vpop.xlane.xlu0 %5712
      %5714 = vadd.xlane.f32.xlu0 %v5654
      %v5715 = vpop.xlane.xlu0 %5714
      %5716 = vadd.xlane.f32.xlu0 %v5655
      %v5717 = vpop.xlane.xlu0 %5716
      %5718 = vadd.xlane.f32.xlu0 %v5656
      %v5719 = vpop.xlane.xlu0 %5718
      %5720 = vadd.xlane.f32.xlu0 %v5657
      %v5721 = vpop.xlane.xlu0 %5720
      %v5722 = vrsqrt.pop %v5659
      %v5723 = vmul.f32 %v5659, %v5722
      %vm5724 = vcmp.eq.f32.partialorder %v5659, inf
      %v5725 = vsel %vm5724, %v5659, %v5723
      %vm5726 = vcmp.eq.f32.partialorder %v5659, 0.0
      %v5727 = vand.u32 %v5659, 2147483648
      %v5728 = vsel %vm5726, %v5727, %v5725
      %v5729 = vrsqrt.pop %v5661
      %v5730 = vmul.f32 %v5661, %v5729
      %vm5731 = vcmp.eq.f32.partialorder %v5661, inf
      %v5732 = vsel %vm5731, %v5661, %v5730
      %vm5733 = vcmp.eq.f32.partialorder %v5661, 0.0
      %v5734 = vand.u32 %v5661, 2147483648
      %v5735 = vsel %vm5733, %v5734, %v5732
      %v5736 = vrsqrt.pop %v5663
      %v5737 = vmul.f32 %v5663, %v5736
      %vm5738 = vcmp.eq.f32.partialorder %v5663, inf
      %v5739 = vsel %vm5738, %v5663, %v5737
      %vm5740 = vcmp.eq.f32.partialorder %v5663, 0.0
      %v5741 = vand.u32 %v5663, 2147483648
      %v5742 = vsel %vm5740, %v5741, %v5739
      %v5743 = vrsqrt.pop %v5665
      %v5744 = vmul.f32 %v5665, %v5743
      %vm5745 = vcmp.eq.f32.partialorder %v5665, inf
      %v5746 = vsel %vm5745, %v5665, %v5744
      %vm5747 = vcmp.eq.f32.partialorder %v5665, 0.0
      %v5748 = vand.u32 %v5665, 2147483648
      %v5749 = vsel %vm5747, %v5748, %v5746
      %v5750 = vrsqrt.pop %v5667
      %v5751 = vmul.f32 %v5667, %v5750
      %vm5752 = vcmp.eq.f32.partialorder %v5667, inf
      %v5753 = vsel %vm5752, %v5667, %v5751
      %vm5754 = vcmp.eq.f32.partialorder %v5667, 0.0
      %v5755 = vand.u32 %v5667, 2147483648
      %v5756 = vsel %vm5754, %v5755, %v5753
      %v5757 = vrsqrt.pop %v5669
      %v5758 = vmul.f32 %v5669, %v5757
      %vm5759 = vcmp.eq.f32.partialorder %v5669, inf
      %v5760 = vsel %vm5759, %v5669, %v5758
      %vm5761 = vcmp.eq.f32.partialorder %v5669, 0.0
      %v5762 = vand.u32 %v5669, 2147483648
      %v5763 = vsel %vm5761, %v5762, %v5760
      %v5764 = vrsqrt.pop %v5671
      %v5765 = vmul.f32 %v5671, %v5764
      %vm5766 = vcmp.eq.f32.partialorder %v5671, inf
      %v5767 = vsel %vm5766, %v5671, %v5765
      %vm5768 = vcmp.eq.f32.partialorder %v5671, 0.0
      %v5769 = vand.u32 %v5671, 2147483648
      %v5770 = vsel %vm5768, %v5769, %v5767
      %v5771 = vrsqrt.pop %v5673
      %v5772 = vmul.f32 %v5673, %v5771
      %vm5773 = vcmp.eq.f32.partialorder %v5673, inf
      %v5774 = vsel %vm5773, %v5673, %v5772
      %vm5775 = vcmp.eq.f32.partialorder %v5673, 0.0
      %v5776 = vand.u32 %v5673, 2147483648
      %v5777 = vsel %vm5775, %v5776, %v5774
      %v5778 = vrsqrt.pop %v5675
      %v5779 = vmul.f32 %v5675, %v5778
      %vm5780 = vcmp.eq.f32.partialorder %v5675, inf
      %v5781 = vsel %vm5780, %v5675, %v5779
      %vm5782 = vcmp.eq.f32.partialorder %v5675, 0.0
      %v5783 = vand.u32 %v5675, 2147483648
      %v5784 = vsel %vm5782, %v5783, %v5781
      %v5785 = vrsqrt.pop %v5677
      %v5786 = vmul.f32 %v5677, %v5785
      %vm5787 = vcmp.eq.f32.partialorder %v5677, inf
      %v5788 = vsel %vm5787, %v5677, %v5786
      %vm5789 = vcmp.eq.f32.partialorder %v5677, 0.0
      %v5790 = vand.u32 %v5677, 2147483648
      %v5791 = vsel %vm5789, %v5790, %v5788
      %v5792 = vrsqrt.pop %v5679
      %v5793 = vmul.f32 %v5679, %v5792
      %vm5794 = vcmp.eq.f32.partialorder %v5679, inf
      %v5795 = vsel %vm5794, %v5679, %v5793
      %vm5796 = vcmp.eq.f32.partialorder %v5679, 0.0
      %v5797 = vand.u32 %v5679, 2147483648
      %v5798 = vsel %vm5796, %v5797, %v5795
      %v5799 = vrsqrt.pop %v5681
      %v5800 = vmul.f32 %v5681, %v5799
      %vm5801 = vcmp.eq.f32.partialorder %v5681, inf
      %v5802 = vsel %vm5801, %v5681, %v5800
      %vm5803 = vcmp.eq.f32.partialorder %v5681, 0.0
      %v5804 = vand.u32 %v5681, 2147483648
      %v5805 = vsel %vm5803, %v5804, %v5802
      %v5806 = vrsqrt.pop %v5683
      %v5807 = vmul.f32 %v5683, %v5806
      %vm5808 = vcmp.eq.f32.partialorder %v5683, inf
      %v5809 = vsel %vm5808, %v5683, %v5807
      %vm5810 = vcmp.eq.f32.partialorder %v5683, 0.0
      %v5811 = vand.u32 %v5683, 2147483648
      %v5812 = vsel %vm5810, %v5811, %v5809
      %v5813 = vrsqrt.pop %v5685
      %v5814 = vmul.f32 %v5685, %v5813
      %vm5815 = vcmp.eq.f32.partialorder %v5685, inf
      %v5816 = vsel %vm5815, %v5685, %v5814
      %vm5817 = vcmp.eq.f32.partialorder %v5685, 0.0
      %v5818 = vand.u32 %v5685, 2147483648
      %v5819 = vsel %vm5817, %v5818, %v5816
      %v5820 = vrsqrt.pop %v5687
      %v5821 = vmul.f32 %v5687, %v5820
      %vm5822 = vcmp.eq.f32.partialorder %v5687, inf
      %v5823 = vsel %vm5822, %v5687, %v5821
      %vm5824 = vcmp.eq.f32.partialorder %v5687, 0.0
      %v5825 = vand.u32 %v5687, 2147483648
      %v5826 = vsel %vm5824, %v5825, %v5823
      %v5827 = vrsqrt.pop %v5689
      %v5828 = vmul.f32 %v5689, %v5827
      %vm5829 = vcmp.eq.f32.partialorder %v5689, inf
      %v5830 = vsel %vm5829, %v5689, %v5828
      %vm5831 = vcmp.eq.f32.partialorder %v5689, 0.0
      %v5832 = vand.u32 %v5689, 2147483648
      %v5833 = vsel %vm5831, %v5832, %v5830
      %v5834 = vrsqrt.pop %v5691
      %v5835 = vmul.f32 %v5691, %v5834
      %vm5836 = vcmp.eq.f32.partialorder %v5691, inf
      %v5837 = vsel %vm5836, %v5691, %v5835
      %vm5838 = vcmp.eq.f32.partialorder %v5691, 0.0
      %v5839 = vand.u32 %v5691, 2147483648
      %v5840 = vsel %vm5838, %v5839, %v5837
      %v5841 = vrsqrt.pop %v5693
      %v5842 = vmul.f32 %v5693, %v5841
      %vm5843 = vcmp.eq.f32.partialorder %v5693, inf
      %v5844 = vsel %vm5843, %v5693, %v5842
      %vm5845 = vcmp.eq.f32.partialorder %v5693, 0.0
      %v5846 = vand.u32 %v5693, 2147483648
      %v5847 = vsel %vm5845, %v5846, %v5844
      %v5848 = vrsqrt.pop %v5695
      %v5849 = vmul.f32 %v5695, %v5848
      %vm5850 = vcmp.eq.f32.partialorder %v5695, inf
      %v5851 = vsel %vm5850, %v5695, %v5849
      %vm5852 = vcmp.eq.f32.partialorder %v5695, 0.0
      %v5853 = vand.u32 %v5695, 2147483648
      %v5854 = vsel %vm5852, %v5853, %v5851
      %v5855 = vrsqrt.pop %v5697
      %v5856 = vmul.f32 %v5697, %v5855
      %vm5857 = vcmp.eq.f32.partialorder %v5697, inf
      %v5858 = vsel %vm5857, %v5697, %v5856
      %vm5859 = vcmp.eq.f32.partialorder %v5697, 0.0
      %v5860 = vand.u32 %v5697, 2147483648
      %v5861 = vsel %vm5859, %v5860, %v5858
      %v5862 = vrsqrt.pop %v5699
      %v5863 = vmul.f32 %v5699, %v5862
      %vm5864 = vcmp.eq.f32.partialorder %v5699, inf
      %v5865 = vsel %vm5864, %v5699, %v5863
      %vm5866 = vcmp.eq.f32.partialorder %v5699, 0.0
      %v5867 = vand.u32 %v5699, 2147483648
      %v5868 = vsel %vm5866, %v5867, %v5865
      %v5869 = vrsqrt.pop %v5701
      %v5870 = vmul.f32 %v5701, %v5869
      %vm5871 = vcmp.eq.f32.partialorder %v5701, inf
      %v5872 = vsel %vm5871, %v5701, %v5870
      %vm5873 = vcmp.eq.f32.partialorder %v5701, 0.0
      %v5874 = vand.u32 %v5701, 2147483648
      %v5875 = vsel %vm5873, %v5874, %v5872
      %v5876 = vrsqrt.pop %v5703
      %v5877 = vmul.f32 %v5703, %v5876
      %vm5878 = vcmp.eq.f32.partialorder %v5703, inf
      %v5879 = vsel %vm5878, %v5703, %v5877
      %vm5880 = vcmp.eq.f32.partialorder %v5703, 0.0
      %v5881 = vand.u32 %v5703, 2147483648
      %v5882 = vsel %vm5880, %v5881, %v5879
      %v5883 = vrsqrt.pop %v5705
      %v5884 = vmul.f32 %v5705, %v5883
      %vm5885 = vcmp.eq.f32.partialorder %v5705, inf
      %v5886 = vsel %vm5885, %v5705, %v5884
      %vm5887 = vcmp.eq.f32.partialorder %v5705, 0.0
      %v5888 = vand.u32 %v5705, 2147483648
      %v5889 = vsel %vm5887, %v5888, %v5886
      %v5890 = vrsqrt.pop %v5707
      %v5891 = vmul.f32 %v5707, %v5890
      %vm5892 = vcmp.eq.f32.partialorder %v5707, inf
      %v5893 = vsel %vm5892, %v5707, %v5891
      %vm5894 = vcmp.eq.f32.partialorder %v5707, 0.0
      %v5895 = vand.u32 %v5707, 2147483648
      %v5896 = vsel %vm5894, %v5895, %v5893
      %v5897 = vrsqrt.pop %v5709
      %v5898 = vmul.f32 %v5709, %v5897
      %vm5899 = vcmp.eq.f32.partialorder %v5709, inf
      %v5900 = vsel %vm5899, %v5709, %v5898
      %vm5901 = vcmp.eq.f32.partialorder %v5709, 0.0
      %v5902 = vand.u32 %v5709, 2147483648
      %v5903 = vsel %vm5901, %v5902, %v5900
      %v5904 = vrsqrt.pop %v5711
      %v5905 = vmul.f32 %v5711, %v5904
      %vm5906 = vcmp.eq.f32.partialorder %v5711, inf
      %v5907 = vsel %vm5906, %v5711, %v5905
      %vm5908 = vcmp.eq.f32.partialorder %v5711, 0.0
      %v5909 = vand.u32 %v5711, 2147483648
      %v5910 = vsel %vm5908, %v5909, %v5907
      %v5911 = vrsqrt.pop %v5713
      %v5912 = vmul.f32 %v5713, %v5911
      %vm5913 = vcmp.eq.f32.partialorder %v5713, inf
      %v5914 = vsel %vm5913, %v5713, %v5912
      %vm5915 = vcmp.eq.f32.partialorder %v5713, 0.0
      %v5916 = vand.u32 %v5713, 2147483648
      %v5917 = vsel %vm5915, %v5916, %v5914
      %v5918 = vrsqrt.pop %v5715
      %v5919 = vmul.f32 %v5715, %v5918
      %vm5920 = vcmp.eq.f32.partialorder %v5715, inf
      %v5921 = vsel %vm5920, %v5715, %v5919
      %vm5922 = vcmp.eq.f32.partialorder %v5715, 0.0
      %v5923 = vand.u32 %v5715, 2147483648
      %v5924 = vsel %vm5922, %v5923, %v5921
      %v5925 = vrsqrt.pop %v5717
      %v5926 = vmul.f32 %v5717, %v5925
      %vm5927 = vcmp.eq.f32.partialorder %v5717, inf
      %v5928 = vsel %vm5927, %v5717, %v5926
      %vm5929 = vcmp.eq.f32.partialorder %v5717, 0.0
      %v5930 = vand.u32 %v5717, 2147483648
      %v5931 = vsel %vm5929, %v5930, %v5928
      %v5932 = vrsqrt.pop %v5719
      %v5933 = vmul.f32 %v5719, %v5932
      %vm5934 = vcmp.eq.f32.partialorder %v5719, inf
      %v5935 = vsel %vm5934, %v5719, %v5933
      %vm5936 = vcmp.eq.f32.partialorder %v5719, 0.0
      %v5937 = vand.u32 %v5719, 2147483648
      %v5938 = vsel %vm5936, %v5937, %v5935
      %v5939 = vrsqrt.pop %v5721
      %v5940 = vmul.f32 %v5721, %v5939
      %vm5941 = vcmp.eq.f32.partialorder %v5721, inf
      %v5942 = vsel %vm5941, %v5721, %v5940
      %vm5943 = vcmp.eq.f32.partialorder %v5721, 0.0
      %v5944 = vand.u32 %v5721, 2147483648
      %v5945 = vsel %vm5943, %v5944, %v5942
      %v5946 = vadd.f32 %v5728, 1e-10
      %v5947 = vadd.f32 %v5735, 1e-10
      %v5948 = vadd.f32 %v5742, 1e-10
      %v5949 = vadd.f32 %v5749, 1e-10
      %v5950 = vadd.f32 %v5756, 1e-10
      %v5951 = vadd.f32 %v5763, 1e-10
      %v5952 = vadd.f32 %v5770, 1e-10
      %v5953 = vadd.f32 %v5777, 1e-10
      %v5954 = vadd.f32 %v5784, 1e-10
      %v5955 = vadd.f32 %v5791, 1e-10
      %v5956 = vadd.f32 %v5798, 1e-10
      %v5957 = vadd.f32 %v5805, 1e-10
      %v5958 = vadd.f32 %v5812, 1e-10
      %v5959 = vadd.f32 %v5819, 1e-10
      %v5960 = vadd.f32 %v5826, 1e-10
      %v5961 = vadd.f32 %v5833, 1e-10
      %v5962 = vadd.f32 %v5840, 1e-10
      %v5963 = vadd.f32 %v5847, 1e-10
      %v5964 = vadd.f32 %v5854, 1e-10
      %v5965 = vadd.f32 %v5861, 1e-10
      %v5966 = vadd.f32 %v5868, 1e-10
      %v5967 = vadd.f32 %v5875, 1e-10
      %v5968 = vadd.f32 %v5882, 1e-10
      %v5969 = vadd.f32 %v5889, 1e-10
      %v5970 = vadd.f32 %v5896, 1e-10
      %v5971 = vadd.f32 %v5903, 1e-10
      %v5972 = vadd.f32 %v5910, 1e-10
      %v5973 = vadd.f32 %v5917, 1e-10
      %v5974 = vadd.f32 %v5924, 1e-10
      %v5975 = vadd.f32 %v5931, 1e-10
      %v5976 = vadd.f32 %v5938, 1e-10
      %v5977 = vadd.f32 %v5945, 1e-10
      %v5978 = vrcp.pop %v5946
      %v5979 = vrcp.pop %v5947
      %v5980 = vrcp.pop %v5948
      %v5981 = vrcp.pop %v5949
      %v5982 = vrcp.pop %v5950
      %v5983 = vrcp.pop %v5951
      %v5984 = vrcp.pop %v5952
      %v5985 = vrcp.pop %v5953
      %v5986 = vrcp.pop %v5954
      %v5987 = vrcp.pop %v5955
      %v5988 = vrcp.pop %v5956
      %v5989 = vrcp.pop %v5957
      %v5990 = vrcp.pop %v5958
      %v5991 = vrcp.pop %v5959
      %v5992 = vrcp.pop %v5960
      %v5993 = vrcp.pop %v5961
      %v5994 = vrcp.pop %v5962
      %v5995 = vrcp.pop %v5963
      %v5996 = vrcp.pop %v5964
      %v5997 = vrcp.pop %v5965
      %v5998 = vrcp.pop %v5966
      %v5999 = vrcp.pop %v5967
      %v6000 = vrcp.pop %v5968
      %v6001 = vrcp.pop %v5969
      %v6002 = vrcp.pop %v5970
      %v6003 = vrcp.pop %v5971
      %v6004 = vrcp.pop %v5972
      %v6005 = vrcp.pop %v5973
      %v6006 = vrcp.pop %v5974
      %v6007 = vrcp.pop %v5975
      %v6008 = vrcp.pop %v5976
      %v6009 = vrcp.pop %v5977
      %v6010 = vmul.f32 %v5177, %v5594
      %v6011 = vmul.f32 %v5178, %v5595
      %v6012 = vmul.f32 %v5179, %v5596
      %v6013 = vmul.f32 %v5180, %v5597
      %v6014 = vmul.f32 %v5181, %v5598
      %v6015 = vmul.f32 %v5182, %v5599
      %v6016 = vmul.f32 %v5183, %v5600
      %v6017 = vmul.f32 %v5184, %v5601
      %v6018 = vmul.f32 %v5185, %v5602
      %v6019 = vmul.f32 %v5186, %v5603
      %v6020 = vmul.f32 %v5187, %v5604
      %v6021 = vmul.f32 %v5188, %v5605
      %v6022 = vmul.f32 %v5189, %v5606
      %v6023 = vmul.f32 %v5190, %v5607
      %v6024 = vmul.f32 %v5191, %v5608
      %v6025 = vmul.f32 %v5192, %v5609
      %v6026 = vmul.f32 %v5193, %v5610
      %v6027 = vmul.f32 %v5194, %v5611
      %v6028 = vmul.f32 %v5195, %v5612
      %v6029 = vmul.f32 %v5196, %v5613
      %v6030 = vmul.f32 %v5197, %v5614
      %v6031 = vmul.f32 %v5198, %v5615
      %v6032 = vmul.f32 %v5199, %v5616
      %v6033 = vmul.f32 %v5200, %v5617
      %v6034 = vmul.f32 %v5201, %v5618
      %v6035 = vmul.f32 %v5202, %v5619
      %v6036 = vmul.f32 %v5203, %v5620
      %v6037 = vmul.f32 %v5204, %v5621
      %v6038 = vmul.f32 %v5205, %v5622
      %v6039 = vmul.f32 %v5206, %v5623
      %v6040 = vmul.f32 %v5207, %v5624
      %v6041 = vmul.f32 %v5208, %v5625
      %v6042 = vmul.f32 %v5209, %v5978
      %v6043 = vmul.f32 %v5210, %v5979
      %v6044 = vmul.f32 %v5211, %v5980
      %v6045 = vmul.f32 %v5212, %v5981
      %v6046 = vmul.f32 %v5213, %v5982
      %v6047 = vmul.f32 %v5214, %v5983
      %v6048 = vmul.f32 %v5215, %v5984
      %v6049 = vmul.f32 %v5216, %v5985
      %v6050 = vmul.f32 %v5217, %v5986
      %v6051 = vmul.f32 %v5218, %v5987
      %v6052 = vmul.f32 %v5219, %v5988
      %v6053 = vmul.f32 %v5220, %v5989
      %v6054 = vmul.f32 %v5221, %v5990
      %v6055 = vmul.f32 %v5222, %v5991
      %v6056 = vmul.f32 %v5223, %v5992
      %v6057 = vmul.f32 %v5224, %v5993
      %v6058 = vmul.f32 %v5225, %v5994
      %v6059 = vmul.f32 %v5226, %v5995
      %v6060 = vmul.f32 %v5227, %v5996
      %v6061 = vmul.f32 %v5228, %v5997
      %v6062 = vmul.f32 %v5229, %v5998
      %v6063 = vmul.f32 %v5230, %v5999
      %v6064 = vmul.f32 %v5231, %v6000
      %v6065 = vmul.f32 %v5232, %v6001
      %v6066 = vmul.f32 %v5233, %v6002
      %v6067 = vmul.f32 %v5234, %v6003
      %v6068 = vmul.f32 %v5235, %v6004
      %v6069 = vmul.f32 %v5236, %v6005
      %v6070 = vmul.f32 %v5237, %v6006
      %v6071 = vmul.f32 %v5238, %v6007
      %v6072 = vmul.f32 %v5239, %v6008
      %v6073 = vmul.f32 %v5240, %v6009
      %v6074 = vsub.f32 %v6010, %v6042
      %v6075 = vsub.f32 %v6011, %v6043
      %v6076 = vsub.f32 %v6012, %v6044
      %v6077 = vsub.f32 %v6013, %v6045
      %v6078 = vsub.f32 %v6014, %v6046
      %v6079 = vsub.f32 %v6015, %v6047
      %v6080 = vsub.f32 %v6016, %v6048
      %v6081 = vsub.f32 %v6017, %v6049
      %v6082 = vsub.f32 %v6018, %v6050
      %v6083 = vsub.f32 %v6019, %v6051
      %v6084 = vsub.f32 %v6020, %v6052
      %v6085 = vsub.f32 %v6021, %v6053
      %v6086 = vsub.f32 %v6022, %v6054
      %v6087 = vsub.f32 %v6023, %v6055
      %v6088 = vsub.f32 %v6024, %v6056
      %v6089 = vsub.f32 %v6025, %v6057
      %v6090 = vsub.f32 %v6026, %v6058
      %v6091 = vsub.f32 %v6027, %v6059
      %v6092 = vsub.f32 %v6028, %v6060
      %v6093 = vsub.f32 %v6029, %v6061
      %v6094 = vsub.f32 %v6030, %v6062
      %v6095 = vsub.f32 %v6031, %v6063
      %v6096 = vsub.f32 %v6032, %v6064
      %v6097 = vsub.f32 %v6033, %v6065
      %v6098 = vsub.f32 %v6034, %v6066
      %v6099 = vsub.f32 %v6035, %v6067
      %v6100 = vsub.f32 %v6036, %v6068
      %v6101 = vsub.f32 %v6037, %v6069
      %v6102 = vsub.f32 %v6038, %v6070
      %v6103 = vsub.f32 %v6039, %v6071
      %v6104 = vsub.f32 %v6040, %v6072
      %v6105 = vsub.f32 %v6041, %v6073
      %v6106 = vmul.f32 %v6074, %v6074
      %v6107 = vmul.f32 %v6075, %v6075
      %v6108 = vmul.f32 %v6076, %v6076
      %v6109 = vmul.f32 %v6077, %v6077
      %v6110 = vmul.f32 %v6078, %v6078
      %v6111 = vmul.f32 %v6079, %v6079
      %v6112 = vmul.f32 %v6080, %v6080
      %v6113 = vmul.f32 %v6081, %v6081
      %v6114 = vmul.f32 %v6082, %v6082
      %v6115 = vmul.f32 %v6083, %v6083
      %v6116 = vmul.f32 %v6084, %v6084
      %v6117 = vmul.f32 %v6085, %v6085
      %v6118 = vmul.f32 %v6086, %v6086
      %v6119 = vmul.f32 %v6087, %v6087
      %v6120 = vmul.f32 %v6088, %v6088
      %v6121 = vmul.f32 %v6089, %v6089
      %v6122 = vmul.f32 %v6090, %v6090
      %v6123 = vmul.f32 %v6091, %v6091
      %v6124 = vmul.f32 %v6092, %v6092
      %v6125 = vmul.f32 %v6093, %v6093
      %v6126 = vmul.f32 %v6094, %v6094
      %v6127 = vmul.f32 %v6095, %v6095
      %v6128 = vmul.f32 %v6096, %v6096
      %v6129 = vmul.f32 %v6097, %v6097
      %v6130 = vmul.f32 %v6098, %v6098
      %v6131 = vmul.f32 %v6099, %v6099
      %v6132 = vmul.f32 %v6100, %v6100
      %v6133 = vmul.f32 %v6101, %v6101
      %v6134 = vmul.f32 %v6102, %v6102
      %v6135 = vmul.f32 %v6103, %v6103
      %v6136 = vmul.f32 %v6104, %v6104
      %v6137 = vmul.f32 %v6105, %v6105
      %v6139 = vlaneseq
      %v6140 = vshrl.u32 %v6139, 7
      %v6141 = vsub.s32 0, %v6140
      %v6142 = vrot.slane %v5241, %v6141
      %v6144 = vmul.f32 %v6106, %v6142
      %v6145 = vmul.f32 %v6107, %v6142
      %v6146 = vmul.f32 %v6108, %v6142
      %v6147 = vmul.f32 %v6109, %v6142
      %v6148 = vmul.f32 %v6110, %v6142
      %v6149 = vmul.f32 %v6111, %v6142
      %v6150 = vmul.f32 %v6112, %v6142
      %v6151 = vmul.f32 %v6113, %v6142
      %v6152 = vmul.f32 %v6114, %v6142
      %v6153 = vmul.f32 %v6115, %v6142
      %v6154 = vmul.f32 %v6116, %v6142
      %v6155 = vmul.f32 %v6117, %v6142
      %v6156 = vmul.f32 %v6118, %v6142
      %v6157 = vmul.f32 %v6119, %v6142
      %v6158 = vmul.f32 %v6120, %v6142
      %v6159 = vmul.f32 %v6121, %v6142
      %v6160 = vmul.f32 %v6122, %v6142
      %v6161 = vmul.f32 %v6123, %v6142
      %v6162 = vmul.f32 %v6124, %v6142
      %v6163 = vmul.f32 %v6125, %v6142
      %v6164 = vmul.f32 %v6126, %v6142
      %v6165 = vmul.f32 %v6127, %v6142
      %v6166 = vmul.f32 %v6128, %v6142
      %v6167 = vmul.f32 %v6129, %v6142
      %v6168 = vmul.f32 %v6130, %v6142
      %v6169 = vmul.f32 %v6131, %v6142
      %v6170 = vmul.f32 %v6132, %v6142
      %v6171 = vmul.f32 %v6133, %v6142
      %v6172 = vmul.f32 %v6134, %v6142
      %v6173 = vmul.f32 %v6135, %v6142
      %v6174 = vmul.f32 %v6136, %v6142
      %v6175 = vmul.f32 %v6137, %v6142
      %v6176 = vadd.f32 %v6144, %v6145
      %v6177 = vadd.f32 %v6176, %v6146
      %v6178 = vadd.f32 %v6177, %v6147
      %v6179 = vadd.f32 %v6178, %v6148
      %v6180 = vadd.f32 %v6179, %v6149
      %v6181 = vadd.f32 %v6180, %v6150
      %v6182 = vadd.f32 %v6181, %v6151
      %v6183 = vadd.f32 %v6182, %v6152
      %v6184 = vadd.f32 %v6183, %v6153
      %v6185 = vadd.f32 %v6184, %v6154
      %v6186 = vadd.f32 %v6185, %v6155
      %v6187 = vadd.f32 %v6186, %v6156
      %v6188 = vadd.f32 %v6187, %v6157
      %v6189 = vadd.f32 %v6188, %v6158
      %v6190 = vadd.f32 %v6189, %v6159
      %v6191 = vadd.f32 %v6190, %v6160
      %v6192 = vadd.f32 %v6191, %v6161
      %v6193 = vadd.f32 %v6192, %v6162
      %v6194 = vadd.f32 %v6193, %v6163
      %v6195 = vadd.f32 %v6194, %v6164
      %v6196 = vadd.f32 %v6195, %v6165
      %v6197 = vadd.f32 %v6196, %v6166
      %v6198 = vadd.f32 %v6197, %v6167
      %v6199 = vadd.f32 %v6198, %v6168
      %v6200 = vadd.f32 %v6199, %v6169
      %v6201 = vadd.f32 %v6200, %v6170
      %v6202 = vadd.f32 %v6201, %v6171
      %v6203 = vadd.f32 %v6202, %v6172
      %v6204 = vadd.f32 %v6203, %v6173
      %v6205 = vadd.f32 %v6204, %v6174
      %v6206 = vadd.f32 %v6205, %v6175
      %v6207 = vrot.slane %v6206, 4
      %v6208 = vadd.f32 %v6206, %v6207
      %v6209 = vrot.slane %v6208, 2
      %v6210 = vadd.f32 %v6208, %v6209
      %v6211 = vrot.slane %v6210, 1
      %v6212 = vadd.f32 %v6210, %v6211
      %6213 = vst [vmem:[#allocation2] sm:$0xff] 0.0
      %6214 = vst [vmem:[#allocation2 + $0x8] sm:$0xff] 0.0
      %6215 = vst [vmem:[#allocation2 + $0x10] sm:$0xff] 0.0
      %6216 = vst [vmem:[#allocation2 + $0x18] sm:$0xff] 0.0
      %6217 = vst [vmem:[#allocation2 + $0x20] sm:$0xff] 0.0
      %6218 = vst [vmem:[#allocation2 + $0x28] sm:$0xff] 0.0
      %6219 = vst [vmem:[#allocation2 + $0x30] sm:$0xff] 0.0
      %6220 = vst [vmem:[#allocation2 + $0x38] sm:$0xff] 0.0
      %6221 = vst [vmem:[#allocation2 + $0x40] sm:$0xff] 0.0
      %6222 = vst [vmem:[#allocation2 + $0x48] sm:$0xff] 0.0
      %6223 = vst [vmem:[#allocation2 + $0x50] sm:$0xff] 0.0
      %6224 = vst [vmem:[#allocation2 + $0x58] sm:$0xff] 0.0
      %6225 = vst [vmem:[#allocation2 + $0x60] sm:$0xff] 0.0
      %6226 = vst [vmem:[#allocation2 + $0x68] sm:$0xff] 0.0
      %6227 = vst [vmem:[#allocation2 + $0x70] sm:$0xff] 0.0
      %6228 = vst [vmem:[#allocation2 + $0x78] sm:$0xff] 0.0
      %6229 = vst [vmem:[#allocation2 + $0x80] sm:$0xff] 0.0
      %6230 = vst [vmem:[#allocation2 + $0x88] sm:$0xff] 0.0
      %6231 = vst [vmem:[#allocation2 + $0x90] sm:$0xff] 0.0
      %6232 = vst [vmem:[#allocation2 + $0x98] sm:$0xff] 0.0
      %6233 = vst [vmem:[#allocation2 + $0xa0] sm:$0xff] 0.0
      %6234 = vst [vmem:[#allocation2 + $0xa8] sm:$0xff] 0.0
      %6235 = vst [vmem:[#allocation2 + $0xb0] sm:$0xff] 0.0
      %6236 = vst [vmem:[#allocation2 + $0xb8] sm:$0xff] 0.0
      %6237 = vst [vmem:[#allocation2 + $0xc0] sm:$0xff] 0.0
      %6238 = vst [vmem:[#allocation2 + $0xc8] sm:$0xff] 0.0
      %6239 = vst [vmem:[#allocation2 + $0xd0] sm:$0xff] 0.0
      %6240 = vst [vmem:[#allocation2 + $0xd8] sm:$0xff] 0.0
      %6241 = vst [vmem:[#allocation2 + $0xe0] sm:$0xff] 0.0
      %6242 = vst [vmem:[#allocation2 + $0xe8] sm:$0xff] 0.0
      %6243 = vst [vmem:[#allocation2 + $0xf0] sm:$0xff] 0.0
      %6244 = vst [vmem:[#allocation2 + $0xf8] sm:$0xff] 0.0
      %6245 = vst [vmem:[#allocation2 + $0x100] sm:$0xff] 0.0
      %6246 = vst [vmem:[#allocation2 + $0x108] sm:$0xff] 0.0
      %6247 = vst [vmem:[#allocation2 + $0x110] sm:$0xff] 0.0
      %6248 = vst [vmem:[#allocation2 + $0x118] sm:$0xff] 0.0
      %6249 = vst [vmem:[#allocation2 + $0x120] sm:$0xff] 0.0
      %6250 = vst [vmem:[#allocation2 + $0x128] sm:$0xff] 0.0
      %6251 = vst [vmem:[#allocation2 + $0x130] sm:$0xff] 0.0
      %6252 = vst [vmem:[#allocation2 + $0x138] sm:$0xff] 0.0
      %6253 = vst [vmem:[#allocation2 + $0x140] sm:$0xff] 0.0
      %6254 = vst [vmem:[#allocation2 + $0x148] sm:$0xff] 0.0
      %6255 = vst [vmem:[#allocation2 + $0x150] sm:$0xff] 0.0
      %6256 = vst [vmem:[#allocation2 + $0x158] sm:$0xff] 0.0
      %6257 = vst [vmem:[#allocation2 + $0x160] sm:$0xff] 0.0
      %6258 = vst [vmem:[#allocation2 + $0x168] sm:$0xff] 0.0
      %6259 = vst [vmem:[#allocation2 + $0x170] sm:$0xff] 0.0
      %6260 = vst [vmem:[#allocation2 + $0x178] sm:$0xff] 0.0
      %6261 = vst [vmem:[#allocation2 + $0x180] sm:$0xff] 0.0
      %6262 = vst [vmem:[#allocation2 + $0x188] sm:$0xff] 0.0
      %6263 = vst [vmem:[#allocation2 + $0x190] sm:$0xff] 0.0
      %6264 = vst [vmem:[#allocation2 + $0x198] sm:$0xff] 0.0
      %6265 = vst [vmem:[#allocation2 + $0x1a0] sm:$0xff] 0.0
      %6266 = vst [vmem:[#allocation2 + $0x1a8] sm:$0xff] 0.0
      %6267 = vst [vmem:[#allocation2 + $0x1b0] sm:$0xff] 0.0
      %6268 = vst [vmem:[#allocation2 + $0x1b8] sm:$0xff] 0.0
      %6269 = vst [vmem:[#allocation2 + $0x1c0] sm:$0xff] 0.0
      %6270 = vst [vmem:[#allocation2 + $0x1c8] sm:$0xff] 0.0
      %6271 = vst [vmem:[#allocation2 + $0x1d0] sm:$0xff] 0.0
      %6272 = vst [vmem:[#allocation2 + $0x1d8] sm:$0xff] 0.0
      %6273 = vst [vmem:[#allocation2 + $0x1e0] sm:$0xff] 0.0
      %6274 = vst [vmem:[#allocation2 + $0x1e8] sm:$0xff] 0.0
      %6275 = vst [vmem:[#allocation2 + $0x1f0] sm:$0xff] 0.0
      %6276 = vst [vmem:[#allocation2 + $0x1f8] sm:$0xff] 0.0
      %6277 = vst [vmem:[#allocation2 + $0x200] sm:$0xff] 0.0
      %6278 = vst [vmem:[#allocation2 + $0x208] sm:$0xff] 0.0
      %6279 = vst [vmem:[#allocation2 + $0x210] sm:$0xff] 0.0
      %6280 = vst [vmem:[#allocation2 + $0x218] sm:$0xff] 0.0
      %6281 = vst [vmem:[#allocation2 + $0x220] sm:$0xff] 0.0
      %6282 = vst [vmem:[#allocation2 + $0x228] sm:$0xff] 0.0
      %6283 = vst [vmem:[#allocation2 + $0x230] sm:$0xff] 0.0
      %6284 = vst [vmem:[#allocation2 + $0x238] sm:$0xff] 0.0
      %6285 = vst [vmem:[#allocation2 + $0x240] sm:$0xff] 0.0
      %6286 = vst [vmem:[#allocation2 + $0x248] sm:$0xff] 0.0
      %6287 = vst [vmem:[#allocation2 + $0x250] sm:$0xff] 0.0
      %6288 = vst [vmem:[#allocation2 + $0x258] sm:$0xff] 0.0
      %6289 = vst [vmem:[#allocation2 + $0x260] sm:$0xff] 0.0
      %6290 = vst [vmem:[#allocation2 + $0x268] sm:$0xff] 0.0
      %6291 = vst [vmem:[#allocation2 + $0x270] sm:$0xff] 0.0
      %6292 = vst [vmem:[#allocation2 + $0x278] sm:$0xff] 0.0
      %6293 = vst [vmem:[#allocation2 + $0x280] sm:$0xff] 0.0
      %6294 = vst [vmem:[#allocation2 + $0x288] sm:$0xff] 0.0
      %6295 = vst [vmem:[#allocation2 + $0x290] sm:$0xff] 0.0
      %6296 = vst [vmem:[#allocation2 + $0x298] sm:$0xff] 0.0
      %6297 = vst [vmem:[#allocation2 + $0x2a0] sm:$0xff] 0.0
      %6298 = vst [vmem:[#allocation2 + $0x2a8] sm:$0xff] 0.0
      %6299 = vst [vmem:[#allocation2 + $0x2b0] sm:$0xff] 0.0
      %6300 = vst [vmem:[#allocation2 + $0x2b8] sm:$0xff] 0.0
      %6301 = vst [vmem:[#allocation2 + $0x2c0] sm:$0xff] 0.0
      %6302 = vst [vmem:[#allocation2 + $0x2c8] sm:$0xff] 0.0
      %6303 = vst [vmem:[#allocation2 + $0x2d0] sm:$0xff] 0.0
      %6304 = vst [vmem:[#allocation2 + $0x2d8] sm:$0xff] 0.0
      %6305 = vst [vmem:[#allocation2 + $0x2e0] sm:$0xff] 0.0
      %6306 = vst [vmem:[#allocation2 + $0x2e8] sm:$0xff] 0.0
      %6307 = vst [vmem:[#allocation2 + $0x2f0] sm:$0xff] 0.0
      %6308 = vst [vmem:[#allocation2 + $0x2f8] sm:$0xff] 0.0
      %6309 = vst [vmem:[#allocation2 + $0x300] sm:$0xff] 0.0
      %6310 = vst [vmem:[#allocation2 + $0x308] sm:$0xff] 0.0
      %6311 = vst [vmem:[#allocation2 + $0x310] sm:$0xff] 0.0
      %6312 = vst [vmem:[#allocation2 + $0x318] sm:$0xff] 0.0
      %6313 = vst [vmem:[#allocation2 + $0x320] sm:$0xff] 0.0
      %6314 = vst [vmem:[#allocation2 + $0x328] sm:$0xff] 0.0
      %6315 = vst [vmem:[#allocation2 + $0x330] sm:$0xff] 0.0
      %6316 = vst [vmem:[#allocation2 + $0x338] sm:$0xff] 0.0
      %6317 = vst [vmem:[#allocation2 + $0x340] sm:$0xff] 0.0
      %6318 = vst [vmem:[#allocation2 + $0x348] sm:$0xff] 0.0
      %6319 = vst [vmem:[#allocation2 + $0x350] sm:$0xff] 0.0
      %6320 = vst [vmem:[#allocation2 + $0x358] sm:$0xff] 0.0
      %s6321 = scalar_lea.vmem [#allocation2], 24
      %6322 = vst [vmem:[%s6321 + $0x8] sm:$0xff] %v5177
      %6323 = vst [vmem:[%s6321 + $0x10] sm:$0xff] %v5178
      %6324 = vst [vmem:[%s6321 + $0x20] sm:$0xff] %v5179
      %6325 = vst [vmem:[%s6321 + $0x28] sm:$0xff] %v5180
      %6326 = vst [vmem:[%s6321 + $0x38] sm:$0xff] %v5181
      %6327 = vst [vmem:[%s6321 + $0x40] sm:$0xff] %v5182
      %6328 = vst [vmem:[%s6321 + $0x50] sm:$0xff] %v5183
      %6329 = vst [vmem:[%s6321 + $0x58] sm:$0xff] %v5184
      %6330 = vst [vmem:[%s6321 + $0x68] sm:$0xff] %v5185
      %6331 = vst [vmem:[%s6321 + $0x70] sm:$0xff] %v5186
      %6332 = vst [vmem:[%s6321 + $0x80] sm:$0xff] %v5187
      %6333 = vst [vmem:[%s6321 + $0x88] sm:$0xff] %v5188
      %6334 = vst [vmem:[%s6321 + $0x98] sm:$0xff] %v5189
      %6335 = vst [vmem:[%s6321 + $0xa0] sm:$0xff] %v5190
      %6336 = vst [vmem:[%s6321 + $0xb0] sm:$0xff] %v5191
      %6337 = vst [vmem:[%s6321 + $0xb8] sm:$0xff] %v5192
      %6338 = vst [vmem:[%s6321 + $0xc8] sm:$0xff] %v5193
      %6339 = vst [vmem:[%s6321 + $0xd0] sm:$0xff] %v5194
      %6340 = vst [vmem:[%s6321 + $0xe0] sm:$0xff] %v5195
      %6341 = vst [vmem:[%s6321 + $0xe8] sm:$0xff] %v5196
      %6342 = vst [vmem:[%s6321 + $0xf8] sm:$0xff] %v5197
      %6343 = vst [vmem:[%s6321 + $0x100] sm:$0xff] %v5198
      %6344 = vst [vmem:[%s6321 + $0x110] sm:$0xff] %v5199
      %6345 = vst [vmem:[%s6321 + $0x118] sm:$0xff] %v5200
      %6346 = vst [vmem:[%s6321 + $0x128] sm:$0xff] %v5201
      %6347 = vst [vmem:[%s6321 + $0x130] sm:$0xff] %v5202
      %6348 = vst [vmem:[%s6321 + $0x140] sm:$0xff] %v5203
      %6349 = vst [vmem:[%s6321 + $0x148] sm:$0xff] %v5204
      %6350 = vst [vmem:[%s6321 + $0x158] sm:$0xff] %v5205
      %6351 = vst [vmem:[%s6321 + $0x160] sm:$0xff] %v5206
      %6352 = vst [vmem:[%s6321 + $0x170] sm:$0xff] %v5207
      %6353 = vst [vmem:[%s6321 + $0x178] sm:$0xff] %v5208
      %6354 = vst [vmem:[%s6321 + $0x1b8] sm:$0xff] %v5209
      %6355 = vst [vmem:[%s6321 + $0x1c0] sm:$0xff] %v5210
      %6356 = vst [vmem:[%s6321 + $0x1d0] sm:$0xff] %v5211
      %6357 = vst [vmem:[%s6321 + $0x1d8] sm:$0xff] %v5212
      %6358 = vst [vmem:[%s6321 + $0x1e8] sm:$0xff] %v5213
      %6359 = vst [vmem:[%s6321 + $0x1f0] sm:$0xff] %v5214
      %6360 = vst [vmem:[%s6321 + $0x200] sm:$0xff] %v5215
      %6361 = vst [vmem:[%s6321 + $0x208] sm:$0xff] %v5216
      %6362 = vst [vmem:[%s6321 + $0x218] sm:$0xff] %v5217
      %6363 = vst [vmem:[%s6321 + $0x220] sm:$0xff] %v5218
      %6364 = vst [vmem:[%s6321 + $0x230] sm:$0xff] %v5219
      %6365 = vst [vmem:[%s6321 + $0x238] sm:$0xff] %v5220
      %6366 = vst [vmem:[%s6321 + $0x248] sm:$0xff] %v5221
      %6367 = vst [vmem:[%s6321 + $0x250] sm:$0xff] %v5222
      %6368 = vst [vmem:[%s6321 + $0x260] sm:$0xff] %v5223
      %6369 = vst [vmem:[%s6321 + $0x268] sm:$0xff] %v5224
      %6370 = vst [vmem:[%s6321 + $0x278] sm:$0xff] %v5225
      %6371 = vst [vmem:[%s6321 + $0x280] sm:$0xff] %v5226
      %6372 = vst [vmem:[%s6321 + $0x290] sm:$0xff] %v5227
      %6373 = vst [vmem:[%s6321 + $0x298] sm:$0xff] %v5228
      %6374 = vst [vmem:[%s6321 + $0x2a8] sm:$0xff] %v5229
      %6375 = vst [vmem:[%s6321 + $0x2b0] sm:$0xff] %v5230
      %6376 = vst [vmem:[%s6321 + $0x2c0] sm:$0xff] %v5231
      %6377 = vst [vmem:[%s6321 + $0x2c8] sm:$0xff] %v5232
      %6378 = vst [vmem:[%s6321 + $0x2d8] sm:$0xff] %v5233
      %6379 = vst [vmem:[%s6321 + $0x2e0] sm:$0xff] %v5234
      %6380 = vst [vmem:[%s6321 + $0x2f0] sm:$0xff] %v5235
      %6381 = vst [vmem:[%s6321 + $0x2f8] sm:$0xff] %v5236
      %6382 = vst [vmem:[%s6321 + $0x308] sm:$0xff] %v5237
      %6383 = vst [vmem:[%s6321 + $0x310] sm:$0xff] %v5238
      %6384 = vst [vmem:[%s6321 + $0x320] sm:$0xff] %v5239
      %6385 = vst [vmem:[%s6321 + $0x328] sm:$0xff] %v5240
      %s6386 = scalar_lea.vmem [#allocation2], 7
      %v6387 = vld [vmem:[%s6386] ss:$2 sm:$0xff]
      %s6388 = scalar_lea.vmem [#allocation2], 55
      %v6389 = vld [vmem:[%s6388] ss:$2 sm:$0xff]
      %s6390 = scalar_lea.vmem [#allocation2], 103
      %v6391 = vld [vmem:[%s6390] ss:$2 sm:$0xff]
      %s6392 = scalar_lea.vmem [#allocation2], 151
      %v6393 = vld [vmem:[%s6392] ss:$2 sm:$0xff]
      %s6394 = scalar_lea.vmem [#allocation2], 199
      %v6395 = vld [vmem:[%s6394] ss:$2 sm:$0xff]
      %s6396 = scalar_lea.vmem [#allocation2], 247
      %v6397 = vld [vmem:[%s6396] ss:$2 sm:$0xff]
      %s6398 = scalar_lea.vmem [#allocation2], 295
      %v6399 = vld [vmem:[%s6398] ss:$2 sm:$0xff]
      %s6400 = scalar_lea.vmem [#allocation2], 343
      %v6401 = vld [vmem:[%s6400] ss:$2 sm:$0xff]
      %s6402 = scalar_lea.vmem [#allocation2], 439
      %v6403 = vld [vmem:[%s6402] ss:$2 sm:$0xff]
      %s6404 = scalar_lea.vmem [#allocation2], 487
      %v6405 = vld [vmem:[%s6404] ss:$2 sm:$0xff]
      %s6406 = scalar_lea.vmem [#allocation2], 535
      %v6407 = vld [vmem:[%s6406] ss:$2 sm:$0xff]
      %s6408 = scalar_lea.vmem [#allocation2], 583
      %v6409 = vld [vmem:[%s6408] ss:$2 sm:$0xff]
      %s6410 = scalar_lea.vmem [#allocation2], 631
      %v6411 = vld [vmem:[%s6410] ss:$2 sm:$0xff]
      %s6412 = scalar_lea.vmem [#allocation2], 679
      %v6413 = vld [vmem:[%s6412] ss:$2 sm:$0xff]
      %s6414 = scalar_lea.vmem [#allocation2], 727
      %v6415 = vld [vmem:[%s6414] ss:$2 sm:$0xff]
      %s6416 = scalar_lea.vmem [#allocation2], 775
      %v6417 = vld [vmem:[%s6416] ss:$2 sm:$0xff]
      %v6418 = vpack.c.bf16 %v6389, %v6387
      %v6419 = vpack.c.bf16 %v6393, %v6391
      %v6420 = vpack.c.bf16 %v6397, %v6395
      %v6421 = vpack.c.bf16 %v6401, %v6399
      %v6422 = vpack.c.bf16 %v6405, %v6403
      %v6423 = vpack.c.bf16 %v6409, %v6407
      %v6424 = vpack.c.bf16 %v6413, %v6411
      %v6425 = vpack.c.bf16 %v6417, %v6415
      %v6426 = vld [vmem:[%s4] sm:$0xf]
      %v6427 = vld [vmem:[%s4 + $0x4] sm:$0xf]
      %v6428 = vld [vmem:[%s4 + $0x8] sm:$0xf]
      %v6429 = vld [vmem:[%s4 + $0xc] sm:$0xf]
      %v6430 = vld [vmem:[%s4 + $0x10] sm:$0xf]
      %v6431 = vld [vmem:[%s4 + $0x14] sm:$0xf]
      %v6432 = vld [vmem:[%s4 + $0x18] sm:$0xf]
      %v6433 = vld [vmem:[%s4 + $0x1c] sm:$0xf]
      %v6434 = vld [vmem:[%s4 + $0x20] sm:$0xf]
      %v6435 = vld [vmem:[%s4 + $0x24] sm:$0xf]
      %v6436 = vld [vmem:[%s4 + $0x28] sm:$0xf]
      %v6437 = vld [vmem:[%s4 + $0x2c] sm:$0xf]
      %v6438 = vld [vmem:[%s4 + $0x30] sm:$0xf]
      %v6439 = vld [vmem:[%s4 + $0x34] sm:$0xf]
      %v6440 = vld [vmem:[%s4 + $0x38] sm:$0xf]
      %v6441 = vld [vmem:[%s4 + $0x3c] sm:$0xf]
      %s6442 = scalar_lea.vmem [#allocation2], 8
      %v6443 = vld [vmem:[%s6442] ss:$2 sm:$0xff]
      %s6444 = scalar_lea.vmem [#allocation2], 56
      %v6445 = vld [vmem:[%s6444] ss:$2 sm:$0xff]
      %s6446 = scalar_lea.vmem [#allocation2], 104
      %v6447 = vld [vmem:[%s6446] ss:$2 sm:$0xff]
      %s6448 = scalar_lea.vmem [#allocation2], 152
      %v6449 = vld [vmem:[%s6448] ss:$2 sm:$0xff]
      %s6450 = scalar_lea.vmem [#allocation2], 200
      %v6451 = vld [vmem:[%s6450] ss:$2 sm:$0xff]
      %s6452 = scalar_lea.vmem [#allocation2], 248
      %v6453 = vld [vmem:[%s6452] ss:$2 sm:$0xff]
      %s6454 = scalar_lea.vmem [#allocation2], 296
      %v6455 = vld [vmem:[%s6454] ss:$2 sm:$0xff]
      %s6456 = scalar_lea.vmem [#allocation2], 344
      %v6457 = vld [vmem:[%s6456] ss:$2 sm:$0xff]
      %s6458 = scalar_lea.vmem [#allocation2], 440
      %v6459 = vld [vmem:[%s6458] ss:$2 sm:$0xff]
      %s6460 = scalar_lea.vmem [#allocation2], 488
      %v6461 = vld [vmem:[%s6460] ss:$2 sm:$0xff]
      %s6462 = scalar_lea.vmem [#allocation2], 536
      %v6463 = vld [vmem:[%s6462] ss:$2 sm:$0xff]
      %s6464 = scalar_lea.vmem [#allocation2], 584
      %v6465 = vld [vmem:[%s6464] ss:$2 sm:$0xff]
      %s6466 = scalar_lea.vmem [#allocation2], 632
      %v6467 = vld [vmem:[%s6466] ss:$2 sm:$0xff]
      %s6468 = scalar_lea.vmem [#allocation2], 680
      %v6469 = vld [vmem:[%s6468] ss:$2 sm:$0xff]
      %s6470 = scalar_lea.vmem [#allocation2], 728
      %v6471 = vld [vmem:[%s6470] ss:$2 sm:$0xff]
      %s6472 = scalar_lea.vmem [#allocation2], 776
      %v6473 = vld [vmem:[%s6472] ss:$2 sm:$0xff]
      %v6474 = vpack.c.bf16 %v6445, %v6443
      %v6475 = vpack.c.bf16 %v6449, %v6447
      %v6476 = vpack.c.bf16 %v6453, %v6451
      %v6477 = vpack.c.bf16 %v6457, %v6455
      %v6478 = vpack.c.bf16 %v6461, %v6459
      %v6479 = vpack.c.bf16 %v6465, %v6463
      %v6480 = vpack.c.bf16 %v6469, %v6467
      %v6481 = vpack.c.bf16 %v6473, %v6471
      %s6482 = scalar_lea.vmem %s4, 64
      %v6483 = vld [vmem:[%s6482] sm:$0xf]
      %v6484 = vld [vmem:[%s6482 + $0x4] sm:$0xf]
      %v6485 = vld [vmem:[%s6482 + $0x8] sm:$0xf]
      %v6486 = vld [vmem:[%s6482 + $0xc] sm:$0xf]
      %v6487 = vld [vmem:[%s6482 + $0x10] sm:$0xf]
      %v6488 = vld [vmem:[%s6482 + $0x14] sm:$0xf]
      %v6489 = vld [vmem:[%s6482 + $0x18] sm:$0xf]
      %v6490 = vld [vmem:[%s6482 + $0x1c] sm:$0xf]
      %v6491 = vld [vmem:[%s6482 + $0x20] sm:$0xf]
      %v6492 = vld [vmem:[%s6482 + $0x24] sm:$0xf]
      %v6493 = vld [vmem:[%s6482 + $0x28] sm:$0xf]
      %v6494 = vld [vmem:[%s6482 + $0x2c] sm:$0xf]
      %v6495 = vld [vmem:[%s6482 + $0x30] sm:$0xf]
      %v6496 = vld [vmem:[%s6482 + $0x34] sm:$0xf]
      %v6497 = vld [vmem:[%s6482 + $0x38] sm:$0xf]
      %v6498 = vld [vmem:[%s6482 + $0x3c] sm:$0xf]
      %v6515 = vunpack.c.l.b16 %v6483
      %v6516 = vunpack.c.l.b16 %v6484
      %v6517 = vunpack.c.l.b16 %v6485
      %v6518 = vunpack.c.l.b16 %v6486
      %v6519 = vunpack.c.l.b16 %v6487
      %v6520 = vunpack.c.l.b16 %v6488
      %v6521 = vunpack.c.l.b16 %v6489
      %v6522 = vunpack.c.l.b16 %v6490
      %v6523 = vunpack.c.l.b16 %v6491
      %v6524 = vunpack.c.l.b16 %v6492
      %v6525 = vunpack.c.l.b16 %v6493
      %v6526 = vunpack.c.l.b16 %v6494
      %v6527 = vunpack.c.l.b16 %v6495
      %v6528 = vunpack.c.l.b16 %v6496
      %v6529 = vunpack.c.l.b16 %v6497
      %v6530 = vunpack.c.l.b16 %v6498
      %v6531 = vpack.c.b16 %v6516, %v6515
      %v6532 = vpack.c.b16 %v6518, %v6517
      %v6533 = vpack.c.b16 %v6520, %v6519
      %v6534 = vpack.c.b16 %v6522, %v6521
      %v6535 = vpack.c.b16 %v6524, %v6523
      %v6536 = vpack.c.b16 %v6526, %v6525
      %v6537 = vpack.c.b16 %v6528, %v6527
      %v6538 = vpack.c.b16 %v6530, %v6529
      %6547 = vmatprep.subr.bf16.mxu0 0
      %6548 = vmatpush1.bf16.msra.mxu0 %v6531
      %6549 = vmatprep.subr.bf16.mxu0 0
      %6550 = vmatpush1.bf16.msra.mxu0 %v6532
      %6551 = vmatprep.subr.bf16.mxu0 0
      %6552 = vmatpush1.bf16.msra.mxu0 %v6533
      %6553 = vmatprep.subr.bf16.mxu0 0
      %6554 = vmatpush1.bf16.msra.mxu0 %v6534
      %6555 = vmatprep.subr.bf16.mxu0 0
      %6556 = vmatpush1.bf16.msra.mxu0 %v6535
      %6557 = vmatprep.subr.bf16.mxu0 0
      %6558 = vmatpush1.bf16.msra.mxu0 %v6536
      %6559 = vmatprep.subr.bf16.mxu0 0
      %6560 = vmatpush1.bf16.msra.mxu0 %v6537
      %6561 = vmatprep.subr.bf16.mxu0 0
      %6562 = vmatpush1.bf16.msra.mxu0 %v6538
      %6563 = vmatprep.subr.bf16.mxu0 0
      %6564 = vmatpush1.bf16.msra.mxu0 0
      %6565 = vmatprep.subr.bf16.mxu0 0
      %6566 = vmatpush1.bf16.msra.mxu0 0
      %6567 = vmatprep.subr.bf16.mxu0 0
      %6568 = vmatpush1.bf16.msra.mxu0 0
      %6569 = vmatprep.subr.bf16.mxu0 0
      %6570 = vmatpush1.bf16.msra.mxu0 0
      %6571 = vmatprep.subr.bf16.mxu0 0
      %6572 = vmatpush1.bf16.msra.mxu0 0
      %6573 = vmatprep.subr.bf16.mxu0 0
      %6574 = vmatpush1.bf16.msra.mxu0 0
      %6575 = vmatprep.subr.bf16.mxu0 0
      %6576 = vmatpush1.bf16.msra.mxu0 0
      %6577 = vmatprep.subr.bf16.mxu0 0
      %6578 = vmatpush1.bf16.msra.mxu0 0
      %6579 = vmatprep.mubr.bf16.mxu0 0
      %6580 = vmatmul.mubr.bf16.gmra.mrb[0].mxu0 %v6474
      %v6581 = vpop.f32.mrb[0].mxu0
      %v6582 = vadd.f32 0.0, %v6581
      %v6583 = vpop.f32.mrb[0].mxu0
      %v6584 = vpop.f32.mrb[0].mxu0
      %v6585 = vadd.f32 0.0, %v6584
      %v6586 = vpop.f32.mrb[0].mxu0
      %6587 = vmatprep.mubr.bf16.mxu0 0
      %6588 = vmatmul.mubr.bf16.gmra.mrb[0].mxu0 %v6475
      %v6589 = vpop.f32.mrb[0].mxu0
      %v6590 = vadd.f32 0.0, %v6589
      %v6591 = vpop.f32.mrb[0].mxu0
      %v6592 = vpop.f32.mrb[0].mxu0
      %v6593 = vadd.f32 0.0, %v6592
      %v6594 = vpop.f32.mrb[0].mxu0
      %6595 = vmatprep.mubr.bf16.mxu0 0
      %6596 = vmatmul.mubr.bf16.gmra.mrb[0].mxu0 %v6476
      %v6597 = vpop.f32.mrb[0].mxu0
      %v6598 = vadd.f32 0.0, %v6597
      %v6599 = vpop.f32.mrb[0].mxu0
      %v6600 = vpop.f32.mrb[0].mxu0
      %v6601 = vadd.f32 0.0, %v6600
      %v6602 = vpop.f32.mrb[0].mxu0
      %6603 = vmatprep.mubr.bf16.mxu0 0
      %6604 = vmatmul.mubr.bf16.gmra.mrb[0].mxu0 %v6477
      %v6605 = vpop.f32.mrb[0].mxu0
      %v6606 = vadd.f32 0.0, %v6605
      %v6607 = vpop.f32.mrb[0].mxu0
      %v6608 = vpop.f32.mrb[0].mxu0
      %v6609 = vadd.f32 0.0, %v6608
      %v6610 = vpop.f32.mrb[0].mxu0
      %6611 = vmatprep.mubr.bf16.mxu0 0
      %6612 = vmatmul.mubr.bf16.gmra.mrb[0].mxu0 %v6478
      %v6613 = vpop.f32.mrb[0].mxu0
      %v6614 = vadd.f32 0.0, %v6613
      %v6615 = vpop.f32.mrb[0].mxu0
      %v6616 = vpop.f32.mrb[0].mxu0
      %v6617 = vadd.f32 0.0, %v6616
      %v6618 = vpop.f32.mrb[0].mxu0
      %6619 = vmatprep.mubr.bf16.mxu0 0
      %6620 = vmatmul.mubr.bf16.gmra.mrb[0].mxu0 %v6479
      %v6621 = vpop.f32.mrb[0].mxu0
      %v6622 = vadd.f32 0.0, %v6621
      %v6623 = vpop.f32.mrb[0].mxu0
      %v6624 = vpop.f32.mrb[0].mxu0
      %v6625 = vadd.f32 0.0, %v6624
      %v6626 = vpop.f32.mrb[0].mxu0
      %6627 = vmatprep.mubr.bf16.mxu0 0
      %6628 = vmatmul.mubr.bf16.gmra.mrb[0].mxu0 %v6480
      %v6629 = vpop.f32.mrb[0].mxu0
      %v6630 = vadd.f32 0.0, %v6629
      %v6631 = vpop.f32.mrb[0].mxu0
      %v6632 = vpop.f32.mrb[0].mxu0
      %v6633 = vadd.f32 0.0, %v6632
      %v6634 = vpop.f32.mrb[0].mxu0
      %6635 = vmatprep.mubr.bf16.mxu0 0
      %6636 = vmatmul.mubr.bf16.gmra.mrb[0].mxu0 %v6481
      %v6637 = vpop.f32.mrb[0].mxu0
      %v6638 = vadd.f32 0.0, %v6637
      %v6639 = vpop.f32.mrb[0].mxu0
      %v6640 = vpop.f32.mrb[0].mxu0
      %v6641 = vadd.f32 0.0, %v6640
      %v6642 = vpop.f32.mrb[0].mxu0
      %6643 = vdwg.mxu0
      %v6660 = vunpack.c.l.b16 %v6426
      %v6661 = vunpack.c.l.b16 %v6427
      %v6662 = vunpack.c.l.b16 %v6428
      %v6663 = vunpack.c.l.b16 %v6429
      %v6664 = vunpack.c.l.b16 %v6430
      %v6665 = vunpack.c.l.b16 %v6431
      %v6666 = vunpack.c.l.b16 %v6432
      %v6667 = vunpack.c.l.b16 %v6433
      %v6668 = vunpack.c.l.b16 %v6434
      %v6669 = vunpack.c.l.b16 %v6435
      %v6670 = vunpack.c.l.b16 %v6436
      %v6671 = vunpack.c.l.b16 %v6437
      %v6672 = vunpack.c.l.b16 %v6438
      %v6673 = vunpack.c.l.b16 %v6439
      %v6674 = vunpack.c.l.b16 %v6440
      %v6675 = vunpack.c.l.b16 %v6441
      %v6676 = vpack.c.b16 %v6661, %v6660
      %v6677 = vpack.c.b16 %v6663, %v6662
      %v6678 = vpack.c.b16 %v6665, %v6664
      %v6679 = vpack.c.b16 %v6667, %v6666
      %v6680 = vpack.c.b16 %v6669, %v6668
      %v6681 = vpack.c.b16 %v6671, %v6670
      %v6682 = vpack.c.b16 %v6673, %v6672
      %v6683 = vpack.c.b16 %v6675, %v6674
      %6692 = vmatprep.subr.bf16.mxu0 0
      %6693 = vmatpush1.bf16.msra.mxu0 %v6676
      %6694 = vmatprep.subr.bf16.mxu0 0
      %6695 = vmatpush1.bf16.msra.mxu0 %v6677
      %6696 = vmatprep.subr.bf16.mxu0 0
      %6697 = vmatpush1.bf16.msra.mxu0 %v6678
      %6698 = vmatprep.subr.bf16.mxu0 0
      %6699 = vmatpush1.bf16.msra.mxu0 %v6679
      %6700 = vmatprep.subr.bf16.mxu0 0
      %6701 = vmatpush1.bf16.msra.mxu0 %v6680
      %6702 = vmatprep.subr.bf16.mxu0 0
      %6703 = vmatpush1.bf16.msra.mxu0 %v6681
      %6704 = vmatprep.subr.bf16.mxu0 0
      %6705 = vmatpush1.bf16.msra.mxu0 %v6682
      %6706 = vmatprep.subr.bf16.mxu0 0
      %6707 = vmatpush1.bf16.msra.mxu0 %v6683
      %6708 = vmatprep.subr.bf16.mxu0 0
      %6709 = vmatpush1.bf16.msra.mxu0 0
      %6710 = vmatprep.subr.bf16.mxu0 0
      %6711 = vmatpush1.bf16.msra.mxu0 0
      %6712 = vmatprep.subr.bf16.mxu0 0
      %6713 = vmatpush1.bf16.msra.mxu0 0
      %6714 = vmatprep.subr.bf16.mxu0 0
      %6715 = vmatpush1.bf16.msra.mxu0 0
      %6716 = vmatprep.subr.bf16.mxu0 0
      %6717 = vmatpush1.bf16.msra.mxu0 0
      %6718 = vmatprep.subr.bf16.mxu0 0
      %6719 = vmatpush1.bf16.msra.mxu0 0
      %6720 = vmatprep.subr.bf16.mxu0 0
      %6721 = vmatpush1.bf16.msra.mxu0 0
      %6722 = vmatprep.subr.bf16.mxu0 0
      %6723 = vmatpush1.bf16.msra.mxu0 0
      %6724 = vmatprep.mubr.bf16.mxu0 0
      %6725 = vmatmul.mubr.bf16.gmra.mrb[0].mxu0 %v6418
      %v6726 = vpop.f32.mrb[0].mxu0
      %v6727 = vadd.f32 %v6582, %v6726
      %v6728 = vpop.f32.mrb[0].mxu0
      %v6729 = vpop.f32.mrb[0].mxu0
      %v6730 = vadd.f32 %v6585, %v6729
      %v6731 = vpop.f32.mrb[0].mxu0
      %6732 = vmatprep.mubr.bf16.mxu0 0
      %6733 = vmatmul.mubr.bf16.gmra.mrb[0].mxu0 %v6419
      %v6734 = vpop.f32.mrb[0].mxu0
      %v6735 = vadd.f32 %v6590, %v6734
      %v6736 = vpop.f32.mrb[0].mxu0
      %v6737 = vpop.f32.mrb[0].mxu0
      %v6738 = vadd.f32 %v6593, %v6737
      %v6739 = vpop.f32.mrb[0].mxu0
      %6740 = vmatprep.mubr.bf16.mxu0 0
      %6741 = vmatmul.mubr.bf16.gmra.mrb[0].mxu0 %v6420
      %v6742 = vpop.f32.mrb[0].mxu0
      %v6743 = vadd.f32 %v6598, %v6742
      %v6744 = vpop.f32.mrb[0].mxu0
      %v6745 = vpop.f32.mrb[0].mxu0
      %v6746 = vadd.f32 %v6601, %v6745
      %v6747 = vpop.f32.mrb[0].mxu0
      %6748 = vmatprep.mubr.bf16.mxu0 0
      %6749 = vmatmul.mubr.bf16.gmra.mrb[0].mxu0 %v6421
      %v6750 = vpop.f32.mrb[0].mxu0
      %v6751 = vadd.f32 %v6606, %v6750
      %v6752 = vpop.f32.mrb[0].mxu0
      %v6753 = vpop.f32.mrb[0].mxu0
      %v6754 = vadd.f32 %v6609, %v6753
      %v6755 = vpop.f32.mrb[0].mxu0
      %6756 = vmatprep.mubr.bf16.mxu0 0
      %6757 = vmatmul.mubr.bf16.gmra.mrb[0].mxu0 %v6422
      %v6758 = vpop.f32.mrb[0].mxu0
      %v6759 = vadd.f32 %v6614, %v6758
      %v6760 = vpop.f32.mrb[0].mxu0
      %v6761 = vpop.f32.mrb[0].mxu0
      %v6762 = vadd.f32 %v6617, %v6761
      %v6763 = vpop.f32.mrb[0].mxu0
      %6764 = vmatprep.mubr.bf16.mxu0 0
      %6765 = vmatmul.mubr.bf16.gmra.mrb[0].mxu0 %v6423
      %v6766 = vpop.f32.mrb[0].mxu0
      %v6767 = vadd.f32 %v6622, %v6766
      %v6768 = vpop.f32.mrb[0].mxu0
      %v6769 = vpop.f32.mrb[0].mxu0
      %v6770 = vadd.f32 %v6625, %v6769
      %v6771 = vpop.f32.mrb[0].mxu0
      %6772 = vmatprep.mubr.bf16.mxu0 0
      %6773 = vmatmul.mubr.bf16.gmra.mrb[0].mxu0 %v6424
      %v6774 = vpop.f32.mrb[0].mxu0
      %v6775 = vadd.f32 %v6630, %v6774
      %v6776 = vpop.f32.mrb[0].mxu0
      %v6777 = vpop.f32.mrb[0].mxu0
      %v6778 = vadd.f32 %v6633, %v6777
      %v6779 = vpop.f32.mrb[0].mxu0
      %6780 = vmatprep.mubr.bf16.mxu0 0
      %6781 = vmatmul.mubr.bf16.gmra.mrb[0].mxu0 %v6425
      %v6782 = vpop.f32.mrb[0].mxu0
      %v6783 = vadd.f32 %v6638, %v6782
      %v6784 = vpop.f32.mrb[0].mxu0
      %v6785 = vpop.f32.mrb[0].mxu0
      %v6786 = vadd.f32 %v6641, %v6785
      %v6787 = vpop.f32.mrb[0].mxu0
      %6788 = vdwg.mxu0
      %s6789 = scalar_lea.vmem [#allocation2], 9
      %v6790 = vld [vmem:[%s6789] ss:$2 sm:$0xff]
      %s6791 = scalar_lea.vmem [#allocation2], 57
      %v6792 = vld [vmem:[%s6791] ss:$2 sm:$0xff]
      %s6793 = scalar_lea.vmem [#allocation2], 105
      %v6794 = vld [vmem:[%s6793] ss:$2 sm:$0xff]
      %s6795 = scalar_lea.vmem [#allocation2], 153
      %v6796 = vld [vmem:[%s6795] ss:$2 sm:$0xff]
      %s6797 = scalar_lea.vmem [#allocation2], 201
      %v6798 = vld [vmem:[%s6797] ss:$2 sm:$0xff]
      %s6799 = scalar_lea.vmem [#allocation2], 249
      %v6800 = vld [vmem:[%s6799] ss:$2 sm:$0xff]
      %s6801 = scalar_lea.vmem [#allocation2], 297
      %v6802 = vld [vmem:[%s6801] ss:$2 sm:$0xff]
      %s6803 = scalar_lea.vmem [#allocation2], 345
      %v6804 = vld [vmem:[%s6803] ss:$2 sm:$0xff]
      %s6805 = scalar_lea.vmem [#allocation2], 441
      %v6806 = vld [vmem:[%s6805] ss:$2 sm:$0xff]
      %s6807 = scalar_lea.vmem [#allocation2], 489
      %v6808 = vld [vmem:[%s6807] ss:$2 sm:$0xff]
      %s6809 = scalar_lea.vmem [#allocation2], 537
      %v6810 = vld [vmem:[%s6809] ss:$2 sm:$0xff]
      %s6811 = scalar_lea.vmem [#allocation2], 585
      %v6812 = vld [vmem:[%s6811] ss:$2 sm:$0xff]
      %s6813 = scalar_lea.vmem [#allocation2], 633
      %v6814 = vld [vmem:[%s6813] ss:$2 sm:$0xff]
      %s6815 = scalar_lea.vmem [#allocation2], 681
      %v6816 = vld [vmem:[%s6815] ss:$2 sm:$0xff]
      %s6817 = scalar_lea.vmem [#allocation2], 729
      %v6818 = vld [vmem:[%s6817] ss:$2 sm:$0xff]
      %s6819 = scalar_lea.vmem [#allocation2], 777
      %v6820 = vld [vmem:[%s6819] ss:$2 sm:$0xff]
      %v6821 = vpack.c.bf16 %v6792, %v6790
      %v6822 = vpack.c.bf16 %v6796, %v6794
      %v6823 = vpack.c.bf16 %v6800, %v6798
      %v6824 = vpack.c.bf16 %v6804, %v6802
      %v6825 = vpack.c.bf16 %v6808, %v6806
      %v6826 = vpack.c.bf16 %v6812, %v6810
      %v6827 = vpack.c.bf16 %v6816, %v6814
      %v6828 = vpack.c.bf16 %v6820, %v6818
      %s6829 = scalar_lea.vmem %s4, 128
      %v6830 = vld [vmem:[%s6829] sm:$0xf]
      %v6831 = vld [vmem:[%s6829 + $0x4] sm:$0xf]
      %v6832 = vld [vmem:[%s6829 + $0x8] sm:$0xf]
      %v6833 = vld [vmem:[%s6829 + $0xc] sm:$0xf]
      %v6834 = vld [vmem:[%s6829 + $0x10] sm:$0xf]
      %v6835 = vld [vmem:[%s6829 + $0x14] sm:$0xf]
      %v6836 = vld [vmem:[%s6829 + $0x18] sm:$0xf]
      %v6837 = vld [vmem:[%s6829 + $0x1c] sm:$0xf]
      %v6838 = vld [vmem:[%s6829 + $0x20] sm:$0xf]
      %v6839 = vld [vmem:[%s6829 + $0x24] sm:$0xf]
      %v6840 = vld [vmem:[%s6829 + $0x28] sm:$0xf]
      %v6841 = vld [vmem:[%s6829 + $0x2c] sm:$0xf]
      %v6842 = vld [vmem:[%s6829 + $0x30] sm:$0xf]
      %v6843 = vld [vmem:[%s6829 + $0x34] sm:$0xf]
      %v6844 = vld [vmem:[%s6829 + $0x38] sm:$0xf]
      %v6845 = vld [vmem:[%s6829 + $0x3c] sm:$0xf]
      %v6862 = vunpack.c.l.b16 %v6830
      %v6863 = vunpack.c.l.b16 %v6831
      %v6864 = vunpack.c.l.b16 %v6832
      %v6865 = vunpack.c.l.b16 %v6833
      %v6866 = vunpack.c.l.b16 %v6834
      %v6867 = vunpack.c.l.b16 %v6835
      %v6868 = vunpack.c.l.b16 %v6836
      %v6869 = vunpack.c.l.b16 %v6837
      %v6870 = vunpack.c.l.b16 %v6838
      %v6871 = vunpack.c.l.b16 %v6839
      %v6872 = vunpack.c.l.b16 %v6840
      %v6873 = vunpack.c.l.b16 %v6841
      %v6874 = vunpack.c.l.b16 %v6842
      %v6875 = vunpack.c.l.b16 %v6843
      %v6876 = vunpack.c.l.b16 %v6844
      %v6877 = vunpack.c.l.b16 %v6845
      %v6878 = vpack.c.b16 %v6863, %v6862
      %v6879 = vpack.c.b16 %v6865, %v6864
      %v6880 = vpack.c.b16 %v6867, %v6866
      %v6881 = vpack.c.b16 %v6869, %v6868
      %v6882 = vpack.c.b16 %v6871, %v6870
      %v6883 = vpack.c.b16 %v6873, %v6872
      %v6884 = vpack.c.b16 %v6875, %v6874
      %v6885 = vpack.c.b16 %v6877, %v6876
      %6894 = vmatprep.subr.bf16.mxu0 0
      %6895 = vmatpush1.bf16.msra.mxu0 %v6878
      %6896 = vmatprep.subr.bf16.mxu0 0
      %6897 = vmatpush1.bf16.msra.mxu0 %v6879
      %6898 = vmatprep.subr.bf16.mxu0 0
      %6899 = vmatpush1.bf16.msra.mxu0 %v6880
      %6900 = vmatprep.subr.bf16.mxu0 0
      %6901 = vmatpush1.bf16.msra.mxu0 %v6881
      %6902 = vmatprep.subr.bf16.mxu0 0
      %6903 = vmatpush1.bf16.msra.mxu0 %v6882
      %6904 = vmatprep.subr.bf16.mxu0 0
      %6905 = vmatpush1.bf16.msra.mxu0 %v6883
      %6906 = vmatprep.subr.bf16.mxu0 0
      %6907 = vmatpush1.bf16.msra.mxu0 %v6884
      %6908 = vmatprep.subr.bf16.mxu0 0
      %6909 = vmatpush1.bf16.msra.mxu0 %v6885
      %6910 = vmatprep.subr.bf16.mxu0 0
      %6911 = vmatpush1.bf16.msra.mxu0 0
      %6912 = vmatprep.subr.bf16.mxu0 0
      %6913 = vmatpush1.bf16.msra.mxu0 0
      %6914 = vmatprep.subr.bf16.mxu0 0
      %6915 = vmatpush1.bf16.msra.mxu0 0
      %6916 = vmatprep.subr.bf16.mxu0 0
      %6917 = vmatpush1.bf16.msra.mxu0 0
      %6918 = vmatprep.subr.bf16.mxu0 0
      %6919 = vmatpush1.bf16.msra.mxu0 0
      %6920 = vmatprep.subr.bf16.mxu0 0
      %6921 = vmatpush1.bf16.msra.mxu0 0
      %6922 = vmatprep.subr.bf16.mxu0 0
      %6923 = vmatpush1.bf16.msra.mxu0 0
      %6924 = vmatprep.subr.bf16.mxu0 0
      %6925 = vmatpush1.bf16.msra.mxu0 0
      %6926 = vmatprep.mubr.bf16.mxu0 0
      %6927 = vmatmul.mubr.bf16.gmra.mrb[0].mxu0 %v6821
      %v6928 = vpop.f32.mrb[0].mxu0
      %v6929 = vadd.f32 0.0, %v6928
      %v6930 = vpop.f32.mrb[0].mxu0
      %v6931 = vpop.f32.mrb[0].mxu0
      %v6932 = vadd.f32 0.0, %v6931
      %v6933 = vpop.f32.mrb[0].mxu0
      %6934 = vmatprep.mubr.bf16.mxu0 0
      %6935 = vmatmul.mubr.bf16.gmra.mrb[0].mxu0 %v6822
      %v6936 = vpop.f32.mrb[0].mxu0
      %v6937 = vadd.f32 0.0, %v6936
      %v6938 = vpop.f32.mrb[0].mxu0
      %v6939 = vpop.f32.mrb[0].mxu0
      %v6940 = vadd.f32 0.0, %v6939
      %v6941 = vpop.f32.mrb[0].mxu0
      %6942 = vmatprep.mubr.bf16.mxu0 0
      %6943 = vmatmul.mubr.bf16.gmra.mrb[0].mxu0 %v6823
      %v6944 = vpop.f32.mrb[0].mxu0
      %v6945 = vadd.f32 0.0, %v6944
      %v6946 = vpop.f32.mrb[0].mxu0
      %v6947 = vpop.f32.mrb[0].mxu0
      %v6948 = vadd.f32 0.0, %v6947
      %v6949 = vpop.f32.mrb[0].mxu0
      %6950 = vmatprep.mubr.bf16.mxu0 0
      %6951 = vmatmul.mubr.bf16.gmra.mrb[0].mxu0 %v6824
      %v6952 = vpop.f32.mrb[0].mxu0
      %v6953 = vadd.f32 0.0, %v6952
      %v6954 = vpop.f32.mrb[0].mxu0
      %v6955 = vpop.f32.mrb[0].mxu0
      %v6956 = vadd.f32 0.0, %v6955
      %v6957 = vpop.f32.mrb[0].mxu0
      %6958 = vmatprep.mubr.bf16.mxu0 0
      %6959 = vmatmul.mubr.bf16.gmra.mrb[0].mxu0 %v6825
      %v6960 = vpop.f32.mrb[0].mxu0
      %v6961 = vadd.f32 0.0, %v6960
      %v6962 = vpop.f32.mrb[0].mxu0
      %v6963 = vpop.f32.mrb[0].mxu0
      %v6964 = vadd.f32 0.0, %v6963
      %v6965 = vpop.f32.mrb[0].mxu0
      %6966 = vmatprep.mubr.bf16.mxu0 0
      %6967 = vmatmul.mubr.bf16.gmra.mrb[0].mxu0 %v6826
      %v6968 = vpop.f32.mrb[0].mxu0
      %v6969 = vadd.f32 0.0, %v6968
      %v6970 = vpop.f32.mrb[0].mxu0
      %v6971 = vpop.f32.mrb[0].mxu0
      %v6972 = vadd.f32 0.0, %v6971
      %v6973 = vpop.f32.mrb[0].mxu0
      %6974 = vmatprep.mubr.bf16.mxu0 0
      %6975 = vmatmul.mubr.bf16.gmra.mrb[0].mxu0 %v6827
      %v6976 = vpop.f32.mrb[0].mxu0
      %v6977 = vadd.f32 0.0, %v6976
      %v6978 = vpop.f32.mrb[0].mxu0
      %v6979 = vpop.f32.mrb[0].mxu0
      %v6980 = vadd.f32 0.0, %v6979
      %v6981 = vpop.f32.mrb[0].mxu0
      %6982 = vmatprep.mubr.bf16.mxu0 0
      %6983 = vmatmul.mubr.bf16.gmra.mrb[0].mxu0 %v6828
      %v6984 = vpop.f32.mrb[0].mxu0
      %v6985 = vadd.f32 0.0, %v6984
      %v6986 = vpop.f32.mrb[0].mxu0
      %v6987 = vpop.f32.mrb[0].mxu0
      %v6988 = vadd.f32 0.0, %v6987
      %v6989 = vpop.f32.mrb[0].mxu0
      %6990 = vdwg.mxu0
      %v6991 = vadd.f32 %v6727, %v6929
      %v6992 = vadd.f32 %v6730, %v6932
      %v6993 = vadd.f32 %v6735, %v6937
      %v6994 = vadd.f32 %v6738, %v6940
      %v6995 = vadd.f32 %v6743, %v6945
      %v6996 = vadd.f32 %v6746, %v6948
      %v6997 = vadd.f32 %v6751, %v6953
      %v6998 = vadd.f32 %v6754, %v6956
      %v6999 = vadd.f32 %v6759, %v6961
      %v7000 = vadd.f32 %v6762, %v6964
      %v7001 = vadd.f32 %v6767, %v6969
      %v7002 = vadd.f32 %v6770, %v6972
      %v7003 = vadd.f32 %v6775, %v6977
      %v7004 = vadd.f32 %v6778, %v6980
      %v7005 = vadd.f32 %v6783, %v6985
      %v7006 = vadd.f32 %v6786, %v6988
      %s7007 = scalar_lea.vmem %s6321, 7 [#allocation2]
      %v7008 = vld [vmem:[%s7007] ss:$2 sm:$0xff]
      %s7009 = scalar_lea.vmem %s6321, 55 [#allocation2]
      %v7010 = vld [vmem:[%s7009] ss:$2 sm:$0xff]
      %s7011 = scalar_lea.vmem %s6321, 103 [#allocation2]
      %v7012 = vld [vmem:[%s7011] ss:$2 sm:$0xff]
      %s7013 = scalar_lea.vmem %s6321, 151 [#allocation2]
      %v7014 = vld [vmem:[%s7013] ss:$2 sm:$0xff]
      %s7015 = scalar_lea.vmem %s6321, 199 [#allocation2]
      %v7016 = vld [vmem:[%s7015] ss:$2 sm:$0xff]
      %s7017 = scalar_lea.vmem %s6321, 247 [#allocation2]
      %v7018 = vld [vmem:[%s7017] ss:$2 sm:$0xff]
      %s7019 = scalar_lea.vmem %s6321, 295 [#allocation2]
      %v7020 = vld [vmem:[%s7019] ss:$2 sm:$0xff]
      %s7021 = scalar_lea.vmem %s6321, 343 [#allocation2]
      %v7022 = vld [vmem:[%s7021] ss:$2 sm:$0xff]
      %s7023 = scalar_lea.vmem %s6321, 439 [#allocation2]
      %v7024 = vld [vmem:[%s7023] ss:$2 sm:$0xff]
      %s7025 = scalar_lea.vmem %s6321, 487 [#allocation2]
      %v7026 = vld [vmem:[%s7025] ss:$2 sm:$0xff]
      %s7027 = scalar_lea.vmem %s6321, 535 [#allocation2]
      %v7028 = vld [vmem:[%s7027] ss:$2 sm:$0xff]
      %s7029 = scalar_lea.vmem %s6321, 583 [#allocation2]
      %v7030 = vld [vmem:[%s7029] ss:$2 sm:$0xff]
      %s7031 = scalar_lea.vmem %s6321, 631 [#allocation2]
      %v7032 = vld [vmem:[%s7031] ss:$2 sm:$0xff]
      %s7033 = scalar_lea.vmem %s6321, 679 [#allocation2]
      %v7034 = vld [vmem:[%s7033] ss:$2 sm:$0xff]
      %s7035 = scalar_lea.vmem %s6321, 727 [#allocation2]
      %v7036 = vld [vmem:[%s7035] ss:$2 sm:$0xff]
      %s7037 = scalar_lea.vmem %s6321, 775 [#allocation2]
      %v7038 = vld [vmem:[%s7037] ss:$2 sm:$0xff]
      %v7039 = vpack.c.bf16 %v7010, %v7008
      %v7040 = vpack.c.bf16 %v7014, %v7012
      %v7041 = vpack.c.bf16 %v7018, %v7016
      %v7042 = vpack.c.bf16 %v7022, %v7020
      %v7043 = vpack.c.bf16 %v7026, %v7024
      %v7044 = vpack.c.bf16 %v7030, %v7028
      %v7045 = vpack.c.bf16 %v7034, %v7032
      %v7046 = vpack.c.bf16 %v7038, %v7036
      %s7047 = scalar_lea.vmem %s4, 192
      %v7048 = vld [vmem:[%s7047] sm:$0xf]
      %v7049 = vld [vmem:[%s7047 + $0x4] sm:$0xf]
      %v7050 = vld [vmem:[%s7047 + $0x8] sm:$0xf]
      %v7051 = vld [vmem:[%s7047 + $0xc] sm:$0xf]
      %v7052 = vld [vmem:[%s7047 + $0x10] sm:$0xf]
      %v7053 = vld [vmem:[%s7047 + $0x14] sm:$0xf]
      %v7054 = vld [vmem:[%s7047 + $0x18] sm:$0xf]
      %v7055 = vld [vmem:[%s7047 + $0x1c] sm:$0xf]
      %v7056 = vld [vmem:[%s7047 + $0x20] sm:$0xf]
      %v7057 = vld [vmem:[%s7047 + $0x24] sm:$0xf]
      %v7058 = vld [vmem:[%s7047 + $0x28] sm:$0xf]
      %v7059 = vld [vmem:[%s7047 + $0x2c] sm:$0xf]
      %v7060 = vld [vmem:[%s7047 + $0x30] sm:$0xf]
      %v7061 = vld [vmem:[%s7047 + $0x34] sm:$0xf]
      %v7062 = vld [vmem:[%s7047 + $0x38] sm:$0xf]
      %v7063 = vld [vmem:[%s7047 + $0x3c] sm:$0xf]
      %v7080 = vunpack.c.l.b16 %v7048
      %v7081 = vunpack.c.l.b16 %v7049
      %v7082 = vunpack.c.l.b16 %v7050
      %v7083 = vunpack.c.l.b16 %v7051
      %v7084 = vunpack.c.l.b16 %v7052
      %v7085 = vunpack.c.l.b16 %v7053
      %v7086 = vunpack.c.l.b16 %v7054
      %v7087 = vunpack.c.l.b16 %v7055
      %v7088 = vunpack.c.l.b16 %v7056
      %v7089 = vunpack.c.l.b16 %v7057
      %v7090 = vunpack.c.l.b16 %v7058
      %v7091 = vunpack.c.l.b16 %v7059
      %v7092 = vunpack.c.l.b16 %v7060
      %v7093 = vunpack.c.l.b16 %v7061
      %v7094 = vunpack.c.l.b16 %v7062
      %v7095 = vunpack.c.l.b16 %v7063
      %v7096 = vpack.c.b16 %v7081, %v7080
      %v7097 = vpack.c.b16 %v7083, %v7082
      %v7098 = vpack.c.b16 %v7085, %v7084
      %v7099 = vpack.c.b16 %v7087, %v7086
      %v7100 = vpack.c.b16 %v7089, %v7088
      %v7101 = vpack.c.b16 %v7091, %v7090
      %v7102 = vpack.c.b16 %v7093, %v7092
      %v7103 = vpack.c.b16 %v7095, %v7094
      %7112 = vmatprep.subr.bf16.mxu0 0
      %7113 = vmatpush1.bf16.msra.mxu0 %v7096
      %7114 = vmatprep.subr.bf16.mxu0 0
      %7115 = vmatpush1.bf16.msra.mxu0 %v7097
      %7116 = vmatprep.subr.bf16.mxu0 0
      %7117 = vmatpush1.bf16.msra.mxu0 %v7098
      %7118 = vmatprep.subr.bf16.mxu0 0
      %7119 = vmatpush1.bf16.msra.mxu0 %v7099
      %7120 = vmatprep.subr.bf16.mxu0 0
      %7121 = vmatpush1.bf16.msra.mxu0 %v7100
      %7122 = vmatprep.subr.bf16.mxu0 0
      %7123 = vmatpush1.bf16.msra.mxu0 %v7101
      %7124 = vmatprep.subr.bf16.mxu0 0
      %7125 = vmatpush1.bf16.msra.mxu0 %v7102
      %7126 = vmatprep.subr.bf16.mxu0 0
      %7127 = vmatpush1.bf16.msra.mxu0 %v7103
      %7128 = vmatprep.subr.bf16.mxu0 0
      %7129 = vmatpush1.bf16.msra.mxu0 0
      %7130 = vmatprep.subr.bf16.mxu0 0
      %7131 = vmatpush1.bf16.msra.mxu0 0
      %7132 = vmatprep.subr.bf16.mxu0 0
      %7133 = vmatpush1.bf16.msra.mxu0 0
      %7134 = vmatprep.subr.bf16.mxu0 0
      %7135 = vmatpush1.bf16.msra.mxu0 0
      %7136 = vmatprep.subr.bf16.mxu0 0
      %7137 = vmatpush1.bf16.msra.mxu0 0
      %7138 = vmatprep.subr.bf16.mxu0 0
      %7139 = vmatpush1.bf16.msra.mxu0 0
      %7140 = vmatprep.subr.bf16.mxu0 0
      %7141 = vmatpush1.bf16.msra.mxu0 0
      %7142 = vmatprep.subr.bf16.mxu0 0
      %7143 = vmatpush1.bf16.msra.mxu0 0
      %7144 = vmatprep.mubr.bf16.mxu0 0
      %7145 = vmatmul.mubr.bf16.gmra.mrb[0].mxu0 %v7039
      %v7146 = vpop.f32.mrb[0].mxu0
      %v7147 = vadd.f32 0.0, %v7146
      %v7148 = vpop.f32.mrb[0].mxu0
      %v7149 = vpop.f32.mrb[0].mxu0
      %v7150 = vadd.f32 0.0, %v7149
      %v7151 = vpop.f32.mrb[0].mxu0
      %7152 = vmatprep.mubr.bf16.mxu0 0
      %7153 = vmatmul.mubr.bf16.gmra.mrb[0].mxu0 %v7040
      %v7154 = vpop.f32.mrb[0].mxu0
      %v7155 = vadd.f32 0.0, %v7154
      %v7156 = vpop.f32.mrb[0].mxu0
      %v7157 = vpop.f32.mrb[0].mxu0
      %v7158 = vadd.f32 0.0, %v7157
      %v7159 = vpop.f32.mrb[0].mxu0
      %7160 = vmatprep.mubr.bf16.mxu0 0
      %7161 = vmatmul.mubr.bf16.gmra.mrb[0].mxu0 %v7041
      %v7162 = vpop.f32.mrb[0].mxu0
      %v7163 = vadd.f32 0.0, %v7162
      %v7164 = vpop.f32.mrb[0].mxu0
      %v7165 = vpop.f32.mrb[0].mxu0
      %v7166 = vadd.f32 0.0, %v7165
      %v7167 = vpop.f32.mrb[0].mxu0
      %7168 = vmatprep.mubr.bf16.mxu0 0
      %7169 = vmatmul.mubr.bf16.gmra.mrb[0].mxu0 %v7042
      %v7170 = vpop.f32.mrb[0].mxu0
      %v7171 = vadd.f32 0.0, %v7170
      %v7172 = vpop.f32.mrb[0].mxu0
      %v7173 = vpop.f32.mrb[0].mxu0
      %v7174 = vadd.f32 0.0, %v7173
      %v7175 = vpop.f32.mrb[0].mxu0
      %7176 = vmatprep.mubr.bf16.mxu0 0
      %7177 = vmatmul.mubr.bf16.gmra.mrb[0].mxu0 %v7043
      %v7178 = vpop.f32.mrb[0].mxu0
      %v7179 = vadd.f32 0.0, %v7178
      %v7180 = vpop.f32.mrb[0].mxu0
      %v7181 = vpop.f32.mrb[0].mxu0
      %v7182 = vadd.f32 0.0, %v7181
      %v7183 = vpop.f32.mrb[0].mxu0
      %7184 = vmatprep.mubr.bf16.mxu0 0
      %7185 = vmatmul.mubr.bf16.gmra.mrb[0].mxu0 %v7044
      %v7186 = vpop.f32.mrb[0].mxu0
      %v7187 = vadd.f32 0.0, %v7186
      %v7188 = vpop.f32.mrb[0].mxu0
      %v7189 = vpop.f32.mrb[0].mxu0
      %v7190 = vadd.f32 0.0, %v7189
      %v7191 = vpop.f32.mrb[0].mxu0
      %7192 = vmatprep.mubr.bf16.mxu0 0
      %7193 = vmatmul.mubr.bf16.gmra.mrb[0].mxu0 %v7045
      %v7194 = vpop.f32.mrb[0].mxu0
      %v7195 = vadd.f32 0.0, %v7194
      %v7196 = vpop.f32.mrb[0].mxu0
      %v7197 = vpop.f32.mrb[0].mxu0
      %v7198 = vadd.f32 0.0, %v7197
      %v7199 = vpop.f32.mrb[0].mxu0
      %7200 = vmatprep.mubr.bf16.mxu0 0
      %7201 = vmatmul.mubr.bf16.gmra.mrb[0].mxu0 %v7046
      %v7202 = vpop.f32.mrb[0].mxu0
      %v7203 = vadd.f32 0.0, %v7202
      %v7204 = vpop.f32.mrb[0].mxu0
      %v7205 = vpop.f32.mrb[0].mxu0
      %v7206 = vadd.f32 0.0, %v7205
      %v7207 = vpop.f32.mrb[0].mxu0
      %7208 = vdwg.mxu0
      %v7209 = vadd.f32 %v6991, %v7147
      %v7210 = vadd.f32 %v6992, %v7150
      %v7211 = vadd.f32 %v6993, %v7155
      %v7212 = vadd.f32 %v6994, %v7158
      %v7213 = vadd.f32 %v6995, %v7163
      %v7214 = vadd.f32 %v6996, %v7166
      %v7215 = vadd.f32 %v6997, %v7171
      %v7216 = vadd.f32 %v6998, %v7174
      %v7217 = vadd.f32 %v6999, %v7179
      %v7218 = vadd.f32 %v7000, %v7182
      %v7219 = vadd.f32 %v7001, %v7187
      %v7220 = vadd.f32 %v7002, %v7190
      %v7221 = vadd.f32 %v7003, %v7195
      %v7222 = vadd.f32 %v7004, %v7198
      %v7223 = vadd.f32 %v7005, %v7203
      %v7224 = vadd.f32 %v7006, %v7206
      %s7225 = scalar_lea.vmem %s6321, 8 [#allocation2]
      %v7226 = vld [vmem:[%s7225] ss:$2 sm:$0xff]
      %s7227 = scalar_lea.vmem %s6321, 56 [#allocation2]
      %v7228 = vld [vmem:[%s7227] ss:$2 sm:$0xff]
      %s7229 = scalar_lea.vmem %s6321, 104 [#allocation2]
      %v7230 = vld [vmem:[%s7229] ss:$2 sm:$0xff]
      %s7231 = scalar_lea.vmem %s6321, 152 [#allocation2]
      %v7232 = vld [vmem:[%s7231] ss:$2 sm:$0xff]
      %s7233 = scalar_lea.vmem %s6321, 200 [#allocation2]
      %v7234 = vld [vmem:[%s7233] ss:$2 sm:$0xff]
      %s7235 = scalar_lea.vmem %s6321, 248 [#allocation2]
      %v7236 = vld [vmem:[%s7235] ss:$2 sm:$0xff]
      %s7237 = scalar_lea.vmem %s6321, 296 [#allocation2]
      %v7238 = vld [vmem:[%s7237] ss:$2 sm:$0xff]
      %s7239 = scalar_lea.vmem %s6321, 344 [#allocation2]
      %v7240 = vld [vmem:[%s7239] ss:$2 sm:$0xff]
      %s7241 = scalar_lea.vmem %s6321, 440 [#allocation2]
      %v7242 = vld [vmem:[%s7241] ss:$2 sm:$0xff]
      %s7243 = scalar_lea.vmem %s6321, 488 [#allocation2]
      %v7244 = vld [vmem:[%s7243] ss:$2 sm:$0xff]
      %s7245 = scalar_lea.vmem %s6321, 536 [#allocation2]
      %v7246 = vld [vmem:[%s7245] ss:$2 sm:$0xff]
      %s7247 = scalar_lea.vmem %s6321, 584 [#allocation2]
      %v7248 = vld [vmem:[%s7247] ss:$2 sm:$0xff]
      %s7249 = scalar_lea.vmem %s6321, 632 [#allocation2]
      %v7250 = vld [vmem:[%s7249] ss:$2 sm:$0xff]
      %s7251 = scalar_lea.vmem %s6321, 680 [#allocation2]
      %v7252 = vld [vmem:[%s7251] ss:$2 sm:$0xff]
      %s7253 = scalar_lea.vmem %s6321, 728 [#allocation2]
      %v7254 = vld [vmem:[%s7253] ss:$2 sm:$0xff]
      %s7255 = scalar_lea.vmem %s6321, 776 [#allocation2]
      %v7256 = vld [vmem:[%s7255] ss:$2 sm:$0xff]
      %v7257 = vpack.c.bf16 %v7228, %v7226
      %v7258 = vpack.c.bf16 %v7232, %v7230
      %v7259 = vpack.c.bf16 %v7236, %v7234
      %v7260 = vpack.c.bf16 %v7240, %v7238
      %v7261 = vpack.c.bf16 %v7244, %v7242
      %v7262 = vpack.c.bf16 %v7248, %v7246
      %v7263 = vpack.c.bf16 %v7252, %v7250
      %v7264 = vpack.c.bf16 %v7256, %v7254
      %s7265 = scalar_lea.vmem %s4, 256
      %v7266 = vld [vmem:[%s7265] sm:$0xf]
      %v7267 = vld [vmem:[%s7265 + $0x4] sm:$0xf]
      %v7268 = vld [vmem:[%s7265 + $0x8] sm:$0xf]
      %v7269 = vld [vmem:[%s7265 + $0xc] sm:$0xf]
      %v7270 = vld [vmem:[%s7265 + $0x10] sm:$0xf]
      %v7271 = vld [vmem:[%s7265 + $0x14] sm:$0xf]
      %v7272 = vld [vmem:[%s7265 + $0x18] sm:$0xf]
      %v7273 = vld [vmem:[%s7265 + $0x1c] sm:$0xf]
      %v7274 = vld [vmem:[%s7265 + $0x20] sm:$0xf]
      %v7275 = vld [vmem:[%s7265 + $0x24] sm:$0xf]
      %v7276 = vld [vmem:[%s7265 + $0x28] sm:$0xf]
      %v7277 = vld [vmem:[%s7265 + $0x2c] sm:$0xf]
      %v7278 = vld [vmem:[%s7265 + $0x30] sm:$0xf]
      %v7279 = vld [vmem:[%s7265 + $0x34] sm:$0xf]
      %v7280 = vld [vmem:[%s7265 + $0x38] sm:$0xf]
      %v7281 = vld [vmem:[%s7265 + $0x3c] sm:$0xf]
      %v7298 = vunpack.c.l.b16 %v7266
      %v7299 = vunpack.c.l.b16 %v7267
      %v7300 = vunpack.c.l.b16 %v7268
      %v7301 = vunpack.c.l.b16 %v7269
      %v7302 = vunpack.c.l.b16 %v7270
      %v7303 = vunpack.c.l.b16 %v7271
      %v7304 = vunpack.c.l.b16 %v7272
      %v7305 = vunpack.c.l.b16 %v7273
      %v7306 = vunpack.c.l.b16 %v7274
      %v7307 = vunpack.c.l.b16 %v7275
      %v7308 = vunpack.c.l.b16 %v7276
      %v7309 = vunpack.c.l.b16 %v7277
      %v7310 = vunpack.c.l.b16 %v7278
      %v7311 = vunpack.c.l.b16 %v7279
      %v7312 = vunpack.c.l.b16 %v7280
      %v7313 = vunpack.c.l.b16 %v7281
      %v7314 = vpack.c.b16 %v7299, %v7298
      %v7315 = vpack.c.b16 %v7301, %v7300
      %v7316 = vpack.c.b16 %v7303, %v7302
      %v7317 = vpack.c.b16 %v7305, %v7304
      %v7318 = vpack.c.b16 %v7307, %v7306
      %v7319 = vpack.c.b16 %v7309, %v7308
      %v7320 = vpack.c.b16 %v7311, %v7310
      %v7321 = vpack.c.b16 %v7313, %v7312
      %7330 = vmatprep.subr.bf16.mxu0 0
      %7331 = vmatpush1.bf16.msra.mxu0 %v7314
      %7332 = vmatprep.subr.bf16.mxu0 0
      %7333 = vmatpush1.bf16.msra.mxu0 %v7315
      %7334 = vmatprep.subr.bf16.mxu0 0
      %7335 = vmatpush1.bf16.msra.mxu0 %v7316
      %7336 = vmatprep.subr.bf16.mxu0 0
      %7337 = vmatpush1.bf16.msra.mxu0 %v7317
      %7338 = vmatprep.subr.bf16.mxu0 0
      %7339 = vmatpush1.bf16.msra.mxu0 %v7318
      %7340 = vmatprep.subr.bf16.mxu0 0
      %7341 = vmatpush1.bf16.msra.mxu0 %v7319
      %7342 = vmatprep.subr.bf16.mxu0 0
      %7343 = vmatpush1.bf16.msra.mxu0 %v7320
      %7344 = vmatprep.subr.bf16.mxu0 0
      %7345 = vmatpush1.bf16.msra.mxu0 %v7321
      %7346 = vmatprep.subr.bf16.mxu0 0
      %7347 = vmatpush1.bf16.msra.mxu0 0
      %7348 = vmatprep.subr.bf16.mxu0 0
      %7349 = vmatpush1.bf16.msra.mxu0 0
      %7350 = vmatprep.subr.bf16.mxu0 0
      %7351 = vmatpush1.bf16.msra.mxu0 0
      %7352 = vmatprep.subr.bf16.mxu0 0
      %7353 = vmatpush1.bf16.msra.mxu0 0
      %7354 = vmatprep.subr.bf16.mxu0 0
      %7355 = vmatpush1.bf16.msra.mxu0 0
      %7356 = vmatprep.subr.bf16.mxu0 0
      %7357 = vmatpush1.bf16.msra.mxu0 0
      %7358 = vmatprep.subr.bf16.mxu0 0
      %7359 = vmatpush1.bf16.msra.mxu0 0
      %7360 = vmatprep.subr.bf16.mxu0 0
      %7361 = vmatpush1.bf16.msra.mxu0 0
      %7362 = vmatprep.mubr.bf16.mxu0 0
      %7363 = vmatmul.mubr.bf16.gmra.mrb[0].mxu0 %v7257
      %v7364 = vpop.f32.mrb[0].mxu0
      %v7365 = vadd.f32 0.0, %v7364
      %v7366 = vpop.f32.mrb[0].mxu0
      %v7367 = vpop.f32.mrb[0].mxu0
      %v7368 = vadd.f32 0.0, %v7367
      %v7369 = vpop.f32.mrb[0].mxu0
      %7370 = vmatprep.mubr.bf16.mxu0 0
      %7371 = vmatmul.mubr.bf16.gmra.mrb[0].mxu0 %v7258
      %v7372 = vpop.f32.mrb[0].mxu0
      %v7373 = vadd.f32 0.0, %v7372
      %v7374 = vpop.f32.mrb[0].mxu0
      %v7375 = vpop.f32.mrb[0].mxu0
      %v7376 = vadd.f32 0.0, %v7375
      %v7377 = vpop.f32.mrb[0].mxu0
      %7378 = vmatprep.mubr.bf16.mxu0 0
      %7379 = vmatmul.mubr.bf16.gmra.mrb[0].mxu0 %v7259
      %v7380 = vpop.f32.mrb[0].mxu0
      %v7381 = vadd.f32 0.0, %v7380
      %v7382 = vpop.f32.mrb[0].mxu0
      %v7383 = vpop.f32.mrb[0].mxu0
      %v7384 = vadd.f32 0.0, %v7383
      %v7385 = vpop.f32.mrb[0].mxu0
      %7386 = vmatprep.mubr.bf16.mxu0 0
      %7387 = vmatmul.mubr.bf16.gmra.mrb[0].mxu0 %v7260
      %v7388 = vpop.f32.mrb[0].mxu0
      %v7389 = vadd.f32 0.0, %v7388
      %v7390 = vpop.f32.mrb[0].mxu0
      %v7391 = vpop.f32.mrb[0].mxu0
      %v7392 = vadd.f32 0.0, %v7391
      %v7393 = vpop.f32.mrb[0].mxu0
      %7394 = vmatprep.mubr.bf16.mxu0 0
      %7395 = vmatmul.mubr.bf16.gmra.mrb[0].mxu0 %v7261
      %v7396 = vpop.f32.mrb[0].mxu0
      %v7397 = vadd.f32 0.0, %v7396
      %v7398 = vpop.f32.mrb[0].mxu0
      %v7399 = vpop.f32.mrb[0].mxu0
      %v7400 = vadd.f32 0.0, %v7399
      %v7401 = vpop.f32.mrb[0].mxu0
      %7402 = vmatprep.mubr.bf16.mxu0 0
      %7403 = vmatmul.mubr.bf16.gmra.mrb[0].mxu0 %v7262
      %v7404 = vpop.f32.mrb[0].mxu0
      %v7405 = vadd.f32 0.0, %v7404
      %v7406 = vpop.f32.mrb[0].mxu0
      %v7407 = vpop.f32.mrb[0].mxu0
      %v7408 = vadd.f32 0.0, %v7407
      %v7409 = vpop.f32.mrb[0].mxu0
      %7410 = vmatprep.mubr.bf16.mxu0 0
      %7411 = vmatmul.mubr.bf16.gmra.mrb[0].mxu0 %v7263
      %v7412 = vpop.f32.mrb[0].mxu0
      %v7413 = vadd.f32 0.0, %v7412
      %v7414 = vpop.f32.mrb[0].mxu0
      %v7415 = vpop.f32.mrb[0].mxu0
      %v7416 = vadd.f32 0.0, %v7415
      %v7417 = vpop.f32.mrb[0].mxu0
      %7418 = vmatprep.mubr.bf16.mxu0 0
      %7419 = vmatmul.mubr.bf16.gmra.mrb[0].mxu0 %v7264
      %v7420 = vpop.f32.mrb[0].mxu0
      %v7421 = vadd.f32 0.0, %v7420
      %v7422 = vpop.f32.mrb[0].mxu0
      %v7423 = vpop.f32.mrb[0].mxu0
      %v7424 = vadd.f32 0.0, %v7423
      %v7425 = vpop.f32.mrb[0].mxu0
      %7426 = vdwg.mxu0
      %v7427 = vadd.f32 %v7209, %v7365
      %v7428 = vadd.f32 %v7210, %v7368
      %v7429 = vadd.f32 %v7211, %v7373
      %v7430 = vadd.f32 %v7212, %v7376
      %v7431 = vadd.f32 %v7213, %v7381
      %v7432 = vadd.f32 %v7214, %v7384
      %v7433 = vadd.f32 %v7215, %v7389
      %v7434 = vadd.f32 %v7216, %v7392
      %v7435 = vadd.f32 %v7217, %v7397
      %v7436 = vadd.f32 %v7218, %v7400
      %v7437 = vadd.f32 %v7219, %v7405
      %v7438 = vadd.f32 %v7220, %v7408
      %v7439 = vadd.f32 %v7221, %v7413
      %v7440 = vadd.f32 %v7222, %v7416
      %v7441 = vadd.f32 %v7223, %v7421
      %v7442 = vadd.f32 %v7224, %v7424
      %s7443 = scalar_lea.vmem %s6321, 9 [#allocation2]
      %v7444 = vld [vmem:[%s7443] ss:$2 sm:$0xff]
      %s7445 = scalar_lea.vmem %s6321, 57 [#allocation2]
      %v7446 = vld [vmem:[%s7445] ss:$2 sm:$0xff]
      %s7447 = scalar_lea.vmem %s6321, 105 [#allocation2]
      %v7448 = vld [vmem:[%s7447] ss:$2 sm:$0xff]
      %s7449 = scalar_lea.vmem %s6321, 153 [#allocation2]
      %v7450 = vld [vmem:[%s7449] ss:$2 sm:$0xff]
      %s7451 = scalar_lea.vmem %s6321, 201 [#allocation2]
      %v7452 = vld [vmem:[%s7451] ss:$2 sm:$0xff]
      %s7453 = scalar_lea.vmem %s6321, 249 [#allocation2]
      %v7454 = vld [vmem:[%s7453] ss:$2 sm:$0xff]
      %s7455 = scalar_lea.vmem %s6321, 297 [#allocation2]
      %v7456 = vld [vmem:[%s7455] ss:$2 sm:$0xff]
      %s7457 = scalar_lea.vmem %s6321, 345 [#allocation2]
      %v7458 = vld [vmem:[%s7457] ss:$2 sm:$0xff]
      %s7459 = scalar_lea.vmem %s6321, 441 [#allocation2]
      %v7460 = vld [vmem:[%s7459] ss:$2 sm:$0xff]
      %s7461 = scalar_lea.vmem %s6321, 489 [#allocation2]
      %v7462 = vld [vmem:[%s7461] ss:$2 sm:$0xff]
      %s7463 = scalar_lea.vmem %s6321, 537 [#allocation2]
      %v7464 = vld [vmem:[%s7463] ss:$2 sm:$0xff]
      %s7465 = scalar_lea.vmem %s6321, 585 [#allocation2]
      %v7466 = vld [vmem:[%s7465] ss:$2 sm:$0xff]
      %s7467 = scalar_lea.vmem %s6321, 633 [#allocation2]
      %v7468 = vld [vmem:[%s7467] ss:$2 sm:$0xff]
      %s7469 = scalar_lea.vmem %s6321, 681 [#allocation2]
      %v7470 = vld [vmem:[%s7469] ss:$2 sm:$0xff]
      %s7471 = scalar_lea.vmem %s6321, 729 [#allocation2]
      %v7472 = vld [vmem:[%s7471] ss:$2 sm:$0xff]
      %s7473 = scalar_lea.vmem %s6321, 777 [#allocation2]
      %v7474 = vld [vmem:[%s7473] ss:$2 sm:$0xff]
      %v7475 = vpack.c.bf16 %v7446, %v7444
      %v7476 = vpack.c.bf16 %v7450, %v7448
      %v7477 = vpack.c.bf16 %v7454, %v7452
      %v7478 = vpack.c.bf16 %v7458, %v7456
      %v7479 = vpack.c.bf16 %v7462, %v7460
      %v7480 = vpack.c.bf16 %v7466, %v7464
      %v7481 = vpack.c.bf16 %v7470, %v7468
      %v7482 = vpack.c.bf16 %v7474, %v7472
      %s7483 = scalar_lea.vmem %s4, 320
      %v7484 = vld [vmem:[%s7483] sm:$0xf]
      %v7485 = vld [vmem:[%s7483 + $0x4] sm:$0xf]
      %v7486 = vld [vmem:[%s7483 + $0x8] sm:$0xf]
      %v7487 = vld [vmem:[%s7483 + $0xc] sm:$0xf]
      %v7488 = vld [vmem:[%s7483 + $0x10] sm:$0xf]
      %v7489 = vld [vmem:[%s7483 + $0x14] sm:$0xf]
      %v7490 = vld [vmem:[%s7483 + $0x18] sm:$0xf]
      %v7491 = vld [vmem:[%s7483 + $0x1c] sm:$0xf]
      %v7492 = vld [vmem:[%s7483 + $0x20] sm:$0xf]
      %v7493 = vld [vmem:[%s7483 + $0x24] sm:$0xf]
      %v7494 = vld [vmem:[%s7483 + $0x28] sm:$0xf]
      %v7495 = vld [vmem:[%s7483 + $0x2c] sm:$0xf]
      %v7496 = vld [vmem:[%s7483 + $0x30] sm:$0xf]
      %v7497 = vld [vmem:[%s7483 + $0x34] sm:$0xf]
      %v7498 = vld [vmem:[%s7483 + $0x38] sm:$0xf]
      %v7499 = vld [vmem:[%s7483 + $0x3c] sm:$0xf]
      %v7516 = vunpack.c.l.b16 %v7484
      %v7517 = vunpack.c.l.b16 %v7485
      %v7518 = vunpack.c.l.b16 %v7486
      %v7519 = vunpack.c.l.b16 %v7487
      %v7520 = vunpack.c.l.b16 %v7488
      %v7521 = vunpack.c.l.b16 %v7489
      %v7522 = vunpack.c.l.b16 %v7490
      %v7523 = vunpack.c.l.b16 %v7491
      %v7524 = vunpack.c.l.b16 %v7492
      %v7525 = vunpack.c.l.b16 %v7493
      %v7526 = vunpack.c.l.b16 %v7494
      %v7527 = vunpack.c.l.b16 %v7495
      %v7528 = vunpack.c.l.b16 %v7496
      %v7529 = vunpack.c.l.b16 %v7497
      %v7530 = vunpack.c.l.b16 %v7498
      %v7531 = vunpack.c.l.b16 %v7499
      %v7532 = vpack.c.b16 %v7517, %v7516
      %v7533 = vpack.c.b16 %v7519, %v7518
      %v7534 = vpack.c.b16 %v7521, %v7520
      %v7535 = vpack.c.b16 %v7523, %v7522
      %v7536 = vpack.c.b16 %v7525, %v7524
      %v7537 = vpack.c.b16 %v7527, %v7526
      %v7538 = vpack.c.b16 %v7529, %v7528
      %v7539 = vpack.c.b16 %v7531, %v7530
      %7548 = vmatprep.subr.bf16.mxu0 0
      %7549 = vmatpush1.bf16.msra.mxu0 %v7532
      %7550 = vmatprep.subr.bf16.mxu0 0
      %7551 = vmatpush1.bf16.msra.mxu0 %v7533
      %7552 = vmatprep.subr.bf16.mxu0 0
      %7553 = vmatpush1.bf16.msra.mxu0 %v7534
      %7554 = vmatprep.subr.bf16.mxu0 0
      %7555 = vmatpush1.bf16.msra.mxu0 %v7535
      %7556 = vmatprep.subr.bf16.mxu0 0
      %7557 = vmatpush1.bf16.msra.mxu0 %v7536
      %7558 = vmatprep.subr.bf16.mxu0 0
      %7559 = vmatpush1.bf16.msra.mxu0 %v7537
      %7560 = vmatprep.subr.bf16.mxu0 0
      %7561 = vmatpush1.bf16.msra.mxu0 %v7538
      %7562 = vmatprep.subr.bf16.mxu0 0
      %7563 = vmatpush1.bf16.msra.mxu0 %v7539
      %7564 = vmatprep.subr.bf16.mxu0 0
      %7565 = vmatpush1.bf16.msra.mxu0 0
      %7566 = vmatprep.subr.bf16.mxu0 0
      %7567 = vmatpush1.bf16.msra.mxu0 0
      %7568 = vmatprep.subr.bf16.mxu0 0
      %7569 = vmatpush1.bf16.msra.mxu0 0
      %7570 = vmatprep.subr.bf16.mxu0 0
      %7571 = vmatpush1.bf16.msra.mxu0 0
      %7572 = vmatprep.subr.bf16.mxu0 0
      %7573 = vmatpush1.bf16.msra.mxu0 0
      %7574 = vmatprep.subr.bf16.mxu0 0
      %7575 = vmatpush1.bf16.msra.mxu0 0
      %7576 = vmatprep.subr.bf16.mxu0 0
      %7577 = vmatpush1.bf16.msra.mxu0 0
      %7578 = vmatprep.subr.bf16.mxu0 0
      %7579 = vmatpush1.bf16.msra.mxu0 0
      %7580 = vmatprep.mubr.bf16.mxu0 0
      %7581 = vmatmul.mubr.bf16.gmra.mrb[0].mxu0 %v7475
      %v7582 = vpop.f32.mrb[0].mxu0
      %v7583 = vadd.f32 0.0, %v7582
      %v7584 = vpop.f32.mrb[0].mxu0
      %v7585 = vpop.f32.mrb[0].mxu0
      %v7586 = vadd.f32 0.0, %v7585
      %v7587 = vpop.f32.mrb[0].mxu0
      %7588 = vmatprep.mubr.bf16.mxu0 0
      %7589 = vmatmul.mubr.bf16.gmra.mrb[0].mxu0 %v7476
      %v7590 = vpop.f32.mrb[0].mxu0
      %v7591 = vadd.f32 0.0, %v7590
      %v7592 = vpop.f32.mrb[0].mxu0
      %v7593 = vpop.f32.mrb[0].mxu0
      %v7594 = vadd.f32 0.0, %v7593
      %v7595 = vpop.f32.mrb[0].mxu0
      %7596 = vmatprep.mubr.bf16.mxu0 0
      %7597 = vmatmul.mubr.bf16.gmra.mrb[0].mxu0 %v7477
      %v7598 = vpop.f32.mrb[0].mxu0
      %v7599 = vadd.f32 0.0, %v7598
      %v7600 = vpop.f32.mrb[0].mxu0
      %v7601 = vpop.f32.mrb[0].mxu0
      %v7602 = vadd.f32 0.0, %v7601
      %v7603 = vpop.f32.mrb[0].mxu0
      %7604 = vmatprep.mubr.bf16.mxu0 0
      %7605 = vmatmul.mubr.bf16.gmra.mrb[0].mxu0 %v7478
      %v7606 = vpop.f32.mrb[0].mxu0
      %v7607 = vadd.f32 0.0, %v7606
      %v7608 = vpop.f32.mrb[0].mxu0
      %v7609 = vpop.f32.mrb[0].mxu0
      %v7610 = vadd.f32 0.0, %v7609
      %v7611 = vpop.f32.mrb[0].mxu0
      %7612 = vmatprep.mubr.bf16.mxu0 0
      %7613 = vmatmul.mubr.bf16.gmra.mrb[0].mxu0 %v7479
      %v7614 = vpop.f32.mrb[0].mxu0
      %v7615 = vadd.f32 0.0, %v7614
      %v7616 = vpop.f32.mrb[0].mxu0
      %v7617 = vpop.f32.mrb[0].mxu0
      %v7618 = vadd.f32 0.0, %v7617
      %v7619 = vpop.f32.mrb[0].mxu0
      %7620 = vmatprep.mubr.bf16.mxu0 0
      %7621 = vmatmul.mubr.bf16.gmra.mrb[0].mxu0 %v7480
      %v7622 = vpop.f32.mrb[0].mxu0
      %v7623 = vadd.f32 0.0, %v7622
      %v7624 = vpop.f32.mrb[0].mxu0
      %v7625 = vpop.f32.mrb[0].mxu0
      %v7626 = vadd.f32 0.0, %v7625
      %v7627 = vpop.f32.mrb[0].mxu0
      %7628 = vmatprep.mubr.bf16.mxu0 0
      %7629 = vmatmul.mubr.bf16.gmra.mrb[0].mxu0 %v7481
      %v7630 = vpop.f32.mrb[0].mxu0
      %v7631 = vadd.f32 0.0, %v7630
      %v7632 = vpop.f32.mrb[0].mxu0
      %v7633 = vpop.f32.mrb[0].mxu0
      %v7634 = vadd.f32 0.0, %v7633
      %v7635 = vpop.f32.mrb[0].mxu0
      %7636 = vmatprep.mubr.bf16.mxu0 0
      %7637 = vmatmul.mubr.bf16.gmra.mrb[0].mxu0 %v7482
      %v7638 = vpop.f32.mrb[0].mxu0
      %v7639 = vadd.f32 0.0, %v7638
      %v7640 = vpop.f32.mrb[0].mxu0
      %v7641 = vpop.f32.mrb[0].mxu0
      %v7642 = vadd.f32 0.0, %v7641
      %v7643 = vpop.f32.mrb[0].mxu0
      %7644 = vdwg.mxu0
      %v7645 = vadd.f32 %v7427, %v7583
      %v7646 = vadd.f32 %v7428, %v7586
      %v7647 = vadd.f32 %v7429, %v7591
      %v7648 = vadd.f32 %v7430, %v7594
      %v7649 = vadd.f32 %v7431, %v7599
      %v7650 = vadd.f32 %v7432, %v7602
      %v7651 = vadd.f32 %v7433, %v7607
      %v7652 = vadd.f32 %v7434, %v7610
      %v7653 = vadd.f32 %v7435, %v7615
      %v7654 = vadd.f32 %v7436, %v7618
      %v7655 = vadd.f32 %v7437, %v7623
      %v7656 = vadd.f32 %v7438, %v7626
      %v7657 = vadd.f32 %v7439, %v7631
      %v7658 = vadd.f32 %v7440, %v7634
      %v7659 = vadd.f32 %v7441, %v7639
      %v7660 = vadd.f32 %v7442, %v7642
      %s7661 = scalar_lea.vmem [#allocation2], 48
      %s7662 = scalar_lea.vmem %s7661, 7 [#allocation2]
      %v7663 = vld [vmem:[%s7662] ss:$2 sm:$0xff]
      %s7664 = scalar_lea.vmem %s7661, 55 [#allocation2]
      %v7665 = vld [vmem:[%s7664] ss:$2 sm:$0xff]
      %s7666 = scalar_lea.vmem %s7661, 103 [#allocation2]
      %v7667 = vld [vmem:[%s7666] ss:$2 sm:$0xff]
      %s7668 = scalar_lea.vmem %s7661, 151 [#allocation2]
      %v7669 = vld [vmem:[%s7668] ss:$2 sm:$0xff]
      %s7670 = scalar_lea.vmem %s7661, 199 [#allocation2]
      %v7671 = vld [vmem:[%s7670] ss:$2 sm:$0xff]
      %s7672 = scalar_lea.vmem %s7661, 247 [#allocation2]
      %v7673 = vld [vmem:[%s7672] ss:$2 sm:$0xff]
      %s7674 = scalar_lea.vmem %s7661, 295 [#allocation2]
      %v7675 = vld [vmem:[%s7674] ss:$2 sm:$0xff]
      %s7676 = scalar_lea.vmem %s7661, 343 [#allocation2]
      %v7677 = vld [vmem:[%s7676] ss:$2 sm:$0xff]
      %s7678 = scalar_lea.vmem %s7661, 439 [#allocation2]
      %v7679 = vld [vmem:[%s7678] ss:$2 sm:$0xff]
      %s7680 = scalar_lea.vmem %s7661, 487 [#allocation2]
      %v7681 = vld [vmem:[%s7680] ss:$2 sm:$0xff]
      %s7682 = scalar_lea.vmem %s7661, 535 [#allocation2]
      %v7683 = vld [vmem:[%s7682] ss:$2 sm:$0xff]
      %s7684 = scalar_lea.vmem %s7661, 583 [#allocation2]
      %v7685 = vld [vmem:[%s7684] ss:$2 sm:$0xff]
      %s7686 = scalar_lea.vmem %s7661, 631 [#allocation2]
      %v7687 = vld [vmem:[%s7686] ss:$2 sm:$0xff]
      %s7688 = scalar_lea.vmem %s7661, 679 [#allocation2]
      %v7689 = vld [vmem:[%s7688] ss:$2 sm:$0xff]
      %s7690 = scalar_lea.vmem %s7661, 727 [#allocation2]
      %v7691 = vld [vmem:[%s7690] ss:$2 sm:$0xff]
      %s7692 = scalar_lea.vmem %s7661, 775 [#allocation2]
      %v7693 = vld [vmem:[%s7692] ss:$2 sm:$0xff]
      %v7694 = vpack.c.bf16 %v7665, %v7663
      %v7695 = vpack.c.bf16 %v7669, %v7667
      %v7696 = vpack.c.bf16 %v7673, %v7671
      %v7697 = vpack.c.bf16 %v7677, %v7675
      %v7698 = vpack.c.bf16 %v7681, %v7679
      %v7699 = vpack.c.bf16 %v7685, %v7683
      %v7700 = vpack.c.bf16 %v7689, %v7687
      %v7701 = vpack.c.bf16 %v7693, %v7691
      %s7702 = scalar_lea.vmem %s4, 384
      %v7703 = vld [vmem:[%s7702] sm:$0xf]
      %v7704 = vld [vmem:[%s7702 + $0x4] sm:$0xf]
      %v7705 = vld [vmem:[%s7702 + $0x8] sm:$0xf]
      %v7706 = vld [vmem:[%s7702 + $0xc] sm:$0xf]
      %v7707 = vld [vmem:[%s7702 + $0x10] sm:$0xf]
      %v7708 = vld [vmem:[%s7702 + $0x14] sm:$0xf]
      %v7709 = vld [vmem:[%s7702 + $0x18] sm:$0xf]
      %v7710 = vld [vmem:[%s7702 + $0x1c] sm:$0xf]
      %v7711 = vld [vmem:[%s7702 + $0x20] sm:$0xf]
      %v7712 = vld [vmem:[%s7702 + $0x24] sm:$0xf]
      %v7713 = vld [vmem:[%s7702 + $0x28] sm:$0xf]
      %v7714 = vld [vmem:[%s7702 + $0x2c] sm:$0xf]
      %v7715 = vld [vmem:[%s7702 + $0x30] sm:$0xf]
      %v7716 = vld [vmem:[%s7702 + $0x34] sm:$0xf]
      %v7717 = vld [vmem:[%s7702 + $0x38] sm:$0xf]
      %v7718 = vld [vmem:[%s7702 + $0x3c] sm:$0xf]
      %v7735 = vunpack.c.l.b16 %v7703
      %v7736 = vunpack.c.l.b16 %v7704
      %v7737 = vunpack.c.l.b16 %v7705
      %v7738 = vunpack.c.l.b16 %v7706
      %v7739 = vunpack.c.l.b16 %v7707
      %v7740 = vunpack.c.l.b16 %v7708
      %v7741 = vunpack.c.l.b16 %v7709
      %v7742 = vunpack.c.l.b16 %v7710
      %v7743 = vunpack.c.l.b16 %v7711
      %v7744 = vunpack.c.l.b16 %v7712
      %v7745 = vunpack.c.l.b16 %v7713
      %v7746 = vunpack.c.l.b16 %v7714
      %v7747 = vunpack.c.l.b16 %v7715
      %v7748 = vunpack.c.l.b16 %v7716
      %v7749 = vunpack.c.l.b16 %v7717
      %v7750 = vunpack.c.l.b16 %v7718
      %v7751 = vpack.c.b16 %v7736, %v7735
      %v7752 = vpack.c.b16 %v7738, %v7737
      %v7753 = vpack.c.b16 %v7740, %v7739
      %v7754 = vpack.c.b16 %v7742, %v7741
      %v7755 = vpack.c.b16 %v7744, %v7743
      %v7756 = vpack.c.b16 %v7746, %v7745
      %v7757 = vpack.c.b16 %v7748, %v7747
      %v7758 = vpack.c.b16 %v7750, %v7749
      %7767 = vmatprep.subr.bf16.mxu0 0
      %7768 = vmatpush1.bf16.msra.mxu0 %v7751
      %7769 = vmatprep.subr.bf16.mxu0 0
      %7770 = vmatpush1.bf16.msra.mxu0 %v7752
      %7771 = vmatprep.subr.bf16.mxu0 0
      %7772 = vmatpush1.bf16.msra.mxu0 %v7753
      %7773 = vmatprep.subr.bf16.mxu0 0
      %7774 = vmatpush1.bf16.msra.mxu0 %v7754
      %7775 = vmatprep.subr.bf16.mxu0 0
      %7776 = vmatpush1.bf16.msra.mxu0 %v7755
      %7777 = vmatprep.subr.bf16.mxu0 0
      %7778 = vmatpush1.bf16.msra.mxu0 %v7756
      %7779 = vmatprep.subr.bf16.mxu0 0
      %7780 = vmatpush1.bf16.msra.mxu0 %v7757
      %7781 = vmatprep.subr.bf16.mxu0 0
      %7782 = vmatpush1.bf16.msra.mxu0 %v7758
      %7783 = vmatprep.subr.bf16.mxu0 0
      %7784 = vmatpush1.bf16.msra.mxu0 0
      %7785 = vmatprep.subr.bf16.mxu0 0
      %7786 = vmatpush1.bf16.msra.mxu0 0
      %7787 = vmatprep.subr.bf16.mxu0 0
      %7788 = vmatpush1.bf16.msra.mxu0 0
      %7789 = vmatprep.subr.bf16.mxu0 0
      %7790 = vmatpush1.bf16.msra.mxu0 0
      %7791 = vmatprep.subr.bf16.mxu0 0
      %7792 = vmatpush1.bf16.msra.mxu0 0
      %7793 = vmatprep.subr.bf16.mxu0 0
      %7794 = vmatpush1.bf16.msra.mxu0 0
      %7795 = vmatprep.subr.bf16.mxu0 0
      %7796 = vmatpush1.bf16.msra.mxu0 0
      %7797 = vmatprep.subr.bf16.mxu0 0
      %7798 = vmatpush1.bf16.msra.mxu0 0
      %7799 = vmatprep.mubr.bf16.mxu0 0
      %7800 = vmatmul.mubr.bf16.gmra.mrb[0].mxu0 %v7694
      %v7801 = vpop.f32.mrb[0].mxu0
      %v7802 = vadd.f32 0.0, %v7801
      %v7803 = vpop.f32.mrb[0].mxu0
      %v7804 = vpop.f32.mrb[0].mxu0
      %v7805 = vadd.f32 0.0, %v7804
      %v7806 = vpop.f32.mrb[0].mxu0
      %7807 = vmatprep.mubr.bf16.mxu0 0
      %7808 = vmatmul.mubr.bf16.gmra.mrb[0].mxu0 %v7695
      %v7809 = vpop.f32.mrb[0].mxu0
      %v7810 = vadd.f32 0.0, %v7809
      %v7811 = vpop.f32.mrb[0].mxu0
      %v7812 = vpop.f32.mrb[0].mxu0
      %v7813 = vadd.f32 0.0, %v7812
      %v7814 = vpop.f32.mrb[0].mxu0
      %7815 = vmatprep.mubr.bf16.mxu0 0
      %7816 = vmatmul.mubr.bf16.gmra.mrb[0].mxu0 %v7696
      %v7817 = vpop.f32.mrb[0].mxu0
      %v7818 = vadd.f32 0.0, %v7817
      %v7819 = vpop.f32.mrb[0].mxu0
      %v7820 = vpop.f32.mrb[0].mxu0
      %v7821 = vadd.f32 0.0, %v7820
      %v7822 = vpop.f32.mrb[0].mxu0
      %7823 = vmatprep.mubr.bf16.mxu0 0
      %7824 = vmatmul.mubr.bf16.gmra.mrb[0].mxu0 %v7697
      %v7825 = vpop.f32.mrb[0].mxu0
      %v7826 = vadd.f32 0.0, %v7825
      %v7827 = vpop.f32.mrb[0].mxu0
      %v7828 = vpop.f32.mrb[0].mxu0
      %v7829 = vadd.f32 0.0, %v7828
      %v7830 = vpop.f32.mrb[0].mxu0
      %7831 = vmatprep.mubr.bf16.mxu0 0
      %7832 = vmatmul.mubr.bf16.gmra.mrb[0].mxu0 %v7698
      %v7833 = vpop.f32.mrb[0].mxu0
      %v7834 = vadd.f32 0.0, %v7833
      %v7835 = vpop.f32.mrb[0].mxu0
      %v7836 = vpop.f32.mrb[0].mxu0
      %v7837 = vadd.f32 0.0, %v7836
      %v7838 = vpop.f32.mrb[0].mxu0
      %7839 = vmatprep.mubr.bf16.mxu0 0
      %7840 = vmatmul.mubr.bf16.gmra.mrb[0].mxu0 %v7699
      %v7841 = vpop.f32.mrb[0].mxu0
      %v7842 = vadd.f32 0.0, %v7841
      %v7843 = vpop.f32.mrb[0].mxu0
      %v7844 = vpop.f32.mrb[0].mxu0
      %v7845 = vadd.f32 0.0, %v7844
      %v7846 = vpop.f32.mrb[0].mxu0
      %7847 = vmatprep.mubr.bf16.mxu0 0
      %7848 = vmatmul.mubr.bf16.gmra.mrb[0].mxu0 %v7700
      %v7849 = vpop.f32.mrb[0].mxu0
      %v7850 = vadd.f32 0.0, %v7849
      %v7851 = vpop.f32.mrb[0].mxu0
      %v7852 = vpop.f32.mrb[0].mxu0
      %v7853 = vadd.f32 0.0, %v7852
      %v7854 = vpop.f32.mrb[0].mxu0
      %7855 = vmatprep.mubr.bf16.mxu0 0
      %7856 = vmatmul.mubr.bf16.gmra.mrb[0].mxu0 %v7701
      %v7857 = vpop.f32.mrb[0].mxu0
      %v7858 = vadd.f32 0.0, %v7857
      %v7859 = vpop.f32.mrb[0].mxu0
      %v7860 = vpop.f32.mrb[0].mxu0
      %v7861 = vadd.f32 0.0, %v7860
      %v7862 = vpop.f32.mrb[0].mxu0
      %7863 = vdwg.mxu0
      %v7864 = vadd.f32 %v7645, %v7802
      %v7865 = vadd.f32 %v7646, %v7805
      %v7866 = vadd.f32 %v7647, %v7810
      %v7867 = vadd.f32 %v7648, %v7813
      %v7868 = vadd.f32 %v7649, %v7818
      %v7869 = vadd.f32 %v7650, %v7821
      %v7870 = vadd.f32 %v7651, %v7826
      %v7871 = vadd.f32 %v7652, %v7829
      %v7872 = vadd.f32 %v7653, %v7834
      %v7873 = vadd.f32 %v7654, %v7837
      %v7874 = vadd.f32 %v7655, %v7842
      %v7875 = vadd.f32 %v7656, %v7845
      %v7876 = vadd.f32 %v7657, %v7850
      %v7877 = vadd.f32 %v7658, %v7853
      %v7878 = vadd.f32 %v7659, %v7858
      %v7879 = vadd.f32 %v7660, %v7861
      %s7880 = scalar_lea.vmem %s7661, 8 [#allocation2]
      %v7881 = vld [vmem:[%s7880] ss:$2 sm:$0xff]
      %s7882 = scalar_lea.vmem %s7661, 56 [#allocation2]
      %v7883 = vld [vmem:[%s7882] ss:$2 sm:$0xff]
      %s7884 = scalar_lea.vmem %s7661, 104 [#allocation2]
      %v7885 = vld [vmem:[%s7884] ss:$2 sm:$0xff]
      %s7886 = scalar_lea.vmem %s7661, 152 [#allocation2]
      %v7887 = vld [vmem:[%s7886] ss:$2 sm:$0xff]
      %s7888 = scalar_lea.vmem %s7661, 200 [#allocation2]
      %v7889 = vld [vmem:[%s7888] ss:$2 sm:$0xff]
      %s7890 = scalar_lea.vmem %s7661, 248 [#allocation2]
      %v7891 = vld [vmem:[%s7890] ss:$2 sm:$0xff]
      %s7892 = scalar_lea.vmem %s7661, 296 [#allocation2]
      %v7893 = vld [vmem:[%s7892] ss:$2 sm:$0xff]
      %s7894 = scalar_lea.vmem %s7661, 344 [#allocation2]
      %v7895 = vld [vmem:[%s7894] ss:$2 sm:$0xff]
      %s7896 = scalar_lea.vmem %s7661, 440 [#allocation2]
      %v7897 = vld [vmem:[%s7896] ss:$2 sm:$0xff]
      %s7898 = scalar_lea.vmem %s7661, 488 [#allocation2]
      %v7899 = vld [vmem:[%s7898] ss:$2 sm:$0xff]
      %s7900 = scalar_lea.vmem %s7661, 536 [#allocation2]
      %v7901 = vld [vmem:[%s7900] ss:$2 sm:$0xff]
      %s7902 = scalar_lea.vmem %s7661, 584 [#allocation2]
      %v7903 = vld [vmem:[%s7902] ss:$2 sm:$0xff]
      %s7904 = scalar_lea.vmem %s7661, 632 [#allocation2]
      %v7905 = vld [vmem:[%s7904] ss:$2 sm:$0xff]
      %s7906 = scalar_lea.vmem %s7661, 680 [#allocation2]
      %v7907 = vld [vmem:[%s7906] ss:$2 sm:$0xff]
      %s7908 = scalar_lea.vmem %s7661, 728 [#allocation2]
      %v7909 = vld [vmem:[%s7908] ss:$2 sm:$0xff]
      %s7910 = scalar_lea.vmem %s7661, 776 [#allocation2]
      %v7911 = vld [vmem:[%s7910] ss:$2 sm:$0xff]
      %v7912 = vpack.c.bf16 %v7883, %v7881
      %v7913 = vpack.c.bf16 %v7887, %v7885
      %v7914 = vpack.c.bf16 %v7891, %v7889
      %v7915 = vpack.c.bf16 %v7895, %v7893
      %v7916 = vpack.c.bf16 %v7899, %v7897
      %v7917 = vpack.c.bf16 %v7903, %v7901
      %v7918 = vpack.c.bf16 %v7907, %v7905
      %v7919 = vpack.c.bf16 %v7911, %v7909
      %s7920 = scalar_lea.vmem %s4, 448
      %v7921 = vld [vmem:[%s7920] sm:$0xf]
      %v7922 = vld [vmem:[%s7920 + $0x4] sm:$0xf]
      %v7923 = vld [vmem:[%s7920 + $0x8] sm:$0xf]
      %v7924 = vld [vmem:[%s7920 + $0xc] sm:$0xf]
      %v7925 = vld [vmem:[%s7920 + $0x10] sm:$0xf]
      %v7926 = vld [vmem:[%s7920 + $0x14] sm:$0xf]
      %v7927 = vld [vmem:[%s7920 + $0x18] sm:$0xf]
      %v7928 = vld [vmem:[%s7920 + $0x1c] sm:$0xf]
      %v7929 = vld [vmem:[%s7920 + $0x20] sm:$0xf]
      %v7930 = vld [vmem:[%s7920 + $0x24] sm:$0xf]
      %v7931 = vld [vmem:[%s7920 + $0x28] sm:$0xf]
      %v7932 = vld [vmem:[%s7920 + $0x2c] sm:$0xf]
      %v7933 = vld [vmem:[%s7920 + $0x30] sm:$0xf]
      %v7934 = vld [vmem:[%s7920 + $0x34] sm:$0xf]
      %v7935 = vld [vmem:[%s7920 + $0x38] sm:$0xf]
      %v7936 = vld [vmem:[%s7920 + $0x3c] sm:$0xf]
      %v7953 = vunpack.c.l.b16 %v7921
      %v7954 = vunpack.c.l.b16 %v7922
      %v7955 = vunpack.c.l.b16 %v7923
      %v7956 = vunpack.c.l.b16 %v7924
      %v7957 = vunpack.c.l.b16 %v7925
      %v7958 = vunpack.c.l.b16 %v7926
      %v7959 = vunpack.c.l.b16 %v7927
      %v7960 = vunpack.c.l.b16 %v7928
      %v7961 = vunpack.c.l.b16 %v7929
      %v7962 = vunpack.c.l.b16 %v7930
      %v7963 = vunpack.c.l.b16 %v7931
      %v7964 = vunpack.c.l.b16 %v7932
      %v7965 = vunpack.c.l.b16 %v7933
      %v7966 = vunpack.c.l.b16 %v7934
      %v7967 = vunpack.c.l.b16 %v7935
      %v7968 = vunpack.c.l.b16 %v7936
      %v7969 = vpack.c.b16 %v7954, %v7953
      %v7970 = vpack.c.b16 %v7956, %v7955
      %v7971 = vpack.c.b16 %v7958, %v7957
      %v7972 = vpack.c.b16 %v7960, %v7959
      %v7973 = vpack.c.b16 %v7962, %v7961
      %v7974 = vpack.c.b16 %v7964, %v7963
      %v7975 = vpack.c.b16 %v7966, %v7965
      %v7976 = vpack.c.b16 %v7968, %v7967
      %7985 = vmatprep.subr.bf16.mxu0 0
      %7986 = vmatpush1.bf16.msra.mxu0 %v7969
      %7987 = vmatprep.subr.bf16.mxu0 0
      %7988 = vmatpush1.bf16.msra.mxu0 %v7970
      %7989 = vmatprep.subr.bf16.mxu0 0
      %7990 = vmatpush1.bf16.msra.mxu0 %v7971
      %7991 = vmatprep.subr.bf16.mxu0 0
      %7992 = vmatpush1.bf16.msra.mxu0 %v7972
      %7993 = vmatprep.subr.bf16.mxu0 0
      %7994 = vmatpush1.bf16.msra.mxu0 %v7973
      %7995 = vmatprep.subr.bf16.mxu0 0
      %7996 = vmatpush1.bf16.msra.mxu0 %v7974
      %7997 = vmatprep.subr.bf16.mxu0 0
      %7998 = vmatpush1.bf16.msra.mxu0 %v7975
      %7999 = vmatprep.subr.bf16.mxu0 0
      %8000 = vmatpush1.bf16.msra.mxu0 %v7976
      %8001 = vmatprep.subr.bf16.mxu0 0
      %8002 = vmatpush1.bf16.msra.mxu0 0
      %8003 = vmatprep.subr.bf16.mxu0 0
      %8004 = vmatpush1.bf16.msra.mxu0 0
      %8005 = vmatprep.subr.bf16.mxu0 0
      %8006 = vmatpush1.bf16.msra.mxu0 0
      %8007 = vmatprep.subr.bf16.mxu0 0
      %8008 = vmatpush1.bf16.msra.mxu0 0
      %8009 = vmatprep.subr.bf16.mxu0 0
      %8010 = vmatpush1.bf16.msra.mxu0 0
      %8011 = vmatprep.subr.bf16.mxu0 0
      %8012 = vmatpush1.bf16.msra.mxu0 0
      %8013 = vmatprep.subr.bf16.mxu0 0
      %8014 = vmatpush1.bf16.msra.mxu0 0
      %8015 = vmatprep.subr.bf16.mxu0 0
      %8016 = vmatpush1.bf16.msra.mxu0 0
      %8017 = vmatprep.mubr.bf16.mxu0 0
      %8018 = vmatmul.mubr.bf16.gmra.mrb[0].mxu0 %v7912
      %v8019 = vpop.f32.mrb[0].mxu0
      %v8020 = vadd.f32 0.0, %v8019
      %v8021 = vpop.f32.mrb[0].mxu0
      %v8022 = vpop.f32.mrb[0].mxu0
      %v8023 = vadd.f32 0.0, %v8022
      %v8024 = vpop.f32.mrb[0].mxu0
      %8025 = vmatprep.mubr.bf16.mxu0 0
      %8026 = vmatmul.mubr.bf16.gmra.mrb[0].mxu0 %v7913
      %v8027 = vpop.f32.mrb[0].mxu0
      %v8028 = vadd.f32 0.0, %v8027
      %v8029 = vpop.f32.mrb[0].mxu0
      %v8030 = vpop.f32.mrb[0].mxu0
      %v8031 = vadd.f32 0.0, %v8030
      %v8032 = vpop.f32.mrb[0].mxu0
      %8033 = vmatprep.mubr.bf16.mxu0 0
      %8034 = vmatmul.mubr.bf16.gmra.mrb[0].mxu0 %v7914
      %v8035 = vpop.f32.mrb[0].mxu0
      %v8036 = vadd.f32 0.0, %v8035
      %v8037 = vpop.f32.mrb[0].mxu0
      %v8038 = vpop.f32.mrb[0].mxu0
      %v8039 = vadd.f32 0.0, %v8038
      %v8040 = vpop.f32.mrb[0].mxu0
      %8041 = vmatprep.mubr.bf16.mxu0 0
      %8042 = vmatmul.mubr.bf16.gmra.mrb[0].mxu0 %v7915
      %v8043 = vpop.f32.mrb[0].mxu0
      %v8044 = vadd.f32 0.0, %v8043
      %v8045 = vpop.f32.mrb[0].mxu0
      %v8046 = vpop.f32.mrb[0].mxu0
      %v8047 = vadd.f32 0.0, %v8046
      %v8048 = vpop.f32.mrb[0].mxu0
      %8049 = vmatprep.mubr.bf16.mxu0 0
      %8050 = vmatmul.mubr.bf16.gmra.mrb[0].mxu0 %v7916
      %v8051 = vpop.f32.mrb[0].mxu0
      %v8052 = vadd.f32 0.0, %v8051
      %v8053 = vpop.f32.mrb[0].mxu0
      %v8054 = vpop.f32.mrb[0].mxu0
      %v8055 = vadd.f32 0.0, %v8054
      %v8056 = vpop.f32.mrb[0].mxu0
      %8057 = vmatprep.mubr.bf16.mxu0 0
      %8058 = vmatmul.mubr.bf16.gmra.mrb[0].mxu0 %v7917
      %v8059 = vpop.f32.mrb[0].mxu0
      %v8060 = vadd.f32 0.0, %v8059
      %v8061 = vpop.f32.mrb[0].mxu0
      %v8062 = vpop.f32.mrb[0].mxu0
      %v8063 = vadd.f32 0.0, %v8062
      %v8064 = vpop.f32.mrb[0].mxu0
      %8065 = vmatprep.mubr.bf16.mxu0 0
      %8066 = vmatmul.mubr.bf16.gmra.mrb[0].mxu0 %v7918
      %v8067 = vpop.f32.mrb[0].mxu0
      %v8068 = vadd.f32 0.0, %v8067
      %v8069 = vpop.f32.mrb[0].mxu0
      %v8070 = vpop.f32.mrb[0].mxu0
      %v8071 = vadd.f32 0.0, %v8070
      %v8072 = vpop.f32.mrb[0].mxu0
      %8073 = vmatprep.mubr.bf16.mxu0 0
      %8074 = vmatmul.mubr.bf16.gmra.mrb[0].mxu0 %v7919
      %v8075 = vpop.f32.mrb[0].mxu0
      %v8076 = vadd.f32 0.0, %v8075
      %v8077 = vpop.f32.mrb[0].mxu0
      %v8078 = vpop.f32.mrb[0].mxu0
      %v8079 = vadd.f32 0.0, %v8078
      %v8080 = vpop.f32.mrb[0].mxu0
      %8081 = vdwg.mxu0
      %v8082 = vadd.f32 %v7864, %v8020
      %v8083 = vadd.f32 %v7865, %v8023
      %v8084 = vadd.f32 %v7866, %v8028
      %v8085 = vadd.f32 %v7867, %v8031
      %v8086 = vadd.f32 %v7868, %v8036
      %v8087 = vadd.f32 %v7869, %v8039
      %v8088 = vadd.f32 %v7870, %v8044
      %v8089 = vadd.f32 %v7871, %v8047
      %v8090 = vadd.f32 %v7872, %v8052
      %v8091 = vadd.f32 %v7873, %v8055
      %v8092 = vadd.f32 %v7874, %v8060
      %v8093 = vadd.f32 %v7875, %v8063
      %v8094 = vadd.f32 %v7876, %v8068
      %v8095 = vadd.f32 %v7877, %v8071
      %v8096 = vadd.f32 %v7878, %v8076
      %v8097 = vadd.f32 %v7879, %v8079
      %s8098 = scalar_lea.vmem %s7661, 9 [#allocation2]
      %v8099 = vld [vmem:[%s8098] ss:$2 sm:$0xff]
      %s8100 = scalar_lea.vmem %s7661, 57 [#allocation2]
      %v8101 = vld [vmem:[%s8100] ss:$2 sm:$0xff]
      %s8102 = scalar_lea.vmem %s7661, 105 [#allocation2]
      %v8103 = vld [vmem:[%s8102] ss:$2 sm:$0xff]
      %s8104 = scalar_lea.vmem %s7661, 153 [#allocation2]
      %v8105 = vld [vmem:[%s8104] ss:$2 sm:$0xff]
      %s8106 = scalar_lea.vmem %s7661, 201 [#allocation2]
      %v8107 = vld [vmem:[%s8106] ss:$2 sm:$0xff]
      %s8108 = scalar_lea.vmem %s7661, 249 [#allocation2]
      %v8109 = vld [vmem:[%s8108] ss:$2 sm:$0xff]
      %s8110 = scalar_lea.vmem %s7661, 297 [#allocation2]
      %v8111 = vld [vmem:[%s8110] ss:$2 sm:$0xff]
      %s8112 = scalar_lea.vmem %s7661, 345 [#allocation2]
      %v8113 = vld [vmem:[%s8112] ss:$2 sm:$0xff]
      %s8114 = scalar_lea.vmem %s7661, 441 [#allocation2]
      %v8115 = vld [vmem:[%s8114] ss:$2 sm:$0xff]
      %s8116 = scalar_lea.vmem %s7661, 489 [#allocation2]
      %v8117 = vld [vmem:[%s8116] ss:$2 sm:$0xff]
      %s8118 = scalar_lea.vmem %s7661, 537 [#allocation2]
      %v8119 = vld [vmem:[%s8118] ss:$2 sm:$0xff]
      %s8120 = scalar_lea.vmem %s7661, 585 [#allocation2]
      %v8121 = vld [vmem:[%s8120] ss:$2 sm:$0xff]
      %s8122 = scalar_lea.vmem %s7661, 633 [#allocation2]
      %v8123 = vld [vmem:[%s8122] ss:$2 sm:$0xff]
      %s8124 = scalar_lea.vmem %s7661, 681 [#allocation2]
      %v8125 = vld [vmem:[%s8124] ss:$2 sm:$0xff]
      %s8126 = scalar_lea.vmem %s7661, 729 [#allocation2]
      %v8127 = vld [vmem:[%s8126] ss:$2 sm:$0xff]
      %s8128 = scalar_lea.vmem %s7661, 777 [#allocation2]
      %v8129 = vld [vmem:[%s8128] ss:$2 sm:$0xff]
      %v8130 = vpack.c.bf16 %v8101, %v8099
      %v8131 = vpack.c.bf16 %v8105, %v8103
      %v8132 = vpack.c.bf16 %v8109, %v8107
      %v8133 = vpack.c.bf16 %v8113, %v8111
      %v8134 = vpack.c.bf16 %v8117, %v8115
      %v8135 = vpack.c.bf16 %v8121, %v8119
      %v8136 = vpack.c.bf16 %v8125, %v8123
      %v8137 = vpack.c.bf16 %v8129, %v8127
      %s8138 = scalar_lea.vmem %s4, 512
      %v8139 = vld [vmem:[%s8138] sm:$0xf]
      %v8140 = vld [vmem:[%s8138 + $0x4] sm:$0xf]
      %v8141 = vld [vmem:[%s8138 + $0x8] sm:$0xf]
      %v8142 = vld [vmem:[%s8138 + $0xc] sm:$0xf]
      %v8143 = vld [vmem:[%s8138 + $0x10] sm:$0xf]
      %v8144 = vld [vmem:[%s8138 + $0x14] sm:$0xf]
      %v8145 = vld [vmem:[%s8138 + $0x18] sm:$0xf]
      %v8146 = vld [vmem:[%s8138 + $0x1c] sm:$0xf]
      %v8147 = vld [vmem:[%s8138 + $0x20] sm:$0xf]
      %v8148 = vld [vmem:[%s8138 + $0x24] sm:$0xf]
      %v8149 = vld [vmem:[%s8138 + $0x28] sm:$0xf]
      %v8150 = vld [vmem:[%s8138 + $0x2c] sm:$0xf]
      %v8151 = vld [vmem:[%s8138 + $0x30] sm:$0xf]
      %v8152 = vld [vmem:[%s8138 + $0x34] sm:$0xf]
      %v8153 = vld [vmem:[%s8138 + $0x38] sm:$0xf]
      %v8154 = vld [vmem:[%s8138 + $0x3c] sm:$0xf]
      %v8171 = vunpack.c.l.b16 %v8139
      %v8172 = vunpack.c.l.b16 %v8140
      %v8173 = vunpack.c.l.b16 %v8141
      %v8174 = vunpack.c.l.b16 %v8142
      %v8175 = vunpack.c.l.b16 %v8143
      %v8176 = vunpack.c.l.b16 %v8144
      %v8177 = vunpack.c.l.b16 %v8145
      %v8178 = vunpack.c.l.b16 %v8146
      %v8179 = vunpack.c.l.b16 %v8147
      %v8180 = vunpack.c.l.b16 %v8148
      %v8181 = vunpack.c.l.b16 %v8149
      %v8182 = vunpack.c.l.b16 %v8150
      %v8183 = vunpack.c.l.b16 %v8151
      %v8184 = vunpack.c.l.b16 %v8152
      %v8185 = vunpack.c.l.b16 %v8153
      %v8186 = vunpack.c.l.b16 %v8154
      %v8187 = vpack.c.b16 %v8172, %v8171
      %v8188 = vpack.c.b16 %v8174, %v8173
      %v8189 = vpack.c.b16 %v8176, %v8175
      %v8190 = vpack.c.b16 %v8178, %v8177
      %v8191 = vpack.c.b16 %v8180, %v8179
      %v8192 = vpack.c.b16 %v8182, %v8181
      %v8193 = vpack.c.b16 %v8184, %v8183
      %v8194 = vpack.c.b16 %v8186, %v8185
      %8203 = vmatprep.subr.bf16.mxu0 0
      %8204 = vmatpush1.bf16.msra.mxu0 %v8187
      %8205 = vmatprep.subr.bf16.mxu0 0
      %8206 = vmatpush1.bf16.msra.mxu0 %v8188
      %8207 = vmatprep.subr.bf16.mxu0 0
      %8208 = vmatpush1.bf16.msra.mxu0 %v8189
      %8209 = vmatprep.subr.bf16.mxu0 0
      %8210 = vmatpush1.bf16.msra.mxu0 %v8190
      %8211 = vmatprep.subr.bf16.mxu0 0
      %8212 = vmatpush1.bf16.msra.mxu0 %v8191
      %8213 = vmatprep.subr.bf16.mxu0 0
      %8214 = vmatpush1.bf16.msra.mxu0 %v8192
      %8215 = vmatprep.subr.bf16.mxu0 0
      %8216 = vmatpush1.bf16.msra.mxu0 %v8193
      %8217 = vmatprep.subr.bf16.mxu0 0
      %8218 = vmatpush1.bf16.msra.mxu0 %v8194
      %8219 = vmatprep.subr.bf16.mxu0 0
      %8220 = vmatpush1.bf16.msra.mxu0 0
      %8221 = vmatprep.subr.bf16.mxu0 0
      %8222 = vmatpush1.bf16.msra.mxu0 0
      %8223 = vmatprep.subr.bf16.mxu0 0
      %8224 = vmatpush1.bf16.msra.mxu0 0
      %8225 = vmatprep.subr.bf16.mxu0 0
      %8226 = vmatpush1.bf16.msra.mxu0 0
      %8227 = vmatprep.subr.bf16.mxu0 0
      %8228 = vmatpush1.bf16.msra.mxu0 0
      %8229 = vmatprep.subr.bf16.mxu0 0
      %8230 = vmatpush1.bf16.msra.mxu0 0
      %8231 = vmatprep.subr.bf16.mxu0 0
      %8232 = vmatpush1.bf16.msra.mxu0 0
      %8233 = vmatprep.subr.bf16.mxu0 0
      %8234 = vmatpush1.bf16.msra.mxu0 0
      %8235 = vmatprep.mubr.bf16.mxu0 0
      %8236 = vmatmul.mubr.bf16.gmra.mrb[0].mxu0 %v8130
      %v8237 = vpop.f32.mrb[0].mxu0
      %v8238 = vadd.f32 0.0, %v8237
      %v8239 = vpop.f32.mrb[0].mxu0
      %v8240 = vpop.f32.mrb[0].mxu0
      %v8241 = vadd.f32 0.0, %v8240
      %v8242 = vpop.f32.mrb[0].mxu0
      %8243 = vmatprep.mubr.bf16.mxu0 0
      %8244 = vmatmul.mubr.bf16.gmra.mrb[0].mxu0 %v8131
      %v8245 = vpop.f32.mrb[0].mxu0
      %v8246 = vadd.f32 0.0, %v8245
      %v8247 = vpop.f32.mrb[0].mxu0
      %v8248 = vpop.f32.mrb[0].mxu0
      %v8249 = vadd.f32 0.0, %v8248
      %v8250 = vpop.f32.mrb[0].mxu0
      %8251 = vmatprep.mubr.bf16.mxu0 0
      %8252 = vmatmul.mubr.bf16.gmra.mrb[0].mxu0 %v8132
      %v8253 = vpop.f32.mrb[0].mxu0
      %v8254 = vadd.f32 0.0, %v8253
      %v8255 = vpop.f32.mrb[0].mxu0
      %v8256 = vpop.f32.mrb[0].mxu0
      %v8257 = vadd.f32 0.0, %v8256
      %v8258 = vpop.f32.mrb[0].mxu0
      %8259 = vmatprep.mubr.bf16.mxu0 0
      %8260 = vmatmul.mubr.bf16.gmra.mrb[0].mxu0 %v8133
      %v8261 = vpop.f32.mrb[0].mxu0
      %v8262 = vadd.f32 0.0, %v8261
      %v8263 = vpop.f32.mrb[0].mxu0
      %v8264 = vpop.f32.mrb[0].mxu0
      %v8265 = vadd.f32 0.0, %v8264
      %v8266 = vpop.f32.mrb[0].mxu0
      %8267 = vmatprep.mubr.bf16.mxu0 0
      %8268 = vmatmul.mubr.bf16.gmra.mrb[0].mxu0 %v8134
      %v8269 = vpop.f32.mrb[0].mxu0
      %v8270 = vadd.f32 0.0, %v8269
      %v8271 = vpop.f32.mrb[0].mxu0
      %v8272 = vpop.f32.mrb[0].mxu0
      %v8273 = vadd.f32 0.0, %v8272
      %v8274 = vpop.f32.mrb[0].mxu0
      %8275 = vmatprep.mubr.bf16.mxu0 0
      %8276 = vmatmul.mubr.bf16.gmra.mrb[0].mxu0 %v8135
      %v8277 = vpop.f32.mrb[0].mxu0
      %v8278 = vadd.f32 0.0, %v8277
      %v8279 = vpop.f32.mrb[0].mxu0
      %v8280 = vpop.f32.mrb[0].mxu0
      %v8281 = vadd.f32 0.0, %v8280
      %v8282 = vpop.f32.mrb[0].mxu0
      %8283 = vmatprep.mubr.bf16.mxu0 0
      %8284 = vmatmul.mubr.bf16.gmra.mrb[0].mxu0 %v8136
      %v8285 = vpop.f32.mrb[0].mxu0
      %v8286 = vadd.f32 0.0, %v8285
      %v8287 = vpop.f32.mrb[0].mxu0
      %v8288 = vpop.f32.mrb[0].mxu0
      %v8289 = vadd.f32 0.0, %v8288
      %v8290 = vpop.f32.mrb[0].mxu0
      %8291 = vmatprep.mubr.bf16.mxu0 0
      %8292 = vmatmul.mubr.bf16.gmra.mrb[0].mxu0 %v8137
      %v8293 = vpop.f32.mrb[0].mxu0
      %v8294 = vadd.f32 0.0, %v8293
      %v8295 = vpop.f32.mrb[0].mxu0
      %v8296 = vpop.f32.mrb[0].mxu0
      %v8297 = vadd.f32 0.0, %v8296
      %v8298 = vpop.f32.mrb[0].mxu0
      %8299 = vdwg.mxu0
      %v8300 = vadd.f32 %v8082, %v8238
      %v8301 = vadd.f32 %v8083, %v8241
      %v8302 = vadd.f32 %v8084, %v8246
      %v8303 = vadd.f32 %v8085, %v8249
      %v8304 = vadd.f32 %v8086, %v8254
      %v8305 = vadd.f32 %v8087, %v8257
      %v8306 = vadd.f32 %v8088, %v8262
      %v8307 = vadd.f32 %v8089, %v8265
      %v8308 = vadd.f32 %v8090, %v8270
      %v8309 = vadd.f32 %v8091, %v8273
      %v8310 = vadd.f32 %v8092, %v8278
      %v8311 = vadd.f32 %v8093, %v8281
      %v8312 = vadd.f32 %v8094, %v8286
      %v8313 = vadd.f32 %v8095, %v8289
      %v8314 = vadd.f32 %v8096, %v8294
      %v8315 = vadd.f32 %v8097, %v8297
      %v8316 = vld [vmem:[%s5] sm:$0x1]
      %v8318 = vlaneseq
      %v8319 = vshrl.u32 %v8318, 7
      %v8320 = vsub.s32 0, %v8319
      %v8321 = vrot.slane %v8316, %v8320
      %v8323 = vadd.f32 %v8300, %v8321
      %v8324 = vadd.f32 %v8301, %v8321
      %v8325 = vadd.f32 %v8302, %v8321
      %v8326 = vadd.f32 %v8303, %v8321
      %v8327 = vadd.f32 %v8304, %v8321
      %v8328 = vadd.f32 %v8305, %v8321
      %v8329 = vadd.f32 %v8306, %v8321
      %v8330 = vadd.f32 %v8307, %v8321
      %v8331 = vadd.f32 %v8308, %v8321
      %v8332 = vadd.f32 %v8309, %v8321
      %v8333 = vadd.f32 %v8310, %v8321
      %v8334 = vadd.f32 %v8311, %v8321
      %v8335 = vadd.f32 %v8312, %v8321
      %v8336 = vadd.f32 %v8313, %v8321
      %v8337 = vadd.f32 %v8314, %v8321
      %v8338 = vadd.f32 %v8315, %v8321
      %v8339 = vmax.f32 %v8323, 0.0
      %v8340 = vmax.f32 %v8324, 0.0
      %v8341 = vmax.f32 %v8325, 0.0
      %v8342 = vmax.f32 %v8326, 0.0
      %v8343 = vmax.f32 %v8327, 0.0
      %v8344 = vmax.f32 %v8328, 0.0
      %v8345 = vmax.f32 %v8329, 0.0
      %v8346 = vmax.f32 %v8330, 0.0
      %v8347 = vmax.f32 %v8331, 0.0
      %v8348 = vmax.f32 %v8332, 0.0
      %v8349 = vmax.f32 %v8333, 0.0
      %v8350 = vmax.f32 %v8334, 0.0
      %v8351 = vmax.f32 %v8335, 0.0
      %v8352 = vmax.f32 %v8336, 0.0
      %v8353 = vmax.f32 %v8337, 0.0
      %v8354 = vmax.f32 %v8338, 0.0
      %v8355 = vld [vmem:[%s6] sm:$0x1]
      %v8356 = vmul.f32 %v8339, %v8339
      %v8357 = vmul.f32 %v8340, %v8340
      %v8358 = vmul.f32 %v8341, %v8341
      %v8359 = vmul.f32 %v8342, %v8342
      %v8360 = vmul.f32 %v8343, %v8343
      %v8361 = vmul.f32 %v8344, %v8344
      %v8362 = vmul.f32 %v8345, %v8345
      %v8363 = vmul.f32 %v8346, %v8346
      %8364 = vadd.xlane.f32.xlu0 %v8356
      %v8365 = vpop.xlane.xlu0 %8364
      %8366 = vadd.xlane.f32.xlu0 %v8357
      %v8367 = vpop.xlane.xlu0 %8366
      %8368 = vadd.xlane.f32.xlu0 %v8358
      %v8369 = vpop.xlane.xlu0 %8368
      %8370 = vadd.xlane.f32.xlu0 %v8359
      %v8371 = vpop.xlane.xlu0 %8370
      %8372 = vadd.xlane.f32.xlu0 %v8360
      %v8373 = vpop.xlane.xlu0 %8372
      %8374 = vadd.xlane.f32.xlu0 %v8361
      %v8375 = vpop.xlane.xlu0 %8374
      %8376 = vadd.xlane.f32.xlu0 %v8362
      %v8377 = vpop.xlane.xlu0 %8376
      %8378 = vadd.xlane.f32.xlu0 %v8363
      %v8379 = vpop.xlane.xlu0 %8378
      %v8380 = vrsqrt.pop %v8365
      %v8381 = vmul.f32 %v8365, %v8380
      %vm8382 = vcmp.eq.f32.partialorder %v8365, inf
      %v8383 = vsel %vm8382, %v8365, %v8381
      %vm8384 = vcmp.eq.f32.partialorder %v8365, 0.0
      %v8385 = vand.u32 %v8365, 2147483648
      %v8386 = vsel %vm8384, %v8385, %v8383
      %v8387 = vrsqrt.pop %v8367
      %v8388 = vmul.f32 %v8367, %v8387
      %vm8389 = vcmp.eq.f32.partialorder %v8367, inf
      %v8390 = vsel %vm8389, %v8367, %v8388
      %vm8391 = vcmp.eq.f32.partialorder %v8367, 0.0
      %v8392 = vand.u32 %v8367, 2147483648
      %v8393 = vsel %vm8391, %v8392, %v8390
      %v8394 = vrsqrt.pop %v8369
      %v8395 = vmul.f32 %v8369, %v8394
      %vm8396 = vcmp.eq.f32.partialorder %v8369, inf
      %v8397 = vsel %vm8396, %v8369, %v8395
      %vm8398 = vcmp.eq.f32.partialorder %v8369, 0.0
      %v8399 = vand.u32 %v8369, 2147483648
      %v8400 = vsel %vm8398, %v8399, %v8397
      %v8401 = vrsqrt.pop %v8371
      %v8402 = vmul.f32 %v8371, %v8401
      %vm8403 = vcmp.eq.f32.partialorder %v8371, inf
      %v8404 = vsel %vm8403, %v8371, %v8402
      %vm8405 = vcmp.eq.f32.partialorder %v8371, 0.0
      %v8406 = vand.u32 %v8371, 2147483648
      %v8407 = vsel %vm8405, %v8406, %v8404
      %v8408 = vrsqrt.pop %v8373
      %v8409 = vmul.f32 %v8373, %v8408
      %vm8410 = vcmp.eq.f32.partialorder %v8373, inf
      %v8411 = vsel %vm8410, %v8373, %v8409
      %vm8412 = vcmp.eq.f32.partialorder %v8373, 0.0
      %v8413 = vand.u32 %v8373, 2147483648
      %v8414 = vsel %vm8412, %v8413, %v8411
      %v8415 = vrsqrt.pop %v8375
      %v8416 = vmul.f32 %v8375, %v8415
      %vm8417 = vcmp.eq.f32.partialorder %v8375, inf
      %v8418 = vsel %vm8417, %v8375, %v8416
      %vm8419 = vcmp.eq.f32.partialorder %v8375, 0.0
      %v8420 = vand.u32 %v8375, 2147483648
      %v8421 = vsel %vm8419, %v8420, %v8418
      %v8422 = vrsqrt.pop %v8377
      %v8423 = vmul.f32 %v8377, %v8422
      %vm8424 = vcmp.eq.f32.partialorder %v8377, inf
      %v8425 = vsel %vm8424, %v8377, %v8423
      %vm8426 = vcmp.eq.f32.partialorder %v8377, 0.0
      %v8427 = vand.u32 %v8377, 2147483648
      %v8428 = vsel %vm8426, %v8427, %v8425
      %v8429 = vrsqrt.pop %v8379
      %v8430 = vmul.f32 %v8379, %v8429
      %vm8431 = vcmp.eq.f32.partialorder %v8379, inf
      %v8432 = vsel %vm8431, %v8379, %v8430
      %vm8433 = vcmp.eq.f32.partialorder %v8379, 0.0
      %v8434 = vand.u32 %v8379, 2147483648
      %v8435 = vsel %vm8433, %v8434, %v8432
      %v8436 = vadd.f32 %v8386, 1e-10
      %v8437 = vadd.f32 %v8393, 1e-10
      %v8438 = vadd.f32 %v8400, 1e-10
      %v8439 = vadd.f32 %v8407, 1e-10
      %v8440 = vadd.f32 %v8414, 1e-10
      %v8441 = vadd.f32 %v8421, 1e-10
      %v8442 = vadd.f32 %v8428, 1e-10
      %v8443 = vadd.f32 %v8435, 1e-10
      %v8444 = vrcp.pop %v8436
      %v8445 = vrcp.pop %v8437
      %v8446 = vrcp.pop %v8438
      %v8447 = vrcp.pop %v8439
      %v8448 = vrcp.pop %v8440
      %v8449 = vrcp.pop %v8441
      %v8450 = vrcp.pop %v8442
      %v8451 = vrcp.pop %v8443
      %v8452 = vmul.f32 %v8347, %v8347
      %v8453 = vmul.f32 %v8348, %v8348
      %v8454 = vmul.f32 %v8349, %v8349
      %v8455 = vmul.f32 %v8350, %v8350
      %v8456 = vmul.f32 %v8351, %v8351
      %v8457 = vmul.f32 %v8352, %v8352
      %v8458 = vmul.f32 %v8353, %v8353
      %v8459 = vmul.f32 %v8354, %v8354
      %8460 = vadd.xlane.f32.xlu0 %v8452
      %v8461 = vpop.xlane.xlu0 %8460
      %8462 = vadd.xlane.f32.xlu0 %v8453
      %v8463 = vpop.xlane.xlu0 %8462
      %8464 = vadd.xlane.f32.xlu0 %v8454
      %v8465 = vpop.xlane.xlu0 %8464
      %8466 = vadd.xlane.f32.xlu0 %v8455
      %v8467 = vpop.xlane.xlu0 %8466
      %8468 = vadd.xlane.f32.xlu0 %v8456
      %v8469 = vpop.xlane.xlu0 %8468
      %8470 = vadd.xlane.f32.xlu0 %v8457
      %v8471 = vpop.xlane.xlu0 %8470
      %8472 = vadd.xlane.f32.xlu0 %v8458
      %v8473 = vpop.xlane.xlu0 %8472
      %8474 = vadd.xlane.f32.xlu0 %v8459
      %v8475 = vpop.xlane.xlu0 %8474
      %v8476 = vrsqrt.pop %v8461
      %v8477 = vmul.f32 %v8461, %v8476
      %vm8478 = vcmp.eq.f32.partialorder %v8461, inf
      %v8479 = vsel %vm8478, %v8461, %v8477
      %vm8480 = vcmp.eq.f32.partialorder %v8461, 0.0
      %v8481 = vand.u32 %v8461, 2147483648
      %v8482 = vsel %vm8480, %v8481, %v8479
      %v8483 = vrsqrt.pop %v8463
      %v8484 = vmul.f32 %v8463, %v8483
      %vm8485 = vcmp.eq.f32.partialorder %v8463, inf
      %v8486 = vsel %vm8485, %v8463, %v8484
      %vm8487 = vcmp.eq.f32.partialorder %v8463, 0.0
      %v8488 = vand.u32 %v8463, 2147483648
      %v8489 = vsel %vm8487, %v8488, %v8486
      %v8490 = vrsqrt.pop %v8465
      %v8491 = vmul.f32 %v8465, %v8490
      %vm8492 = vcmp.eq.f32.partialorder %v8465, inf
      %v8493 = vsel %vm8492, %v8465, %v8491
      %vm8494 = vcmp.eq.f32.partialorder %v8465, 0.0
      %v8495 = vand.u32 %v8465, 2147483648
      %v8496 = vsel %vm8494, %v8495, %v8493
      %v8497 = vrsqrt.pop %v8467
      %v8498 = vmul.f32 %v8467, %v8497
      %vm8499 = vcmp.eq.f32.partialorder %v8467, inf
      %v8500 = vsel %vm8499, %v8467, %v8498
      %vm8501 = vcmp.eq.f32.partialorder %v8467, 0.0
      %v8502 = vand.u32 %v8467, 2147483648
      %v8503 = vsel %vm8501, %v8502, %v8500
      %v8504 = vrsqrt.pop %v8469
      %v8505 = vmul.f32 %v8469, %v8504
      %vm8506 = vcmp.eq.f32.partialorder %v8469, inf
      %v8507 = vsel %vm8506, %v8469, %v8505
      %vm8508 = vcmp.eq.f32.partialorder %v8469, 0.0
      %v8509 = vand.u32 %v8469, 2147483648
      %v8510 = vsel %vm8508, %v8509, %v8507
      %v8511 = vrsqrt.pop %v8471
      %v8512 = vmul.f32 %v8471, %v8511
      %vm8513 = vcmp.eq.f32.partialorder %v8471, inf
      %v8514 = vsel %vm8513, %v8471, %v8512
      %vm8515 = vcmp.eq.f32.partialorder %v8471, 0.0
      %v8516 = vand.u32 %v8471, 2147483648
      %v8517 = vsel %vm8515, %v8516, %v8514
      %v8518 = vrsqrt.pop %v8473
      %v8519 = vmul.f32 %v8473, %v8518
      %vm8520 = vcmp.eq.f32.partialorder %v8473, inf
      %v8521 = vsel %vm8520, %v8473, %v8519
      %vm8522 = vcmp.eq.f32.partialorder %v8473, 0.0
      %v8523 = vand.u32 %v8473, 2147483648
      %v8524 = vsel %vm8522, %v8523, %v8521
      %v8525 = vrsqrt.pop %v8475
      %v8526 = vmul.f32 %v8475, %v8525
      %vm8527 = vcmp.eq.f32.partialorder %v8475, inf
      %v8528 = vsel %vm8527, %v8475, %v8526
      %vm8529 = vcmp.eq.f32.partialorder %v8475, 0.0
      %v8530 = vand.u32 %v8475, 2147483648
      %v8531 = vsel %vm8529, %v8530, %v8528
      %v8532 = vadd.f32 %v8482, 1e-10
      %v8533 = vadd.f32 %v8489, 1e-10
      %v8534 = vadd.f32 %v8496, 1e-10
      %v8535 = vadd.f32 %v8503, 1e-10
      %v8536 = vadd.f32 %v8510, 1e-10
      %v8537 = vadd.f32 %v8517, 1e-10
      %v8538 = vadd.f32 %v8524, 1e-10
      %v8539 = vadd.f32 %v8531, 1e-10
      %v8540 = vrcp.pop %v8532
      %v8541 = vrcp.pop %v8533
      %v8542 = vrcp.pop %v8534
      %v8543 = vrcp.pop %v8535
      %v8544 = vrcp.pop %v8536
      %v8545 = vrcp.pop %v8537
      %v8546 = vrcp.pop %v8538
      %v8547 = vrcp.pop %v8539
      %v8548 = vmul.f32 %v8339, %v8444
      %v8549 = vmul.f32 %v8340, %v8445
      %v8550 = vmul.f32 %v8341, %v8446
      %v8551 = vmul.f32 %v8342, %v8447
      %v8552 = vmul.f32 %v8343, %v8448
      %v8553 = vmul.f32 %v8344, %v8449
      %v8554 = vmul.f32 %v8345, %v8450
      %v8555 = vmul.f32 %v8346, %v8451
      %v8556 = vmul.f32 %v8347, %v8540
      %v8557 = vmul.f32 %v8348, %v8541
      %v8558 = vmul.f32 %v8349, %v8542
      %v8559 = vmul.f32 %v8350, %v8543
      %v8560 = vmul.f32 %v8351, %v8544
      %v8561 = vmul.f32 %v8352, %v8545
      %v8562 = vmul.f32 %v8353, %v8546
      %v8563 = vmul.f32 %v8354, %v8547
      %v8564 = vsub.f32 %v8548, %v8556
      %v8565 = vsub.f32 %v8549, %v8557
      %v8566 = vsub.f32 %v8550, %v8558
      %v8567 = vsub.f32 %v8551, %v8559
      %v8568 = vsub.f32 %v8552, %v8560
      %v8569 = vsub.f32 %v8553, %v8561
      %v8570 = vsub.f32 %v8554, %v8562
      %v8571 = vsub.f32 %v8555, %v8563
      %v8572 = vmul.f32 %v8564, %v8564
      %v8573 = vmul.f32 %v8565, %v8565
      %v8574 = vmul.f32 %v8566, %v8566
      %v8575 = vmul.f32 %v8567, %v8567
      %v8576 = vmul.f32 %v8568, %v8568
      %v8577 = vmul.f32 %v8569, %v8569
      %v8578 = vmul.f32 %v8570, %v8570
      %v8579 = vmul.f32 %v8571, %v8571
      %v8581 = vlaneseq
      %v8582 = vshrl.u32 %v8581, 7
      %v8583 = vsub.s32 0, %v8582
      %v8584 = vrot.slane %v8355, %v8583
      %v8586 = vmul.f32 %v8572, %v8584
      %v8587 = vmul.f32 %v8573, %v8584
      %v8588 = vmul.f32 %v8574, %v8584
      %v8589 = vmul.f32 %v8575, %v8584
      %v8590 = vmul.f32 %v8576, %v8584
      %v8591 = vmul.f32 %v8577, %v8584
      %v8592 = vmul.f32 %v8578, %v8584
      %v8593 = vmul.f32 %v8579, %v8584
      %v8594 = vadd.f32 %v8586, %v8587
      %v8595 = vadd.f32 %v8594, %v8588
      %v8596 = vadd.f32 %v8595, %v8589
      %v8597 = vadd.f32 %v8596, %v8590
      %v8598 = vadd.f32 %v8597, %v8591
      %v8599 = vadd.f32 %v8598, %v8592
      %v8600 = vadd.f32 %v8599, %v8593
      %v8601 = vrot.slane %v8600, 4
      %v8602 = vadd.f32 %v8600, %v8601
      %v8603 = vrot.slane %v8602, 2
      %v8604 = vadd.f32 %v8602, %v8603
      %v8605 = vrot.slane %v8604, 1
      %v8606 = vadd.f32 %v8604, %v8605
      %v8607 = vmul.f32 %v6212, 0.00390625
      %v8608 = vmul.f32 %v8606, 0.015625
      %v8609 = vadd.f32 %v8607, %v8608
      %8610 = vst [vmem:[%s279] sm:$0x1] %v8609
      %p8611 = scmp.lt.s32.totalorder %s18, 1
      %s8612 = scalar_select %p8611, %s18, 1
      %s8613 = scalar_lea.vmem %s7, %s8612
      // Predicated region
      $region49: #{lpips_loss_forward.1} parent=47 // pred_check
        %p8614 = pneg %p188
      $region50: #{lpips_loss_forward.1} parent=47 // pred_check_branch
        %8616 = sbr.rel (%p8614) target = $region52
      $region51: #{lpips_loss_forward.1} parent=47 // pred_region
        _
      $region52: #{lpips_loss_forward.1} parent=47 // pred_fallthru
        _
    $region48: #{lpips_loss_forward.1} parent=5 // pred_fallthru
      _
    %p8617 = scmp.le.s32.totalorder 2, %s13
    // Predicated region
    $region53: #{lpips_loss_forward.1} parent=5 // pred_check
      %p8618 = pneg %p8617
    $region54: #{lpips_loss_forward.1} parent=5 // pred_check_branch
      %8620 = sbr.rel (%p8618) target = $region56
    $region55: #{lpips_loss_forward.1} parent=5 // pred_region
      %s8621 = ssub.s32 %s13, 2
      // Predicated region
      $region57: #{lpips_loss_forward.1} parent=55 // pred_check
        %p8622 = pneg %p194
      $region58: #{lpips_loss_forward.1} parent=55 // pred_check_branch
        %8624 = sbr.rel (%p8622) target = $region60
      $region59: #{lpips_loss_forward.1} parent=55 // pred_region
        %p8625 = scmp.lt.s32.totalorder %s19, 1
        %s8626 = scalar_select %p8625, %s19, 1
        %s8627 = scalar_lea.vmem %s7, %s8626
      $region60: #{lpips_loss_forward.1} parent=55 // pred_fallthru
        _
    $region56: #{lpips_loss_forward.1} parent=5 // pred_fallthru
      _
  $region6: #{lpips_loss_forward.1} parent=0 // loop_footer
    %s17 = sadd.s32 1, %s13
  $region7: #{lpips_loss_forward.1} parent=0 // loop_footer_branch
    %12 = sbr.rel target = $region3
  $region8: #{lpips_loss_forward.1} parent=0 // loop_exit
    _

</llo_original>
